<compile_context>
chip_gen: v7x
topology: tpu7x:2x2x1
jax: 0.10.0
libtpu: 0.0.40
codegen_flags: <defaults>
</compile_context>

<pallas_src>
import jax
import jax.numpy as jnp
from jax.experimental import pallas as pl
from jax.experimental.pallas import tpu as pltpu


def _round_up(x, m):
    return (x + m - 1) // m * m


def _pick_block_b(B, target=8):
    b = min(target, B)
    while B % b:
        b -= 1
    return b


def _make_mmoe_kernel(B_blk, H, W, Wp, Cin, E, Cout, T, Cmax):
    HWp = H * Wp                    # rows of the "wide" (H x Wp) conv-output grid
    inv_hw = 1.0 / float(H * W)
    center = Wp + 1                 # offset of the (1,1) tap == raw pixel (h, w)

    def kernel(x_ref, convw_ref, convb_ref, gatew_ref, gateb_ref,
               towerw_ref, towerb_ref, out_ref):
        # valid-column mask over the wide (H, Wp) grid: keep w < W
        col = jax.lax.broadcasted_iota(jnp.int32, (HWp, 1), 0) % Wp
        mask = (col < W).astype(jnp.float32)[None, :, :]           # (1, HWp, 1)

        # ---- 3x3 SAME conv for all E experts: 9 shifted matmuls, f32 acc ----
        acc = jnp.zeros((B_blk * HWp, E * Cout), jnp.float32)
        for kh in range(3):
            for kw in range(3):
                off = kh * Wp + kw
                xs = x_ref[:, off:off + HWp, :]                    # (B_blk, HWp, Cin)
                acc += jnp.dot(xs.reshape(B_blk * HWp, Cin),
                               convw_ref[kh * 3 + kw],
                               preferred_element_type=jnp.float32)
        y = acc.reshape(B_blk, HWp, E * Cout)
        y = jnp.maximum(y + convb_ref[...][None, :, :], 0.0)       # bias + ReLU

        # ---- per-image global average pool (masked row reduction) ----
        ef = (jnp.sum(y * mask, axis=1) * inv_hw).reshape(B_blk, E, Cout)

        # ---- gate GAP straight from the center tap of the padded block ----
        xc = x_ref[:, center:center + HWp, :]                      # (B_blk, HWp, Cin)
        x_gap = jnp.sum(xc * mask, axis=1) * inv_hw                # (B_blk, Cin)

        # ---- all T gates in one matmul; softmax over experts ----
        logits = jnp.dot(x_gap, gatew_ref[...],
                         preferred_element_type=jnp.float32)       # (B_blk, T*E)
        logits = logits.reshape(B_blk, T, E) + gateb_ref[...][None, :, :]
        logits = logits - jnp.max(logits, axis=-1, keepdims=True)
        p = jnp.exp(logits)
        w = p / jnp.sum(p, axis=-1, keepdims=True)                 # (B_blk, T, E)

        # ---- expert mixture for all tasks: one batched (T,E)@(E,Cout) matmul ----
        feat = jnp.einsum('bte,bec->btc', w, ef,
                          preferred_element_type=jnp.float32)      # (B_blk, T, Cout)

        # ---- per-task towers (tiny unrolled loop, no diagonal extraction) ----
        outs = []
        for t in range(T):
            o_t = jnp.dot(feat[:, t, :], towerw_ref[t],
                          preferred_element_type=jnp.float32)
            o_t = o_t + towerb_ref[...][t:t + 1, :]                # (B_blk, Cmax)
            outs.append(o_t[:, None, :])
        outs = jnp.concatenate(outs, axis=1)                       # (B_blk, T, Cmax)

        # ---- single fused output: [:E] = gate weights, [E:] = tower logits ----
        out_ref[...] = jnp.concatenate([w, outs], axis=-1)

    return kernel


def task_mmoe_ddc_forward(x_nchw, params, num_task_classes, block_b=8):
    B, Cin, H, W = x_nchw.shape
    conv_w = params["conv_w"]    # (E, Cout, Cin, 3, 3)  (PyTorch OIHW per expert)
    conv_b = params["conv_b"]    # (E, Cout)
    gate_w = params["gate_w"]    # (T, Cin, E)
    gate_b = params["gate_b"]    # (T, E)
    tower_w = params["tower_w"]  # (T, Cout, Cmax)  zero-padded over classes
    tower_b = params["tower_b"]  # (T, Cmax)
    E, Cout = conv_b.shape
    T = gate_w.shape[0]
    Cmax = tower_b.shape[1]
    Hp, Wp = H + 2, W + 2

    # --- glue: NCHW -> zero-padded NHWC rows (pure data movement, no im2col) ---
    x_nhwc = jnp.transpose(x_nchw, (0, 2, 3, 1)).astype(jnp.float32)   # (B,H,W,Cin)
    x_pad = jnp.pad(x_nhwc, ((0, 0), (1, 1), (1, 1), (0, 0)))          # (B,Hp,Wp,Cin)
    x_rows = x_pad.reshape(B, Hp * Wp, Cin)
    # trailing pad so the (kh=2,kw=2) tap window stays in-bounds (+ sublane align)
    R = _round_up(Hp * Wp + 2, 8)
    x_rows = jnp.pad(x_rows, ((0, 0), (0, R - Hp * Wp), (0, 0)))

    # per-tap fused conv weight: (E,Cout,Cin,3,3) -> (kh,kw,ci,e,co) -> (9,Cin,E*Cout)
    conv_w_taps = (jnp.transpose(conv_w, (3, 4, 2, 0, 1))
                   .reshape(9, Cin, E * Cout).astype(jnp.float32))
    conv_b_all = conv_b.reshape(1, E * Cout).astype(jnp.float32)
    # gates concatenated over tasks: (T,Cin,E) -> (Cin, T*E)
    gate_w_all = jnp.transpose(gate_w, (1, 0, 2)).reshape(Cin, T * E).astype(jnp.float32)
    gate_b_all = gate_b.astype(jnp.float32)          # (T, E)
    tower_w_all = tower_w.astype(jnp.float32)        # (T, Cout, Cmax)
    tower_b_all = tower_b.astype(jnp.float32)        # (T, Cmax)

    # Images per grid step.  Re-derive against VMEM budget per generation
    # (v7x: 64 MiB physical / 32 MiB scoped; v5e scoped default 16 MiB).
    B_blk = _pick_block_b(B, block_b)
    grid = (B // B_blk,)

    kernel = _make_mmoe_kernel(B_blk, H, W, Wp, Cin, E, Cout, T, Cmax)

    fused = pl.pallas_call(
        kernel,
        grid=grid,
        in_specs=[
            pl.BlockSpec((B_blk, R, Cin), lambda i: (i, 0, 0)),        # image rows
            pl.BlockSpec((9, Cin, E * Cout), lambda i: (0, 0, 0)),     # conv taps
            pl.BlockSpec((1, E * Cout), lambda i: (0, 0)),             # conv bias
            pl.BlockSpec((Cin, T * E), lambda i: (0, 0)),              # gate weights
            pl.BlockSpec((T, E), lambda i: (0, 0)),                    # gate bias
            pl.BlockSpec((T, Cout, Cmax), lambda i: (0, 0, 0)),        # tower weights
            pl.BlockSpec((T, Cmax), lambda i: (0, 0)),                 # tower bias
        ],
        out_specs=pl.BlockSpec((B_blk, T, E + Cmax), lambda i: (i, 0, 0)),
        out_shape=jax.ShapeDtypeStruct((B, T, E + Cmax), jnp.float32),
        compiler_params=pltpu.CompilerParams(
            dimension_semantics=("parallel",),
            vmem_limit_bytes=32 * 1024 * 1024,
        ),
    )(x_rows, conv_w_taps, conv_b_all, gate_w_all, gate_b_all,
      tower_w_all, tower_b_all)

    wts = fused[:, :, :E]                                              # (B, T, E)
    outs = [fused[:, t, E:E + num_task_classes[t]] for t in range(T)]
    # torch: each task_weight is (B, 1, E) via unsqueeze(1)
    task_weights = [wts[:, t, :][:, None, :] for t in range(T)]
    return outs + [task_weights]


if __name__ == "__main__":
    B, Cin, H, W = 2, 4, 16, 16
    Cout, E = 8, 3
    num_task_classes = [3, 5]
    T = len(num_task_classes)
    Cmax = max(num_task_classes)

    key = jax.random.PRNGKey(0)
    ks = jax.random.split(key, 8)
    x = jax.random.normal(ks[0], (B, Cin, H, W), jnp.float32)
    conv_w = 0.1 * jax.random.normal(ks[1], (E, Cout, Cin, 3, 3), jnp.float32)
    conv_b = 0.05 * jax.random.normal(ks[2], (E, Cout), jnp.float32)
    gate_w = 0.2 * jax.random.normal(ks[3], (T, Cin, E), jnp.float32)
    gate_b = 0.05 * jax.random.normal(ks[4], (T, E), jnp.float32)
    tower_w = jnp.zeros((T, Cout, Cmax), jnp.float32)
    tower_b = jnp.zeros((T, Cmax), jnp.float32)
    for t, nc in enumerate(num_task_classes):
        tower_w = tower_w.at[t, :, :nc].set(
            0.2 * jax.random.normal(jax.random.fold_in(ks[5], t), (Cout, nc), jnp.float32))
        tower_b = tower_b.at[t, :nc].set(
            0.05 * jax.random.normal(jax.random.fold_in(ks[6], t), (nc,), jnp.float32))

    params = dict(conv_w=conv_w, conv_b=conv_b, gate_w=gate_w, gate_b=gate_b,
                  tower_w=tower_w, tower_b=tower_b)

    result = task_mmoe_ddc_forward(x, params, num_task_classes)
    jax.block_until_ready(result)

    # ---- pure-JAX reference check ----
    ef_ref = []
    for e in range(E):
        y = jax.lax.conv_general_dilated(
            x, conv_w[e], (1, 1), "SAME",
            dimension_numbers=("NCHW", "OIHW", "NCHW"),
            precision=jax.lax.Precision.HIGHEST)
        y = jnp.maximum(y + conv_b[e][None, :, None, None], 0.0)
        ef_ref.append(jnp.mean(y, axis=(2, 3)))
    ef_ref = jnp.stack(ef_ref, axis=1)                    # (B, E, Cout)
    x_gap_ref = jnp.mean(x, axis=(2, 3))                  # (B, Cin)
    for t in range(T):
        logits = x_gap_ref @ gate_w[t] + gate_b[t]
        w_ref = jax.nn.softmax(logits, axis=1)
        feat = jnp.einsum("be,bec->bc", w_ref, ef_ref)
        nc = num_task_classes[t]
        o_ref = feat @ tower_w[t][:, :nc] + tower_b[t, :nc]
        assert jnp.allclose(result[t], o_ref, atol=2e-2, rtol=2e-2), f"task {t} out mismatch"
        assert jnp.allclose(result[T][t][:, 0, :], w_ref, atol=2e-2, rtol=2e-2), \
            f"task {t} gate weights mismatch"

    print("KERNEL_OK")
</pallas_src>

<mosaic_0001>
module attributes {stable_mosaic.version = 11 : i64} {
  func.func @kernel(%arg0: i32, %arg1: memref<2x328x4xf32, #tpu.memory_space<vmem>>, %arg2: memref<9x4x24xf32, #tpu.memory_space<vmem>>, %arg3: memref<1x24xf32, #tpu.memory_space<vmem>>, %arg4: memref<4x6xf32, #tpu.memory_space<vmem>>, %arg5: memref<2x3xf32, #tpu.memory_space<vmem>>, %arg6: memref<2x8x5xf32, #tpu.memory_space<vmem>>, %arg7: memref<2x5xf32, #tpu.memory_space<vmem>>, %arg8: memref<2x2x8xf32, #tpu.memory_space<vmem>>) attributes {dimension_semantics = [#tpu.dimension_semantics<parallel>], iteration_bounds = array<i64: 1>, scalar_prefetch = 0 : i64, scratch_operands = 0 : i64, tpu.core_type = #tpu.core_type<tc>, window_params = [{transform_indices = @transform_0, window_bounds = array<i64: 2, 328, 4>}, {pipeline_mode = #tpu.pipeline_mode<synchronous>, transform_indices = @transform_1, window_bounds = array<i64: 9, 4, 24>}, {pipeline_mode = #tpu.pipeline_mode<synchronous>, transform_indices = @transform_2, window_bounds = array<i64: 1, 24>}, {pipeline_mode = #tpu.pipeline_mode<synchronous>, transform_indices = @transform_3, window_bounds = array<i64: 4, 6>}, {pipeline_mode = #tpu.pipeline_mode<synchronous>, transform_indices = @transform_4, window_bounds = array<i64: 2, 3>}, {pipeline_mode = #tpu.pipeline_mode<synchronous>, transform_indices = @transform_5, window_bounds = array<i64: 2, 8, 5>}, {pipeline_mode = #tpu.pipeline_mode<synchronous>, transform_indices = @transform_6, window_bounds = array<i64: 2, 5>}, {transform_indices = @transform_7, window_bounds = array<i64: 2, 2, 8>}]} {
    %0 = tpu.iota {dimensions = array<i32: 0>} : vector<288x1xi32>
    %c18_i32 = arith.constant 18 : i32
    %c0_i32 = arith.constant 0 : i32
    %1 = arith.cmpi eq, %c18_i32, %c0_i32 : i32
    %c1_i32 = arith.constant 1 : i32
    %2 = arith.select %1, %c1_i32, %c18_i32 : i32
    %3 = vector.broadcast %2 : i32 to vector<288x1xi32>
    %4 = arith.remsi %0, %3 : vector<288x1xi32>
    %c0_i32_0 = arith.constant 0 : i32
    %5 = vector.broadcast %c0_i32_0 : i32 to vector<288x1xi32>
    %6 = arith.cmpi ne, %4, %5 : vector<288x1xi32>
    %c0_i32_1 = arith.constant 0 : i32
    %7 = vector.broadcast %c0_i32_1 : i32 to vector<288x1xi32>
    %8 = arith.cmpi slt, %4, %7 : vector<288x1xi32>
    %c0_i32_2 = arith.constant 0 : i32
    %9 = arith.cmpi slt, %2, %c0_i32_2 : i32
    %10 = vector.broadcast %9 : i1 to vector<288x1xi1>
    %11 = vector.broadcast %10 : vector<288x1xi1> to vector<288x1xi1>
    %12 = arith.xori %8, %11 : vector<288x1xi1>
    %13 = arith.andi %12, %6 : vector<288x1xi1>
    %14 = vector.broadcast %2 : i32 to vector<288x1xi32>
    %15 = arith.addi %4, %14 : vector<288x1xi32>
    %16 = arith.select %13, %15, %4 : vector<288x1xi1>, vector<288x1xi32>
    %c16_i32 = arith.constant 16 : i32
    %17 = vector.broadcast %c16_i32 : i32 to vector<288x1xi32>
    %18 = arith.cmpi slt, %16, %17 : vector<288x1xi32>
    %19 = arith.extui %18 : vector<288x1xi1> to vector<288x1xi32>
    %20 = arith.sitofp %19 : vector<288x1xi32> to vector<288x1xf32>
    %21 = vector.shape_cast %20 : vector<288x1xf32> to vector<1x288x1xf32>
    %cst = arith.constant 0.000000e+00 : f32
    %22 = vector.broadcast %cst : f32 to vector<576x24xf32>
    %c0 = arith.constant 0 : index
    %c0_3 = arith.constant 0 : index
    %c0_4 = arith.constant 0 : index
    %23 = vector.load %arg1[%c0, %c0_3, %c0_4] : memref<2x328x4xf32, #tpu.memory_space<vmem>>, vector<2x288x4xf32>
    %24 = vector.shape_cast %23 : vector<2x288x4xf32> to vector<576x4xf32>
    %c0_5 = arith.constant 0 : index
    %c0_6 = arith.constant 0 : index
    %c0_7 = arith.constant 0 : index
    %25 = vector.load %arg2[%c0_5, %c0_6, %c0_7] : memref<9x4x24xf32, #tpu.memory_space<vmem>>, vector<1x4x24xf32>
    %26 = vector.shape_cast %25 : vector<1x4x24xf32> to vector<4x24xf32>
    %cst_8 = arith.constant dense<0.000000e+00> : vector<576x24xf32>
    %27 = tpu.matmul %24, %26, %cst_8 {dimension_numbers = #tpu.dot_dimension_numbers<[1], [0], [0], [1], [0, 0, 1, 1], [], []>} : vector<576x4xf32>, vector<4x24xf32>, vector<576x24xf32> -> vector<576x24xf32>
    %28 = arith.addf %22, %27 : vector<576x24xf32>
    %c0_9 = arith.constant 0 : index
    %c1 = arith.constant 1 : index
    %c0_10 = arith.constant 0 : index
    %29 = vector.load %arg1[%c0_9, %c1, %c0_10] : memref<2x328x4xf32, #tpu.memory_space<vmem>>, vector<2x288x4xf32>
    %30 = vector.shape_cast %29 : vector<2x288x4xf32> to vector<576x4xf32>
    %c1_11 = arith.constant 1 : index
    %c0_12 = arith.constant 0 : index
    %c0_13 = arith.constant 0 : index
    %31 = vector.load %arg2[%c1_11, %c0_12, %c0_13] : memref<9x4x24xf32, #tpu.memory_space<vmem>>, vector<1x4x24xf32>
    %32 = vector.shape_cast %31 : vector<1x4x24xf32> to vector<4x24xf32>
    %cst_14 = arith.constant dense<0.000000e+00> : vector<576x24xf32>
    %33 = tpu.matmul %30, %32, %cst_14 {dimension_numbers = #tpu.dot_dimension_numbers<[1], [0], [0], [1], [0, 0, 1, 1], [], []>} : vector<576x4xf32>, vector<4x24xf32>, vector<576x24xf32> -> vector<576x24xf32>
    %34 = arith.addf %28, %33 : vector<576x24xf32>
    %c0_15 = arith.constant 0 : index
    %c2 = arith.constant 2 : index
    %c0_16 = arith.constant 0 : index
    %35 = vector.load %arg1[%c0_15, %c2, %c0_16] : memref<2x328x4xf32, #tpu.memory_space<vmem>>, vector<2x288x4xf32>
    %36 = vector.shape_cast %35 : vector<2x288x4xf32> to vector<576x4xf32>
    %c2_17 = arith.constant 2 : index
    %c0_18 = arith.constant 0 : index
    %c0_19 = arith.constant 0 : index
    %37 = vector.load %arg2[%c2_17, %c0_18, %c0_19] : memref<9x4x24xf32, #tpu.memory_space<vmem>>, vector<1x4x24xf32>
    %38 = vector.shape_cast %37 : vector<1x4x24xf32> to vector<4x24xf32>
    %cst_20 = arith.constant dense<0.000000e+00> : vector<576x24xf32>
    %39 = tpu.matmul %36, %38, %cst_20 {dimension_numbers = #tpu.dot_dimension_numbers<[1], [0], [0], [1], [0, 0, 1, 1], [], []>} : vector<576x4xf32>, vector<4x24xf32>, vector<576x24xf32> -> vector<576x24xf32>
    %40 = arith.addf %34, %39 : vector<576x24xf32>
    %c0_21 = arith.constant 0 : index
    %c18 = arith.constant 18 : index
    %c0_22 = arith.constant 0 : index
    %41 = vector.load %arg1[%c0_21, %c18, %c0_22] : memref<2x328x4xf32, #tpu.memory_space<vmem>>, vector<2x288x4xf32>
    %42 = vector.shape_cast %41 : vector<2x288x4xf32> to vector<576x4xf32>
    %c3 = arith.constant 3 : index
    %c0_23 = arith.constant 0 : index
    %c0_24 = arith.constant 0 : index
    %43 = vector.load %arg2[%c3, %c0_23, %c0_24] : memref<9x4x24xf32, #tpu.memory_space<vmem>>, vector<1x4x24xf32>
    %44 = vector.shape_cast %43 : vector<1x4x24xf32> to vector<4x24xf32>
    %cst_25 = arith.constant dense<0.000000e+00> : vector<576x24xf32>
    %45 = tpu.matmul %42, %44, %cst_25 {dimension_numbers = #tpu.dot_dimension_numbers<[1], [0], [0], [1], [0, 0, 1, 1], [], []>} : vector<576x4xf32>, vector<4x24xf32>, vector<576x24xf32> -> vector<576x24xf32>
    %46 = arith.addf %40, %45 : vector<576x24xf32>
    %c0_26 = arith.constant 0 : index
    %c19 = arith.constant 19 : index
    %c0_27 = arith.constant 0 : index
    %47 = vector.load %arg1[%c0_26, %c19, %c0_27] : memref<2x328x4xf32, #tpu.memory_space<vmem>>, vector<2x288x4xf32>
    %48 = vector.shape_cast %47 : vector<2x288x4xf32> to vector<576x4xf32>
    %c4 = arith.constant 4 : index
    %c0_28 = arith.constant 0 : index
    %c0_29 = arith.constant 0 : index
    %49 = vector.load %arg2[%c4, %c0_28, %c0_29] : memref<9x4x24xf32, #tpu.memory_space<vmem>>, vector<1x4x24xf32>
    %50 = vector.shape_cast %49 : vector<1x4x24xf32> to vector<4x24xf32>
    %cst_30 = arith.constant dense<0.000000e+00> : vector<576x24xf32>
    %51 = tpu.matmul %48, %50, %cst_30 {dimension_numbers = #tpu.dot_dimension_numbers<[1], [0], [0], [1], [0, 0, 1, 1], [], []>} : vector<576x4xf32>, vector<4x24xf32>, vector<576x24xf32> -> vector<576x24xf32>
    %52 = arith.addf %46, %51 : vector<576x24xf32>
    %c0_31 = arith.constant 0 : index
    %c20 = arith.constant 20 : index
    %c0_32 = arith.constant 0 : index
    %53 = vector.load %arg1[%c0_31, %c20, %c0_32] : memref<2x328x4xf32, #tpu.memory_space<vmem>>, vector<2x288x4xf32>
    %54 = vector.shape_cast %53 : vector<2x288x4xf32> to vector<576x4xf32>
    %c5 = arith.constant 5 : index
    %c0_33 = arith.constant 0 : index
    %c0_34 = arith.constant 0 : index
    %55 = vector.load %arg2[%c5, %c0_33, %c0_34] : memref<9x4x24xf32, #tpu.memory_space<vmem>>, vector<1x4x24xf32>
    %56 = vector.shape_cast %55 : vector<1x4x24xf32> to vector<4x24xf32>
    %cst_35 = arith.constant dense<0.000000e+00> : vector<576x24xf32>
    %57 = tpu.matmul %54, %56, %cst_35 {dimension_numbers = #tpu.dot_dimension_numbers<[1], [0], [0], [1], [0, 0, 1, 1], [], []>} : vector<576x4xf32>, vector<4x24xf32>, vector<576x24xf32> -> vector<576x24xf32>
    %58 = arith.addf %52, %57 : vector<576x24xf32>
    %c0_36 = arith.constant 0 : index
    %c36 = arith.constant 36 : index
    %c0_37 = arith.constant 0 : index
    %59 = vector.load %arg1[%c0_36, %c36, %c0_37] : memref<2x328x4xf32, #tpu.memory_space<vmem>>, vector<2x288x4xf32>
    %60 = vector.shape_cast %59 : vector<2x288x4xf32> to vector<576x4xf32>
    %c6 = arith.constant 6 : index
    %c0_38 = arith.constant 0 : index
    %c0_39 = arith.constant 0 : index
    %61 = vector.load %arg2[%c6, %c0_38, %c0_39] : memref<9x4x24xf32, #tpu.memory_space<vmem>>, vector<1x4x24xf32>
    %62 = vector.shape_cast %61 : vector<1x4x24xf32> to vector<4x24xf32>
    %cst_40 = arith.constant dense<0.000000e+00> : vector<576x24xf32>
    %63 = tpu.matmul %60, %62, %cst_40 {dimension_numbers = #tpu.dot_dimension_numbers<[1], [0], [0], [1], [0, 0, 1, 1], [], []>} : vector<576x4xf32>, vector<4x24xf32>, vector<576x24xf32> -> vector<576x24xf32>
    %64 = arith.addf %58, %63 : vector<576x24xf32>
    %c0_41 = arith.constant 0 : index
    %c37 = arith.constant 37 : index
    %c0_42 = arith.constant 0 : index
    %65 = vector.load %arg1[%c0_41, %c37, %c0_42] : memref<2x328x4xf32, #tpu.memory_space<vmem>>, vector<2x288x4xf32>
    %66 = vector.shape_cast %65 : vector<2x288x4xf32> to vector<576x4xf32>
    %c7 = arith.constant 7 : index
    %c0_43 = arith.constant 0 : index
    %c0_44 = arith.constant 0 : index
    %67 = vector.load %arg2[%c7, %c0_43, %c0_44] : memref<9x4x24xf32, #tpu.memory_space<vmem>>, vector<1x4x24xf32>
    %68 = vector.shape_cast %67 : vector<1x4x24xf32> to vector<4x24xf32>
    %cst_45 = arith.constant dense<0.000000e+00> : vector<576x24xf32>
    %69 = tpu.matmul %66, %68, %cst_45 {dimension_numbers = #tpu.dot_dimension_numbers<[1], [0], [0], [1], [0, 0, 1, 1], [], []>} : vector<576x4xf32>, vector<4x24xf32>, vector<576x24xf32> -> vector<576x24xf32>
    %70 = arith.addf %64, %69 : vector<576x24xf32>
    %c0_46 = arith.constant 0 : index
    %c38 = arith.constant 38 : index
    %c0_47 = arith.constant 0 : index
    %71 = vector.load %arg1[%c0_46, %c38, %c0_47] : memref<2x328x4xf32, #tpu.memory_space<vmem>>, vector<2x288x4xf32>
    %72 = vector.shape_cast %71 : vector<2x288x4xf32> to vector<576x4xf32>
    %c8 = arith.constant 8 : index
    %c0_48 = arith.constant 0 : index
    %c0_49 = arith.constant 0 : index
    %73 = vector.load %arg2[%c8, %c0_48, %c0_49] : memref<9x4x24xf32, #tpu.memory_space<vmem>>, vector<1x4x24xf32>
    %74 = vector.shape_cast %73 : vector<1x4x24xf32> to vector<4x24xf32>
    %cst_50 = arith.constant dense<0.000000e+00> : vector<576x24xf32>
    %75 = tpu.matmul %72, %74, %cst_50 {dimension_numbers = #tpu.dot_dimension_numbers<[1], [0], [0], [1], [0, 0, 1, 1], [], []>} : vector<576x4xf32>, vector<4x24xf32>, vector<576x24xf32> -> vector<576x24xf32>
    %76 = arith.addf %70, %75 : vector<576x24xf32>
    %77 = vector.shape_cast %76 : vector<576x24xf32> to vector<2x288x24xf32>
    %c0_51 = arith.constant 0 : index
    %c0_52 = arith.constant 0 : index
    %78 = vector.load %arg3[%c0_51, %c0_52] : memref<1x24xf32, #tpu.memory_space<vmem>>, vector<1x24xf32>
    %79 = vector.shape_cast %78 : vector<1x24xf32> to vector<1x1x24xf32>
    %80 = vector.broadcast %79 : vector<1x1x24xf32> to vector<2x288x24xf32>
    %81 = arith.addf %77, %80 : vector<2x288x24xf32>
    %cst_53 = arith.constant 0.000000e+00 : f32
    %82 = vector.broadcast %cst_53 : f32 to vector<2x288x24xf32>
    %83 = arith.maximumf %81, %82 : vector<2x288x24xf32>
    %84 = vector.broadcast %21 : vector<1x288x1xf32> to vector<2x288x24xf32>
    %85 = arith.mulf %83, %84 : vector<2x288x24xf32>
    %cst_54 = arith.constant dense<0.000000e+00> : vector<2x24xf32>
    %86 = vector.multi_reduction <add>, %85, %cst_54 [1] : vector<2x288x24xf32> to vector<2x24xf32>
    %cst_55 = arith.constant 3.906250e-03 : f32
    %87 = vector.broadcast %cst_55 : f32 to vector<2x24xf32>
    %88 = arith.mulf %86, %87 : vector<2x24xf32>
    %89 = vector.shape_cast %88 : vector<2x24xf32> to vector<2x3x8xf32>
    %c0_56 = arith.constant 0 : index
    %c19_57 = arith.constant 19 : index
    %c0_58 = arith.constant 0 : index
    %90 = vector.load %arg1[%c0_56, %c19_57, %c0_58] : memref<2x328x4xf32, #tpu.memory_space<vmem>>, vector<2x288x4xf32>
    %91 = vector.broadcast %21 : vector<1x288x1xf32> to vector<2x288x4xf32>
    %92 = arith.mulf %90, %91 : vector<2x288x4xf32>
    %cst_59 = arith.constant dense<0.000000e+00> : vector<2x4xf32>
    %93 = vector.multi_reduction <add>, %92, %cst_59 [1] : vector<2x288x4xf32> to vector<2x4xf32>
    %cst_60 = arith.constant 3.906250e-03 : f32
    %94 = vector.broadcast %cst_60 : f32 to vector<2x4xf32>
    %95 = arith.mulf %93, %94 : vector<2x4xf32>
    %c0_61 = arith.constant 0 : index
    %c0_62 = arith.constant 0 : index
    %96 = vector.load %arg4[%c0_61, %c0_62] : memref<4x6xf32, #tpu.memory_space<vmem>>, vector<4x6xf32>
    %cst_63 = arith.constant dense<0.000000e+00> : vector<2x6xf32>
    %97 = tpu.matmul %95, %96, %cst_63 {dimension_numbers = #tpu.dot_dimension_numbers<[1], [0], [0], [1], [0, 0, 1, 1], [], []>} : vector<2x4xf32>, vector<4x6xf32>, vector<2x6xf32> -> vector<2x6xf32>
    %98 = vector.shape_cast %97 : vector<2x6xf32> to vector<2x2x3xf32>
    %c0_64 = arith.constant 0 : index
    %c0_65 = arith.constant 0 : index
    %99 = vector.load %arg5[%c0_64, %c0_65] : memref<2x3xf32, #tpu.memory_space<vmem>>, vector<2x3xf32>
    %100 = vector.shape_cast %99 : vector<2x3xf32> to vector<1x2x3xf32>
    %101 = vector.broadcast %100 : vector<1x2x3xf32> to vector<2x2x3xf32>
    %102 = arith.addf %98, %101 : vector<2x2x3xf32>
    %cst_66 = arith.constant dense<0xFF800000> : vector<2x2xf32>
    %103 = vector.multi_reduction <maximumf>, %102, %cst_66 [2] : vector<2x2x3xf32> to vector<2x2xf32>
    %104 = vector.shape_cast %103 : vector<2x2xf32> to vector<2x2x1xf32>
    %105 = vector.broadcast %104 : vector<2x2x1xf32> to vector<2x2x3xf32>
    %106 = arith.subf %102, %105 : vector<2x2x3xf32>
    %107 = math.exp %106 : vector<2x2x3xf32>
    %cst_67 = arith.constant dense<0.000000e+00> : vector<2x2xf32>
    %108 = vector.multi_reduction <add>, %107, %cst_67 [2] : vector<2x2x3xf32> to vector<2x2xf32>
    %109 = vector.shape_cast %108 : vector<2x2xf32> to vector<2x2x1xf32>
    %110 = vector.broadcast %109 : vector<2x2x1xf32> to vector<2x2x3xf32>
    %111 = arith.divf %107, %110 : vector<2x2x3xf32>
    "tpu.trace_start"() <{level = 10 : i32, message = "bte,bec->btc"}> : () -> ()
    %cst_68 = arith.constant dense<0.000000e+00> : vector<2x2x8xf32>
    %112 = tpu.matmul %111, %89, %cst_68 {dimension_numbers = #tpu.dot_dimension_numbers<[2], [1], [1], [2], [0, 0, 0, 1, 1, 2], [0], [0]>} : vector<2x2x3xf32>, vector<2x3x8xf32>, vector<2x2x8xf32> -> vector<2x2x8xf32>
    "tpu.trace_stop"() : () -> ()
    %113 = vector.extract_strided_slice %112 {offsets = [0, 0, 0], sizes = [2, 1, 8], strides = [1, 1, 1]} : vector<2x2x8xf32> to vector<2x1x8xf32>
    %114 = vector.shape_cast %113 : vector<2x1x8xf32> to vector<2x8xf32>
    %c0_69 = arith.constant 0 : index
    %c0_70 = arith.constant 0 : index
    %c0_71 = arith.constant 0 : index
    %115 = vector.load %arg6[%c0_69, %c0_70, %c0_71] : memref<2x8x5xf32, #tpu.memory_space<vmem>>, vector<1x8x5xf32>
    %116 = vector.shape_cast %115 : vector<1x8x5xf32> to vector<8x5xf32>
    %cst_72 = arith.constant dense<0.000000e+00> : vector<2x5xf32>
    %117 = tpu.matmul %114, %116, %cst_72 {dimension_numbers = #tpu.dot_dimension_numbers<[1], [0], [0], [1], [0, 0, 1, 1], [], []>} : vector<2x8xf32>, vector<8x5xf32>, vector<2x5xf32> -> vector<2x5xf32>
    %c0_73 = arith.constant 0 : index
    %c0_74 = arith.constant 0 : index
    %118 = vector.load %arg7[%c0_73, %c0_74] : memref<2x5xf32, #tpu.memory_space<vmem>>, vector<2x5xf32>
    %119 = vector.extract_strided_slice %118 {offsets = [0, 0], sizes = [1, 5], strides = [1, 1]} : vector<2x5xf32> to vector<1x5xf32>
    %120 = vector.broadcast %119 : vector<1x5xf32> to vector<2x5xf32>
    %121 = arith.addf %117, %120 : vector<2x5xf32>
    %122 = vector.shape_cast %121 : vector<2x5xf32> to vector<2x1x5xf32>
    %123 = vector.extract_strided_slice %112 {offsets = [0, 1, 0], sizes = [2, 1, 8], strides = [1, 1, 1]} : vector<2x2x8xf32> to vector<2x1x8xf32>
    %124 = vector.shape_cast %123 : vector<2x1x8xf32> to vector<2x8xf32>
    %c1_75 = arith.constant 1 : index
    %c0_76 = arith.constant 0 : index
    %c0_77 = arith.constant 0 : index
    %125 = vector.load %arg6[%c1_75, %c0_76, %c0_77] : memref<2x8x5xf32, #tpu.memory_space<vmem>>, vector<1x8x5xf32>
    %126 = vector.shape_cast %125 : vector<1x8x5xf32> to vector<8x5xf32>
    %cst_78 = arith.constant dense<0.000000e+00> : vector<2x5xf32>
    %127 = tpu.matmul %124, %126, %cst_78 {dimension_numbers = #tpu.dot_dimension_numbers<[1], [0], [0], [1], [0, 0, 1, 1], [], []>} : vector<2x8xf32>, vector<8x5xf32>, vector<2x5xf32> -> vector<2x5xf32>
    %c0_79 = arith.constant 0 : index
    %c0_80 = arith.constant 0 : index
    %128 = vector.load %arg7[%c0_79, %c0_80] : memref<2x5xf32, #tpu.memory_space<vmem>>, vector<2x5xf32>
    %129 = vector.extract_strided_slice %128 {offsets = [1, 0], sizes = [1, 5], strides = [1, 1]} : vector<2x5xf32> to vector<1x5xf32>
    %130 = vector.broadcast %129 : vector<1x5xf32> to vector<2x5xf32>
    %131 = arith.addf %127, %130 : vector<2x5xf32>
    %132 = vector.shape_cast %131 : vector<2x5xf32> to vector<2x1x5xf32>
    %133 = tpu.concatenate %122, %132 in 1 : vector<2x1x5xf32>, vector<2x1x5xf32> -> vector<2x2x5xf32>
    %134 = tpu.concatenate %111, %133 in 2 : vector<2x2x3xf32>, vector<2x2x5xf32> -> vector<2x2x8xf32>
    %c0_81 = arith.constant 0 : index
    %c0_82 = arith.constant 0 : index
    %c0_83 = arith.constant 0 : index
    %135 = vector.load %arg8[%c0_81, %c0_82, %c0_83] : memref<2x2x8xf32, #tpu.memory_space<vmem>>, vector<2x2x8xf32>
    tpu.vector_store %arg8[%c0_81, %c0_82, %c0_83], %134 {strides = array<i32>} : memref<2x2x8xf32, #tpu.memory_space<vmem>>, vector<2x2x8xf32>,
    return
  }
  func.func @transform_0(%arg0: i32) -> (i32, i32, i32) {
    %c0_i32 = arith.constant 0 : i32
    %c0_i32_0 = arith.constant 0 : i32
    %c0_i32_1 = arith.constant 0 : i32
    return %arg0, %c0_i32, %c0_i32_0 : i32, i32, i32
  }
  func.func @transform_1(%arg0: i32) -> (i32, i32, i32) {
    %c0_i32 = arith.constant 0 : i32
    %c0_i32_0 = arith.constant 0 : i32
    %c0_i32_1 = arith.constant 0 : i32
    %c0_i32_2 = arith.constant 0 : i32
    return %c0_i32, %c0_i32_0, %c0_i32_1 : i32, i32, i32
  }
  func.func @transform_2(%arg0: i32) -> (i32, i32) {
    %c0_i32 = arith.constant 0 : i32
    %c0_i32_0 = arith.constant 0 : i32
    %c0_i32_1 = arith.constant 0 : i32
    return %c0_i32, %c0_i32_0 : i32, i32
  }
  func.func @transform_3(%arg0: i32) -> (i32, i32) {
    %c0_i32 = arith.constant 0 : i32
    %c0_i32_0 = arith.constant 0 : i32
    %c0_i32_1 = arith.constant 0 : i32
    return %c0_i32, %c0_i32_0 : i32, i32
  }
  func.func @transform_4(%arg0: i32) -> (i32, i32) {
    %c0_i32 = arith.constant 0 : i32
    %c0_i32_0 = arith.constant 0 : i32
    %c0_i32_1 = arith.constant 0 : i32
    return %c0_i32, %c0_i32_0 : i32, i32
  }
  func.func @transform_5(%arg0: i32) -> (i32, i32, i32) {
    %c0_i32 = arith.constant 0 : i32
    %c0_i32_0 = arith.constant 0 : i32
    %c0_i32_1 = arith.constant 0 : i32
    %c0_i32_2 = arith.constant 0 : i32
    return %c0_i32, %c0_i32_0, %c0_i32_1 : i32, i32, i32
  }
  func.func @transform_6(%arg0: i32) -> (i32, i32) {
    %c0_i32 = arith.constant 0 : i32
    %c0_i32_0 = arith.constant 0 : i32
    %c0_i32_1 = arith.constant 0 : i32
    return %c0_i32, %c0_i32_0 : i32, i32
  }
  func.func @transform_7(%arg0: i32) -> (i32, i32, i32) {
    %c0_i32 = arith.constant 0 : i32
    %c0_i32_0 = arith.constant 0 : i32
    %c0_i32_1 = arith.constant 0 : i32
    return %arg0, %c0_i32, %c0_i32_0 : i32, i32, i32
  }
}

</mosaic_0001>

<llo_original>
// kernel: tpu_custom_call.1
$region0: #{tpu_custom_call.1}
  #allocation0 [shape = 'u32[]', space=smem, size = 0x4, offset = 0x4, fixed_abs, tag = 'smem constant byte address 0x4 - core index']
  #allocation1 [shape = 'u32[144,128]{1,0:T(1,128)}', space=vmem, size = 0x12000, scoped, tag = 'internal scratch']
  %s0 = inlined_call_operand.vmem [shape: f32[2,328,4], index: 0, kind: input, shape index: {}]
  %s1 = inlined_call_operand.vmem [shape: f32[9,4,24], index: 1, kind: input, shape index: {}]
  %s2 = inlined_call_operand.vmem [shape: f32[1,24], index: 2, kind: input, shape index: {}]
  %s3 = inlined_call_operand.vmem [shape: f32[4,6], index: 3, kind: input, shape index: {}]
  %s4 = inlined_call_operand.vmem [shape: f32[2,3], index: 4, kind: input, shape index: {}]
  %s5 = inlined_call_operand.vmem [shape: f32[2,8,5], index: 5, kind: input, shape index: {}]
  %s6 = inlined_call_operand.vmem [shape: f32[2,5], index: 6, kind: input, shape index: {}]
  %s7 = inlined_call_operand.hbm [shape: f32[2,2,8], index: 7, kind: output, shape index: {}]
  %s8 = sld [smem:[#allocation0]]
  $region38: #{tpu_custom_call.1} parent=0
    _
  %s10 = ssub.s32 1, %s8
  %s11 = scalar_select 0, %s10, %s8
  $region1: #{tpu_custom_call.1} parent=0
    #allocation2 [shape = 'u8[2048]{0}', space=vmem, size = 0x800, scoped, tag = 'output window, operand 0, single buffered']
    #allocation3 [shape = 's32[1]{0}', space=sflag, size = 0x4, scoped, tag = 'scoped memory for tpu_custom_call.1']
    %12 = vsyncpa [#allocation3], 0
    // Predicated region
    $region2: #{tpu_custom_call.1} parent=1 // pred_check
      _
    $region3: #{tpu_custom_call.1} parent=1 // pred_check_branch
      %14 = sbr.rel (0) target = $region5
    $region4: #{tpu_custom_call.1} parent=1 // pred_region
      _
    $region5: #{tpu_custom_call.1} parent=1 // pred_fallthru
      _
    // Predicated region
    $region6: #{tpu_custom_call.1} parent=1 // pred_check
      _
    $region7: #{tpu_custom_call.1} parent=1 // pred_check_branch
      %16 = sbr.rel (0) target = $region9
    $region8: #{tpu_custom_call.1} parent=1 // pred_region
      _
    $region9: #{tpu_custom_call.1} parent=1 // pred_fallthru
      _
    // Predicated region
    $region10: #{tpu_custom_call.1} parent=1 // pred_check
      _
    $region11: #{tpu_custom_call.1} parent=1 // pred_check_branch
      %18 = sbr.rel (0) target = $region13
    $region12: #{tpu_custom_call.1} parent=1 // pred_region
      _
    $region13: #{tpu_custom_call.1} parent=1 // pred_fallthru
      _
    // Predicated region
    $region14: #{tpu_custom_call.1} parent=1 // pred_check
      _
    $region15: #{tpu_custom_call.1} parent=1 // pred_check_branch
      %20 = sbr.rel (0) target = $region17
    $region16: #{tpu_custom_call.1} parent=1 // pred_region
      _
    $region17: #{tpu_custom_call.1} parent=1 // pred_fallthru
      _
    // Predicated region
    $region18: #{tpu_custom_call.1} parent=1 // pred_check
      _
    $region19: #{tpu_custom_call.1} parent=1 // pred_check_branch
      %22 = sbr.rel (0) target = $region21
    $region20: #{tpu_custom_call.1} parent=1 // pred_region
      _
    $region21: #{tpu_custom_call.1} parent=1 // pred_fallthru
      _
    // Predicated region
    $region22: #{tpu_custom_call.1} parent=1 // pred_check
      _
    $region23: #{tpu_custom_call.1} parent=1 // pred_check_branch
      %24 = sbr.rel (0) target = $region25
    $region24: #{tpu_custom_call.1} parent=1 // pred_region
      _
    $region25: #{tpu_custom_call.1} parent=1 // pred_fallthru
      _
    // Predicated region
    $region26: #{tpu_custom_call.1} parent=1 // pred_check
      _
    $region27: #{tpu_custom_call.1} parent=1 // pred_check_branch
      %26 = sbr.rel (0) target = $region29
    $region28: #{tpu_custom_call.1} parent=1 // pred_region
      _
    $region29: #{tpu_custom_call.1} parent=1 // pred_fallthru
      _
    %v27 = vlaneseq
    %v28 = vshrl.u32 %v27, 7
    %v29 = vadd.s32 %v28, 8
    %v30 = vadd.s32 %v28, 16
    %v31 = vadd.s32 %v28, 24
    %v32 = vadd.s32 %v28, 32
    %v33 = vadd.s32 %v28, 40
    %v34 = vadd.s32 %v28, 48
    %v35 = vadd.s32 %v28, 56
    %v36 = vadd.s32 %v28, 64
    %v37 = vadd.s32 %v28, 72
    %v38 = vadd.s32 %v28, 80
    %v39 = vadd.s32 %v28, 88
    %v40 = vadd.s32 %v28, 96
    %v41 = vadd.s32 %v28, 104
    %v42 = vadd.s32 %v28, 112
    %v43 = vadd.s32 %v28, 120
    %v44 = vadd.s32 %v28, 128
    %v45 = vadd.s32 %v28, 136
    %v46 = vadd.s32 %v28, 144
    %v47 = vadd.s32 %v28, 152
    %v48 = vadd.s32 %v28, 160
    %v49 = vadd.s32 %v28, 168
    %v50 = vadd.s32 %v28, 176
    %v51 = vadd.s32 %v28, 184
    %v52 = vadd.s32 %v28, 192
    %v53 = vadd.s32 %v28, 200
    %v54 = vadd.s32 %v28, 208
    %v55 = vadd.s32 %v28, 216
    %v56 = vadd.s32 %v28, 224
    %v57 = vadd.s32 %v28, 232
    %v58 = vadd.s32 %v28, 240
    %v59 = vadd.s32 %v28, 248
    %v60 = vadd.s32 %v28, 256
    %v61 = vadd.s32 %v28, 264
    %v62 = vadd.s32 %v28, 272
    %v63 = vadd.s32 %v28, 280
    %vm64 = vcmp.lt.s32.totalorder %v28, 0
    %v65 = vsub.s32 0, %v28
    %v66 = vsel %vm64, %v65, %v28
    %v67 = vmul.u32.u64.compose %v66, 3817748708
    %v68 = vextract.low.u32 %v67
    %v69 = vextract.high.u32 %v67
    %v70 = vshrl.u32 %v69, 4
    %v71 = vmul.u32 %v70, 18
    %v72 = vsub.s32 %v66, %v71
    %v73 = vsub.s32 0, %v72
    %v74 = vsel %vm64, %v73, %v72
    %vm75 = vcmp.lt.s32.totalorder %v29, 0
    %v76 = vsub.s32 0, %v29
    %v77 = vsel %vm75, %v76, %v29
    %v78 = vmul.u32.u64.compose %v77, 3817748708
    %v79 = vextract.low.u32 %v78
    %v80 = vextract.high.u32 %v78
    %v81 = vshrl.u32 %v80, 4
    %v82 = vmul.u32 %v81, 18
    %v83 = vsub.s32 %v77, %v82
    %v84 = vsub.s32 0, %v83
    %v85 = vsel %vm75, %v84, %v83
    %vm86 = vcmp.lt.s32.totalorder %v30, 0
    %v87 = vsub.s32 0, %v30
    %v88 = vsel %vm86, %v87, %v30
    %v89 = vmul.u32.u64.compose %v88, 3817748708
    %v90 = vextract.low.u32 %v89
    %v91 = vextract.high.u32 %v89
    %v92 = vshrl.u32 %v91, 4
    %v93 = vmul.u32 %v92, 18
    %v94 = vsub.s32 %v88, %v93
    %v95 = vsub.s32 0, %v94
    %v96 = vsel %vm86, %v95, %v94
    %vm97 = vcmp.lt.s32.totalorder %v31, 0
    %v98 = vsub.s32 0, %v31
    %v99 = vsel %vm97, %v98, %v31
    %v100 = vmul.u32.u64.compose %v99, 3817748708
    %v101 = vextract.low.u32 %v100
    %v102 = vextract.high.u32 %v100
    %v103 = vshrl.u32 %v102, 4
    %v104 = vmul.u32 %v103, 18
    %v105 = vsub.s32 %v99, %v104
    %v106 = vsub.s32 0, %v105
    %v107 = vsel %vm97, %v106, %v105
    %vm108 = vcmp.lt.s32.totalorder %v32, 0
    %v109 = vsub.s32 0, %v32
    %v110 = vsel %vm108, %v109, %v32
    %v111 = vmul.u32.u64.compose %v110, 3817748708
    %v112 = vextract.low.u32 %v111
    %v113 = vextract.high.u32 %v111
    %v114 = vshrl.u32 %v113, 4
    %v115 = vmul.u32 %v114, 18
    %v116 = vsub.s32 %v110, %v115
    %v117 = vsub.s32 0, %v116
    %v118 = vsel %vm108, %v117, %v116
    %vm119 = vcmp.lt.s32.totalorder %v33, 0
    %v120 = vsub.s32 0, %v33
    %v121 = vsel %vm119, %v120, %v33
    %v122 = vmul.u32.u64.compose %v121, 3817748708
    %v123 = vextract.low.u32 %v122
    %v124 = vextract.high.u32 %v122
    %v125 = vshrl.u32 %v124, 4
    %v126 = vmul.u32 %v125, 18
    %v127 = vsub.s32 %v121, %v126
    %v128 = vsub.s32 0, %v127
    %v129 = vsel %vm119, %v128, %v127
    %vm130 = vcmp.lt.s32.totalorder %v34, 0
    %v131 = vsub.s32 0, %v34
    %v132 = vsel %vm130, %v131, %v34
    %v133 = vmul.u32.u64.compose %v132, 3817748708
    %v134 = vextract.low.u32 %v133
    %v135 = vextract.high.u32 %v133
    %v136 = vshrl.u32 %v135, 4
    %v137 = vmul.u32 %v136, 18
    %v138 = vsub.s32 %v132, %v137
    %v139 = vsub.s32 0, %v138
    %v140 = vsel %vm130, %v139, %v138
    %vm141 = vcmp.lt.s32.totalorder %v35, 0
    %v142 = vsub.s32 0, %v35
    %v143 = vsel %vm141, %v142, %v35
    %v144 = vmul.u32.u64.compose %v143, 3817748708
    %v145 = vextract.low.u32 %v144
    %v146 = vextract.high.u32 %v144
    %v147 = vshrl.u32 %v146, 4
    %v148 = vmul.u32 %v147, 18
    %v149 = vsub.s32 %v143, %v148
    %v150 = vsub.s32 0, %v149
    %v151 = vsel %vm141, %v150, %v149
    %vm152 = vcmp.lt.s32.totalorder %v36, 0
    %v153 = vsub.s32 0, %v36
    %v154 = vsel %vm152, %v153, %v36
    %v155 = vmul.u32.u64.compose %v154, 3817748708
    %v156 = vextract.low.u32 %v155
    %v157 = vextract.high.u32 %v155
    %v158 = vshrl.u32 %v157, 4
    %v159 = vmul.u32 %v158, 18
    %v160 = vsub.s32 %v154, %v159
    %v161 = vsub.s32 0, %v160
    %v162 = vsel %vm152, %v161, %v160
    %vm163 = vcmp.lt.s32.totalorder %v37, 0
    %v164 = vsub.s32 0, %v37
    %v165 = vsel %vm163, %v164, %v37
    %v166 = vmul.u32.u64.compose %v165, 3817748708
    %v167 = vextract.low.u32 %v166
    %v168 = vextract.high.u32 %v166
    %v169 = vshrl.u32 %v168, 4
    %v170 = vmul.u32 %v169, 18
    %v171 = vsub.s32 %v165, %v170
    %v172 = vsub.s32 0, %v171
    %v173 = vsel %vm163, %v172, %v171
    %vm174 = vcmp.lt.s32.totalorder %v38, 0
    %v175 = vsub.s32 0, %v38
    %v176 = vsel %vm174, %v175, %v38
    %v177 = vmul.u32.u64.compose %v176, 3817748708
    %v178 = vextract.low.u32 %v177
    %v179 = vextract.high.u32 %v177
    %v180 = vshrl.u32 %v179, 4
    %v181 = vmul.u32 %v180, 18
    %v182 = vsub.s32 %v176, %v181
    %v183 = vsub.s32 0, %v182
    %v184 = vsel %vm174, %v183, %v182
    %vm185 = vcmp.lt.s32.totalorder %v39, 0
    %v186 = vsub.s32 0, %v39
    %v187 = vsel %vm185, %v186, %v39
    %v188 = vmul.u32.u64.compose %v187, 3817748708
    %v189 = vextract.low.u32 %v188
    %v190 = vextract.high.u32 %v188
    %v191 = vshrl.u32 %v190, 4
    %v192 = vmul.u32 %v191, 18
    %v193 = vsub.s32 %v187, %v192
    %v194 = vsub.s32 0, %v193
    %v195 = vsel %vm185, %v194, %v193
    %vm196 = vcmp.lt.s32.totalorder %v40, 0
    %v197 = vsub.s32 0, %v40
    %v198 = vsel %vm196, %v197, %v40
    %v199 = vmul.u32.u64.compose %v198, 3817748708
    %v200 = vextract.low.u32 %v199
    %v201 = vextract.high.u32 %v199
    %v202 = vshrl.u32 %v201, 4
    %v203 = vmul.u32 %v202, 18
    %v204 = vsub.s32 %v198, %v203
    %v205 = vsub.s32 0, %v204
    %v206 = vsel %vm196, %v205, %v204
    %vm207 = vcmp.lt.s32.totalorder %v41, 0
    %v208 = vsub.s32 0, %v41
    %v209 = vsel %vm207, %v208, %v41
    %v210 = vmul.u32.u64.compose %v209, 3817748708
    %v211 = vextract.low.u32 %v210
    %v212 = vextract.high.u32 %v210
    %v213 = vshrl.u32 %v212, 4
    %v214 = vmul.u32 %v213, 18
    %v215 = vsub.s32 %v209, %v214
    %v216 = vsub.s32 0, %v215
    %v217 = vsel %vm207, %v216, %v215
    %vm218 = vcmp.lt.s32.totalorder %v42, 0
    %v219 = vsub.s32 0, %v42
    %v220 = vsel %vm218, %v219, %v42
    %v221 = vmul.u32.u64.compose %v220, 3817748708
    %v222 = vextract.low.u32 %v221
    %v223 = vextract.high.u32 %v221
    %v224 = vshrl.u32 %v223, 4
    %v225 = vmul.u32 %v224, 18
    %v226 = vsub.s32 %v220, %v225
    %v227 = vsub.s32 0, %v226
    %v228 = vsel %vm218, %v227, %v226
    %vm229 = vcmp.lt.s32.totalorder %v43, 0
    %v230 = vsub.s32 0, %v43
    %v231 = vsel %vm229, %v230, %v43
    %v232 = vmul.u32.u64.compose %v231, 3817748708
    %v233 = vextract.low.u32 %v232
    %v234 = vextract.high.u32 %v232
    %v235 = vshrl.u32 %v234, 4
    %v236 = vmul.u32 %v235, 18
    %v237 = vsub.s32 %v231, %v236
    %v238 = vsub.s32 0, %v237
    %v239 = vsel %vm229, %v238, %v237
    %vm240 = vcmp.lt.s32.totalorder %v44, 0
    %v241 = vsub.s32 0, %v44
    %v242 = vsel %vm240, %v241, %v44
    %v243 = vmul.u32.u64.compose %v242, 3817748708
    %v244 = vextract.low.u32 %v243
    %v245 = vextract.high.u32 %v243
    %v246 = vshrl.u32 %v245, 4
    %v247 = vmul.u32 %v246, 18
    %v248 = vsub.s32 %v242, %v247
    %v249 = vsub.s32 0, %v248
    %v250 = vsel %vm240, %v249, %v248
    %vm251 = vcmp.lt.s32.totalorder %v45, 0
    %v252 = vsub.s32 0, %v45
    %v253 = vsel %vm251, %v252, %v45
    %v254 = vmul.u32.u64.compose %v253, 3817748708
    %v255 = vextract.low.u32 %v254
    %v256 = vextract.high.u32 %v254
    %v257 = vshrl.u32 %v256, 4
    %v258 = vmul.u32 %v257, 18
    %v259 = vsub.s32 %v253, %v258
    %v260 = vsub.s32 0, %v259
    %v261 = vsel %vm251, %v260, %v259
    %vm262 = vcmp.lt.s32.totalorder %v46, 0
    %v263 = vsub.s32 0, %v46
    %v264 = vsel %vm262, %v263, %v46
    %v265 = vmul.u32.u64.compose %v264, 3817748708
    %v266 = vextract.low.u32 %v265
    %v267 = vextract.high.u32 %v265
    %v268 = vshrl.u32 %v267, 4
    %v269 = vmul.u32 %v268, 18
    %v270 = vsub.s32 %v264, %v269
    %v271 = vsub.s32 0, %v270
    %v272 = vsel %vm262, %v271, %v270
    %vm273 = vcmp.lt.s32.totalorder %v47, 0
    %v274 = vsub.s32 0, %v47
    %v275 = vsel %vm273, %v274, %v47
    %v276 = vmul.u32.u64.compose %v275, 3817748708
    %v277 = vextract.low.u32 %v276
    %v278 = vextract.high.u32 %v276
    %v279 = vshrl.u32 %v278, 4
    %v280 = vmul.u32 %v279, 18
    %v281 = vsub.s32 %v275, %v280
    %v282 = vsub.s32 0, %v281
    %v283 = vsel %vm273, %v282, %v281
    %vm284 = vcmp.lt.s32.totalorder %v48, 0
    %v285 = vsub.s32 0, %v48
    %v286 = vsel %vm284, %v285, %v48
    %v287 = vmul.u32.u64.compose %v286, 3817748708
    %v288 = vextract.low.u32 %v287
    %v289 = vextract.high.u32 %v287
    %v290 = vshrl.u32 %v289, 4
    %v291 = vmul.u32 %v290, 18
    %v292 = vsub.s32 %v286, %v291
    %v293 = vsub.s32 0, %v292
    %v294 = vsel %vm284, %v293, %v292
    %vm295 = vcmp.lt.s32.totalorder %v49, 0
    %v296 = vsub.s32 0, %v49
    %v297 = vsel %vm295, %v296, %v49
    %v298 = vmul.u32.u64.compose %v297, 3817748708
    %v299 = vextract.low.u32 %v298
    %v300 = vextract.high.u32 %v298
    %v301 = vshrl.u32 %v300, 4
    %v302 = vmul.u32 %v301, 18
    %v303 = vsub.s32 %v297, %v302
    %v304 = vsub.s32 0, %v303
    %v305 = vsel %vm295, %v304, %v303
    %vm306 = vcmp.lt.s32.totalorder %v50, 0
    %v307 = vsub.s32 0, %v50
    %v308 = vsel %vm306, %v307, %v50
    %v309 = vmul.u32.u64.compose %v308, 3817748708
    %v310 = vextract.low.u32 %v309
    %v311 = vextract.high.u32 %v309
    %v312 = vshrl.u32 %v311, 4
    %v313 = vmul.u32 %v312, 18
    %v314 = vsub.s32 %v308, %v313
    %v315 = vsub.s32 0, %v314
    %v316 = vsel %vm306, %v315, %v314
    %vm317 = vcmp.lt.s32.totalorder %v51, 0
    %v318 = vsub.s32 0, %v51
    %v319 = vsel %vm317, %v318, %v51
    %v320 = vmul.u32.u64.compose %v319, 3817748708
    %v321 = vextract.low.u32 %v320
    %v322 = vextract.high.u32 %v320
    %v323 = vshrl.u32 %v322, 4
    %v324 = vmul.u32 %v323, 18
    %v325 = vsub.s32 %v319, %v324
    %v326 = vsub.s32 0, %v325
    %v327 = vsel %vm317, %v326, %v325
    %vm328 = vcmp.lt.s32.totalorder %v52, 0
    %v329 = vsub.s32 0, %v52
    %v330 = vsel %vm328, %v329, %v52
    %v331 = vmul.u32.u64.compose %v330, 3817748708
    %v332 = vextract.low.u32 %v331
    %v333 = vextract.high.u32 %v331
    %v334 = vshrl.u32 %v333, 4
    %v335 = vmul.u32 %v334, 18
    %v336 = vsub.s32 %v330, %v335
    %v337 = vsub.s32 0, %v336
    %v338 = vsel %vm328, %v337, %v336
    %vm339 = vcmp.lt.s32.totalorder %v53, 0
    %v340 = vsub.s32 0, %v53
    %v341 = vsel %vm339, %v340, %v53
    %v342 = vmul.u32.u64.compose %v341, 3817748708
    %v343 = vextract.low.u32 %v342
    %v344 = vextract.high.u32 %v342
    %v345 = vshrl.u32 %v344, 4
    %v346 = vmul.u32 %v345, 18
    %v347 = vsub.s32 %v341, %v346
    %v348 = vsub.s32 0, %v347
    %v349 = vsel %vm339, %v348, %v347
    %vm350 = vcmp.lt.s32.totalorder %v54, 0
    %v351 = vsub.s32 0, %v54
    %v352 = vsel %vm350, %v351, %v54
    %v353 = vmul.u32.u64.compose %v352, 3817748708
    %v354 = vextract.low.u32 %v353
    %v355 = vextract.high.u32 %v353
    %v356 = vshrl.u32 %v355, 4
    %v357 = vmul.u32 %v356, 18
    %v358 = vsub.s32 %v352, %v357
    %v359 = vsub.s32 0, %v358
    %v360 = vsel %vm350, %v359, %v358
    %vm361 = vcmp.lt.s32.totalorder %v55, 0
    %v362 = vsub.s32 0, %v55
    %v363 = vsel %vm361, %v362, %v55
    %v364 = vmul.u32.u64.compose %v363, 3817748708
    %v365 = vextract.low.u32 %v364
    %v366 = vextract.high.u32 %v364
    %v367 = vshrl.u32 %v366, 4
    %v368 = vmul.u32 %v367, 18
    %v369 = vsub.s32 %v363, %v368
    %v370 = vsub.s32 0, %v369
    %v371 = vsel %vm361, %v370, %v369
    %vm372 = vcmp.lt.s32.totalorder %v56, 0
    %v373 = vsub.s32 0, %v56
    %v374 = vsel %vm372, %v373, %v56
    %v375 = vmul.u32.u64.compose %v374, 3817748708
    %v376 = vextract.low.u32 %v375
    %v377 = vextract.high.u32 %v375
    %v378 = vshrl.u32 %v377, 4
    %v379 = vmul.u32 %v378, 18
    %v380 = vsub.s32 %v374, %v379
    %v381 = vsub.s32 0, %v380
    %v382 = vsel %vm372, %v381, %v380
    %vm383 = vcmp.lt.s32.totalorder %v57, 0
    %v384 = vsub.s32 0, %v57
    %v385 = vsel %vm383, %v384, %v57
    %v386 = vmul.u32.u64.compose %v385, 3817748708
    %v387 = vextract.low.u32 %v386
    %v388 = vextract.high.u32 %v386
    %v389 = vshrl.u32 %v388, 4
    %v390 = vmul.u32 %v389, 18
    %v391 = vsub.s32 %v385, %v390
    %v392 = vsub.s32 0, %v391
    %v393 = vsel %vm383, %v392, %v391
    %vm394 = vcmp.lt.s32.totalorder %v58, 0
    %v395 = vsub.s32 0, %v58
    %v396 = vsel %vm394, %v395, %v58
    %v397 = vmul.u32.u64.compose %v396, 3817748708
    %v398 = vextract.low.u32 %v397
    %v399 = vextract.high.u32 %v397
    %v400 = vshrl.u32 %v399, 4
    %v401 = vmul.u32 %v400, 18
    %v402 = vsub.s32 %v396, %v401
    %v403 = vsub.s32 0, %v402
    %v404 = vsel %vm394, %v403, %v402
    %vm405 = vcmp.lt.s32.totalorder %v59, 0
    %v406 = vsub.s32 0, %v59
    %v407 = vsel %vm405, %v406, %v59
    %v408 = vmul.u32.u64.compose %v407, 3817748708
    %v409 = vextract.low.u32 %v408
    %v410 = vextract.high.u32 %v408
    %v411 = vshrl.u32 %v410, 4
    %v412 = vmul.u32 %v411, 18
    %v413 = vsub.s32 %v407, %v412
    %v414 = vsub.s32 0, %v413
    %v415 = vsel %vm405, %v414, %v413
    %vm416 = vcmp.lt.s32.totalorder %v60, 0
    %v417 = vsub.s32 0, %v60
    %v418 = vsel %vm416, %v417, %v60
    %v419 = vmul.u32.u64.compose %v418, 3817748708
    %v420 = vextract.low.u32 %v419
    %v421 = vextract.high.u32 %v419
    %v422 = vshrl.u32 %v421, 4
    %v423 = vmul.u32 %v422, 18
    %v424 = vsub.s32 %v418, %v423
    %v425 = vsub.s32 0, %v424
    %v426 = vsel %vm416, %v425, %v424
    %vm427 = vcmp.lt.s32.totalorder %v61, 0
    %v428 = vsub.s32 0, %v61
    %v429 = vsel %vm427, %v428, %v61
    %v430 = vmul.u32.u64.compose %v429, 3817748708
    %v431 = vextract.low.u32 %v430
    %v432 = vextract.high.u32 %v430
    %v433 = vshrl.u32 %v432, 4
    %v434 = vmul.u32 %v433, 18
    %v435 = vsub.s32 %v429, %v434
    %v436 = vsub.s32 0, %v435
    %v437 = vsel %vm427, %v436, %v435
    %vm438 = vcmp.lt.s32.totalorder %v62, 0
    %v439 = vsub.s32 0, %v62
    %v440 = vsel %vm438, %v439, %v62
    %v441 = vmul.u32.u64.compose %v440, 3817748708
    %v442 = vextract.low.u32 %v441
    %v443 = vextract.high.u32 %v441
    %v444 = vshrl.u32 %v443, 4
    %v445 = vmul.u32 %v444, 18
    %v446 = vsub.s32 %v440, %v445
    %v447 = vsub.s32 0, %v446
    %v448 = vsel %vm438, %v447, %v446
    %vm449 = vcmp.lt.s32.totalorder %v63, 0
    %v450 = vsub.s32 0, %v63
    %v451 = vsel %vm449, %v450, %v63
    %v452 = vmul.u32.u64.compose %v451, 3817748708
    %v453 = vextract.low.u32 %v452
    %v454 = vextract.high.u32 %v452
    %v455 = vshrl.u32 %v454, 4
    %v456 = vmul.u32 %v455, 18
    %v457 = vsub.s32 %v451, %v456
    %v458 = vsub.s32 0, %v457
    %v459 = vsel %vm449, %v458, %v457
    %vm460 = vcmp.ne.s32.totalorder %v74, 0
    %vm461 = vcmp.ne.s32.totalorder %v85, 0
    %vm462 = vcmp.ne.s32.totalorder %v96, 0
    %vm463 = vcmp.ne.s32.totalorder %v107, 0
    %vm464 = vcmp.ne.s32.totalorder %v118, 0
    %vm465 = vcmp.ne.s32.totalorder %v129, 0
    %vm466 = vcmp.ne.s32.totalorder %v140, 0
    %vm467 = vcmp.ne.s32.totalorder %v151, 0
    %vm468 = vcmp.ne.s32.totalorder %v162, 0
    %vm469 = vcmp.ne.s32.totalorder %v173, 0
    %vm470 = vcmp.ne.s32.totalorder %v184, 0
    %vm471 = vcmp.ne.s32.totalorder %v195, 0
    %vm472 = vcmp.ne.s32.totalorder %v206, 0
    %vm473 = vcmp.ne.s32.totalorder %v217, 0
    %vm474 = vcmp.ne.s32.totalorder %v228, 0
    %vm475 = vcmp.ne.s32.totalorder %v239, 0
    %vm476 = vcmp.ne.s32.totalorder %v250, 0
    %vm477 = vcmp.ne.s32.totalorder %v261, 0
    %vm478 = vcmp.ne.s32.totalorder %v272, 0
    %vm479 = vcmp.ne.s32.totalorder %v283, 0
    %vm480 = vcmp.ne.s32.totalorder %v294, 0
    %vm481 = vcmp.ne.s32.totalorder %v305, 0
    %vm482 = vcmp.ne.s32.totalorder %v316, 0
    %vm483 = vcmp.ne.s32.totalorder %v327, 0
    %vm484 = vcmp.ne.s32.totalorder %v338, 0
    %vm485 = vcmp.ne.s32.totalorder %v349, 0
    %vm486 = vcmp.ne.s32.totalorder %v360, 0
    %vm487 = vcmp.ne.s32.totalorder %v371, 0
    %vm488 = vcmp.ne.s32.totalorder %v382, 0
    %vm489 = vcmp.ne.s32.totalorder %v393, 0
    %vm490 = vcmp.ne.s32.totalorder %v404, 0
    %vm491 = vcmp.ne.s32.totalorder %v415, 0
    %vm492 = vcmp.ne.s32.totalorder %v426, 0
    %vm493 = vcmp.ne.s32.totalorder %v437, 0
    %vm494 = vcmp.ne.s32.totalorder %v448, 0
    %vm495 = vcmp.ne.s32.totalorder %v459, 0
    %vm496 = vcmp.lt.s32.totalorder %v74, 0
    %vm497 = vcmp.lt.s32.totalorder %v85, 0
    %vm498 = vcmp.lt.s32.totalorder %v96, 0
    %vm499 = vcmp.lt.s32.totalorder %v107, 0
    %vm500 = vcmp.lt.s32.totalorder %v118, 0
    %vm501 = vcmp.lt.s32.totalorder %v129, 0
    %vm502 = vcmp.lt.s32.totalorder %v140, 0
    %vm503 = vcmp.lt.s32.totalorder %v151, 0
    %vm504 = vcmp.lt.s32.totalorder %v162, 0
    %vm505 = vcmp.lt.s32.totalorder %v173, 0
    %vm506 = vcmp.lt.s32.totalorder %v184, 0
    %vm507 = vcmp.lt.s32.totalorder %v195, 0
    %vm508 = vcmp.lt.s32.totalorder %v206, 0
    %vm509 = vcmp.lt.s32.totalorder %v217, 0
    %vm510 = vcmp.lt.s32.totalorder %v228, 0
    %vm511 = vcmp.lt.s32.totalorder %v239, 0
    %vm512 = vcmp.lt.s32.totalorder %v250, 0
    %vm513 = vcmp.lt.s32.totalorder %v261, 0
    %vm514 = vcmp.lt.s32.totalorder %v272, 0
    %vm515 = vcmp.lt.s32.totalorder %v283, 0
    %vm516 = vcmp.lt.s32.totalorder %v294, 0
    %vm517 = vcmp.lt.s32.totalorder %v305, 0
    %vm518 = vcmp.lt.s32.totalorder %v316, 0
    %vm519 = vcmp.lt.s32.totalorder %v327, 0
    %vm520 = vcmp.lt.s32.totalorder %v338, 0
    %vm521 = vcmp.lt.s32.totalorder %v349, 0
    %vm522 = vcmp.lt.s32.totalorder %v360, 0
    %vm523 = vcmp.lt.s32.totalorder %v371, 0
    %vm524 = vcmp.lt.s32.totalorder %v382, 0
    %vm525 = vcmp.lt.s32.totalorder %v393, 0
    %vm526 = vcmp.lt.s32.totalorder %v404, 0
    %vm527 = vcmp.lt.s32.totalorder %v415, 0
    %vm528 = vcmp.lt.s32.totalorder %v426, 0
    %vm529 = vcmp.lt.s32.totalorder %v437, 0
    %vm530 = vcmp.lt.s32.totalorder %v448, 0
    %vm531 = vcmp.lt.s32.totalorder %v459, 0
    %vm532 = vmand %vm496, %vm460
    %vm533 = vmand %vm497, %vm461
    %vm534 = vmand %vm498, %vm462
    %vm535 = vmand %vm499, %vm463
    %vm536 = vmand %vm500, %vm464
    %vm537 = vmand %vm501, %vm465
    %vm538 = vmand %vm502, %vm466
    %vm539 = vmand %vm503, %vm467
    %vm540 = vmand %vm504, %vm468
    %vm541 = vmand %vm505, %vm469
    %vm542 = vmand %vm506, %vm470
    %vm543 = vmand %vm507, %vm471
    %vm544 = vmand %vm508, %vm472
    %vm545 = vmand %vm509, %vm473
    %vm546 = vmand %vm510, %vm474
    %vm547 = vmand %vm511, %vm475
    %vm548 = vmand %vm512, %vm476
    %vm549 = vmand %vm513, %vm477
    %vm550 = vmand %vm514, %vm478
    %vm551 = vmand %vm515, %vm479
    %vm552 = vmand %vm516, %vm480
    %vm553 = vmand %vm517, %vm481
    %vm554 = vmand %vm518, %vm482
    %vm555 = vmand %vm519, %vm483
    %vm556 = vmand %vm520, %vm484
    %vm557 = vmand %vm521, %vm485
    %vm558 = vmand %vm522, %vm486
    %vm559 = vmand %vm523, %vm487
    %vm560 = vmand %vm524, %vm488
    %vm561 = vmand %vm525, %vm489
    %vm562 = vmand %vm526, %vm490
    %vm563 = vmand %vm527, %vm491
    %vm564 = vmand %vm528, %vm492
    %vm565 = vmand %vm529, %vm493
    %vm566 = vmand %vm530, %vm494
    %vm567 = vmand %vm531, %vm495
    %v568 = vadd.s32 %v74, 18
    %v569 = vadd.s32 %v85, 18
    %v570 = vadd.s32 %v96, 18
    %v571 = vadd.s32 %v107, 18
    %v572 = vadd.s32 %v118, 18
    %v573 = vadd.s32 %v129, 18
    %v574 = vadd.s32 %v140, 18
    %v575 = vadd.s32 %v151, 18
    %v576 = vadd.s32 %v162, 18
    %v577 = vadd.s32 %v173, 18
    %v578 = vadd.s32 %v184, 18
    %v579 = vadd.s32 %v195, 18
    %v580 = vadd.s32 %v206, 18
    %v581 = vadd.s32 %v217, 18
    %v582 = vadd.s32 %v228, 18
    %v583 = vadd.s32 %v239, 18
    %v584 = vadd.s32 %v250, 18
    %v585 = vadd.s32 %v261, 18
    %v586 = vadd.s32 %v272, 18
    %v587 = vadd.s32 %v283, 18
    %v588 = vadd.s32 %v294, 18
    %v589 = vadd.s32 %v305, 18
    %v590 = vadd.s32 %v316, 18
    %v591 = vadd.s32 %v327, 18
    %v592 = vadd.s32 %v338, 18
    %v593 = vadd.s32 %v349, 18
    %v594 = vadd.s32 %v360, 18
    %v595 = vadd.s32 %v371, 18
    %v596 = vadd.s32 %v382, 18
    %v597 = vadd.s32 %v393, 18
    %v598 = vadd.s32 %v404, 18
    %v599 = vadd.s32 %v415, 18
    %v600 = vadd.s32 %v426, 18
    %v601 = vadd.s32 %v437, 18
    %v602 = vadd.s32 %v448, 18
    %v603 = vadd.s32 %v459, 18
    %v604 = vsel %vm532, %v568, %v74
    %v605 = vsel %vm533, %v569, %v85
    %v606 = vsel %vm534, %v570, %v96
    %v607 = vsel %vm535, %v571, %v107
    %v608 = vsel %vm536, %v572, %v118
    %v609 = vsel %vm537, %v573, %v129
    %v610 = vsel %vm538, %v574, %v140
    %v611 = vsel %vm539, %v575, %v151
    %v612 = vsel %vm540, %v576, %v162
    %v613 = vsel %vm541, %v577, %v173
    %v614 = vsel %vm542, %v578, %v184
    %v615 = vsel %vm543, %v579, %v195
    %v616 = vsel %vm544, %v580, %v206
    %v617 = vsel %vm545, %v581, %v217
    %v618 = vsel %vm546, %v582, %v228
    %v619 = vsel %vm547, %v583, %v239
    %v620 = vsel %vm548, %v584, %v250
    %v621 = vsel %vm549, %v585, %v261
    %v622 = vsel %vm550, %v586, %v272
    %v623 = vsel %vm551, %v587, %v283
    %v624 = vsel %vm552, %v588, %v294
    %v625 = vsel %vm553, %v589, %v305
    %v626 = vsel %vm554, %v590, %v316
    %v627 = vsel %vm555, %v591, %v327
    %v628 = vsel %vm556, %v592, %v338
    %v629 = vsel %vm557, %v593, %v349
    %v630 = vsel %vm558, %v594, %v360
    %v631 = vsel %vm559, %v595, %v371
    %v632 = vsel %vm560, %v596, %v382
    %v633 = vsel %vm561, %v597, %v393
    %v634 = vsel %vm562, %v598, %v404
    %v635 = vsel %vm563, %v599, %v415
    %v636 = vsel %vm564, %v600, %v426
    %v637 = vsel %vm565, %v601, %v437
    %v638 = vsel %vm566, %v602, %v448
    %v639 = vsel %vm567, %v603, %v459
    %vm640 = vcmp.lt.s32.totalorder %v604, 16
    %vm641 = vcmp.lt.s32.totalorder %v605, 16
    %vm642 = vcmp.lt.s32.totalorder %v606, 16
    %vm643 = vcmp.lt.s32.totalorder %v607, 16
    %vm644 = vcmp.lt.s32.totalorder %v608, 16
    %vm645 = vcmp.lt.s32.totalorder %v609, 16
    %vm646 = vcmp.lt.s32.totalorder %v610, 16
    %vm647 = vcmp.lt.s32.totalorder %v611, 16
    %vm648 = vcmp.lt.s32.totalorder %v612, 16
    %vm649 = vcmp.lt.s32.totalorder %v613, 16
    %vm650 = vcmp.lt.s32.totalorder %v614, 16
    %vm651 = vcmp.lt.s32.totalorder %v615, 16
    %vm652 = vcmp.lt.s32.totalorder %v616, 16
    %vm653 = vcmp.lt.s32.totalorder %v617, 16
    %vm654 = vcmp.lt.s32.totalorder %v618, 16
    %vm655 = vcmp.lt.s32.totalorder %v619, 16
    %vm656 = vcmp.lt.s32.totalorder %v620, 16
    %vm657 = vcmp.lt.s32.totalorder %v621, 16
    %vm658 = vcmp.lt.s32.totalorder %v622, 16
    %vm659 = vcmp.lt.s32.totalorder %v623, 16
    %vm660 = vcmp.lt.s32.totalorder %v624, 16
    %vm661 = vcmp.lt.s32.totalorder %v625, 16
    %vm662 = vcmp.lt.s32.totalorder %v626, 16
    %vm663 = vcmp.lt.s32.totalorder %v627, 16
    %vm664 = vcmp.lt.s32.totalorder %v628, 16
    %vm665 = vcmp.lt.s32.totalorder %v629, 16
    %vm666 = vcmp.lt.s32.totalorder %v630, 16
    %vm667 = vcmp.lt.s32.totalorder %v631, 16
    %vm668 = vcmp.lt.s32.totalorder %v632, 16
    %vm669 = vcmp.lt.s32.totalorder %v633, 16
    %vm670 = vcmp.lt.s32.totalorder %v634, 16
    %vm671 = vcmp.lt.s32.totalorder %v635, 16
    %vm672 = vcmp.lt.s32.totalorder %v636, 16
    %vm673 = vcmp.lt.s32.totalorder %v637, 16
    %vm674 = vcmp.lt.s32.totalorder %v638, 16
    %vm675 = vcmp.lt.s32.totalorder %v639, 16
    %v676 = vsel %vm640, 1, 0
    %v677 = vsel %vm641, 1, 0
    %v678 = vsel %vm642, 1, 0
    %v679 = vsel %vm643, 1, 0
    %v680 = vsel %vm644, 1, 0
    %v681 = vsel %vm645, 1, 0
    %v682 = vsel %vm646, 1, 0
    %v683 = vsel %vm647, 1, 0
    %v684 = vsel %vm648, 1, 0
    %v685 = vsel %vm649, 1, 0
    %v686 = vsel %vm650, 1, 0
    %v687 = vsel %vm651, 1, 0
    %v688 = vsel %vm652, 1, 0
    %v689 = vsel %vm653, 1, 0
    %v690 = vsel %vm654, 1, 0
    %v691 = vsel %vm655, 1, 0
    %v692 = vsel %vm656, 1, 0
    %v693 = vsel %vm657, 1, 0
    %v694 = vsel %vm658, 1, 0
    %v695 = vsel %vm659, 1, 0
    %v696 = vsel %vm660, 1, 0
    %v697 = vsel %vm661, 1, 0
    %v698 = vsel %vm662, 1, 0
    %v699 = vsel %vm663, 1, 0
    %v700 = vsel %vm664, 1, 0
    %v701 = vsel %vm665, 1, 0
    %v702 = vsel %vm666, 1, 0
    %v703 = vsel %vm667, 1, 0
    %v704 = vsel %vm668, 1, 0
    %v705 = vsel %vm669, 1, 0
    %v706 = vsel %vm670, 1, 0
    %v707 = vsel %vm671, 1, 0
    %v708 = vsel %vm672, 1, 0
    %v709 = vsel %vm673, 1, 0
    %v710 = vsel %vm674, 1, 0
    %v711 = vsel %vm675, 1, 0
    %v712 = vcvt.s32.f32 %v676
    %v713 = vcvt.s32.f32 %v677
    %v714 = vcvt.s32.f32 %v678
    %v715 = vcvt.s32.f32 %v679
    %v716 = vcvt.s32.f32 %v680
    %v717 = vcvt.s32.f32 %v681
    %v718 = vcvt.s32.f32 %v682
    %v719 = vcvt.s32.f32 %v683
    %v720 = vcvt.s32.f32 %v684
    %v721 = vcvt.s32.f32 %v685
    %v722 = vcvt.s32.f32 %v686
    %v723 = vcvt.s32.f32 %v687
    %v724 = vcvt.s32.f32 %v688
    %v725 = vcvt.s32.f32 %v689
    %v726 = vcvt.s32.f32 %v690
    %v727 = vcvt.s32.f32 %v691
    %v728 = vcvt.s32.f32 %v692
    %v729 = vcvt.s32.f32 %v693
    %v730 = vcvt.s32.f32 %v694
    %v731 = vcvt.s32.f32 %v695
    %v732 = vcvt.s32.f32 %v696
    %v733 = vcvt.s32.f32 %v697
    %v734 = vcvt.s32.f32 %v698
    %v735 = vcvt.s32.f32 %v699
    %v736 = vcvt.s32.f32 %v700
    %v737 = vcvt.s32.f32 %v701
    %v738 = vcvt.s32.f32 %v702
    %v739 = vcvt.s32.f32 %v703
    %v740 = vcvt.s32.f32 %v704
    %v741 = vcvt.s32.f32 %v705
    %v742 = vcvt.s32.f32 %v706
    %v743 = vcvt.s32.f32 %v707
    %v744 = vcvt.s32.f32 %v708
    %v745 = vcvt.s32.f32 %v709
    %v746 = vcvt.s32.f32 %v710
    %v747 = vcvt.s32.f32 %v711
    %v748 = vld [vmem:[%s0] sm:$0xff]
    %v749 = vld [vmem:[%s0 + $0x8] sm:$0xff]
    %v750 = vld [vmem:[%s0 + $0x10] sm:$0xff]
    %v751 = vld [vmem:[%s0 + $0x18] sm:$0xff]
    %v752 = vld [vmem:[%s0 + $0x20] sm:$0xff]
    %v753 = vld [vmem:[%s0 + $0x28] sm:$0xff]
    %v754 = vld [vmem:[%s0 + $0x30] sm:$0xff]
    %v755 = vld [vmem:[%s0 + $0x38] sm:$0xff]
    %v756 = vld [vmem:[%s0 + $0x40] sm:$0xff]
    %v757 = vld [vmem:[%s0 + $0x48] sm:$0xff]
    %v758 = vld [vmem:[%s0 + $0x50] sm:$0xff]
    %v759 = vld [vmem:[%s0 + $0x58] sm:$0xff]
    %v760 = vld [vmem:[%s0 + $0x60] sm:$0xff]
    %v761 = vld [vmem:[%s0 + $0x68] sm:$0xff]
    %v762 = vld [vmem:[%s0 + $0x70] sm:$0xff]
    %v763 = vld [vmem:[%s0 + $0x78] sm:$0xff]
    %v764 = vld [vmem:[%s0 + $0x80] sm:$0xff]
    %v765 = vld [vmem:[%s0 + $0x88] sm:$0xff]
    %v766 = vld [vmem:[%s0 + $0x90] sm:$0xff]
    %v767 = vld [vmem:[%s0 + $0x98] sm:$0xff]
    %v768 = vld [vmem:[%s0 + $0xa0] sm:$0xff]
    %v769 = vld [vmem:[%s0 + $0xa8] sm:$0xff]
    %v770 = vld [vmem:[%s0 + $0xb0] sm:$0xff]
    %v771 = vld [vmem:[%s0 + $0xb8] sm:$0xff]
    %v772 = vld [vmem:[%s0 + $0xc0] sm:$0xff]
    %v773 = vld [vmem:[%s0 + $0xc8] sm:$0xff]
    %v774 = vld [vmem:[%s0 + $0xd0] sm:$0xff]
    %v775 = vld [vmem:[%s0 + $0xd8] sm:$0xff]
    %v776 = vld [vmem:[%s0 + $0xe0] sm:$0xff]
    %v777 = vld [vmem:[%s0 + $0xe8] sm:$0xff]
    %v778 = vld [vmem:[%s0 + $0xf0] sm:$0xff]
    %v779 = vld [vmem:[%s0 + $0xf8] sm:$0xff]
    %v780 = vld [vmem:[%s0 + $0x100] sm:$0xff]
    %v781 = vld [vmem:[%s0 + $0x108] sm:$0xff]
    %v782 = vld [vmem:[%s0 + $0x110] sm:$0xff]
    %v783 = vld [vmem:[%s0 + $0x118] sm:$0xff]
    %v784 = vld [vmem:[%s0 + $0x148] sm:$0xff]
    %v785 = vld [vmem:[%s0 + $0x150] sm:$0xff]
    %v786 = vld [vmem:[%s0 + $0x158] sm:$0xff]
    %v787 = vld [vmem:[%s0 + $0x160] sm:$0xff]
    %v788 = vld [vmem:[%s0 + $0x168] sm:$0xff]
    %v789 = vld [vmem:[%s0 + $0x170] sm:$0xff]
    %v790 = vld [vmem:[%s0 + $0x178] sm:$0xff]
    %v791 = vld [vmem:[%s0 + $0x180] sm:$0xff]
    %v792 = vld [vmem:[%s0 + $0x188] sm:$0xff]
    %v793 = vld [vmem:[%s0 + $0x190] sm:$0xff]
    %v794 = vld [vmem:[%s0 + $0x198] sm:$0xff]
    %v795 = vld [vmem:[%s0 + $0x1a0] sm:$0xff]
    %v796 = vld [vmem:[%s0 + $0x1a8] sm:$0xff]
    %v797 = vld [vmem:[%s0 + $0x1b0] sm:$0xff]
    %v798 = vld [vmem:[%s0 + $0x1b8] sm:$0xff]
    %v799 = vld [vmem:[%s0 + $0x1c0] sm:$0xff]
    %v800 = vld [vmem:[%s0 + $0x1c8] sm:$0xff]
    %v801 = vld [vmem:[%s0 + $0x1d0] sm:$0xff]
    %v802 = vld [vmem:[%s0 + $0x1d8] sm:$0xff]
    %v803 = vld [vmem:[%s0 + $0x1e0] sm:$0xff]
    %v804 = vld [vmem:[%s0 + $0x1e8] sm:$0xff]
    %v805 = vld [vmem:[%s0 + $0x1f0] sm:$0xff]
    %v806 = vld [vmem:[%s0 + $0x1f8] sm:$0xff]
    %v807 = vld [vmem:[%s0 + $0x200] sm:$0xff]
    %v808 = vld [vmem:[%s0 + $0x208] sm:$0xff]
    %v809 = vld [vmem:[%s0 + $0x210] sm:$0xff]
    %v810 = vld [vmem:[%s0 + $0x218] sm:$0xff]
    %v811 = vld [vmem:[%s0 + $0x220] sm:$0xff]
    %v812 = vld [vmem:[%s0 + $0x228] sm:$0xff]
    %v813 = vld [vmem:[%s0 + $0x230] sm:$0xff]
    %v814 = vld [vmem:[%s0 + $0x238] sm:$0xff]
    %v815 = vld [vmem:[%s0 + $0x240] sm:$0xff]
    %v816 = vld [vmem:[%s0 + $0x248] sm:$0xff]
    %v817 = vld [vmem:[%s0 + $0x250] sm:$0xff]
    %v818 = vld [vmem:[%s0 + $0x258] sm:$0xff]
    %v819 = vld [vmem:[%s0 + $0x260] sm:$0xff]
    %v820 = vld [vmem:[%s1] sm:$0xf]
    %v821 = vld [vmem:[%s0 + $0x1] sm:$0xff]
    %v822 = vld [vmem:[%s0 + $0x9] sm:$0xff]
    %v823 = vld [vmem:[%s0 + $0x11] sm:$0xff]
    %v824 = vld [vmem:[%s0 + $0x19] sm:$0xff]
    %v825 = vld [vmem:[%s0 + $0x21] sm:$0xff]
    %v826 = vld [vmem:[%s0 + $0x29] sm:$0xff]
    %v827 = vld [vmem:[%s0 + $0x31] sm:$0xff]
    %v828 = vld [vmem:[%s0 + $0x39] sm:$0xff]
    %v829 = vld [vmem:[%s0 + $0x41] sm:$0xff]
    %v830 = vld [vmem:[%s0 + $0x49] sm:$0xff]
    %v831 = vld [vmem:[%s0 + $0x51] sm:$0xff]
    %v832 = vld [vmem:[%s0 + $0x59] sm:$0xff]
    %v833 = vld [vmem:[%s0 + $0x61] sm:$0xff]
    %v834 = vld [vmem:[%s0 + $0x69] sm:$0xff]
    %v835 = vld [vmem:[%s0 + $0x71] sm:$0xff]
    %v836 = vld [vmem:[%s0 + $0x79] sm:$0xff]
    %v837 = vld [vmem:[%s0 + $0x81] sm:$0xff]
    %v838 = vld [vmem:[%s0 + $0x89] sm:$0xff]
    %v839 = vld [vmem:[%s0 + $0x91] sm:$0xff]
    %v840 = vld [vmem:[%s0 + $0x99] sm:$0xff]
    %v841 = vld [vmem:[%s0 + $0xa1] sm:$0xff]
    %v842 = vld [vmem:[%s0 + $0xa9] sm:$0xff]
    %v843 = vld [vmem:[%s0 + $0xb1] sm:$0xff]
    %v844 = vld [vmem:[%s0 + $0xb9] sm:$0xff]
    %v845 = vld [vmem:[%s0 + $0xc1] sm:$0xff]
    %v846 = vld [vmem:[%s0 + $0xc9] sm:$0xff]
    %v847 = vld [vmem:[%s0 + $0xd1] sm:$0xff]
    %v848 = vld [vmem:[%s0 + $0xd9] sm:$0xff]
    %v849 = vld [vmem:[%s0 + $0xe1] sm:$0xff]
    %v850 = vld [vmem:[%s0 + $0xe9] sm:$0xff]
    %v851 = vld [vmem:[%s0 + $0xf1] sm:$0xff]
    %v852 = vld [vmem:[%s0 + $0xf9] sm:$0xff]
    %v853 = vld [vmem:[%s0 + $0x101] sm:$0xff]
    %v854 = vld [vmem:[%s0 + $0x109] sm:$0xff]
    %v855 = vld [vmem:[%s0 + $0x111] sm:$0xff]
    %v856 = vld [vmem:[%s0 + $0x119] sm:$0xff]
    %v857 = vld [vmem:[%s0 + $0x149] sm:$0xff]
    %v858 = vld [vmem:[%s0 + $0x151] sm:$0xff]
    %v859 = vld [vmem:[%s0 + $0x159] sm:$0xff]
    %v860 = vld [vmem:[%s0 + $0x161] sm:$0xff]
    %v861 = vld [vmem:[%s0 + $0x169] sm:$0xff]
    %v862 = vld [vmem:[%s0 + $0x171] sm:$0xff]
    %v863 = vld [vmem:[%s0 + $0x179] sm:$0xff]
    %v864 = vld [vmem:[%s0 + $0x181] sm:$0xff]
    %v865 = vld [vmem:[%s0 + $0x189] sm:$0xff]
    %v866 = vld [vmem:[%s0 + $0x191] sm:$0xff]
    %v867 = vld [vmem:[%s0 + $0x199] sm:$0xff]
    %v868 = vld [vmem:[%s0 + $0x1a1] sm:$0xff]
    %v869 = vld [vmem:[%s0 + $0x1a9] sm:$0xff]
    %v870 = vld [vmem:[%s0 + $0x1b1] sm:$0xff]
    %v871 = vld [vmem:[%s0 + $0x1b9] sm:$0xff]
    %v872 = vld [vmem:[%s0 + $0x1c1] sm:$0xff]
    %v873 = vld [vmem:[%s0 + $0x1c9] sm:$0xff]
    %v874 = vld [vmem:[%s0 + $0x1d1] sm:$0xff]
    %v875 = vld [vmem:[%s0 + $0x1d9] sm:$0xff]
    %v876 = vld [vmem:[%s0 + $0x1e1] sm:$0xff]
    %v877 = vld [vmem:[%s0 + $0x1e9] sm:$0xff]
    %v878 = vld [vmem:[%s0 + $0x1f1] sm:$0xff]
    %v879 = vld [vmem:[%s0 + $0x1f9] sm:$0xff]
    %v880 = vld [vmem:[%s0 + $0x201] sm:$0xff]
    %v881 = vld [vmem:[%s0 + $0x209] sm:$0xff]
    %v882 = vld [vmem:[%s0 + $0x211] sm:$0xff]
    %v883 = vld [vmem:[%s0 + $0x219] sm:$0xff]
    %v884 = vld [vmem:[%s0 + $0x221] sm:$0xff]
    %v885 = vld [vmem:[%s0 + $0x229] sm:$0xff]
    %v886 = vld [vmem:[%s0 + $0x231] sm:$0xff]
    %v887 = vld [vmem:[%s0 + $0x239] sm:$0xff]
    %v888 = vld [vmem:[%s0 + $0x241] sm:$0xff]
    %v889 = vld [vmem:[%s0 + $0x249] sm:$0xff]
    %v890 = vld [vmem:[%s0 + $0x251] sm:$0xff]
    %v891 = vld [vmem:[%s0 + $0x259] sm:$0xff]
    %v892 = vld [vmem:[%s0 + $0x261] sm:$0xff]
    %s893 = scalar_lea.vmem %s1, 4
    %v894 = vld [vmem:[%s893] sm:$0xf]
    %vm895 = vcmask 31744
    %v897 = vsel %vm895, %v821, 0
    %v900 = vsel %vm895, %v822, 0
    %v903 = vsel %vm895, %v823, 0
    %v906 = vsel %vm895, %v824, 0
    %v909 = vsel %vm895, %v825, 0
    %v912 = vsel %vm895, %v826, 0
    %v915 = vsel %vm895, %v827, 0
    %v918 = vsel %vm895, %v828, 0
    %v921 = vsel %vm895, %v829, 0
    %v924 = vsel %vm895, %v830, 0
    %v927 = vsel %vm895, %v831, 0
    %v930 = vsel %vm895, %v832, 0
    %v933 = vsel %vm895, %v833, 0
    %v936 = vsel %vm895, %v834, 0
    %v939 = vsel %vm895, %v835, 0
    %v942 = vsel %vm895, %v836, 0
    %v945 = vsel %vm895, %v837, 0
    %v948 = vsel %vm895, %v838, 0
    %v951 = vsel %vm895, %v839, 0
    %v954 = vsel %vm895, %v840, 0
    %v957 = vsel %vm895, %v841, 0
    %v960 = vsel %vm895, %v842, 0
    %v963 = vsel %vm895, %v843, 0
    %v966 = vsel %vm895, %v844, 0
    %v969 = vsel %vm895, %v845, 0
    %v972 = vsel %vm895, %v846, 0
    %v975 = vsel %vm895, %v847, 0
    %v978 = vsel %vm895, %v848, 0
    %v981 = vsel %vm895, %v849, 0
    %v984 = vsel %vm895, %v850, 0
    %v987 = vsel %vm895, %v851, 0
    %v990 = vsel %vm895, %v852, 0
    %v993 = vsel %vm895, %v853, 0
    %v996 = vsel %vm895, %v854, 0
    %v999 = vsel %vm895, %v855, 0
    %v1002 = vsel %vm895, %v856, 0
    %v1005 = vsel %vm895, %v857, 0
    %v1008 = vsel %vm895, %v858, 0
    %v1011 = vsel %vm895, %v859, 0
    %v1014 = vsel %vm895, %v860, 0
    %v1017 = vsel %vm895, %v861, 0
    %v1020 = vsel %vm895, %v862, 0
    %v1023 = vsel %vm895, %v863, 0
    %v1026 = vsel %vm895, %v864, 0
    %v1029 = vsel %vm895, %v865, 0
    %v1032 = vsel %vm895, %v866, 0
    %v1035 = vsel %vm895, %v867, 0
    %v1038 = vsel %vm895, %v868, 0
    %v1041 = vsel %vm895, %v869, 0
    %v1044 = vsel %vm895, %v870, 0
    %v1047 = vsel %vm895, %v871, 0
    %v1050 = vsel %vm895, %v872, 0
    %v1053 = vsel %vm895, %v873, 0
    %v1056 = vsel %vm895, %v874, 0
    %v1059 = vsel %vm895, %v875, 0
    %v1062 = vsel %vm895, %v876, 0
    %v1065 = vsel %vm895, %v877, 0
    %v1068 = vsel %vm895, %v878, 0
    %v1071 = vsel %vm895, %v879, 0
    %v1074 = vsel %vm895, %v880, 0
    %v1077 = vsel %vm895, %v881, 0
    %v1080 = vsel %vm895, %v882, 0
    %v1083 = vsel %vm895, %v883, 0
    %v1086 = vsel %vm895, %v884, 0
    %v1089 = vsel %vm895, %v885, 0
    %v1092 = vsel %vm895, %v886, 0
    %v1095 = vsel %vm895, %v887, 0
    %v1098 = vsel %vm895, %v888, 0
    %v1101 = vsel %vm895, %v889, 0
    %v1104 = vsel %vm895, %v890, 0
    %v1107 = vsel %vm895, %v891, 0
    %v1110 = vsel %vm895, %v892, 0
    %vm1112 = vcmask 1043456
    %v1114 = vsel %vm1112, %v894, 0
    %1116 = vmatprep.subr.mxu0 0.0
    %1117 = vmatpush1.msra.mxu0 %v1114
    %1118 = vmatprep.subr.mxu0 0.0
    %1119 = vmatpush1.msra.mxu0 0.0
    %1120 = vmatprep.subr.mxu0 0.0
    %1121 = vmatpush1.msra.mxu0 0.0
    %1122 = vmatprep.subr.mxu0 0.0
    %1123 = vmatpush1.msra.mxu0 0.0
    %1124 = vmatprep.subr.mxu0 0.0
    %1125 = vmatpush1.msra.mxu0 0.0
    %1126 = vmatprep.subr.mxu0 0.0
    %1127 = vmatpush1.msra.mxu0 0.0
    %1128 = vmatprep.subr.mxu0 0.0
    %1129 = vmatpush1.msra.mxu0 0.0
    %1130 = vmatprep.subr.mxu0 0.0
    %1131 = vmatpush1.msra.mxu0 0.0
    %1132 = vmatprep.subr.mxu0 0.0
    %1133 = vmatpush1.msra.mxu0 0.0
    %1134 = vmatprep.subr.mxu0 0.0
    %1135 = vmatpush1.msra.mxu0 0.0
    %1136 = vmatprep.subr.mxu0 0.0
    %1137 = vmatpush1.msra.mxu0 0.0
    %1138 = vmatprep.subr.mxu0 0.0
    %1139 = vmatpush1.msra.mxu0 0.0
    %1140 = vmatprep.subr.mxu0 0.0
    %1141 = vmatpush1.msra.mxu0 0.0
    %1142 = vmatprep.subr.mxu0 0.0
    %1143 = vmatpush1.msra.mxu0 0.0
    %1144 = vmatprep.subr.mxu0 0.0
    %1145 = vmatpush1.msra.mxu0 0.0
    %1146 = vmatprep.subr.mxu0 0.0
    %1147 = vmatpush1.msra.mxu0 0.0
    %1148 = vmatprep.subr.mxu0 0.0
    %1149 = vmatpush1.msra.mxu0 0.0
    %1150 = vmatprep.subr.mxu0 0.0
    %1151 = vmatpush1.msra.mxu0 0.0
    %1152 = vmatprep.subr.mxu0 0.0
    %1153 = vmatpush1.msra.mxu0 0.0
    %1154 = vmatprep.subr.mxu0 0.0
    %1155 = vmatpush1.msra.mxu0 0.0
    %1156 = vmatprep.subr.mxu0 0.0
    %1157 = vmatpush1.msra.mxu0 0.0
    %1158 = vmatprep.subr.mxu0 0.0
    %1159 = vmatpush1.msra.mxu0 0.0
    %1160 = vmatprep.subr.mxu0 0.0
    %1161 = vmatpush1.msra.mxu0 0.0
    %1162 = vmatprep.subr.mxu0 0.0
    %1163 = vmatpush1.msra.mxu0 0.0
    %1164 = vmatprep.subr.mxu0 0.0
    %1165 = vmatpush1.msra.mxu0 0.0
    %1166 = vmatprep.subr.mxu0 0.0
    %1167 = vmatpush1.msra.mxu0 0.0
    %1168 = vmatprep.subr.mxu0 0.0
    %1169 = vmatpush1.msra.mxu0 0.0
    %1170 = vmatprep.subr.mxu0 0.0
    %1171 = vmatpush1.msra.mxu0 0.0
    %1172 = vmatprep.subr.mxu0 0.0
    %1173 = vmatpush1.msra.mxu0 0.0
    %1174 = vmatprep.subr.mxu0 0.0
    %1175 = vmatpush1.msra.mxu0 0.0
    %1176 = vmatprep.subr.mxu0 0.0
    %1177 = vmatpush1.msra.mxu0 0.0
    %1178 = vmatprep.subr.mxu0 0.0
    %1179 = vmatpush1.msra.mxu0 0.0
    %1180 = vmatprep.mubr.f32.mxu0 0.0
    %1181 = vmatmul.mubr.f32.gmra.mrb[0].mxu0 %v897
    %v1182 = vpop.f32.mrb[0].mxu0
    %v1183 = vadd.f32 0.0, %v1182
    %v1184 = vpop.f32.mrb[0].mxu0
    %1185 = vmatprep.mubr.f32.mxu0 0.0
    %1186 = vmatmul.mubr.f32.gmra.mrb[0].mxu0 %v900
    %v1187 = vpop.f32.mrb[0].mxu0
    %v1188 = vadd.f32 0.0, %v1187
    %v1189 = vpop.f32.mrb[0].mxu0
    %1190 = vmatprep.mubr.f32.mxu0 0.0
    %1191 = vmatmul.mubr.f32.gmra.mrb[0].mxu0 %v903
    %v1192 = vpop.f32.mrb[0].mxu0
    %v1193 = vadd.f32 0.0, %v1192
    %v1194 = vpop.f32.mrb[0].mxu0
    %1195 = vmatprep.mubr.f32.mxu0 0.0
    %1196 = vmatmul.mubr.f32.gmra.mrb[0].mxu0 %v906
    %v1197 = vpop.f32.mrb[0].mxu0
    %v1198 = vadd.f32 0.0, %v1197
    %v1199 = vpop.f32.mrb[0].mxu0
    %1200 = vmatprep.mubr.f32.mxu0 0.0
    %1201 = vmatmul.mubr.f32.gmra.mrb[0].mxu0 %v909
    %v1202 = vpop.f32.mrb[0].mxu0
    %v1203 = vadd.f32 0.0, %v1202
    %v1204 = vpop.f32.mrb[0].mxu0
    %1205 = vmatprep.mubr.f32.mxu0 0.0
    %1206 = vmatmul.mubr.f32.gmra.mrb[0].mxu0 %v912
    %v1207 = vpop.f32.mrb[0].mxu0
    %v1208 = vadd.f32 0.0, %v1207
    %v1209 = vpop.f32.mrb[0].mxu0
    %1210 = vmatprep.mubr.f32.mxu0 0.0
    %1211 = vmatmul.mubr.f32.gmra.mrb[0].mxu0 %v915
    %v1212 = vpop.f32.mrb[0].mxu0
    %v1213 = vadd.f32 0.0, %v1212
    %v1214 = vpop.f32.mrb[0].mxu0
    %1215 = vmatprep.mubr.f32.mxu0 0.0
    %1216 = vmatmul.mubr.f32.gmra.mrb[0].mxu0 %v918
    %v1217 = vpop.f32.mrb[0].mxu0
    %v1218 = vadd.f32 0.0, %v1217
    %v1219 = vpop.f32.mrb[0].mxu0
    %1220 = vmatprep.mubr.f32.mxu0 0.0
    %1221 = vmatmul.mubr.f32.gmra.mrb[0].mxu0 %v921
    %v1222 = vpop.f32.mrb[0].mxu0
    %v1223 = vadd.f32 0.0, %v1222
    %v1224 = vpop.f32.mrb[0].mxu0
    %1225 = vmatprep.mubr.f32.mxu0 0.0
    %1226 = vmatmul.mubr.f32.gmra.mrb[0].mxu0 %v924
    %v1227 = vpop.f32.mrb[0].mxu0
    %v1228 = vadd.f32 0.0, %v1227
    %v1229 = vpop.f32.mrb[0].mxu0
    %1230 = vmatprep.mubr.f32.mxu0 0.0
    %1231 = vmatmul.mubr.f32.gmra.mrb[0].mxu0 %v927
    %v1232 = vpop.f32.mrb[0].mxu0
    %v1233 = vadd.f32 0.0, %v1232
    %v1234 = vpop.f32.mrb[0].mxu0
    %1235 = vmatprep.mubr.f32.mxu0 0.0
    %1236 = vmatmul.mubr.f32.gmra.mrb[0].mxu0 %v930
    %v1237 = vpop.f32.mrb[0].mxu0
    %v1238 = vadd.f32 0.0, %v1237
    %v1239 = vpop.f32.mrb[0].mxu0
    %1240 = vmatprep.mubr.f32.mxu0 0.0
    %1241 = vmatmul.mubr.f32.gmra.mrb[0].mxu0 %v933
    %v1242 = vpop.f32.mrb[0].mxu0
    %v1243 = vadd.f32 0.0, %v1242
    %v1244 = vpop.f32.mrb[0].mxu0
    %1245 = vmatprep.mubr.f32.mxu0 0.0
    %1246 = vmatmul.mubr.f32.gmra.mrb[0].mxu0 %v936
    %v1247 = vpop.f32.mrb[0].mxu0
    %v1248 = vadd.f32 0.0, %v1247
    %v1249 = vpop.f32.mrb[0].mxu0
    %1250 = vmatprep.mubr.f32.mxu0 0.0
    %1251 = vmatmul.mubr.f32.gmra.mrb[0].mxu0 %v939
    %v1252 = vpop.f32.mrb[0].mxu0
    %v1253 = vadd.f32 0.0, %v1252
    %v1254 = vpop.f32.mrb[0].mxu0
    %1255 = vmatprep.mubr.f32.mxu0 0.0
    %1256 = vmatmul.mubr.f32.gmra.mrb[0].mxu0 %v942
    %v1257 = vpop.f32.mrb[0].mxu0
    %v1258 = vadd.f32 0.0, %v1257
    %v1259 = vpop.f32.mrb[0].mxu0
    %1260 = vmatprep.mubr.f32.mxu0 0.0
    %1261 = vmatmul.mubr.f32.gmra.mrb[0].mxu0 %v945
    %v1262 = vpop.f32.mrb[0].mxu0
    %v1263 = vadd.f32 0.0, %v1262
    %v1264 = vpop.f32.mrb[0].mxu0
    %1265 = vmatprep.mubr.f32.mxu0 0.0
    %1266 = vmatmul.mubr.f32.gmra.mrb[0].mxu0 %v948
    %v1267 = vpop.f32.mrb[0].mxu0
    %v1268 = vadd.f32 0.0, %v1267
    %v1269 = vpop.f32.mrb[0].mxu0
    %1270 = vmatprep.mubr.f32.mxu0 0.0
    %1271 = vmatmul.mubr.f32.gmra.mrb[0].mxu0 %v951
    %v1272 = vpop.f32.mrb[0].mxu0
    %v1273 = vadd.f32 0.0, %v1272
    %v1274 = vpop.f32.mrb[0].mxu0
    %1275 = vmatprep.mubr.f32.mxu0 0.0
    %1276 = vmatmul.mubr.f32.gmra.mrb[0].mxu0 %v954
    %v1277 = vpop.f32.mrb[0].mxu0
    %v1278 = vadd.f32 0.0, %v1277
    %v1279 = vpop.f32.mrb[0].mxu0
    %1280 = vmatprep.mubr.f32.mxu0 0.0
    %1281 = vmatmul.mubr.f32.gmra.mrb[0].mxu0 %v957
    %v1282 = vpop.f32.mrb[0].mxu0
    %v1283 = vadd.f32 0.0, %v1282
    %v1284 = vpop.f32.mrb[0].mxu0
    %1285 = vmatprep.mubr.f32.mxu0 0.0
    %1286 = vmatmul.mubr.f32.gmra.mrb[0].mxu0 %v960
    %v1287 = vpop.f32.mrb[0].mxu0
    %v1288 = vadd.f32 0.0, %v1287
    %v1289 = vpop.f32.mrb[0].mxu0
    %1290 = vmatprep.mubr.f32.mxu0 0.0
    %1291 = vmatmul.mubr.f32.gmra.mrb[0].mxu0 %v963
    %v1292 = vpop.f32.mrb[0].mxu0
    %v1293 = vadd.f32 0.0, %v1292
    %v1294 = vpop.f32.mrb[0].mxu0
    %1295 = vmatprep.mubr.f32.mxu0 0.0
    %1296 = vmatmul.mubr.f32.gmra.mrb[0].mxu0 %v966
    %v1297 = vpop.f32.mrb[0].mxu0
    %v1298 = vadd.f32 0.0, %v1297
    %v1299 = vpop.f32.mrb[0].mxu0
    %1300 = vmatprep.mubr.f32.mxu0 0.0
    %1301 = vmatmul.mubr.f32.gmra.mrb[0].mxu0 %v969
    %v1302 = vpop.f32.mrb[0].mxu0
    %v1303 = vadd.f32 0.0, %v1302
    %v1304 = vpop.f32.mrb[0].mxu0
    %1305 = vmatprep.mubr.f32.mxu0 0.0
    %1306 = vmatmul.mubr.f32.gmra.mrb[0].mxu0 %v972
    %v1307 = vpop.f32.mrb[0].mxu0
    %v1308 = vadd.f32 0.0, %v1307
    %v1309 = vpop.f32.mrb[0].mxu0
    %1310 = vmatprep.mubr.f32.mxu0 0.0
    %1311 = vmatmul.mubr.f32.gmra.mrb[0].mxu0 %v975
    %v1312 = vpop.f32.mrb[0].mxu0
    %v1313 = vadd.f32 0.0, %v1312
    %v1314 = vpop.f32.mrb[0].mxu0
    %1315 = vmatprep.mubr.f32.mxu0 0.0
    %1316 = vmatmul.mubr.f32.gmra.mrb[0].mxu0 %v978
    %v1317 = vpop.f32.mrb[0].mxu0
    %v1318 = vadd.f32 0.0, %v1317
    %v1319 = vpop.f32.mrb[0].mxu0
    %1320 = vmatprep.mubr.f32.mxu0 0.0
    %1321 = vmatmul.mubr.f32.gmra.mrb[0].mxu0 %v981
    %v1322 = vpop.f32.mrb[0].mxu0
    %v1323 = vadd.f32 0.0, %v1322
    %v1324 = vpop.f32.mrb[0].mxu0
    %1325 = vmatprep.mubr.f32.mxu0 0.0
    %1326 = vmatmul.mubr.f32.gmra.mrb[0].mxu0 %v984
    %v1327 = vpop.f32.mrb[0].mxu0
    %v1328 = vadd.f32 0.0, %v1327
    %v1329 = vpop.f32.mrb[0].mxu0
    %1330 = vmatprep.mubr.f32.mxu0 0.0
    %1331 = vmatmul.mubr.f32.gmra.mrb[0].mxu0 %v987
    %v1332 = vpop.f32.mrb[0].mxu0
    %v1333 = vadd.f32 0.0, %v1332
    %v1334 = vpop.f32.mrb[0].mxu0
    %1335 = vmatprep.mubr.f32.mxu0 0.0
    %1336 = vmatmul.mubr.f32.gmra.mrb[0].mxu0 %v990
    %v1337 = vpop.f32.mrb[0].mxu0
    %v1338 = vadd.f32 0.0, %v1337
    %v1339 = vpop.f32.mrb[0].mxu0
    %1340 = vmatprep.mubr.f32.mxu0 0.0
    %1341 = vmatmul.mubr.f32.gmra.mrb[0].mxu0 %v993
    %v1342 = vpop.f32.mrb[0].mxu0
    %v1343 = vadd.f32 0.0, %v1342
    %v1344 = vpop.f32.mrb[0].mxu0
    %1345 = vmatprep.mubr.f32.mxu0 0.0
    %1346 = vmatmul.mubr.f32.gmra.mrb[0].mxu0 %v996
    %v1347 = vpop.f32.mrb[0].mxu0
    %v1348 = vadd.f32 0.0, %v1347
    %v1349 = vpop.f32.mrb[0].mxu0
    %1350 = vmatprep.mubr.f32.mxu0 0.0
    %1351 = vmatmul.mubr.f32.gmra.mrb[0].mxu0 %v999
    %v1352 = vpop.f32.mrb[0].mxu0
    %v1353 = vadd.f32 0.0, %v1352
    %v1354 = vpop.f32.mrb[0].mxu0
    %1355 = vmatprep.mubr.f32.mxu0 0.0
    %1356 = vmatmul.mubr.f32.gmra.mrb[0].mxu0 %v1002
    %v1357 = vpop.f32.mrb[0].mxu0
    %v1358 = vadd.f32 0.0, %v1357
    %v1359 = vpop.f32.mrb[0].mxu0
    %1360 = vmatprep.mubr.f32.mxu0 0.0
    %1361 = vmatmul.mubr.f32.gmra.mrb[0].mxu0 %v1005
    %v1362 = vpop.f32.mrb[0].mxu0
    %v1363 = vadd.f32 0.0, %v1362
    %v1364 = vpop.f32.mrb[0].mxu0
    %1365 = vmatprep.mubr.f32.mxu0 0.0
    %1366 = vmatmul.mubr.f32.gmra.mrb[0].mxu0 %v1008
    %v1367 = vpop.f32.mrb[0].mxu0
    %v1368 = vadd.f32 0.0, %v1367
    %v1369 = vpop.f32.mrb[0].mxu0
    %1370 = vmatprep.mubr.f32.mxu0 0.0
    %1371 = vmatmul.mubr.f32.gmra.mrb[0].mxu0 %v1011
    %v1372 = vpop.f32.mrb[0].mxu0
    %v1373 = vadd.f32 0.0, %v1372
    %v1374 = vpop.f32.mrb[0].mxu0
    %1375 = vmatprep.mubr.f32.mxu0 0.0
    %1376 = vmatmul.mubr.f32.gmra.mrb[0].mxu0 %v1014
    %v1377 = vpop.f32.mrb[0].mxu0
    %v1378 = vadd.f32 0.0, %v1377
    %v1379 = vpop.f32.mrb[0].mxu0
    %1380 = vmatprep.mubr.f32.mxu0 0.0
    %1381 = vmatmul.mubr.f32.gmra.mrb[0].mxu0 %v1017
    %v1382 = vpop.f32.mrb[0].mxu0
    %v1383 = vadd.f32 0.0, %v1382
    %v1384 = vpop.f32.mrb[0].mxu0
    %1385 = vmatprep.mubr.f32.mxu0 0.0
    %1386 = vmatmul.mubr.f32.gmra.mrb[0].mxu0 %v1020
    %v1387 = vpop.f32.mrb[0].mxu0
    %v1388 = vadd.f32 0.0, %v1387
    %v1389 = vpop.f32.mrb[0].mxu0
    %1390 = vmatprep.mubr.f32.mxu0 0.0
    %1391 = vmatmul.mubr.f32.gmra.mrb[0].mxu0 %v1023
    %v1392 = vpop.f32.mrb[0].mxu0
    %v1393 = vadd.f32 0.0, %v1392
    %v1394 = vpop.f32.mrb[0].mxu0
    %1395 = vmatprep.mubr.f32.mxu0 0.0
    %1396 = vmatmul.mubr.f32.gmra.mrb[0].mxu0 %v1026
    %v1397 = vpop.f32.mrb[0].mxu0
    %v1398 = vadd.f32 0.0, %v1397
    %v1399 = vpop.f32.mrb[0].mxu0
    %1400 = vmatprep.mubr.f32.mxu0 0.0
    %1401 = vmatmul.mubr.f32.gmra.mrb[0].mxu0 %v1029
    %v1402 = vpop.f32.mrb[0].mxu0
    %v1403 = vadd.f32 0.0, %v1402
    %v1404 = vpop.f32.mrb[0].mxu0
    %1405 = vmatprep.mubr.f32.mxu0 0.0
    %1406 = vmatmul.mubr.f32.gmra.mrb[0].mxu0 %v1032
    %v1407 = vpop.f32.mrb[0].mxu0
    %v1408 = vadd.f32 0.0, %v1407
    %v1409 = vpop.f32.mrb[0].mxu0
    %1410 = vmatprep.mubr.f32.mxu0 0.0
    %1411 = vmatmul.mubr.f32.gmra.mrb[0].mxu0 %v1035
    %v1412 = vpop.f32.mrb[0].mxu0
    %v1413 = vadd.f32 0.0, %v1412
    %v1414 = vpop.f32.mrb[0].mxu0
    %1415 = vmatprep.mubr.f32.mxu0 0.0
    %1416 = vmatmul.mubr.f32.gmra.mrb[0].mxu0 %v1038
    %v1417 = vpop.f32.mrb[0].mxu0
    %v1418 = vadd.f32 0.0, %v1417
    %v1419 = vpop.f32.mrb[0].mxu0
    %1420 = vmatprep.mubr.f32.mxu0 0.0
    %1421 = vmatmul.mubr.f32.gmra.mrb[0].mxu0 %v1041
    %v1422 = vpop.f32.mrb[0].mxu0
    %v1423 = vadd.f32 0.0, %v1422
    %v1424 = vpop.f32.mrb[0].mxu0
    %1425 = vmatprep.mubr.f32.mxu0 0.0
    %1426 = vmatmul.mubr.f32.gmra.mrb[0].mxu0 %v1044
    %v1427 = vpop.f32.mrb[0].mxu0
    %v1428 = vadd.f32 0.0, %v1427
    %v1429 = vpop.f32.mrb[0].mxu0
    %1430 = vmatprep.mubr.f32.mxu0 0.0
    %1431 = vmatmul.mubr.f32.gmra.mrb[0].mxu0 %v1047
    %v1432 = vpop.f32.mrb[0].mxu0
    %v1433 = vadd.f32 0.0, %v1432
    %v1434 = vpop.f32.mrb[0].mxu0
    %1435 = vmatprep.mubr.f32.mxu0 0.0
    %1436 = vmatmul.mubr.f32.gmra.mrb[0].mxu0 %v1050
    %v1437 = vpop.f32.mrb[0].mxu0
    %v1438 = vadd.f32 0.0, %v1437
    %v1439 = vpop.f32.mrb[0].mxu0
    %1440 = vmatprep.mubr.f32.mxu0 0.0
    %1441 = vmatmul.mubr.f32.gmra.mrb[0].mxu0 %v1053
    %v1442 = vpop.f32.mrb[0].mxu0
    %v1443 = vadd.f32 0.0, %v1442
    %v1444 = vpop.f32.mrb[0].mxu0
    %1445 = vmatprep.mubr.f32.mxu0 0.0
    %1446 = vmatmul.mubr.f32.gmra.mrb[0].mxu0 %v1056
    %v1447 = vpop.f32.mrb[0].mxu0
    %v1448 = vadd.f32 0.0, %v1447
    %v1449 = vpop.f32.mrb[0].mxu0
    %1450 = vmatprep.mubr.f32.mxu0 0.0
    %1451 = vmatmul.mubr.f32.gmra.mrb[0].mxu0 %v1059
    %v1452 = vpop.f32.mrb[0].mxu0
    %v1453 = vadd.f32 0.0, %v1452
    %v1454 = vpop.f32.mrb[0].mxu0
    %1455 = vmatprep.mubr.f32.mxu0 0.0
    %1456 = vmatmul.mubr.f32.gmra.mrb[0].mxu0 %v1062
    %v1457 = vpop.f32.mrb[0].mxu0
    %v1458 = vadd.f32 0.0, %v1457
    %v1459 = vpop.f32.mrb[0].mxu0
    %1460 = vmatprep.mubr.f32.mxu0 0.0
    %1461 = vmatmul.mubr.f32.gmra.mrb[0].mxu0 %v1065
    %v1462 = vpop.f32.mrb[0].mxu0
    %v1463 = vadd.f32 0.0, %v1462
    %v1464 = vpop.f32.mrb[0].mxu0
    %1465 = vmatprep.mubr.f32.mxu0 0.0
    %1466 = vmatmul.mubr.f32.gmra.mrb[0].mxu0 %v1068
    %v1467 = vpop.f32.mrb[0].mxu0
    %v1468 = vadd.f32 0.0, %v1467
    %v1469 = vpop.f32.mrb[0].mxu0
    %1470 = vmatprep.mubr.f32.mxu0 0.0
    %1471 = vmatmul.mubr.f32.gmra.mrb[0].mxu0 %v1071
    %v1472 = vpop.f32.mrb[0].mxu0
    %v1473 = vadd.f32 0.0, %v1472
    %v1474 = vpop.f32.mrb[0].mxu0
    %1475 = vmatprep.mubr.f32.mxu0 0.0
    %1476 = vmatmul.mubr.f32.gmra.mrb[0].mxu0 %v1074
    %v1477 = vpop.f32.mrb[0].mxu0
    %v1478 = vadd.f32 0.0, %v1477
    %v1479 = vpop.f32.mrb[0].mxu0
    %1480 = vmatprep.mubr.f32.mxu0 0.0
    %1481 = vmatmul.mubr.f32.gmra.mrb[0].mxu0 %v1077
    %v1482 = vpop.f32.mrb[0].mxu0
    %v1483 = vadd.f32 0.0, %v1482
    %v1484 = vpop.f32.mrb[0].mxu0
    %1485 = vmatprep.mubr.f32.mxu0 0.0
    %1486 = vmatmul.mubr.f32.gmra.mrb[0].mxu0 %v1080
    %v1487 = vpop.f32.mrb[0].mxu0
    %v1488 = vadd.f32 0.0, %v1487
    %v1489 = vpop.f32.mrb[0].mxu0
    %1490 = vmatprep.mubr.f32.mxu0 0.0
    %1491 = vmatmul.mubr.f32.gmra.mrb[0].mxu0 %v1083
    %v1492 = vpop.f32.mrb[0].mxu0
    %v1493 = vadd.f32 0.0, %v1492
    %v1494 = vpop.f32.mrb[0].mxu0
    %1495 = vmatprep.mubr.f32.mxu0 0.0
    %1496 = vmatmul.mubr.f32.gmra.mrb[0].mxu0 %v1086
    %v1497 = vpop.f32.mrb[0].mxu0
    %v1498 = vadd.f32 0.0, %v1497
    %v1499 = vpop.f32.mrb[0].mxu0
    %1500 = vmatprep.mubr.f32.mxu0 0.0
    %1501 = vmatmul.mubr.f32.gmra.mrb[0].mxu0 %v1089
    %v1502 = vpop.f32.mrb[0].mxu0
    %v1503 = vadd.f32 0.0, %v1502
    %v1504 = vpop.f32.mrb[0].mxu0
    %1505 = vmatprep.mubr.f32.mxu0 0.0
    %1506 = vmatmul.mubr.f32.gmra.mrb[0].mxu0 %v1092
    %v1507 = vpop.f32.mrb[0].mxu0
    %v1508 = vadd.f32 0.0, %v1507
    %v1509 = vpop.f32.mrb[0].mxu0
    %1510 = vmatprep.mubr.f32.mxu0 0.0
    %1511 = vmatmul.mubr.f32.gmra.mrb[0].mxu0 %v1095
    %v1512 = vpop.f32.mrb[0].mxu0
    %v1513 = vadd.f32 0.0, %v1512
    %v1514 = vpop.f32.mrb[0].mxu0
    %1515 = vmatprep.mubr.f32.mxu0 0.0
    %1516 = vmatmul.mubr.f32.gmra.mrb[0].mxu0 %v1098
    %v1517 = vpop.f32.mrb[0].mxu0
    %v1518 = vadd.f32 0.0, %v1517
    %v1519 = vpop.f32.mrb[0].mxu0
    %1520 = vmatprep.mubr.f32.mxu0 0.0
    %1521 = vmatmul.mubr.f32.gmra.mrb[0].mxu0 %v1101
    %v1522 = vpop.f32.mrb[0].mxu0
    %v1523 = vadd.f32 0.0, %v1522
    %v1524 = vpop.f32.mrb[0].mxu0
    %1525 = vmatprep.mubr.f32.mxu0 0.0
    %1526 = vmatmul.mubr.f32.gmra.mrb[0].mxu0 %v1104
    %v1527 = vpop.f32.mrb[0].mxu0
    %v1528 = vadd.f32 0.0, %v1527
    %v1529 = vpop.f32.mrb[0].mxu0
    %1530 = vmatprep.mubr.f32.mxu0 0.0
    %1531 = vmatmul.mubr.f32.gmra.mrb[0].mxu0 %v1107
    %v1532 = vpop.f32.mrb[0].mxu0
    %v1533 = vadd.f32 0.0, %v1532
    %v1534 = vpop.f32.mrb[0].mxu0
    %1535 = vmatprep.mubr.f32.mxu0 0.0
    %1536 = vmatmul.mubr.f32.gmra.mrb[0].mxu0 %v1110
    %v1537 = vpop.f32.mrb[0].mxu0
    %v1538 = vadd.f32 0.0, %v1537
    %v1539 = vpop.f32.mrb[0].mxu0
    %1540 = vdwg.mxu0
    %v1542 = vsel %vm895, %v748, 0
    %v1545 = vsel %vm895, %v749, 0
    %v1548 = vsel %vm895, %v750, 0
    %v1551 = vsel %vm895, %v751, 0
    %v1554 = vsel %vm895, %v752, 0
    %v1557 = vsel %vm895, %v753, 0
    %v1560 = vsel %vm895, %v754, 0
    %v1563 = vsel %vm895, %v755, 0
    %v1566 = vsel %vm895, %v756, 0
    %v1569 = vsel %vm895, %v757, 0
    %v1572 = vsel %vm895, %v758, 0
    %v1575 = vsel %vm895, %v759, 0
    %v1578 = vsel %vm895, %v760, 0
    %v1581 = vsel %vm895, %v761, 0
    %v1584 = vsel %vm895, %v762, 0
    %v1587 = vsel %vm895, %v763, 0
    %v1590 = vsel %vm895, %v764, 0
    %v1593 = vsel %vm895, %v765, 0
    %v1596 = vsel %vm895, %v766, 0
    %v1599 = vsel %vm895, %v767, 0
    %v1602 = vsel %vm895, %v768, 0
    %v1605 = vsel %vm895, %v769, 0
    %v1608 = vsel %vm895, %v770, 0
    %v1611 = vsel %vm895, %v771, 0
    %v1614 = vsel %vm895, %v772, 0
    %v1617 = vsel %vm895, %v773, 0
    %v1620 = vsel %vm895, %v774, 0
    %v1623 = vsel %vm895, %v775, 0
    %v1626 = vsel %vm895, %v776, 0
    %v1629 = vsel %vm895, %v777, 0
    %v1632 = vsel %vm895, %v778, 0
    %v1635 = vsel %vm895, %v779, 0
    %v1638 = vsel %vm895, %v780, 0
    %v1641 = vsel %vm895, %v781, 0
    %v1644 = vsel %vm895, %v782, 0
    %v1647 = vsel %vm895, %v783, 0
    %v1650 = vsel %vm895, %v784, 0
    %v1653 = vsel %vm895, %v785, 0
    %v1656 = vsel %vm895, %v786, 0
    %v1659 = vsel %vm895, %v787, 0
    %v1662 = vsel %vm895, %v788, 0
    %v1665 = vsel %vm895, %v789, 0
    %v1668 = vsel %vm895, %v790, 0
    %v1671 = vsel %vm895, %v791, 0
    %v1674 = vsel %vm895, %v792, 0
    %v1677 = vsel %vm895, %v793, 0
    %v1680 = vsel %vm895, %v794, 0
    %v1683 = vsel %vm895, %v795, 0
    %v1686 = vsel %vm895, %v796, 0
    %v1689 = vsel %vm895, %v797, 0
    %v1692 = vsel %vm895, %v798, 0
    %v1695 = vsel %vm895, %v799, 0
    %v1698 = vsel %vm895, %v800, 0
    %v1701 = vsel %vm895, %v801, 0
    %v1704 = vsel %vm895, %v802, 0
    %v1707 = vsel %vm895, %v803, 0
    %v1710 = vsel %vm895, %v804, 0
    %v1713 = vsel %vm895, %v805, 0
    %v1716 = vsel %vm895, %v806, 0
    %v1719 = vsel %vm895, %v807, 0
    %v1722 = vsel %vm895, %v808, 0
    %v1725 = vsel %vm895, %v809, 0
    %v1728 = vsel %vm895, %v810, 0
    %v1731 = vsel %vm895, %v811, 0
    %v1734 = vsel %vm895, %v812, 0
    %v1737 = vsel %vm895, %v813, 0
    %v1740 = vsel %vm895, %v814, 0
    %v1743 = vsel %vm895, %v815, 0
    %v1746 = vsel %vm895, %v816, 0
    %v1749 = vsel %vm895, %v817, 0
    %v1752 = vsel %vm895, %v818, 0
    %v1755 = vsel %vm895, %v819, 0
    %v1758 = vsel %vm1112, %v820, 0
    %1760 = vmatprep.subr.mxu0 0.0
    %1761 = vmatpush1.msra.mxu0 %v1758
    %1762 = vmatprep.subr.mxu0 0.0
    %1763 = vmatpush1.msra.mxu0 0.0
    %1764 = vmatprep.subr.mxu0 0.0
    %1765 = vmatpush1.msra.mxu0 0.0
    %1766 = vmatprep.subr.mxu0 0.0
    %1767 = vmatpush1.msra.mxu0 0.0
    %1768 = vmatprep.subr.mxu0 0.0
    %1769 = vmatpush1.msra.mxu0 0.0
    %1770 = vmatprep.subr.mxu0 0.0
    %1771 = vmatpush1.msra.mxu0 0.0
    %1772 = vmatprep.subr.mxu0 0.0
    %1773 = vmatpush1.msra.mxu0 0.0
    %1774 = vmatprep.subr.mxu0 0.0
    %1775 = vmatpush1.msra.mxu0 0.0
    %1776 = vmatprep.subr.mxu0 0.0
    %1777 = vmatpush1.msra.mxu0 0.0
    %1778 = vmatprep.subr.mxu0 0.0
    %1779 = vmatpush1.msra.mxu0 0.0
    %1780 = vmatprep.subr.mxu0 0.0
    %1781 = vmatpush1.msra.mxu0 0.0
    %1782 = vmatprep.subr.mxu0 0.0
    %1783 = vmatpush1.msra.mxu0 0.0
    %1784 = vmatprep.subr.mxu0 0.0
    %1785 = vmatpush1.msra.mxu0 0.0
    %1786 = vmatprep.subr.mxu0 0.0
    %1787 = vmatpush1.msra.mxu0 0.0
    %1788 = vmatprep.subr.mxu0 0.0
    %1789 = vmatpush1.msra.mxu0 0.0
    %1790 = vmatprep.subr.mxu0 0.0
    %1791 = vmatpush1.msra.mxu0 0.0
    %1792 = vmatprep.subr.mxu0 0.0
    %1793 = vmatpush1.msra.mxu0 0.0
    %1794 = vmatprep.subr.mxu0 0.0
    %1795 = vmatpush1.msra.mxu0 0.0
    %1796 = vmatprep.subr.mxu0 0.0
    %1797 = vmatpush1.msra.mxu0 0.0
    %1798 = vmatprep.subr.mxu0 0.0
    %1799 = vmatpush1.msra.mxu0 0.0
    %1800 = vmatprep.subr.mxu0 0.0
    %1801 = vmatpush1.msra.mxu0 0.0
    %1802 = vmatprep.subr.mxu0 0.0
    %1803 = vmatpush1.msra.mxu0 0.0
    %1804 = vmatprep.subr.mxu0 0.0
    %1805 = vmatpush1.msra.mxu0 0.0
    %1806 = vmatprep.subr.mxu0 0.0
    %1807 = vmatpush1.msra.mxu0 0.0
    %1808 = vmatprep.subr.mxu0 0.0
    %1809 = vmatpush1.msra.mxu0 0.0
    %1810 = vmatprep.subr.mxu0 0.0
    %1811 = vmatpush1.msra.mxu0 0.0
    %1812 = vmatprep.subr.mxu0 0.0
    %1813 = vmatpush1.msra.mxu0 0.0
    %1814 = vmatprep.subr.mxu0 0.0
    %1815 = vmatpush1.msra.mxu0 0.0
    %1816 = vmatprep.subr.mxu0 0.0
    %1817 = vmatpush1.msra.mxu0 0.0
    %1818 = vmatprep.subr.mxu0 0.0
    %1819 = vmatpush1.msra.mxu0 0.0
    %1820 = vmatprep.subr.mxu0 0.0
    %1821 = vmatpush1.msra.mxu0 0.0
    %1822 = vmatprep.subr.mxu0 0.0
    %1823 = vmatpush1.msra.mxu0 0.0
    %1824 = vmatprep.mubr.f32.mxu0 0.0
    %1825 = vmatmul.mubr.f32.gmra.mrb[0].mxu0 %v1542
    %v1826 = vpop.f32.mrb[0].mxu0
    %v1827 = vadd.f32 %v1183, %v1826
    %v1828 = vpop.f32.mrb[0].mxu0
    %1829 = vmatprep.mubr.f32.mxu0 0.0
    %1830 = vmatmul.mubr.f32.gmra.mrb[0].mxu0 %v1545
    %v1831 = vpop.f32.mrb[0].mxu0
    %v1832 = vadd.f32 %v1188, %v1831
    %v1833 = vpop.f32.mrb[0].mxu0
    %1834 = vmatprep.mubr.f32.mxu0 0.0
    %1835 = vmatmul.mubr.f32.gmra.mrb[0].mxu0 %v1548
    %v1836 = vpop.f32.mrb[0].mxu0
    %v1837 = vadd.f32 %v1193, %v1836
    %v1838 = vpop.f32.mrb[0].mxu0
    %1839 = vmatprep.mubr.f32.mxu0 0.0
    %1840 = vmatmul.mubr.f32.gmra.mrb[0].mxu0 %v1551
    %v1841 = vpop.f32.mrb[0].mxu0
    %v1842 = vadd.f32 %v1198, %v1841
    %v1843 = vpop.f32.mrb[0].mxu0
    %1844 = vmatprep.mubr.f32.mxu0 0.0
    %1845 = vmatmul.mubr.f32.gmra.mrb[0].mxu0 %v1554
    %v1846 = vpop.f32.mrb[0].mxu0
    %v1847 = vadd.f32 %v1203, %v1846
    %v1848 = vpop.f32.mrb[0].mxu0
    %1849 = vmatprep.mubr.f32.mxu0 0.0
    %1850 = vmatmul.mubr.f32.gmra.mrb[0].mxu0 %v1557
    %v1851 = vpop.f32.mrb[0].mxu0
    %v1852 = vadd.f32 %v1208, %v1851
    %v1853 = vpop.f32.mrb[0].mxu0
    %1854 = vmatprep.mubr.f32.mxu0 0.0
    %1855 = vmatmul.mubr.f32.gmra.mrb[0].mxu0 %v1560
    %v1856 = vpop.f32.mrb[0].mxu0
    %v1857 = vadd.f32 %v1213, %v1856
    %v1858 = vpop.f32.mrb[0].mxu0
    %1859 = vmatprep.mubr.f32.mxu0 0.0
    %1860 = vmatmul.mubr.f32.gmra.mrb[0].mxu0 %v1563
    %v1861 = vpop.f32.mrb[0].mxu0
    %v1862 = vadd.f32 %v1218, %v1861
    %v1863 = vpop.f32.mrb[0].mxu0
    %1864 = vmatprep.mubr.f32.mxu0 0.0
    %1865 = vmatmul.mubr.f32.gmra.mrb[0].mxu0 %v1566
    %v1866 = vpop.f32.mrb[0].mxu0
    %v1867 = vadd.f32 %v1223, %v1866
    %v1868 = vpop.f32.mrb[0].mxu0
    %1869 = vmatprep.mubr.f32.mxu0 0.0
    %1870 = vmatmul.mubr.f32.gmra.mrb[0].mxu0 %v1569
    %v1871 = vpop.f32.mrb[0].mxu0
    %v1872 = vadd.f32 %v1228, %v1871
    %v1873 = vpop.f32.mrb[0].mxu0
    %1874 = vmatprep.mubr.f32.mxu0 0.0
    %1875 = vmatmul.mubr.f32.gmra.mrb[0].mxu0 %v1572
    %v1876 = vpop.f32.mrb[0].mxu0
    %v1877 = vadd.f32 %v1233, %v1876
    %v1878 = vpop.f32.mrb[0].mxu0
    %1879 = vmatprep.mubr.f32.mxu0 0.0
    %1880 = vmatmul.mubr.f32.gmra.mrb[0].mxu0 %v1575
    %v1881 = vpop.f32.mrb[0].mxu0
    %v1882 = vadd.f32 %v1238, %v1881
    %v1883 = vpop.f32.mrb[0].mxu0
    %1884 = vmatprep.mubr.f32.mxu0 0.0
    %1885 = vmatmul.mubr.f32.gmra.mrb[0].mxu0 %v1578
    %v1886 = vpop.f32.mrb[0].mxu0
    %v1887 = vadd.f32 %v1243, %v1886
    %v1888 = vpop.f32.mrb[0].mxu0
    %1889 = vmatprep.mubr.f32.mxu0 0.0
    %1890 = vmatmul.mubr.f32.gmra.mrb[0].mxu0 %v1581
    %v1891 = vpop.f32.mrb[0].mxu0
    %v1892 = vadd.f32 %v1248, %v1891
    %v1893 = vpop.f32.mrb[0].mxu0
    %1894 = vmatprep.mubr.f32.mxu0 0.0
    %1895 = vmatmul.mubr.f32.gmra.mrb[0].mxu0 %v1584
    %v1896 = vpop.f32.mrb[0].mxu0
    %v1897 = vadd.f32 %v1253, %v1896
    %v1898 = vpop.f32.mrb[0].mxu0
    %1899 = vmatprep.mubr.f32.mxu0 0.0
    %1900 = vmatmul.mubr.f32.gmra.mrb[0].mxu0 %v1587
    %v1901 = vpop.f32.mrb[0].mxu0
    %v1902 = vadd.f32 %v1258, %v1901
    %v1903 = vpop.f32.mrb[0].mxu0
    %1904 = vmatprep.mubr.f32.mxu0 0.0
    %1905 = vmatmul.mubr.f32.gmra.mrb[0].mxu0 %v1590
    %v1906 = vpop.f32.mrb[0].mxu0
    %v1907 = vadd.f32 %v1263, %v1906
    %v1908 = vpop.f32.mrb[0].mxu0
    %1909 = vmatprep.mubr.f32.mxu0 0.0
    %1910 = vmatmul.mubr.f32.gmra.mrb[0].mxu0 %v1593
    %v1911 = vpop.f32.mrb[0].mxu0
    %v1912 = vadd.f32 %v1268, %v1911
    %v1913 = vpop.f32.mrb[0].mxu0
    %1914 = vmatprep.mubr.f32.mxu0 0.0
    %1915 = vmatmul.mubr.f32.gmra.mrb[0].mxu0 %v1596
    %v1916 = vpop.f32.mrb[0].mxu0
    %v1917 = vadd.f32 %v1273, %v1916
    %v1918 = vpop.f32.mrb[0].mxu0
    %1919 = vmatprep.mubr.f32.mxu0 0.0
    %1920 = vmatmul.mubr.f32.gmra.mrb[0].mxu0 %v1599
    %v1921 = vpop.f32.mrb[0].mxu0
    %v1922 = vadd.f32 %v1278, %v1921
    %v1923 = vpop.f32.mrb[0].mxu0
    %1924 = vmatprep.mubr.f32.mxu0 0.0
    %1925 = vmatmul.mubr.f32.gmra.mrb[0].mxu0 %v1602
    %v1926 = vpop.f32.mrb[0].mxu0
    %v1927 = vadd.f32 %v1283, %v1926
    %v1928 = vpop.f32.mrb[0].mxu0
    %1929 = vmatprep.mubr.f32.mxu0 0.0
    %1930 = vmatmul.mubr.f32.gmra.mrb[0].mxu0 %v1605
    %v1931 = vpop.f32.mrb[0].mxu0
    %v1932 = vadd.f32 %v1288, %v1931
    %v1933 = vpop.f32.mrb[0].mxu0
    %1934 = vmatprep.mubr.f32.mxu0 0.0
    %1935 = vmatmul.mubr.f32.gmra.mrb[0].mxu0 %v1608
    %v1936 = vpop.f32.mrb[0].mxu0
    %v1937 = vadd.f32 %v1293, %v1936
    %v1938 = vpop.f32.mrb[0].mxu0
    %1939 = vmatprep.mubr.f32.mxu0 0.0
    %1940 = vmatmul.mubr.f32.gmra.mrb[0].mxu0 %v1611
    %v1941 = vpop.f32.mrb[0].mxu0
    %v1942 = vadd.f32 %v1298, %v1941
    %v1943 = vpop.f32.mrb[0].mxu0
    %1944 = vmatprep.mubr.f32.mxu0 0.0
    %1945 = vmatmul.mubr.f32.gmra.mrb[0].mxu0 %v1614
    %v1946 = vpop.f32.mrb[0].mxu0
    %v1947 = vadd.f32 %v1303, %v1946
    %v1948 = vpop.f32.mrb[0].mxu0
    %1949 = vmatprep.mubr.f32.mxu0 0.0
    %1950 = vmatmul.mubr.f32.gmra.mrb[0].mxu0 %v1617
    %v1951 = vpop.f32.mrb[0].mxu0
    %v1952 = vadd.f32 %v1308, %v1951
    %v1953 = vpop.f32.mrb[0].mxu0
    %1954 = vmatprep.mubr.f32.mxu0 0.0
    %1955 = vmatmul.mubr.f32.gmra.mrb[0].mxu0 %v1620
    %v1956 = vpop.f32.mrb[0].mxu0
    %v1957 = vadd.f32 %v1313, %v1956
    %v1958 = vpop.f32.mrb[0].mxu0
    %1959 = vmatprep.mubr.f32.mxu0 0.0
    %1960 = vmatmul.mubr.f32.gmra.mrb[0].mxu0 %v1623
    %v1961 = vpop.f32.mrb[0].mxu0
    %v1962 = vadd.f32 %v1318, %v1961
    %v1963 = vpop.f32.mrb[0].mxu0
    %1964 = vmatprep.mubr.f32.mxu0 0.0
    %1965 = vmatmul.mubr.f32.gmra.mrb[0].mxu0 %v1626
    %v1966 = vpop.f32.mrb[0].mxu0
    %v1967 = vadd.f32 %v1323, %v1966
    %v1968 = vpop.f32.mrb[0].mxu0
    %1969 = vmatprep.mubr.f32.mxu0 0.0
    %1970 = vmatmul.mubr.f32.gmra.mrb[0].mxu0 %v1629
    %v1971 = vpop.f32.mrb[0].mxu0
    %v1972 = vadd.f32 %v1328, %v1971
    %v1973 = vpop.f32.mrb[0].mxu0
    %1974 = vmatprep.mubr.f32.mxu0 0.0
    %1975 = vmatmul.mubr.f32.gmra.mrb[0].mxu0 %v1632
    %v1976 = vpop.f32.mrb[0].mxu0
    %v1977 = vadd.f32 %v1333, %v1976
    %v1978 = vpop.f32.mrb[0].mxu0
    %1979 = vmatprep.mubr.f32.mxu0 0.0
    %1980 = vmatmul.mubr.f32.gmra.mrb[0].mxu0 %v1635
    %v1981 = vpop.f32.mrb[0].mxu0
    %v1982 = vadd.f32 %v1338, %v1981
    %v1983 = vpop.f32.mrb[0].mxu0
    %1984 = vmatprep.mubr.f32.mxu0 0.0
    %1985 = vmatmul.mubr.f32.gmra.mrb[0].mxu0 %v1638
    %v1986 = vpop.f32.mrb[0].mxu0
    %v1987 = vadd.f32 %v1343, %v1986
    %v1988 = vpop.f32.mrb[0].mxu0
    %1989 = vmatprep.mubr.f32.mxu0 0.0
    %1990 = vmatmul.mubr.f32.gmra.mrb[0].mxu0 %v1641
    %v1991 = vpop.f32.mrb[0].mxu0
    %v1992 = vadd.f32 %v1348, %v1991
    %v1993 = vpop.f32.mrb[0].mxu0
    %1994 = vmatprep.mubr.f32.mxu0 0.0
    %1995 = vmatmul.mubr.f32.gmra.mrb[0].mxu0 %v1644
    %v1996 = vpop.f32.mrb[0].mxu0
    %v1997 = vadd.f32 %v1353, %v1996
    %v1998 = vpop.f32.mrb[0].mxu0
    %1999 = vmatprep.mubr.f32.mxu0 0.0
    %2000 = vmatmul.mubr.f32.gmra.mrb[0].mxu0 %v1647
    %v2001 = vpop.f32.mrb[0].mxu0
    %v2002 = vadd.f32 %v1358, %v2001
    %v2003 = vpop.f32.mrb[0].mxu0
    %2004 = vmatprep.mubr.f32.mxu0 0.0
    %2005 = vmatmul.mubr.f32.gmra.mrb[0].mxu0 %v1650
    %v2006 = vpop.f32.mrb[0].mxu0
    %v2007 = vadd.f32 %v1363, %v2006
    %v2008 = vpop.f32.mrb[0].mxu0
    %2009 = vmatprep.mubr.f32.mxu0 0.0
    %2010 = vmatmul.mubr.f32.gmra.mrb[0].mxu0 %v1653
    %v2011 = vpop.f32.mrb[0].mxu0
    %v2012 = vadd.f32 %v1368, %v2011
    %v2013 = vpop.f32.mrb[0].mxu0
    %2014 = vmatprep.mubr.f32.mxu0 0.0
    %2015 = vmatmul.mubr.f32.gmra.mrb[0].mxu0 %v1656
    %v2016 = vpop.f32.mrb[0].mxu0
    %v2017 = vadd.f32 %v1373, %v2016
    %v2018 = vpop.f32.mrb[0].mxu0
    %2019 = vmatprep.mubr.f32.mxu0 0.0
    %2020 = vmatmul.mubr.f32.gmra.mrb[0].mxu0 %v1659
    %v2021 = vpop.f32.mrb[0].mxu0
    %v2022 = vadd.f32 %v1378, %v2021
    %v2023 = vpop.f32.mrb[0].mxu0
    %2024 = vmatprep.mubr.f32.mxu0 0.0
    %2025 = vmatmul.mubr.f32.gmra.mrb[0].mxu0 %v1662
    %v2026 = vpop.f32.mrb[0].mxu0
    %v2027 = vadd.f32 %v1383, %v2026
    %v2028 = vpop.f32.mrb[0].mxu0
    %2029 = vmatprep.mubr.f32.mxu0 0.0
    %2030 = vmatmul.mubr.f32.gmra.mrb[0].mxu0 %v1665
    %v2031 = vpop.f32.mrb[0].mxu0
    %v2032 = vadd.f32 %v1388, %v2031
    %v2033 = vpop.f32.mrb[0].mxu0
    %2034 = vmatprep.mubr.f32.mxu0 0.0
    %2035 = vmatmul.mubr.f32.gmra.mrb[0].mxu0 %v1668
    %v2036 = vpop.f32.mrb[0].mxu0
    %v2037 = vadd.f32 %v1393, %v2036
    %v2038 = vpop.f32.mrb[0].mxu0
    %2039 = vmatprep.mubr.f32.mxu0 0.0
    %2040 = vmatmul.mubr.f32.gmra.mrb[0].mxu0 %v1671
    %v2041 = vpop.f32.mrb[0].mxu0
    %v2042 = vadd.f32 %v1398, %v2041
    %v2043 = vpop.f32.mrb[0].mxu0
    %2044 = vmatprep.mubr.f32.mxu0 0.0
    %2045 = vmatmul.mubr.f32.gmra.mrb[0].mxu0 %v1674
    %v2046 = vpop.f32.mrb[0].mxu0
    %v2047 = vadd.f32 %v1403, %v2046
    %v2048 = vpop.f32.mrb[0].mxu0
    %2049 = vmatprep.mubr.f32.mxu0 0.0
    %2050 = vmatmul.mubr.f32.gmra.mrb[0].mxu0 %v1677
    %v2051 = vpop.f32.mrb[0].mxu0
    %v2052 = vadd.f32 %v1408, %v2051
    %v2053 = vpop.f32.mrb[0].mxu0
    %2054 = vmatprep.mubr.f32.mxu0 0.0
    %2055 = vmatmul.mubr.f32.gmra.mrb[0].mxu0 %v1680
    %v2056 = vpop.f32.mrb[0].mxu0
    %v2057 = vadd.f32 %v1413, %v2056
    %v2058 = vpop.f32.mrb[0].mxu0
    %2059 = vmatprep.mubr.f32.mxu0 0.0
    %2060 = vmatmul.mubr.f32.gmra.mrb[0].mxu0 %v1683
    %v2061 = vpop.f32.mrb[0].mxu0
    %v2062 = vadd.f32 %v1418, %v2061
    %v2063 = vpop.f32.mrb[0].mxu0
    %2064 = vmatprep.mubr.f32.mxu0 0.0
    %2065 = vmatmul.mubr.f32.gmra.mrb[0].mxu0 %v1686
    %v2066 = vpop.f32.mrb[0].mxu0
    %v2067 = vadd.f32 %v1423, %v2066
    %v2068 = vpop.f32.mrb[0].mxu0
    %2069 = vmatprep.mubr.f32.mxu0 0.0
    %2070 = vmatmul.mubr.f32.gmra.mrb[0].mxu0 %v1689
    %v2071 = vpop.f32.mrb[0].mxu0
    %v2072 = vadd.f32 %v1428, %v2071
    %v2073 = vpop.f32.mrb[0].mxu0
    %2074 = vmatprep.mubr.f32.mxu0 0.0
    %2075 = vmatmul.mubr.f32.gmra.mrb[0].mxu0 %v1692
    %v2076 = vpop.f32.mrb[0].mxu0
    %v2077 = vadd.f32 %v1433, %v2076
    %v2078 = vpop.f32.mrb[0].mxu0
    %2079 = vmatprep.mubr.f32.mxu0 0.0
    %2080 = vmatmul.mubr.f32.gmra.mrb[0].mxu0 %v1695
    %v2081 = vpop.f32.mrb[0].mxu0
    %v2082 = vadd.f32 %v1438, %v2081
    %v2083 = vpop.f32.mrb[0].mxu0
    %2084 = vmatprep.mubr.f32.mxu0 0.0
    %2085 = vmatmul.mubr.f32.gmra.mrb[0].mxu0 %v1698
    %v2086 = vpop.f32.mrb[0].mxu0
    %v2087 = vadd.f32 %v1443, %v2086
    %v2088 = vpop.f32.mrb[0].mxu0
    %2089 = vmatprep.mubr.f32.mxu0 0.0
    %2090 = vmatmul.mubr.f32.gmra.mrb[0].mxu0 %v1701
    %v2091 = vpop.f32.mrb[0].mxu0
    %v2092 = vadd.f32 %v1448, %v2091
    %v2093 = vpop.f32.mrb[0].mxu0
    %2094 = vmatprep.mubr.f32.mxu0 0.0
    %2095 = vmatmul.mubr.f32.gmra.mrb[0].mxu0 %v1704
    %v2096 = vpop.f32.mrb[0].mxu0
    %v2097 = vadd.f32 %v1453, %v2096
    %v2098 = vpop.f32.mrb[0].mxu0
    %2099 = vmatprep.mubr.f32.mxu0 0.0
    %2100 = vmatmul.mubr.f32.gmra.mrb[0].mxu0 %v1707
    %v2101 = vpop.f32.mrb[0].mxu0
    %v2102 = vadd.f32 %v1458, %v2101
    %v2103 = vpop.f32.mrb[0].mxu0
    %2104 = vmatprep.mubr.f32.mxu0 0.0
    %2105 = vmatmul.mubr.f32.gmra.mrb[0].mxu0 %v1710
    %v2106 = vpop.f32.mrb[0].mxu0
    %v2107 = vadd.f32 %v1463, %v2106
    %v2108 = vpop.f32.mrb[0].mxu0
    %2109 = vmatprep.mubr.f32.mxu0 0.0
    %2110 = vmatmul.mubr.f32.gmra.mrb[0].mxu0 %v1713
    %v2111 = vpop.f32.mrb[0].mxu0
    %v2112 = vadd.f32 %v1468, %v2111
    %v2113 = vpop.f32.mrb[0].mxu0
    %2114 = vmatprep.mubr.f32.mxu0 0.0
    %2115 = vmatmul.mubr.f32.gmra.mrb[0].mxu0 %v1716
    %v2116 = vpop.f32.mrb[0].mxu0
    %v2117 = vadd.f32 %v1473, %v2116
    %v2118 = vpop.f32.mrb[0].mxu0
    %2119 = vmatprep.mubr.f32.mxu0 0.0
    %2120 = vmatmul.mubr.f32.gmra.mrb[0].mxu0 %v1719
    %v2121 = vpop.f32.mrb[0].mxu0
    %v2122 = vadd.f32 %v1478, %v2121
    %v2123 = vpop.f32.mrb[0].mxu0
    %2124 = vmatprep.mubr.f32.mxu0 0.0
    %2125 = vmatmul.mubr.f32.gmra.mrb[0].mxu0 %v1722
    %v2126 = vpop.f32.mrb[0].mxu0
    %v2127 = vadd.f32 %v1483, %v2126
    %v2128 = vpop.f32.mrb[0].mxu0
    %2129 = vmatprep.mubr.f32.mxu0 0.0
    %2130 = vmatmul.mubr.f32.gmra.mrb[0].mxu0 %v1725
    %v2131 = vpop.f32.mrb[0].mxu0
    %v2132 = vadd.f32 %v1488, %v2131
    %v2133 = vpop.f32.mrb[0].mxu0
    %2134 = vmatprep.mubr.f32.mxu0 0.0
    %2135 = vmatmul.mubr.f32.gmra.mrb[0].mxu0 %v1728
    %v2136 = vpop.f32.mrb[0].mxu0
    %v2137 = vadd.f32 %v1493, %v2136
    %v2138 = vpop.f32.mrb[0].mxu0
    %2139 = vmatprep.mubr.f32.mxu0 0.0
    %2140 = vmatmul.mubr.f32.gmra.mrb[0].mxu0 %v1731
    %v2141 = vpop.f32.mrb[0].mxu0
    %v2142 = vadd.f32 %v1498, %v2141
    %v2143 = vpop.f32.mrb[0].mxu0
    %2144 = vmatprep.mubr.f32.mxu0 0.0
    %2145 = vmatmul.mubr.f32.gmra.mrb[0].mxu0 %v1734
    %v2146 = vpop.f32.mrb[0].mxu0
    %v2147 = vadd.f32 %v1503, %v2146
    %v2148 = vpop.f32.mrb[0].mxu0
    %2149 = vmatprep.mubr.f32.mxu0 0.0
    %2150 = vmatmul.mubr.f32.gmra.mrb[0].mxu0 %v1737
    %v2151 = vpop.f32.mrb[0].mxu0
    %v2152 = vadd.f32 %v1508, %v2151
    %v2153 = vpop.f32.mrb[0].mxu0
    %2154 = vmatprep.mubr.f32.mxu0 0.0
    %2155 = vmatmul.mubr.f32.gmra.mrb[0].mxu0 %v1740
    %v2156 = vpop.f32.mrb[0].mxu0
    %v2157 = vadd.f32 %v1513, %v2156
    %v2158 = vpop.f32.mrb[0].mxu0
    %2159 = vmatprep.mubr.f32.mxu0 0.0
    %2160 = vmatmul.mubr.f32.gmra.mrb[0].mxu0 %v1743
    %v2161 = vpop.f32.mrb[0].mxu0
    %v2162 = vadd.f32 %v1518, %v2161
    %v2163 = vpop.f32.mrb[0].mxu0
    %2164 = vmatprep.mubr.f32.mxu0 0.0
    %2165 = vmatmul.mubr.f32.gmra.mrb[0].mxu0 %v1746
    %v2166 = vpop.f32.mrb[0].mxu0
    %v2167 = vadd.f32 %v1523, %v2166
    %v2168 = vpop.f32.mrb[0].mxu0
    %2169 = vmatprep.mubr.f32.mxu0 0.0
    %2170 = vmatmul.mubr.f32.gmra.mrb[0].mxu0 %v1749
    %v2171 = vpop.f32.mrb[0].mxu0
    %v2172 = vadd.f32 %v1528, %v2171
    %v2173 = vpop.f32.mrb[0].mxu0
    %2174 = vmatprep.mubr.f32.mxu0 0.0
    %2175 = vmatmul.mubr.f32.gmra.mrb[0].mxu0 %v1752
    %v2176 = vpop.f32.mrb[0].mxu0
    %v2177 = vadd.f32 %v1533, %v2176
    %v2178 = vpop.f32.mrb[0].mxu0
    %2179 = vmatprep.mubr.f32.mxu0 0.0
    %2180 = vmatmul.mubr.f32.gmra.mrb[0].mxu0 %v1755
    %v2181 = vpop.f32.mrb[0].mxu0
    %v2182 = vadd.f32 %v1538, %v2181
    %v2183 = vpop.f32.mrb[0].mxu0
    %2184 = vdwg.mxu0
    %v2185 = vld [vmem:[%s0 + $0x2] sm:$0xff]
    %v2186 = vld [vmem:[%s0 + $0xa] sm:$0xff]
    %v2187 = vld [vmem:[%s0 + $0x12] sm:$0xff]
    %v2188 = vld [vmem:[%s0 + $0x1a] sm:$0xff]
    %v2189 = vld [vmem:[%s0 + $0x22] sm:$0xff]
    %v2190 = vld [vmem:[%s0 + $0x2a] sm:$0xff]
    %v2191 = vld [vmem:[%s0 + $0x32] sm:$0xff]
    %v2192 = vld [vmem:[%s0 + $0x3a] sm:$0xff]
    %v2193 = vld [vmem:[%s0 + $0x42] sm:$0xff]
    %v2194 = vld [vmem:[%s0 + $0x4a] sm:$0xff]
    %v2195 = vld [vmem:[%s0 + $0x52] sm:$0xff]
    %v2196 = vld [vmem:[%s0 + $0x5a] sm:$0xff]
    %v2197 = vld [vmem:[%s0 + $0x62] sm:$0xff]
    %v2198 = vld [vmem:[%s0 + $0x6a] sm:$0xff]
    %v2199 = vld [vmem:[%s0 + $0x72] sm:$0xff]
    %v2200 = vld [vmem:[%s0 + $0x7a] sm:$0xff]
    %v2201 = vld [vmem:[%s0 + $0x82] sm:$0xff]
    %v2202 = vld [vmem:[%s0 + $0x8a] sm:$0xff]
    %v2203 = vld [vmem:[%s0 + $0x92] sm:$0xff]
    %v2204 = vld [vmem:[%s0 + $0x9a] sm:$0xff]
    %v2205 = vld [vmem:[%s0 + $0xa2] sm:$0xff]
    %v2206 = vld [vmem:[%s0 + $0xaa] sm:$0xff]
    %v2207 = vld [vmem:[%s0 + $0xb2] sm:$0xff]
    %v2208 = vld [vmem:[%s0 + $0xba] sm:$0xff]
    %v2209 = vld [vmem:[%s0 + $0xc2] sm:$0xff]
    %v2210 = vld [vmem:[%s0 + $0xca] sm:$0xff]
    %v2211 = vld [vmem:[%s0 + $0xd2] sm:$0xff]
    %v2212 = vld [vmem:[%s0 + $0xda] sm:$0xff]
    %v2213 = vld [vmem:[%s0 + $0xe2] sm:$0xff]
    %v2214 = vld [vmem:[%s0 + $0xea] sm:$0xff]
    %v2215 = vld [vmem:[%s0 + $0xf2] sm:$0xff]
    %v2216 = vld [vmem:[%s0 + $0xfa] sm:$0xff]
    %v2217 = vld [vmem:[%s0 + $0x102] sm:$0xff]
    %v2218 = vld [vmem:[%s0 + $0x10a] sm:$0xff]
    %v2219 = vld [vmem:[%s0 + $0x112] sm:$0xff]
    %v2220 = vld [vmem:[%s0 + $0x11a] sm:$0xff]
    %v2221 = vld [vmem:[%s0 + $0x14a] sm:$0xff]
    %v2222 = vld [vmem:[%s0 + $0x152] sm:$0xff]
    %v2223 = vld [vmem:[%s0 + $0x15a] sm:$0xff]
    %v2224 = vld [vmem:[%s0 + $0x162] sm:$0xff]
    %v2225 = vld [vmem:[%s0 + $0x16a] sm:$0xff]
    %v2226 = vld [vmem:[%s0 + $0x172] sm:$0xff]
    %v2227 = vld [vmem:[%s0 + $0x17a] sm:$0xff]
    %v2228 = vld [vmem:[%s0 + $0x182] sm:$0xff]
    %v2229 = vld [vmem:[%s0 + $0x18a] sm:$0xff]
    %v2230 = vld [vmem:[%s0 + $0x192] sm:$0xff]
    %v2231 = vld [vmem:[%s0 + $0x19a] sm:$0xff]
    %v2232 = vld [vmem:[%s0 + $0x1a2] sm:$0xff]
    %v2233 = vld [vmem:[%s0 + $0x1aa] sm:$0xff]
    %v2234 = vld [vmem:[%s0 + $0x1b2] sm:$0xff]
    %v2235 = vld [vmem:[%s0 + $0x1ba] sm:$0xff]
    %v2236 = vld [vmem:[%s0 + $0x1c2] sm:$0xff]
    %v2237 = vld [vmem:[%s0 + $0x1ca] sm:$0xff]
    %v2238 = vld [vmem:[%s0 + $0x1d2] sm:$0xff]
    %v2239 = vld [vmem:[%s0 + $0x1da] sm:$0xff]
    %v2240 = vld [vmem:[%s0 + $0x1e2] sm:$0xff]
    %v2241 = vld [vmem:[%s0 + $0x1ea] sm:$0xff]
    %v2242 = vld [vmem:[%s0 + $0x1f2] sm:$0xff]
    %v2243 = vld [vmem:[%s0 + $0x1fa] sm:$0xff]
    %v2244 = vld [vmem:[%s0 + $0x202] sm:$0xff]
    %v2245 = vld [vmem:[%s0 + $0x20a] sm:$0xff]
    %v2246 = vld [vmem:[%s0 + $0x212] sm:$0xff]
    %v2247 = vld [vmem:[%s0 + $0x21a] sm:$0xff]
    %v2248 = vld [vmem:[%s0 + $0x222] sm:$0xff]
    %v2249 = vld [vmem:[%s0 + $0x22a] sm:$0xff]
    %v2250 = vld [vmem:[%s0 + $0x232] sm:$0xff]
    %v2251 = vld [vmem:[%s0 + $0x23a] sm:$0xff]
    %v2252 = vld [vmem:[%s0 + $0x242] sm:$0xff]
    %v2253 = vld [vmem:[%s0 + $0x24a] sm:$0xff]
    %v2254 = vld [vmem:[%s0 + $0x252] sm:$0xff]
    %v2255 = vld [vmem:[%s0 + $0x25a] sm:$0xff]
    %v2256 = vld [vmem:[%s0 + $0x262] sm:$0xff]
    %s2257 = scalar_lea.vmem %s1, 8
    %v2258 = vld [vmem:[%s2257] sm:$0xf]
    %v2260 = vsel %vm895, %v2185, 0
    %v2263 = vsel %vm895, %v2186, 0
    %v2266 = vsel %vm895, %v2187, 0
    %v2269 = vsel %vm895, %v2188, 0
    %v2272 = vsel %vm895, %v2189, 0
    %v2275 = vsel %vm895, %v2190, 0
    %v2278 = vsel %vm895, %v2191, 0
    %v2281 = vsel %vm895, %v2192, 0
    %v2284 = vsel %vm895, %v2193, 0
    %v2287 = vsel %vm895, %v2194, 0
    %v2290 = vsel %vm895, %v2195, 0
    %v2293 = vsel %vm895, %v2196, 0
    %v2296 = vsel %vm895, %v2197, 0
    %v2299 = vsel %vm895, %v2198, 0
    %v2302 = vsel %vm895, %v2199, 0
    %v2305 = vsel %vm895, %v2200, 0
    %v2308 = vsel %vm895, %v2201, 0
    %v2311 = vsel %vm895, %v2202, 0
    %v2314 = vsel %vm895, %v2203, 0
    %v2317 = vsel %vm895, %v2204, 0
    %v2320 = vsel %vm895, %v2205, 0
    %v2323 = vsel %vm895, %v2206, 0
    %v2326 = vsel %vm895, %v2207, 0
    %v2329 = vsel %vm895, %v2208, 0
    %v2332 = vsel %vm895, %v2209, 0
    %v2335 = vsel %vm895, %v2210, 0
    %v2338 = vsel %vm895, %v2211, 0
    %v2341 = vsel %vm895, %v2212, 0
    %v2344 = vsel %vm895, %v2213, 0
    %v2347 = vsel %vm895, %v2214, 0
    %v2350 = vsel %vm895, %v2215, 0
    %v2353 = vsel %vm895, %v2216, 0
    %v2356 = vsel %vm895, %v2217, 0
    %v2359 = vsel %vm895, %v2218, 0
    %v2362 = vsel %vm895, %v2219, 0
    %v2365 = vsel %vm895, %v2220, 0
    %v2368 = vsel %vm895, %v2221, 0
    %v2371 = vsel %vm895, %v2222, 0
    %v2374 = vsel %vm895, %v2223, 0
    %v2377 = vsel %vm895, %v2224, 0
    %v2380 = vsel %vm895, %v2225, 0
    %v2383 = vsel %vm895, %v2226, 0
    %v2386 = vsel %vm895, %v2227, 0
    %v2389 = vsel %vm895, %v2228, 0
    %v2392 = vsel %vm895, %v2229, 0
    %v2395 = vsel %vm895, %v2230, 0
    %v2398 = vsel %vm895, %v2231, 0
    %v2401 = vsel %vm895, %v2232, 0
    %v2404 = vsel %vm895, %v2233, 0
    %v2407 = vsel %vm895, %v2234, 0
    %v2410 = vsel %vm895, %v2235, 0
    %v2413 = vsel %vm895, %v2236, 0
    %v2416 = vsel %vm895, %v2237, 0
    %v2419 = vsel %vm895, %v2238, 0
    %v2422 = vsel %vm895, %v2239, 0
    %v2425 = vsel %vm895, %v2240, 0
    %v2428 = vsel %vm895, %v2241, 0
    %v2431 = vsel %vm895, %v2242, 0
    %v2434 = vsel %vm895, %v2243, 0
    %v2437 = vsel %vm895, %v2244, 0
    %v2440 = vsel %vm895, %v2245, 0
    %v2443 = vsel %vm895, %v2246, 0
    %v2446 = vsel %vm895, %v2247, 0
    %v2449 = vsel %vm895, %v2248, 0
    %v2452 = vsel %vm895, %v2249, 0
    %v2455 = vsel %vm895, %v2250, 0
    %v2458 = vsel %vm895, %v2251, 0
    %v2461 = vsel %vm895, %v2252, 0
    %v2464 = vsel %vm895, %v2253, 0
    %v2467 = vsel %vm895, %v2254, 0
    %v2470 = vsel %vm895, %v2255, 0
    %v2473 = vsel %vm895, %v2256, 0
    %v2476 = vsel %vm1112, %v2258, 0
    %2478 = vmatprep.subr.mxu0 0.0
    %2479 = vmatpush1.msra.mxu0 %v2476
    %2480 = vmatprep.subr.mxu0 0.0
    %2481 = vmatpush1.msra.mxu0 0.0
    %2482 = vmatprep.subr.mxu0 0.0
    %2483 = vmatpush1.msra.mxu0 0.0
    %2484 = vmatprep.subr.mxu0 0.0
    %2485 = vmatpush1.msra.mxu0 0.0
    %2486 = vmatprep.subr.mxu0 0.0
    %2487 = vmatpush1.msra.mxu0 0.0
    %2488 = vmatprep.subr.mxu0 0.0
    %2489 = vmatpush1.msra.mxu0 0.0
    %2490 = vmatprep.subr.mxu0 0.0
    %2491 = vmatpush1.msra.mxu0 0.0
    %2492 = vmatprep.subr.mxu0 0.0
    %2493 = vmatpush1.msra.mxu0 0.0
    %2494 = vmatprep.subr.mxu0 0.0
    %2495 = vmatpush1.msra.mxu0 0.0
    %2496 = vmatprep.subr.mxu0 0.0
    %2497 = vmatpush1.msra.mxu0 0.0
    %2498 = vmatprep.subr.mxu0 0.0
    %2499 = vmatpush1.msra.mxu0 0.0
    %2500 = vmatprep.subr.mxu0 0.0
    %2501 = vmatpush1.msra.mxu0 0.0
    %2502 = vmatprep.subr.mxu0 0.0
    %2503 = vmatpush1.msra.mxu0 0.0
    %2504 = vmatprep.subr.mxu0 0.0
    %2505 = vmatpush1.msra.mxu0 0.0
    %2506 = vmatprep.subr.mxu0 0.0
    %2507 = vmatpush1.msra.mxu0 0.0
    %2508 = vmatprep.subr.mxu0 0.0
    %2509 = vmatpush1.msra.mxu0 0.0
    %2510 = vmatprep.subr.mxu0 0.0
    %2511 = vmatpush1.msra.mxu0 0.0
    %2512 = vmatprep.subr.mxu0 0.0
    %2513 = vmatpush1.msra.mxu0 0.0
    %2514 = vmatprep.subr.mxu0 0.0
    %2515 = vmatpush1.msra.mxu0 0.0
    %2516 = vmatprep.subr.mxu0 0.0
    %2517 = vmatpush1.msra.mxu0 0.0
    %2518 = vmatprep.subr.mxu0 0.0
    %2519 = vmatpush1.msra.mxu0 0.0
    %2520 = vmatprep.subr.mxu0 0.0
    %2521 = vmatpush1.msra.mxu0 0.0
    %2522 = vmatprep.subr.mxu0 0.0
    %2523 = vmatpush1.msra.mxu0 0.0
    %2524 = vmatprep.subr.mxu0 0.0
    %2525 = vmatpush1.msra.mxu0 0.0
    %2526 = vmatprep.subr.mxu0 0.0
    %2527 = vmatpush1.msra.mxu0 0.0
    %2528 = vmatprep.subr.mxu0 0.0
    %2529 = vmatpush1.msra.mxu0 0.0
    %2530 = vmatprep.subr.mxu0 0.0
    %2531 = vmatpush1.msra.mxu0 0.0
    %2532 = vmatprep.subr.mxu0 0.0
    %2533 = vmatpush1.msra.mxu0 0.0
    %2534 = vmatprep.subr.mxu0 0.0
    %2535 = vmatpush1.msra.mxu0 0.0
    %2536 = vmatprep.subr.mxu0 0.0
    %2537 = vmatpush1.msra.mxu0 0.0
    %2538 = vmatprep.subr.mxu0 0.0
    %2539 = vmatpush1.msra.mxu0 0.0
    %2540 = vmatprep.subr.mxu0 0.0
    %2541 = vmatpush1.msra.mxu0 0.0
    %2542 = vmatprep.mubr.f32.mxu0 0.0
    %2543 = vmatmul.mubr.f32.gmra.mrb[0].mxu0 %v2260
    %v2544 = vpop.f32.mrb[0].mxu0
    %v2545 = vadd.f32 0.0, %v2544
    %v2546 = vpop.f32.mrb[0].mxu0
    %2547 = vmatprep.mubr.f32.mxu0 0.0
    %2548 = vmatmul.mubr.f32.gmra.mrb[0].mxu0 %v2263
    %v2549 = vpop.f32.mrb[0].mxu0
    %v2550 = vadd.f32 0.0, %v2549
    %v2551 = vpop.f32.mrb[0].mxu0
    %2552 = vmatprep.mubr.f32.mxu0 0.0
    %2553 = vmatmul.mubr.f32.gmra.mrb[0].mxu0 %v2266
    %v2554 = vpop.f32.mrb[0].mxu0
    %v2555 = vadd.f32 0.0, %v2554
    %v2556 = vpop.f32.mrb[0].mxu0
    %2557 = vmatprep.mubr.f32.mxu0 0.0
    %2558 = vmatmul.mubr.f32.gmra.mrb[0].mxu0 %v2269
    %v2559 = vpop.f32.mrb[0].mxu0
    %v2560 = vadd.f32 0.0, %v2559
    %v2561 = vpop.f32.mrb[0].mxu0
    %2562 = vmatprep.mubr.f32.mxu0 0.0
    %2563 = vmatmul.mubr.f32.gmra.mrb[0].mxu0 %v2272
    %v2564 = vpop.f32.mrb[0].mxu0
    %v2565 = vadd.f32 0.0, %v2564
    %v2566 = vpop.f32.mrb[0].mxu0
    %2567 = vmatprep.mubr.f32.mxu0 0.0
    %2568 = vmatmul.mubr.f32.gmra.mrb[0].mxu0 %v2275
    %v2569 = vpop.f32.mrb[0].mxu0
    %v2570 = vadd.f32 0.0, %v2569
    %v2571 = vpop.f32.mrb[0].mxu0
    %2572 = vmatprep.mubr.f32.mxu0 0.0
    %2573 = vmatmul.mubr.f32.gmra.mrb[0].mxu0 %v2278
    %v2574 = vpop.f32.mrb[0].mxu0
    %v2575 = vadd.f32 0.0, %v2574
    %v2576 = vpop.f32.mrb[0].mxu0
    %2577 = vmatprep.mubr.f32.mxu0 0.0
    %2578 = vmatmul.mubr.f32.gmra.mrb[0].mxu0 %v2281
    %v2579 = vpop.f32.mrb[0].mxu0
    %v2580 = vadd.f32 0.0, %v2579
    %v2581 = vpop.f32.mrb[0].mxu0
    %2582 = vmatprep.mubr.f32.mxu0 0.0
    %2583 = vmatmul.mubr.f32.gmra.mrb[0].mxu0 %v2284
    %v2584 = vpop.f32.mrb[0].mxu0
    %v2585 = vadd.f32 0.0, %v2584
    %v2586 = vpop.f32.mrb[0].mxu0
    %2587 = vmatprep.mubr.f32.mxu0 0.0
    %2588 = vmatmul.mubr.f32.gmra.mrb[0].mxu0 %v2287
    %v2589 = vpop.f32.mrb[0].mxu0
    %v2590 = vadd.f32 0.0, %v2589
    %v2591 = vpop.f32.mrb[0].mxu0
    %2592 = vmatprep.mubr.f32.mxu0 0.0
    %2593 = vmatmul.mubr.f32.gmra.mrb[0].mxu0 %v2290
    %v2594 = vpop.f32.mrb[0].mxu0
    %v2595 = vadd.f32 0.0, %v2594
    %v2596 = vpop.f32.mrb[0].mxu0
    %2597 = vmatprep.mubr.f32.mxu0 0.0
    %2598 = vmatmul.mubr.f32.gmra.mrb[0].mxu0 %v2293
    %v2599 = vpop.f32.mrb[0].mxu0
    %v2600 = vadd.f32 0.0, %v2599
    %v2601 = vpop.f32.mrb[0].mxu0
    %2602 = vmatprep.mubr.f32.mxu0 0.0
    %2603 = vmatmul.mubr.f32.gmra.mrb[0].mxu0 %v2296
    %v2604 = vpop.f32.mrb[0].mxu0
    %v2605 = vadd.f32 0.0, %v2604
    %v2606 = vpop.f32.mrb[0].mxu0
    %2607 = vmatprep.mubr.f32.mxu0 0.0
    %2608 = vmatmul.mubr.f32.gmra.mrb[0].mxu0 %v2299
    %v2609 = vpop.f32.mrb[0].mxu0
    %v2610 = vadd.f32 0.0, %v2609
    %v2611 = vpop.f32.mrb[0].mxu0
    %2612 = vmatprep.mubr.f32.mxu0 0.0
    %2613 = vmatmul.mubr.f32.gmra.mrb[0].mxu0 %v2302
    %v2614 = vpop.f32.mrb[0].mxu0
    %v2615 = vadd.f32 0.0, %v2614
    %v2616 = vpop.f32.mrb[0].mxu0
    %2617 = vmatprep.mubr.f32.mxu0 0.0
    %2618 = vmatmul.mubr.f32.gmra.mrb[0].mxu0 %v2305
    %v2619 = vpop.f32.mrb[0].mxu0
    %v2620 = vadd.f32 0.0, %v2619
    %v2621 = vpop.f32.mrb[0].mxu0
    %2622 = vmatprep.mubr.f32.mxu0 0.0
    %2623 = vmatmul.mubr.f32.gmra.mrb[0].mxu0 %v2308
    %v2624 = vpop.f32.mrb[0].mxu0
    %v2625 = vadd.f32 0.0, %v2624
    %v2626 = vpop.f32.mrb[0].mxu0
    %2627 = vmatprep.mubr.f32.mxu0 0.0
    %2628 = vmatmul.mubr.f32.gmra.mrb[0].mxu0 %v2311
    %v2629 = vpop.f32.mrb[0].mxu0
    %v2630 = vadd.f32 0.0, %v2629
    %v2631 = vpop.f32.mrb[0].mxu0
    %2632 = vmatprep.mubr.f32.mxu0 0.0
    %2633 = vmatmul.mubr.f32.gmra.mrb[0].mxu0 %v2314
    %v2634 = vpop.f32.mrb[0].mxu0
    %v2635 = vadd.f32 0.0, %v2634
    %v2636 = vpop.f32.mrb[0].mxu0
    %2637 = vmatprep.mubr.f32.mxu0 0.0
    %2638 = vmatmul.mubr.f32.gmra.mrb[0].mxu0 %v2317
    %v2639 = vpop.f32.mrb[0].mxu0
    %v2640 = vadd.f32 0.0, %v2639
    %v2641 = vpop.f32.mrb[0].mxu0
    %2642 = vmatprep.mubr.f32.mxu0 0.0
    %2643 = vmatmul.mubr.f32.gmra.mrb[0].mxu0 %v2320
    %v2644 = vpop.f32.mrb[0].mxu0
    %v2645 = vadd.f32 0.0, %v2644
    %v2646 = vpop.f32.mrb[0].mxu0
    %2647 = vmatprep.mubr.f32.mxu0 0.0
    %2648 = vmatmul.mubr.f32.gmra.mrb[0].mxu0 %v2323
    %v2649 = vpop.f32.mrb[0].mxu0
    %v2650 = vadd.f32 0.0, %v2649
    %v2651 = vpop.f32.mrb[0].mxu0
    %2652 = vmatprep.mubr.f32.mxu0 0.0
    %2653 = vmatmul.mubr.f32.gmra.mrb[0].mxu0 %v2326
    %v2654 = vpop.f32.mrb[0].mxu0
    %v2655 = vadd.f32 0.0, %v2654
    %v2656 = vpop.f32.mrb[0].mxu0
    %2657 = vmatprep.mubr.f32.mxu0 0.0
    %2658 = vmatmul.mubr.f32.gmra.mrb[0].mxu0 %v2329
    %v2659 = vpop.f32.mrb[0].mxu0
    %v2660 = vadd.f32 0.0, %v2659
    %v2661 = vpop.f32.mrb[0].mxu0
    %2662 = vmatprep.mubr.f32.mxu0 0.0
    %2663 = vmatmul.mubr.f32.gmra.mrb[0].mxu0 %v2332
    %v2664 = vpop.f32.mrb[0].mxu0
    %v2665 = vadd.f32 0.0, %v2664
    %v2666 = vpop.f32.mrb[0].mxu0
    %2667 = vmatprep.mubr.f32.mxu0 0.0
    %2668 = vmatmul.mubr.f32.gmra.mrb[0].mxu0 %v2335
    %v2669 = vpop.f32.mrb[0].mxu0
    %v2670 = vadd.f32 0.0, %v2669
    %v2671 = vpop.f32.mrb[0].mxu0
    %2672 = vmatprep.mubr.f32.mxu0 0.0
    %2673 = vmatmul.mubr.f32.gmra.mrb[0].mxu0 %v2338
    %v2674 = vpop.f32.mrb[0].mxu0
    %v2675 = vadd.f32 0.0, %v2674
    %v2676 = vpop.f32.mrb[0].mxu0
    %2677 = vmatprep.mubr.f32.mxu0 0.0
    %2678 = vmatmul.mubr.f32.gmra.mrb[0].mxu0 %v2341
    %v2679 = vpop.f32.mrb[0].mxu0
    %v2680 = vadd.f32 0.0, %v2679
    %v2681 = vpop.f32.mrb[0].mxu0
    %2682 = vmatprep.mubr.f32.mxu0 0.0
    %2683 = vmatmul.mubr.f32.gmra.mrb[0].mxu0 %v2344
    %v2684 = vpop.f32.mrb[0].mxu0
    %v2685 = vadd.f32 0.0, %v2684
    %v2686 = vpop.f32.mrb[0].mxu0
    %2687 = vmatprep.mubr.f32.mxu0 0.0
    %2688 = vmatmul.mubr.f32.gmra.mrb[0].mxu0 %v2347
    %v2689 = vpop.f32.mrb[0].mxu0
    %v2690 = vadd.f32 0.0, %v2689
    %v2691 = vpop.f32.mrb[0].mxu0
    %2692 = vmatprep.mubr.f32.mxu0 0.0
    %2693 = vmatmul.mubr.f32.gmra.mrb[0].mxu0 %v2350
    %v2694 = vpop.f32.mrb[0].mxu0
    %v2695 = vadd.f32 0.0, %v2694
    %v2696 = vpop.f32.mrb[0].mxu0
    %2697 = vmatprep.mubr.f32.mxu0 0.0
    %2698 = vmatmul.mubr.f32.gmra.mrb[0].mxu0 %v2353
    %v2699 = vpop.f32.mrb[0].mxu0
    %v2700 = vadd.f32 0.0, %v2699
    %v2701 = vpop.f32.mrb[0].mxu0
    %2702 = vmatprep.mubr.f32.mxu0 0.0
    %2703 = vmatmul.mubr.f32.gmra.mrb[0].mxu0 %v2356
    %v2704 = vpop.f32.mrb[0].mxu0
    %v2705 = vadd.f32 0.0, %v2704
    %v2706 = vpop.f32.mrb[0].mxu0
    %2707 = vmatprep.mubr.f32.mxu0 0.0
    %2708 = vmatmul.mubr.f32.gmra.mrb[0].mxu0 %v2359
    %v2709 = vpop.f32.mrb[0].mxu0
    %v2710 = vadd.f32 0.0, %v2709
    %v2711 = vpop.f32.mrb[0].mxu0
    %2712 = vmatprep.mubr.f32.mxu0 0.0
    %2713 = vmatmul.mubr.f32.gmra.mrb[0].mxu0 %v2362
    %v2714 = vpop.f32.mrb[0].mxu0
    %v2715 = vadd.f32 0.0, %v2714
    %v2716 = vpop.f32.mrb[0].mxu0
    %2717 = vmatprep.mubr.f32.mxu0 0.0
    %2718 = vmatmul.mubr.f32.gmra.mrb[0].mxu0 %v2365
    %v2719 = vpop.f32.mrb[0].mxu0
    %v2720 = vadd.f32 0.0, %v2719
    %v2721 = vpop.f32.mrb[0].mxu0
    %2722 = vmatprep.mubr.f32.mxu0 0.0
    %2723 = vmatmul.mubr.f32.gmra.mrb[0].mxu0 %v2368
    %v2724 = vpop.f32.mrb[0].mxu0
    %v2725 = vadd.f32 0.0, %v2724
    %v2726 = vpop.f32.mrb[0].mxu0
    %2727 = vmatprep.mubr.f32.mxu0 0.0
    %2728 = vmatmul.mubr.f32.gmra.mrb[0].mxu0 %v2371
    %v2729 = vpop.f32.mrb[0].mxu0
    %v2730 = vadd.f32 0.0, %v2729
    %v2731 = vpop.f32.mrb[0].mxu0
    %2732 = vmatprep.mubr.f32.mxu0 0.0
    %2733 = vmatmul.mubr.f32.gmra.mrb[0].mxu0 %v2374
    %v2734 = vpop.f32.mrb[0].mxu0
    %v2735 = vadd.f32 0.0, %v2734
    %v2736 = vpop.f32.mrb[0].mxu0
    %2737 = vmatprep.mubr.f32.mxu0 0.0
    %2738 = vmatmul.mubr.f32.gmra.mrb[0].mxu0 %v2377
    %v2739 = vpop.f32.mrb[0].mxu0
    %v2740 = vadd.f32 0.0, %v2739
    %v2741 = vpop.f32.mrb[0].mxu0
    %2742 = vmatprep.mubr.f32.mxu0 0.0
    %2743 = vmatmul.mubr.f32.gmra.mrb[0].mxu0 %v2380
    %v2744 = vpop.f32.mrb[0].mxu0
    %v2745 = vadd.f32 0.0, %v2744
    %v2746 = vpop.f32.mrb[0].mxu0
    %2747 = vmatprep.mubr.f32.mxu0 0.0
    %2748 = vmatmul.mubr.f32.gmra.mrb[0].mxu0 %v2383
    %v2749 = vpop.f32.mrb[0].mxu0
    %v2750 = vadd.f32 0.0, %v2749
    %v2751 = vpop.f32.mrb[0].mxu0
    %2752 = vmatprep.mubr.f32.mxu0 0.0
    %2753 = vmatmul.mubr.f32.gmra.mrb[0].mxu0 %v2386
    %v2754 = vpop.f32.mrb[0].mxu0
    %v2755 = vadd.f32 0.0, %v2754
    %v2756 = vpop.f32.mrb[0].mxu0
    %2757 = vmatprep.mubr.f32.mxu0 0.0
    %2758 = vmatmul.mubr.f32.gmra.mrb[0].mxu0 %v2389
    %v2759 = vpop.f32.mrb[0].mxu0
    %v2760 = vadd.f32 0.0, %v2759
    %v2761 = vpop.f32.mrb[0].mxu0
    %2762 = vmatprep.mubr.f32.mxu0 0.0
    %2763 = vmatmul.mubr.f32.gmra.mrb[0].mxu0 %v2392
    %v2764 = vpop.f32.mrb[0].mxu0
    %v2765 = vadd.f32 0.0, %v2764
    %v2766 = vpop.f32.mrb[0].mxu0
    %2767 = vmatprep.mubr.f32.mxu0 0.0
    %2768 = vmatmul.mubr.f32.gmra.mrb[0].mxu0 %v2395
    %v2769 = vpop.f32.mrb[0].mxu0
    %v2770 = vadd.f32 0.0, %v2769
    %v2771 = vpop.f32.mrb[0].mxu0
    %2772 = vmatprep.mubr.f32.mxu0 0.0
    %2773 = vmatmul.mubr.f32.gmra.mrb[0].mxu0 %v2398
    %v2774 = vpop.f32.mrb[0].mxu0
    %v2775 = vadd.f32 0.0, %v2774
    %v2776 = vpop.f32.mrb[0].mxu0
    %2777 = vmatprep.mubr.f32.mxu0 0.0
    %2778 = vmatmul.mubr.f32.gmra.mrb[0].mxu0 %v2401
    %v2779 = vpop.f32.mrb[0].mxu0
    %v2780 = vadd.f32 0.0, %v2779
    %v2781 = vpop.f32.mrb[0].mxu0
    %2782 = vmatprep.mubr.f32.mxu0 0.0
    %2783 = vmatmul.mubr.f32.gmra.mrb[0].mxu0 %v2404
    %v2784 = vpop.f32.mrb[0].mxu0
    %v2785 = vadd.f32 0.0, %v2784
    %v2786 = vpop.f32.mrb[0].mxu0
    %2787 = vmatprep.mubr.f32.mxu0 0.0
    %2788 = vmatmul.mubr.f32.gmra.mrb[0].mxu0 %v2407
    %v2789 = vpop.f32.mrb[0].mxu0
    %v2790 = vadd.f32 0.0, %v2789
    %v2791 = vpop.f32.mrb[0].mxu0
    %2792 = vmatprep.mubr.f32.mxu0 0.0
    %2793 = vmatmul.mubr.f32.gmra.mrb[0].mxu0 %v2410
    %v2794 = vpop.f32.mrb[0].mxu0
    %v2795 = vadd.f32 0.0, %v2794
    %v2796 = vpop.f32.mrb[0].mxu0
    %2797 = vmatprep.mubr.f32.mxu0 0.0
    %2798 = vmatmul.mubr.f32.gmra.mrb[0].mxu0 %v2413
    %v2799 = vpop.f32.mrb[0].mxu0
    %v2800 = vadd.f32 0.0, %v2799
    %v2801 = vpop.f32.mrb[0].mxu0
    %2802 = vmatprep.mubr.f32.mxu0 0.0
    %2803 = vmatmul.mubr.f32.gmra.mrb[0].mxu0 %v2416
    %v2804 = vpop.f32.mrb[0].mxu0
    %v2805 = vadd.f32 0.0, %v2804
    %v2806 = vpop.f32.mrb[0].mxu0
    %2807 = vmatprep.mubr.f32.mxu0 0.0
    %2808 = vmatmul.mubr.f32.gmra.mrb[0].mxu0 %v2419
    %v2809 = vpop.f32.mrb[0].mxu0
    %v2810 = vadd.f32 0.0, %v2809
    %v2811 = vpop.f32.mrb[0].mxu0
    %2812 = vmatprep.mubr.f32.mxu0 0.0
    %2813 = vmatmul.mubr.f32.gmra.mrb[0].mxu0 %v2422
    %v2814 = vpop.f32.mrb[0].mxu0
    %v2815 = vadd.f32 0.0, %v2814
    %v2816 = vpop.f32.mrb[0].mxu0
    %2817 = vmatprep.mubr.f32.mxu0 0.0
    %2818 = vmatmul.mubr.f32.gmra.mrb[0].mxu0 %v2425
    %v2819 = vpop.f32.mrb[0].mxu0
    %v2820 = vadd.f32 0.0, %v2819
    %v2821 = vpop.f32.mrb[0].mxu0
    %2822 = vmatprep.mubr.f32.mxu0 0.0
    %2823 = vmatmul.mubr.f32.gmra.mrb[0].mxu0 %v2428
    %v2824 = vpop.f32.mrb[0].mxu0
    %v2825 = vadd.f32 0.0, %v2824
    %v2826 = vpop.f32.mrb[0].mxu0
    %2827 = vmatprep.mubr.f32.mxu0 0.0
    %2828 = vmatmul.mubr.f32.gmra.mrb[0].mxu0 %v2431
    %v2829 = vpop.f32.mrb[0].mxu0
    %v2830 = vadd.f32 0.0, %v2829
    %v2831 = vpop.f32.mrb[0].mxu0
    %2832 = vmatprep.mubr.f32.mxu0 0.0
    %2833 = vmatmul.mubr.f32.gmra.mrb[0].mxu0 %v2434
    %v2834 = vpop.f32.mrb[0].mxu0
    %v2835 = vadd.f32 0.0, %v2834
    %v2836 = vpop.f32.mrb[0].mxu0
    %2837 = vmatprep.mubr.f32.mxu0 0.0
    %2838 = vmatmul.mubr.f32.gmra.mrb[0].mxu0 %v2437
    %v2839 = vpop.f32.mrb[0].mxu0
    %v2840 = vadd.f32 0.0, %v2839
    %v2841 = vpop.f32.mrb[0].mxu0
    %2842 = vmatprep.mubr.f32.mxu0 0.0
    %2843 = vmatmul.mubr.f32.gmra.mrb[0].mxu0 %v2440
    %v2844 = vpop.f32.mrb[0].mxu0
    %v2845 = vadd.f32 0.0, %v2844
    %v2846 = vpop.f32.mrb[0].mxu0
    %2847 = vmatprep.mubr.f32.mxu0 0.0
    %2848 = vmatmul.mubr.f32.gmra.mrb[0].mxu0 %v2443
    %v2849 = vpop.f32.mrb[0].mxu0
    %v2850 = vadd.f32 0.0, %v2849
    %v2851 = vpop.f32.mrb[0].mxu0
    %2852 = vmatprep.mubr.f32.mxu0 0.0
    %2853 = vmatmul.mubr.f32.gmra.mrb[0].mxu0 %v2446
    %v2854 = vpop.f32.mrb[0].mxu0
    %v2855 = vadd.f32 0.0, %v2854
    %v2856 = vpop.f32.mrb[0].mxu0
    %2857 = vmatprep.mubr.f32.mxu0 0.0
    %2858 = vmatmul.mubr.f32.gmra.mrb[0].mxu0 %v2449
    %v2859 = vpop.f32.mrb[0].mxu0
    %v2860 = vadd.f32 0.0, %v2859
    %v2861 = vpop.f32.mrb[0].mxu0
    %2862 = vmatprep.mubr.f32.mxu0 0.0
    %2863 = vmatmul.mubr.f32.gmra.mrb[0].mxu0 %v2452
    %v2864 = vpop.f32.mrb[0].mxu0
    %v2865 = vadd.f32 0.0, %v2864
    %v2866 = vpop.f32.mrb[0].mxu0
    %2867 = vmatprep.mubr.f32.mxu0 0.0
    %2868 = vmatmul.mubr.f32.gmra.mrb[0].mxu0 %v2455
    %v2869 = vpop.f32.mrb[0].mxu0
    %v2870 = vadd.f32 0.0, %v2869
    %v2871 = vpop.f32.mrb[0].mxu0
    %2872 = vmatprep.mubr.f32.mxu0 0.0
    %2873 = vmatmul.mubr.f32.gmra.mrb[0].mxu0 %v2458
    %v2874 = vpop.f32.mrb[0].mxu0
    %v2875 = vadd.f32 0.0, %v2874
    %v2876 = vpop.f32.mrb[0].mxu0
    %2877 = vmatprep.mubr.f32.mxu0 0.0
    %2878 = vmatmul.mubr.f32.gmra.mrb[0].mxu0 %v2461
    %v2879 = vpop.f32.mrb[0].mxu0
    %v2880 = vadd.f32 0.0, %v2879
    %v2881 = vpop.f32.mrb[0].mxu0
    %2882 = vmatprep.mubr.f32.mxu0 0.0
    %2883 = vmatmul.mubr.f32.gmra.mrb[0].mxu0 %v2464
    %v2884 = vpop.f32.mrb[0].mxu0
    %v2885 = vadd.f32 0.0, %v2884
    %v2886 = vpop.f32.mrb[0].mxu0
    %2887 = vmatprep.mubr.f32.mxu0 0.0
    %2888 = vmatmul.mubr.f32.gmra.mrb[0].mxu0 %v2467
    %v2889 = vpop.f32.mrb[0].mxu0
    %v2890 = vadd.f32 0.0, %v2889
    %v2891 = vpop.f32.mrb[0].mxu0
    %2892 = vmatprep.mubr.f32.mxu0 0.0
    %2893 = vmatmul.mubr.f32.gmra.mrb[0].mxu0 %v2470
    %v2894 = vpop.f32.mrb[0].mxu0
    %v2895 = vadd.f32 0.0, %v2894
    %v2896 = vpop.f32.mrb[0].mxu0
    %2897 = vmatprep.mubr.f32.mxu0 0.0
    %2898 = vmatmul.mubr.f32.gmra.mrb[0].mxu0 %v2473
    %v2899 = vpop.f32.mrb[0].mxu0
    %v2900 = vadd.f32 0.0, %v2899
    %v2901 = vpop.f32.mrb[0].mxu0
    %2902 = vdwg.mxu0
    %v2903 = vadd.f32 %v1827, %v2545
    %v2904 = vadd.f32 %v1832, %v2550
    %v2905 = vadd.f32 %v1837, %v2555
    %v2906 = vadd.f32 %v1842, %v2560
    %v2907 = vadd.f32 %v1847, %v2565
    %v2908 = vadd.f32 %v1852, %v2570
    %v2909 = vadd.f32 %v1857, %v2575
    %v2910 = vadd.f32 %v1862, %v2580
    %v2911 = vadd.f32 %v1867, %v2585
    %v2912 = vadd.f32 %v1872, %v2590
    %v2913 = vadd.f32 %v1877, %v2595
    %v2914 = vadd.f32 %v1882, %v2600
    %v2915 = vadd.f32 %v1887, %v2605
    %v2916 = vadd.f32 %v1892, %v2610
    %v2917 = vadd.f32 %v1897, %v2615
    %v2918 = vadd.f32 %v1902, %v2620
    %v2919 = vadd.f32 %v1907, %v2625
    %v2920 = vadd.f32 %v1912, %v2630
    %v2921 = vadd.f32 %v1917, %v2635
    %v2922 = vadd.f32 %v1922, %v2640
    %v2923 = vadd.f32 %v1927, %v2645
    %v2924 = vadd.f32 %v1932, %v2650
    %v2925 = vadd.f32 %v1937, %v2655
    %v2926 = vadd.f32 %v1942, %v2660
    %v2927 = vadd.f32 %v1947, %v2665
    %v2928 = vadd.f32 %v1952, %v2670
    %v2929 = vadd.f32 %v1957, %v2675
    %v2930 = vadd.f32 %v1962, %v2680
    %v2931 = vadd.f32 %v1967, %v2685
    %v2932 = vadd.f32 %v1972, %v2690
    %v2933 = vadd.f32 %v1977, %v2695
    %v2934 = vadd.f32 %v1982, %v2700
    %v2935 = vadd.f32 %v1987, %v2705
    %v2936 = vadd.f32 %v1992, %v2710
    %v2937 = vadd.f32 %v1997, %v2715
    %v2938 = vadd.f32 %v2002, %v2720
    %v2939 = vadd.f32 %v2007, %v2725
    %v2940 = vadd.f32 %v2012, %v2730
    %v2941 = vadd.f32 %v2017, %v2735
    %v2942 = vadd.f32 %v2022, %v2740
    %v2943 = vadd.f32 %v2027, %v2745
    %v2944 = vadd.f32 %v2032, %v2750
    %v2945 = vadd.f32 %v2037, %v2755
    %v2946 = vadd.f32 %v2042, %v2760
    %v2947 = vadd.f32 %v2047, %v2765
    %v2948 = vadd.f32 %v2052, %v2770
    %v2949 = vadd.f32 %v2057, %v2775
    %v2950 = vadd.f32 %v2062, %v2780
    %v2951 = vadd.f32 %v2067, %v2785
    %v2952 = vadd.f32 %v2072, %v2790
    %v2953 = vadd.f32 %v2077, %v2795
    %v2954 = vadd.f32 %v2082, %v2800
    %v2955 = vadd.f32 %v2087, %v2805
    %v2956 = vadd.f32 %v2092, %v2810
    %v2957 = vadd.f32 %v2097, %v2815
    %v2958 = vadd.f32 %v2102, %v2820
    %v2959 = vadd.f32 %v2107, %v2825
    %v2960 = vadd.f32 %v2112, %v2830
    %v2961 = vadd.f32 %v2117, %v2835
    %v2962 = vadd.f32 %v2122, %v2840
    %v2963 = vadd.f32 %v2127, %v2845
    %v2964 = vadd.f32 %v2132, %v2850
    %v2965 = vadd.f32 %v2137, %v2855
    %v2966 = vadd.f32 %v2142, %v2860
    %v2967 = vadd.f32 %v2147, %v2865
    %v2968 = vadd.f32 %v2152, %v2870
    %v2969 = vadd.f32 %v2157, %v2875
    %v2970 = vadd.f32 %v2162, %v2880
    %v2971 = vadd.f32 %v2167, %v2885
    %v2972 = vadd.f32 %v2172, %v2890
    %v2973 = vadd.f32 %v2177, %v2895
    %v2974 = vadd.f32 %v2182, %v2900
    %v2975 = vld [vmem:[%s0 + $0x12] sm:$0xff]
    %v2976 = vld [vmem:[%s0 + $0x1a] sm:$0xff]
    %v2977 = vld [vmem:[%s0 + $0x22] sm:$0xff]
    %v2978 = vld [vmem:[%s0 + $0x2a] sm:$0xff]
    %v2979 = vld [vmem:[%s0 + $0x32] sm:$0xff]
    %v2980 = vld [vmem:[%s0 + $0x3a] sm:$0xff]
    %v2981 = vld [vmem:[%s0 + $0x42] sm:$0xff]
    %v2982 = vld [vmem:[%s0 + $0x4a] sm:$0xff]
    %v2983 = vld [vmem:[%s0 + $0x52] sm:$0xff]
    %v2984 = vld [vmem:[%s0 + $0x5a] sm:$0xff]
    %v2985 = vld [vmem:[%s0 + $0x62] sm:$0xff]
    %v2986 = vld [vmem:[%s0 + $0x6a] sm:$0xff]
    %v2987 = vld [vmem:[%s0 + $0x72] sm:$0xff]
    %v2988 = vld [vmem:[%s0 + $0x7a] sm:$0xff]
    %v2989 = vld [vmem:[%s0 + $0x82] sm:$0xff]
    %v2990 = vld [vmem:[%s0 + $0x8a] sm:$0xff]
    %v2991 = vld [vmem:[%s0 + $0x92] sm:$0xff]
    %v2992 = vld [vmem:[%s0 + $0x9a] sm:$0xff]
    %v2993 = vld [vmem:[%s0 + $0xa2] sm:$0xff]
    %v2994 = vld [vmem:[%s0 + $0xaa] sm:$0xff]
    %v2995 = vld [vmem:[%s0 + $0xb2] sm:$0xff]
    %v2996 = vld [vmem:[%s0 + $0xba] sm:$0xff]
    %v2997 = vld [vmem:[%s0 + $0xc2] sm:$0xff]
    %v2998 = vld [vmem:[%s0 + $0xca] sm:$0xff]
    %v2999 = vld [vmem:[%s0 + $0xd2] sm:$0xff]
    %v3000 = vld [vmem:[%s0 + $0xda] sm:$0xff]
    %v3001 = vld [vmem:[%s0 + $0xe2] sm:$0xff]
    %v3002 = vld [vmem:[%s0 + $0xea] sm:$0xff]
    %v3003 = vld [vmem:[%s0 + $0xf2] sm:$0xff]
    %v3004 = vld [vmem:[%s0 + $0xfa] sm:$0xff]
    %v3005 = vld [vmem:[%s0 + $0x102] sm:$0xff]
    %v3006 = vld [vmem:[%s0 + $0x10a] sm:$0xff]
    %v3007 = vld [vmem:[%s0 + $0x112] sm:$0xff]
    %v3008 = vld [vmem:[%s0 + $0x11a] sm:$0xff]
    %v3009 = vld [vmem:[%s0 + $0x122] sm:$0xff]
    %v3010 = vld [vmem:[%s0 + $0x12a] sm:$0xff]
    %v3011 = vld [vmem:[%s0 + $0x15a] sm:$0xff]
    %v3012 = vld [vmem:[%s0 + $0x162] sm:$0xff]
    %v3013 = vld [vmem:[%s0 + $0x16a] sm:$0xff]
    %v3014 = vld [vmem:[%s0 + $0x172] sm:$0xff]
    %v3015 = vld [vmem:[%s0 + $0x17a] sm:$0xff]
    %v3016 = vld [vmem:[%s0 + $0x182] sm:$0xff]
    %v3017 = vld [vmem:[%s0 + $0x18a] sm:$0xff]
    %v3018 = vld [vmem:[%s0 + $0x192] sm:$0xff]
    %v3019 = vld [vmem:[%s0 + $0x19a] sm:$0xff]
    %v3020 = vld [vmem:[%s0 + $0x1a2] sm:$0xff]
    %v3021 = vld [vmem:[%s0 + $0x1aa] sm:$0xff]
    %v3022 = vld [vmem:[%s0 + $0x1b2] sm:$0xff]
    %v3023 = vld [vmem:[%s0 + $0x1ba] sm:$0xff]
    %v3024 = vld [vmem:[%s0 + $0x1c2] sm:$0xff]
    %v3025 = vld [vmem:[%s0 + $0x1ca] sm:$0xff]
    %v3026 = vld [vmem:[%s0 + $0x1d2] sm:$0xff]
    %v3027 = vld [vmem:[%s0 + $0x1da] sm:$0xff]
    %v3028 = vld [vmem:[%s0 + $0x1e2] sm:$0xff]
    %v3029 = vld [vmem:[%s0 + $0x1ea] sm:$0xff]
    %v3030 = vld [vmem:[%s0 + $0x1f2] sm:$0xff]
    %v3031 = vld [vmem:[%s0 + $0x1fa] sm:$0xff]
    %v3032 = vld [vmem:[%s0 + $0x202] sm:$0xff]
    %v3033 = vld [vmem:[%s0 + $0x20a] sm:$0xff]
    %v3034 = vld [vmem:[%s0 + $0x212] sm:$0xff]
    %v3035 = vld [vmem:[%s0 + $0x21a] sm:$0xff]
    %v3036 = vld [vmem:[%s0 + $0x222] sm:$0xff]
    %v3037 = vld [vmem:[%s0 + $0x22a] sm:$0xff]
    %v3038 = vld [vmem:[%s0 + $0x232] sm:$0xff]
    %v3039 = vld [vmem:[%s0 + $0x23a] sm:$0xff]
    %v3040 = vld [vmem:[%s0 + $0x242] sm:$0xff]
    %v3041 = vld [vmem:[%s0 + $0x24a] sm:$0xff]
    %v3042 = vld [vmem:[%s0 + $0x252] sm:$0xff]
    %v3043 = vld [vmem:[%s0 + $0x25a] sm:$0xff]
    %v3044 = vld [vmem:[%s0 + $0x262] sm:$0xff]
    %v3045 = vld [vmem:[%s0 + $0x26a] sm:$0xff]
    %v3046 = vld [vmem:[%s0 + $0x272] sm:$0xff]
    %s3047 = scalar_lea.vmem %s1, 12
    %v3048 = vld [vmem:[%s3047] sm:$0xf]
    %v3050 = vsel %vm895, %v2975, 0
    %v3053 = vsel %vm895, %v2976, 0
    %v3056 = vsel %vm895, %v2977, 0
    %v3059 = vsel %vm895, %v2978, 0
    %v3062 = vsel %vm895, %v2979, 0
    %v3065 = vsel %vm895, %v2980, 0
    %v3068 = vsel %vm895, %v2981, 0
    %v3071 = vsel %vm895, %v2982, 0
    %v3074 = vsel %vm895, %v2983, 0
    %v3077 = vsel %vm895, %v2984, 0
    %v3080 = vsel %vm895, %v2985, 0
    %v3083 = vsel %vm895, %v2986, 0
    %v3086 = vsel %vm895, %v2987, 0
    %v3089 = vsel %vm895, %v2988, 0
    %v3092 = vsel %vm895, %v2989, 0
    %v3095 = vsel %vm895, %v2990, 0
    %v3098 = vsel %vm895, %v2991, 0
    %v3101 = vsel %vm895, %v2992, 0
    %v3104 = vsel %vm895, %v2993, 0
    %v3107 = vsel %vm895, %v2994, 0
    %v3110 = vsel %vm895, %v2995, 0
    %v3113 = vsel %vm895, %v2996, 0
    %v3116 = vsel %vm895, %v2997, 0
    %v3119 = vsel %vm895, %v2998, 0
    %v3122 = vsel %vm895, %v2999, 0
    %v3125 = vsel %vm895, %v3000, 0
    %v3128 = vsel %vm895, %v3001, 0
    %v3131 = vsel %vm895, %v3002, 0
    %v3134 = vsel %vm895, %v3003, 0
    %v3137 = vsel %vm895, %v3004, 0
    %v3140 = vsel %vm895, %v3005, 0
    %v3143 = vsel %vm895, %v3006, 0
    %v3146 = vsel %vm895, %v3007, 0
    %v3149 = vsel %vm895, %v3008, 0
    %v3152 = vsel %vm895, %v3009, 0
    %v3155 = vsel %vm895, %v3010, 0
    %v3158 = vsel %vm895, %v3011, 0
    %v3161 = vsel %vm895, %v3012, 0
    %v3164 = vsel %vm895, %v3013, 0
    %v3167 = vsel %vm895, %v3014, 0
    %v3170 = vsel %vm895, %v3015, 0
    %v3173 = vsel %vm895, %v3016, 0
    %v3176 = vsel %vm895, %v3017, 0
    %v3179 = vsel %vm895, %v3018, 0
    %v3182 = vsel %vm895, %v3019, 0
    %v3185 = vsel %vm895, %v3020, 0
    %v3188 = vsel %vm895, %v3021, 0
    %v3191 = vsel %vm895, %v3022, 0
    %v3194 = vsel %vm895, %v3023, 0
    %v3197 = vsel %vm895, %v3024, 0
    %v3200 = vsel %vm895, %v3025, 0
    %v3203 = vsel %vm895, %v3026, 0
    %v3206 = vsel %vm895, %v3027, 0
    %v3209 = vsel %vm895, %v3028, 0
    %v3212 = vsel %vm895, %v3029, 0
    %v3215 = vsel %vm895, %v3030, 0
    %v3218 = vsel %vm895, %v3031, 0
    %v3221 = vsel %vm895, %v3032, 0
    %v3224 = vsel %vm895, %v3033, 0
    %v3227 = vsel %vm895, %v3034, 0
    %v3230 = vsel %vm895, %v3035, 0
    %v3233 = vsel %vm895, %v3036, 0
    %v3236 = vsel %vm895, %v3037, 0
    %v3239 = vsel %vm895, %v3038, 0
    %v3242 = vsel %vm895, %v3039, 0
    %v3245 = vsel %vm895, %v3040, 0
    %v3248 = vsel %vm895, %v3041, 0
    %v3251 = vsel %vm895, %v3042, 0
    %v3254 = vsel %vm895, %v3043, 0
    %v3257 = vsel %vm895, %v3044, 0
    %v3260 = vsel %vm895, %v3045, 0
    %v3263 = vsel %vm895, %v3046, 0
    %v3266 = vsel %vm1112, %v3048, 0
    %3268 = vmatprep.subr.mxu0 0.0
    %3269 = vmatpush1.msra.mxu0 %v3266
    %3270 = vmatprep.subr.mxu0 0.0
    %3271 = vmatpush1.msra.mxu0 0.0
    %3272 = vmatprep.subr.mxu0 0.0
    %3273 = vmatpush1.msra.mxu0 0.0
    %3274 = vmatprep.subr.mxu0 0.0
    %3275 = vmatpush1.msra.mxu0 0.0
    %3276 = vmatprep.subr.mxu0 0.0
    %3277 = vmatpush1.msra.mxu0 0.0
    %3278 = vmatprep.subr.mxu0 0.0
    %3279 = vmatpush1.msra.mxu0 0.0
    %3280 = vmatprep.subr.mxu0 0.0
    %3281 = vmatpush1.msra.mxu0 0.0
    %3282 = vmatprep.subr.mxu0 0.0
    %3283 = vmatpush1.msra.mxu0 0.0
    %3284 = vmatprep.subr.mxu0 0.0
    %3285 = vmatpush1.msra.mxu0 0.0
    %3286 = vmatprep.subr.mxu0 0.0
    %3287 = vmatpush1.msra.mxu0 0.0
    %3288 = vmatprep.subr.mxu0 0.0
    %3289 = vmatpush1.msra.mxu0 0.0
    %3290 = vmatprep.subr.mxu0 0.0
    %3291 = vmatpush1.msra.mxu0 0.0
    %3292 = vmatprep.subr.mxu0 0.0
    %3293 = vmatpush1.msra.mxu0 0.0
    %3294 = vmatprep.subr.mxu0 0.0
    %3295 = vmatpush1.msra.mxu0 0.0
    %3296 = vmatprep.subr.mxu0 0.0
    %3297 = vmatpush1.msra.mxu0 0.0
    %3298 = vmatprep.subr.mxu0 0.0
    %3299 = vmatpush1.msra.mxu0 0.0
    %3300 = vmatprep.subr.mxu0 0.0
    %3301 = vmatpush1.msra.mxu0 0.0
    %3302 = vmatprep.subr.mxu0 0.0
    %3303 = vmatpush1.msra.mxu0 0.0
    %3304 = vmatprep.subr.mxu0 0.0
    %3305 = vmatpush1.msra.mxu0 0.0
    %3306 = vmatprep.subr.mxu0 0.0
    %3307 = vmatpush1.msra.mxu0 0.0
    %3308 = vmatprep.subr.mxu0 0.0
    %3309 = vmatpush1.msra.mxu0 0.0
    %3310 = vmatprep.subr.mxu0 0.0
    %3311 = vmatpush1.msra.mxu0 0.0
    %3312 = vmatprep.subr.mxu0 0.0
    %3313 = vmatpush1.msra.mxu0 0.0
    %3314 = vmatprep.subr.mxu0 0.0
    %3315 = vmatpush1.msra.mxu0 0.0
    %3316 = vmatprep.subr.mxu0 0.0
    %3317 = vmatpush1.msra.mxu0 0.0
    %3318 = vmatprep.subr.mxu0 0.0
    %3319 = vmatpush1.msra.mxu0 0.0
    %3320 = vmatprep.subr.mxu0 0.0
    %3321 = vmatpush1.msra.mxu0 0.0
    %3322 = vmatprep.subr.mxu0 0.0
    %3323 = vmatpush1.msra.mxu0 0.0
    %3324 = vmatprep.subr.mxu0 0.0
    %3325 = vmatpush1.msra.mxu0 0.0
    %3326 = vmatprep.subr.mxu0 0.0
    %3327 = vmatpush1.msra.mxu0 0.0
    %3328 = vmatprep.subr.mxu0 0.0
    %3329 = vmatpush1.msra.mxu0 0.0
    %3330 = vmatprep.subr.mxu0 0.0
    %3331 = vmatpush1.msra.mxu0 0.0
    %3332 = vmatprep.mubr.f32.mxu0 0.0
    %3333 = vmatmul.mubr.f32.gmra.mrb[0].mxu0 %v3050
    %v3334 = vpop.f32.mrb[0].mxu0
    %v3335 = vadd.f32 0.0, %v3334
    %v3336 = vpop.f32.mrb[0].mxu0
    %3337 = vmatprep.mubr.f32.mxu0 0.0
    %3338 = vmatmul.mubr.f32.gmra.mrb[0].mxu0 %v3053
    %v3339 = vpop.f32.mrb[0].mxu0
    %v3340 = vadd.f32 0.0, %v3339
    %v3341 = vpop.f32.mrb[0].mxu0
    %3342 = vmatprep.mubr.f32.mxu0 0.0
    %3343 = vmatmul.mubr.f32.gmra.mrb[0].mxu0 %v3056
    %v3344 = vpop.f32.mrb[0].mxu0
    %v3345 = vadd.f32 0.0, %v3344
    %v3346 = vpop.f32.mrb[0].mxu0
    %3347 = vmatprep.mubr.f32.mxu0 0.0
    %3348 = vmatmul.mubr.f32.gmra.mrb[0].mxu0 %v3059
    %v3349 = vpop.f32.mrb[0].mxu0
    %v3350 = vadd.f32 0.0, %v3349
    %v3351 = vpop.f32.mrb[0].mxu0
    %3352 = vmatprep.mubr.f32.mxu0 0.0
    %3353 = vmatmul.mubr.f32.gmra.mrb[0].mxu0 %v3062
    %v3354 = vpop.f32.mrb[0].mxu0
    %v3355 = vadd.f32 0.0, %v3354
    %v3356 = vpop.f32.mrb[0].mxu0
    %3357 = vmatprep.mubr.f32.mxu0 0.0
    %3358 = vmatmul.mubr.f32.gmra.mrb[0].mxu0 %v3065
    %v3359 = vpop.f32.mrb[0].mxu0
    %v3360 = vadd.f32 0.0, %v3359
    %v3361 = vpop.f32.mrb[0].mxu0
    %3362 = vmatprep.mubr.f32.mxu0 0.0
    %3363 = vmatmul.mubr.f32.gmra.mrb[0].mxu0 %v3068
    %v3364 = vpop.f32.mrb[0].mxu0
    %v3365 = vadd.f32 0.0, %v3364
    %v3366 = vpop.f32.mrb[0].mxu0
    %3367 = vmatprep.mubr.f32.mxu0 0.0
    %3368 = vmatmul.mubr.f32.gmra.mrb[0].mxu0 %v3071
    %v3369 = vpop.f32.mrb[0].mxu0
    %v3370 = vadd.f32 0.0, %v3369
    %v3371 = vpop.f32.mrb[0].mxu0
    %3372 = vmatprep.mubr.f32.mxu0 0.0
    %3373 = vmatmul.mubr.f32.gmra.mrb[0].mxu0 %v3074
    %v3374 = vpop.f32.mrb[0].mxu0
    %v3375 = vadd.f32 0.0, %v3374
    %v3376 = vpop.f32.mrb[0].mxu0
    %3377 = vmatprep.mubr.f32.mxu0 0.0
    %3378 = vmatmul.mubr.f32.gmra.mrb[0].mxu0 %v3077
    %v3379 = vpop.f32.mrb[0].mxu0
    %v3380 = vadd.f32 0.0, %v3379
    %v3381 = vpop.f32.mrb[0].mxu0
    %3382 = vmatprep.mubr.f32.mxu0 0.0
    %3383 = vmatmul.mubr.f32.gmra.mrb[0].mxu0 %v3080
    %v3384 = vpop.f32.mrb[0].mxu0
    %v3385 = vadd.f32 0.0, %v3384
    %v3386 = vpop.f32.mrb[0].mxu0
    %3387 = vmatprep.mubr.f32.mxu0 0.0
    %3388 = vmatmul.mubr.f32.gmra.mrb[0].mxu0 %v3083
    %v3389 = vpop.f32.mrb[0].mxu0
    %v3390 = vadd.f32 0.0, %v3389
    %v3391 = vpop.f32.mrb[0].mxu0
    %3392 = vmatprep.mubr.f32.mxu0 0.0
    %3393 = vmatmul.mubr.f32.gmra.mrb[0].mxu0 %v3086
    %v3394 = vpop.f32.mrb[0].mxu0
    %v3395 = vadd.f32 0.0, %v3394
    %v3396 = vpop.f32.mrb[0].mxu0
    %3397 = vmatprep.mubr.f32.mxu0 0.0
    %3398 = vmatmul.mubr.f32.gmra.mrb[0].mxu0 %v3089
    %v3399 = vpop.f32.mrb[0].mxu0
    %v3400 = vadd.f32 0.0, %v3399
    %v3401 = vpop.f32.mrb[0].mxu0
    %3402 = vmatprep.mubr.f32.mxu0 0.0
    %3403 = vmatmul.mubr.f32.gmra.mrb[0].mxu0 %v3092
    %v3404 = vpop.f32.mrb[0].mxu0
    %v3405 = vadd.f32 0.0, %v3404
    %v3406 = vpop.f32.mrb[0].mxu0
    %3407 = vmatprep.mubr.f32.mxu0 0.0
    %3408 = vmatmul.mubr.f32.gmra.mrb[0].mxu0 %v3095
    %v3409 = vpop.f32.mrb[0].mxu0
    %v3410 = vadd.f32 0.0, %v3409
    %v3411 = vpop.f32.mrb[0].mxu0
    %3412 = vmatprep.mubr.f32.mxu0 0.0
    %3413 = vmatmul.mubr.f32.gmra.mrb[0].mxu0 %v3098
    %v3414 = vpop.f32.mrb[0].mxu0
    %v3415 = vadd.f32 0.0, %v3414
    %v3416 = vpop.f32.mrb[0].mxu0
    %3417 = vmatprep.mubr.f32.mxu0 0.0
    %3418 = vmatmul.mubr.f32.gmra.mrb[0].mxu0 %v3101
    %v3419 = vpop.f32.mrb[0].mxu0
    %v3420 = vadd.f32 0.0, %v3419
    %v3421 = vpop.f32.mrb[0].mxu0
    %3422 = vmatprep.mubr.f32.mxu0 0.0
    %3423 = vmatmul.mubr.f32.gmra.mrb[0].mxu0 %v3104
    %v3424 = vpop.f32.mrb[0].mxu0
    %v3425 = vadd.f32 0.0, %v3424
    %v3426 = vpop.f32.mrb[0].mxu0
    %3427 = vmatprep.mubr.f32.mxu0 0.0
    %3428 = vmatmul.mubr.f32.gmra.mrb[0].mxu0 %v3107
    %v3429 = vpop.f32.mrb[0].mxu0
    %v3430 = vadd.f32 0.0, %v3429
    %v3431 = vpop.f32.mrb[0].mxu0
    %3432 = vmatprep.mubr.f32.mxu0 0.0
    %3433 = vmatmul.mubr.f32.gmra.mrb[0].mxu0 %v3110
    %v3434 = vpop.f32.mrb[0].mxu0
    %v3435 = vadd.f32 0.0, %v3434
    %v3436 = vpop.f32.mrb[0].mxu0
    %3437 = vmatprep.mubr.f32.mxu0 0.0
    %3438 = vmatmul.mubr.f32.gmra.mrb[0].mxu0 %v3113
    %v3439 = vpop.f32.mrb[0].mxu0
    %v3440 = vadd.f32 0.0, %v3439
    %v3441 = vpop.f32.mrb[0].mxu0
    %3442 = vmatprep.mubr.f32.mxu0 0.0
    %3443 = vmatmul.mubr.f32.gmra.mrb[0].mxu0 %v3116
    %v3444 = vpop.f32.mrb[0].mxu0
    %v3445 = vadd.f32 0.0, %v3444
    %v3446 = vpop.f32.mrb[0].mxu0
    %3447 = vmatprep.mubr.f32.mxu0 0.0
    %3448 = vmatmul.mubr.f32.gmra.mrb[0].mxu0 %v3119
    %v3449 = vpop.f32.mrb[0].mxu0
    %v3450 = vadd.f32 0.0, %v3449
    %v3451 = vpop.f32.mrb[0].mxu0
    %3452 = vmatprep.mubr.f32.mxu0 0.0
    %3453 = vmatmul.mubr.f32.gmra.mrb[0].mxu0 %v3122
    %v3454 = vpop.f32.mrb[0].mxu0
    %v3455 = vadd.f32 0.0, %v3454
    %v3456 = vpop.f32.mrb[0].mxu0
    %3457 = vmatprep.mubr.f32.mxu0 0.0
    %3458 = vmatmul.mubr.f32.gmra.mrb[0].mxu0 %v3125
    %v3459 = vpop.f32.mrb[0].mxu0
    %v3460 = vadd.f32 0.0, %v3459
    %v3461 = vpop.f32.mrb[0].mxu0
    %3462 = vmatprep.mubr.f32.mxu0 0.0
    %3463 = vmatmul.mubr.f32.gmra.mrb[0].mxu0 %v3128
    %v3464 = vpop.f32.mrb[0].mxu0
    %v3465 = vadd.f32 0.0, %v3464
    %v3466 = vpop.f32.mrb[0].mxu0
    %3467 = vmatprep.mubr.f32.mxu0 0.0
    %3468 = vmatmul.mubr.f32.gmra.mrb[0].mxu0 %v3131
    %v3469 = vpop.f32.mrb[0].mxu0
    %v3470 = vadd.f32 0.0, %v3469
    %v3471 = vpop.f32.mrb[0].mxu0
    %3472 = vmatprep.mubr.f32.mxu0 0.0
    %3473 = vmatmul.mubr.f32.gmra.mrb[0].mxu0 %v3134
    %v3474 = vpop.f32.mrb[0].mxu0
    %v3475 = vadd.f32 0.0, %v3474
    %v3476 = vpop.f32.mrb[0].mxu0
    %3477 = vmatprep.mubr.f32.mxu0 0.0
    %3478 = vmatmul.mubr.f32.gmra.mrb[0].mxu0 %v3137
    %v3479 = vpop.f32.mrb[0].mxu0
    %v3480 = vadd.f32 0.0, %v3479
    %v3481 = vpop.f32.mrb[0].mxu0
    %3482 = vmatprep.mubr.f32.mxu0 0.0
    %3483 = vmatmul.mubr.f32.gmra.mrb[0].mxu0 %v3140
    %v3484 = vpop.f32.mrb[0].mxu0
    %v3485 = vadd.f32 0.0, %v3484
    %v3486 = vpop.f32.mrb[0].mxu0
    %3487 = vmatprep.mubr.f32.mxu0 0.0
    %3488 = vmatmul.mubr.f32.gmra.mrb[0].mxu0 %v3143
    %v3489 = vpop.f32.mrb[0].mxu0
    %v3490 = vadd.f32 0.0, %v3489
    %v3491 = vpop.f32.mrb[0].mxu0
    %3492 = vmatprep.mubr.f32.mxu0 0.0
    %3493 = vmatmul.mubr.f32.gmra.mrb[0].mxu0 %v3146
    %v3494 = vpop.f32.mrb[0].mxu0
    %v3495 = vadd.f32 0.0, %v3494
    %v3496 = vpop.f32.mrb[0].mxu0
    %3497 = vmatprep.mubr.f32.mxu0 0.0
    %3498 = vmatmul.mubr.f32.gmra.mrb[0].mxu0 %v3149
    %v3499 = vpop.f32.mrb[0].mxu0
    %v3500 = vadd.f32 0.0, %v3499
    %v3501 = vpop.f32.mrb[0].mxu0
    %3502 = vmatprep.mubr.f32.mxu0 0.0
    %3503 = vmatmul.mubr.f32.gmra.mrb[0].mxu0 %v3152
    %v3504 = vpop.f32.mrb[0].mxu0
    %v3505 = vadd.f32 0.0, %v3504
    %v3506 = vpop.f32.mrb[0].mxu0
    %3507 = vmatprep.mubr.f32.mxu0 0.0
    %3508 = vmatmul.mubr.f32.gmra.mrb[0].mxu0 %v3155
    %v3509 = vpop.f32.mrb[0].mxu0
    %v3510 = vadd.f32 0.0, %v3509
    %v3511 = vpop.f32.mrb[0].mxu0
    %3512 = vmatprep.mubr.f32.mxu0 0.0
    %3513 = vmatmul.mubr.f32.gmra.mrb[0].mxu0 %v3158
    %v3514 = vpop.f32.mrb[0].mxu0
    %v3515 = vadd.f32 0.0, %v3514
    %v3516 = vpop.f32.mrb[0].mxu0
    %3517 = vmatprep.mubr.f32.mxu0 0.0
    %3518 = vmatmul.mubr.f32.gmra.mrb[0].mxu0 %v3161
    %v3519 = vpop.f32.mrb[0].mxu0
    %v3520 = vadd.f32 0.0, %v3519
    %v3521 = vpop.f32.mrb[0].mxu0
    %3522 = vmatprep.mubr.f32.mxu0 0.0
    %3523 = vmatmul.mubr.f32.gmra.mrb[0].mxu0 %v3164
    %v3524 = vpop.f32.mrb[0].mxu0
    %v3525 = vadd.f32 0.0, %v3524
    %v3526 = vpop.f32.mrb[0].mxu0
    %3527 = vmatprep.mubr.f32.mxu0 0.0
    %3528 = vmatmul.mubr.f32.gmra.mrb[0].mxu0 %v3167
    %v3529 = vpop.f32.mrb[0].mxu0
    %v3530 = vadd.f32 0.0, %v3529
    %v3531 = vpop.f32.mrb[0].mxu0
    %3532 = vmatprep.mubr.f32.mxu0 0.0
    %3533 = vmatmul.mubr.f32.gmra.mrb[0].mxu0 %v3170
    %v3534 = vpop.f32.mrb[0].mxu0
    %v3535 = vadd.f32 0.0, %v3534
    %v3536 = vpop.f32.mrb[0].mxu0
    %3537 = vmatprep.mubr.f32.mxu0 0.0
    %3538 = vmatmul.mubr.f32.gmra.mrb[0].mxu0 %v3173
    %v3539 = vpop.f32.mrb[0].mxu0
    %v3540 = vadd.f32 0.0, %v3539
    %v3541 = vpop.f32.mrb[0].mxu0
    %3542 = vmatprep.mubr.f32.mxu0 0.0
    %3543 = vmatmul.mubr.f32.gmra.mrb[0].mxu0 %v3176
    %v3544 = vpop.f32.mrb[0].mxu0
    %v3545 = vadd.f32 0.0, %v3544
    %v3546 = vpop.f32.mrb[0].mxu0
    %3547 = vmatprep.mubr.f32.mxu0 0.0
    %3548 = vmatmul.mubr.f32.gmra.mrb[0].mxu0 %v3179
    %v3549 = vpop.f32.mrb[0].mxu0
    %v3550 = vadd.f32 0.0, %v3549
    %v3551 = vpop.f32.mrb[0].mxu0
    %3552 = vmatprep.mubr.f32.mxu0 0.0
    %3553 = vmatmul.mubr.f32.gmra.mrb[0].mxu0 %v3182
    %v3554 = vpop.f32.mrb[0].mxu0
    %v3555 = vadd.f32 0.0, %v3554
    %v3556 = vpop.f32.mrb[0].mxu0
    %3557 = vmatprep.mubr.f32.mxu0 0.0
    %3558 = vmatmul.mubr.f32.gmra.mrb[0].mxu0 %v3185
    %v3559 = vpop.f32.mrb[0].mxu0
    %v3560 = vadd.f32 0.0, %v3559
    %v3561 = vpop.f32.mrb[0].mxu0
    %3562 = vmatprep.mubr.f32.mxu0 0.0
    %3563 = vmatmul.mubr.f32.gmra.mrb[0].mxu0 %v3188
    %v3564 = vpop.f32.mrb[0].mxu0
    %v3565 = vadd.f32 0.0, %v3564
    %v3566 = vpop.f32.mrb[0].mxu0
    %3567 = vmatprep.mubr.f32.mxu0 0.0
    %3568 = vmatmul.mubr.f32.gmra.mrb[0].mxu0 %v3191
    %v3569 = vpop.f32.mrb[0].mxu0
    %v3570 = vadd.f32 0.0, %v3569
    %v3571 = vpop.f32.mrb[0].mxu0
    %3572 = vmatprep.mubr.f32.mxu0 0.0
    %3573 = vmatmul.mubr.f32.gmra.mrb[0].mxu0 %v3194
    %v3574 = vpop.f32.mrb[0].mxu0
    %v3575 = vadd.f32 0.0, %v3574
    %v3576 = vpop.f32.mrb[0].mxu0
    %3577 = vmatprep.mubr.f32.mxu0 0.0
    %3578 = vmatmul.mubr.f32.gmra.mrb[0].mxu0 %v3197
    %v3579 = vpop.f32.mrb[0].mxu0
    %v3580 = vadd.f32 0.0, %v3579
    %v3581 = vpop.f32.mrb[0].mxu0
    %3582 = vmatprep.mubr.f32.mxu0 0.0
    %3583 = vmatmul.mubr.f32.gmra.mrb[0].mxu0 %v3200
    %v3584 = vpop.f32.mrb[0].mxu0
    %v3585 = vadd.f32 0.0, %v3584
    %v3586 = vpop.f32.mrb[0].mxu0
    %3587 = vmatprep.mubr.f32.mxu0 0.0
    %3588 = vmatmul.mubr.f32.gmra.mrb[0].mxu0 %v3203
    %v3589 = vpop.f32.mrb[0].mxu0
    %v3590 = vadd.f32 0.0, %v3589
    %v3591 = vpop.f32.mrb[0].mxu0
    %3592 = vmatprep.mubr.f32.mxu0 0.0
    %3593 = vmatmul.mubr.f32.gmra.mrb[0].mxu0 %v3206
    %v3594 = vpop.f32.mrb[0].mxu0
    %v3595 = vadd.f32 0.0, %v3594
    %v3596 = vpop.f32.mrb[0].mxu0
    %3597 = vmatprep.mubr.f32.mxu0 0.0
    %3598 = vmatmul.mubr.f32.gmra.mrb[0].mxu0 %v3209
    %v3599 = vpop.f32.mrb[0].mxu0
    %v3600 = vadd.f32 0.0, %v3599
    %v3601 = vpop.f32.mrb[0].mxu0
    %3602 = vmatprep.mubr.f32.mxu0 0.0
    %3603 = vmatmul.mubr.f32.gmra.mrb[0].mxu0 %v3212
    %v3604 = vpop.f32.mrb[0].mxu0
    %v3605 = vadd.f32 0.0, %v3604
    %v3606 = vpop.f32.mrb[0].mxu0
    %3607 = vmatprep.mubr.f32.mxu0 0.0
    %3608 = vmatmul.mubr.f32.gmra.mrb[0].mxu0 %v3215
    %v3609 = vpop.f32.mrb[0].mxu0
    %v3610 = vadd.f32 0.0, %v3609
    %v3611 = vpop.f32.mrb[0].mxu0
    %3612 = vmatprep.mubr.f32.mxu0 0.0
    %3613 = vmatmul.mubr.f32.gmra.mrb[0].mxu0 %v3218
    %v3614 = vpop.f32.mrb[0].mxu0
    %v3615 = vadd.f32 0.0, %v3614
    %v3616 = vpop.f32.mrb[0].mxu0
    %3617 = vmatprep.mubr.f32.mxu0 0.0
    %3618 = vmatmul.mubr.f32.gmra.mrb[0].mxu0 %v3221
    %v3619 = vpop.f32.mrb[0].mxu0
    %v3620 = vadd.f32 0.0, %v3619
    %v3621 = vpop.f32.mrb[0].mxu0
    %3622 = vmatprep.mubr.f32.mxu0 0.0
    %3623 = vmatmul.mubr.f32.gmra.mrb[0].mxu0 %v3224
    %v3624 = vpop.f32.mrb[0].mxu0
    %v3625 = vadd.f32 0.0, %v3624
    %v3626 = vpop.f32.mrb[0].mxu0
    %3627 = vmatprep.mubr.f32.mxu0 0.0
    %3628 = vmatmul.mubr.f32.gmra.mrb[0].mxu0 %v3227
    %v3629 = vpop.f32.mrb[0].mxu0
    %v3630 = vadd.f32 0.0, %v3629
    %v3631 = vpop.f32.mrb[0].mxu0
    %3632 = vmatprep.mubr.f32.mxu0 0.0
    %3633 = vmatmul.mubr.f32.gmra.mrb[0].mxu0 %v3230
    %v3634 = vpop.f32.mrb[0].mxu0
    %v3635 = vadd.f32 0.0, %v3634
    %v3636 = vpop.f32.mrb[0].mxu0
    %3637 = vmatprep.mubr.f32.mxu0 0.0
    %3638 = vmatmul.mubr.f32.gmra.mrb[0].mxu0 %v3233
    %v3639 = vpop.f32.mrb[0].mxu0
    %v3640 = vadd.f32 0.0, %v3639
    %v3641 = vpop.f32.mrb[0].mxu0
    %3642 = vmatprep.mubr.f32.mxu0 0.0
    %3643 = vmatmul.mubr.f32.gmra.mrb[0].mxu0 %v3236
    %v3644 = vpop.f32.mrb[0].mxu0
    %v3645 = vadd.f32 0.0, %v3644
    %v3646 = vpop.f32.mrb[0].mxu0
    %3647 = vmatprep.mubr.f32.mxu0 0.0
    %3648 = vmatmul.mubr.f32.gmra.mrb[0].mxu0 %v3239
    %v3649 = vpop.f32.mrb[0].mxu0
    %v3650 = vadd.f32 0.0, %v3649
    %v3651 = vpop.f32.mrb[0].mxu0
    %3652 = vmatprep.mubr.f32.mxu0 0.0
    %3653 = vmatmul.mubr.f32.gmra.mrb[0].mxu0 %v3242
    %v3654 = vpop.f32.mrb[0].mxu0
    %v3655 = vadd.f32 0.0, %v3654
    %v3656 = vpop.f32.mrb[0].mxu0
    %3657 = vmatprep.mubr.f32.mxu0 0.0
    %3658 = vmatmul.mubr.f32.gmra.mrb[0].mxu0 %v3245
    %v3659 = vpop.f32.mrb[0].mxu0
    %v3660 = vadd.f32 0.0, %v3659
    %v3661 = vpop.f32.mrb[0].mxu0
    %3662 = vmatprep.mubr.f32.mxu0 0.0
    %3663 = vmatmul.mubr.f32.gmra.mrb[0].mxu0 %v3248
    %v3664 = vpop.f32.mrb[0].mxu0
    %v3665 = vadd.f32 0.0, %v3664
    %v3666 = vpop.f32.mrb[0].mxu0
    %3667 = vmatprep.mubr.f32.mxu0 0.0
    %3668 = vmatmul.mubr.f32.gmra.mrb[0].mxu0 %v3251
    %v3669 = vpop.f32.mrb[0].mxu0
    %v3670 = vadd.f32 0.0, %v3669
    %v3671 = vpop.f32.mrb[0].mxu0
    %3672 = vmatprep.mubr.f32.mxu0 0.0
    %3673 = vmatmul.mubr.f32.gmra.mrb[0].mxu0 %v3254
    %v3674 = vpop.f32.mrb[0].mxu0
    %v3675 = vadd.f32 0.0, %v3674
    %v3676 = vpop.f32.mrb[0].mxu0
    %3677 = vmatprep.mubr.f32.mxu0 0.0
    %3678 = vmatmul.mubr.f32.gmra.mrb[0].mxu0 %v3257
    %v3679 = vpop.f32.mrb[0].mxu0
    %v3680 = vadd.f32 0.0, %v3679
    %v3681 = vpop.f32.mrb[0].mxu0
    %3682 = vmatprep.mubr.f32.mxu0 0.0
    %3683 = vmatmul.mubr.f32.gmra.mrb[0].mxu0 %v3260
    %v3684 = vpop.f32.mrb[0].mxu0
    %v3685 = vadd.f32 0.0, %v3684
    %v3686 = vpop.f32.mrb[0].mxu0
    %3687 = vmatprep.mubr.f32.mxu0 0.0
    %3688 = vmatmul.mubr.f32.gmra.mrb[0].mxu0 %v3263
    %v3689 = vpop.f32.mrb[0].mxu0
    %v3690 = vadd.f32 0.0, %v3689
    %v3691 = vpop.f32.mrb[0].mxu0
    %3692 = vdwg.mxu0
    %v3693 = vadd.f32 %v2903, %v3335
    %v3694 = vadd.f32 %v2904, %v3340
    %v3695 = vadd.f32 %v2905, %v3345
    %v3696 = vadd.f32 %v2906, %v3350
    %v3697 = vadd.f32 %v2907, %v3355
    %v3698 = vadd.f32 %v2908, %v3360
    %v3699 = vadd.f32 %v2909, %v3365
    %v3700 = vadd.f32 %v2910, %v3370
    %v3701 = vadd.f32 %v2911, %v3375
    %v3702 = vadd.f32 %v2912, %v3380
    %v3703 = vadd.f32 %v2913, %v3385
    %v3704 = vadd.f32 %v2914, %v3390
    %v3705 = vadd.f32 %v2915, %v3395
    %v3706 = vadd.f32 %v2916, %v3400
    %v3707 = vadd.f32 %v2917, %v3405
    %v3708 = vadd.f32 %v2918, %v3410
    %v3709 = vadd.f32 %v2919, %v3415
    %v3710 = vadd.f32 %v2920, %v3420
    %v3711 = vadd.f32 %v2921, %v3425
    %v3712 = vadd.f32 %v2922, %v3430
    %v3713 = vadd.f32 %v2923, %v3435
    %v3714 = vadd.f32 %v2924, %v3440
    %v3715 = vadd.f32 %v2925, %v3445
    %v3716 = vadd.f32 %v2926, %v3450
    %v3717 = vadd.f32 %v2927, %v3455
    %v3718 = vadd.f32 %v2928, %v3460
    %v3719 = vadd.f32 %v2929, %v3465
    %v3720 = vadd.f32 %v2930, %v3470
    %v3721 = vadd.f32 %v2931, %v3475
    %v3722 = vadd.f32 %v2932, %v3480
    %v3723 = vadd.f32 %v2933, %v3485
    %v3724 = vadd.f32 %v2934, %v3490
    %v3725 = vadd.f32 %v2935, %v3495
    %v3726 = vadd.f32 %v2936, %v3500
    %v3727 = vadd.f32 %v2937, %v3505
    %v3728 = vadd.f32 %v2938, %v3510
    %v3729 = vadd.f32 %v2939, %v3515
    %v3730 = vadd.f32 %v2940, %v3520
    %v3731 = vadd.f32 %v2941, %v3525
    %v3732 = vadd.f32 %v2942, %v3530
    %v3733 = vadd.f32 %v2943, %v3535
    %v3734 = vadd.f32 %v2944, %v3540
    %v3735 = vadd.f32 %v2945, %v3545
    %v3736 = vadd.f32 %v2946, %v3550
    %v3737 = vadd.f32 %v2947, %v3555
    %v3738 = vadd.f32 %v2948, %v3560
    %v3739 = vadd.f32 %v2949, %v3565
    %v3740 = vadd.f32 %v2950, %v3570
    %v3741 = vadd.f32 %v2951, %v3575
    %v3742 = vadd.f32 %v2952, %v3580
    %v3743 = vadd.f32 %v2953, %v3585
    %v3744 = vadd.f32 %v2954, %v3590
    %v3745 = vadd.f32 %v2955, %v3595
    %v3746 = vadd.f32 %v2956, %v3600
    %v3747 = vadd.f32 %v2957, %v3605
    %v3748 = vadd.f32 %v2958, %v3610
    %v3749 = vadd.f32 %v2959, %v3615
    %v3750 = vadd.f32 %v2960, %v3620
    %v3751 = vadd.f32 %v2961, %v3625
    %v3752 = vadd.f32 %v2962, %v3630
    %v3753 = vadd.f32 %v2963, %v3635
    %v3754 = vadd.f32 %v2964, %v3640
    %v3755 = vadd.f32 %v2965, %v3645
    %v3756 = vadd.f32 %v2966, %v3650
    %v3757 = vadd.f32 %v2967, %v3655
    %v3758 = vadd.f32 %v2968, %v3660
    %v3759 = vadd.f32 %v2969, %v3665
    %v3760 = vadd.f32 %v2970, %v3670
    %v3761 = vadd.f32 %v2971, %v3675
    %v3762 = vadd.f32 %v2972, %v3680
    %v3763 = vadd.f32 %v2973, %v3685
    %v3764 = vadd.f32 %v2974, %v3690
    %v3765 = vld [vmem:[%s0 + $0x13] sm:$0xff]
    %v3766 = vld [vmem:[%s0 + $0x1b] sm:$0xff]
    %v3767 = vld [vmem:[%s0 + $0x23] sm:$0xff]
    %v3768 = vld [vmem:[%s0 + $0x2b] sm:$0xff]
    %v3769 = vld [vmem:[%s0 + $0x33] sm:$0xff]
    %v3770 = vld [vmem:[%s0 + $0x3b] sm:$0xff]
    %v3771 = vld [vmem:[%s0 + $0x43] sm:$0xff]
    %v3772 = vld [vmem:[%s0 + $0x4b] sm:$0xff]
    %v3773 = vld [vmem:[%s0 + $0x53] sm:$0xff]
    %v3774 = vld [vmem:[%s0 + $0x5b] sm:$0xff]
    %v3775 = vld [vmem:[%s0 + $0x63] sm:$0xff]
    %v3776 = vld [vmem:[%s0 + $0x6b] sm:$0xff]
    %v3777 = vld [vmem:[%s0 + $0x73] sm:$0xff]
    %v3778 = vld [vmem:[%s0 + $0x7b] sm:$0xff]
    %v3779 = vld [vmem:[%s0 + $0x83] sm:$0xff]
    %v3780 = vld [vmem:[%s0 + $0x8b] sm:$0xff]
    %v3781 = vld [vmem:[%s0 + $0x93] sm:$0xff]
    %v3782 = vld [vmem:[%s0 + $0x9b] sm:$0xff]
    %v3783 = vld [vmem:[%s0 + $0xa3] sm:$0xff]
    %v3784 = vld [vmem:[%s0 + $0xab] sm:$0xff]
    %v3785 = vld [vmem:[%s0 + $0xb3] sm:$0xff]
    %v3786 = vld [vmem:[%s0 + $0xbb] sm:$0xff]
    %v3787 = vld [vmem:[%s0 + $0xc3] sm:$0xff]
    %v3788 = vld [vmem:[%s0 + $0xcb] sm:$0xff]
    %v3789 = vld [vmem:[%s0 + $0xd3] sm:$0xff]
    %v3790 = vld [vmem:[%s0 + $0xdb] sm:$0xff]
    %v3791 = vld [vmem:[%s0 + $0xe3] sm:$0xff]
    %v3792 = vld [vmem:[%s0 + $0xeb] sm:$0xff]
    %v3793 = vld [vmem:[%s0 + $0xf3] sm:$0xff]
    %v3794 = vld [vmem:[%s0 + $0xfb] sm:$0xff]
    %v3795 = vld [vmem:[%s0 + $0x103] sm:$0xff]
    %v3796 = vld [vmem:[%s0 + $0x10b] sm:$0xff]
    %v3797 = vld [vmem:[%s0 + $0x113] sm:$0xff]
    %v3798 = vld [vmem:[%s0 + $0x11b] sm:$0xff]
    %v3799 = vld [vmem:[%s0 + $0x123] sm:$0xff]
    %v3800 = vld [vmem:[%s0 + $0x12b] sm:$0xff]
    %v3801 = vld [vmem:[%s0 + $0x15b] sm:$0xff]
    %v3802 = vld [vmem:[%s0 + $0x163] sm:$0xff]
    %v3803 = vld [vmem:[%s0 + $0x16b] sm:$0xff]
    %v3804 = vld [vmem:[%s0 + $0x173] sm:$0xff]
    %v3805 = vld [vmem:[%s0 + $0x17b] sm:$0xff]
    %v3806 = vld [vmem:[%s0 + $0x183] sm:$0xff]
    %v3807 = vld [vmem:[%s0 + $0x18b] sm:$0xff]
    %v3808 = vld [vmem:[%s0 + $0x193] sm:$0xff]
    %v3809 = vld [vmem:[%s0 + $0x19b] sm:$0xff]
    %v3810 = vld [vmem:[%s0 + $0x1a3] sm:$0xff]
    %v3811 = vld [vmem:[%s0 + $0x1ab] sm:$0xff]
    %v3812 = vld [vmem:[%s0 + $0x1b3] sm:$0xff]
    %v3813 = vld [vmem:[%s0 + $0x1bb] sm:$0xff]
    %v3814 = vld [vmem:[%s0 + $0x1c3] sm:$0xff]
    %v3815 = vld [vmem:[%s0 + $0x1cb] sm:$0xff]
    %v3816 = vld [vmem:[%s0 + $0x1d3] sm:$0xff]
    %v3817 = vld [vmem:[%s0 + $0x1db] sm:$0xff]
    %v3818 = vld [vmem:[%s0 + $0x1e3] sm:$0xff]
    %v3819 = vld [vmem:[%s0 + $0x1eb] sm:$0xff]
    %v3820 = vld [vmem:[%s0 + $0x1f3] sm:$0xff]
    %v3821 = vld [vmem:[%s0 + $0x1fb] sm:$0xff]
    %v3822 = vld [vmem:[%s0 + $0x203] sm:$0xff]
    %v3823 = vld [vmem:[%s0 + $0x20b] sm:$0xff]
    %v3824 = vld [vmem:[%s0 + $0x213] sm:$0xff]
    %v3825 = vld [vmem:[%s0 + $0x21b] sm:$0xff]
    %v3826 = vld [vmem:[%s0 + $0x223] sm:$0xff]
    %v3827 = vld [vmem:[%s0 + $0x22b] sm:$0xff]
    %v3828 = vld [vmem:[%s0 + $0x233] sm:$0xff]
    %v3829 = vld [vmem:[%s0 + $0x23b] sm:$0xff]
    %v3830 = vld [vmem:[%s0 + $0x243] sm:$0xff]
    %v3831 = vld [vmem:[%s0 + $0x24b] sm:$0xff]
    %v3832 = vld [vmem:[%s0 + $0x253] sm:$0xff]
    %v3833 = vld [vmem:[%s0 + $0x25b] sm:$0xff]
    %v3834 = vld [vmem:[%s0 + $0x263] sm:$0xff]
    %v3835 = vld [vmem:[%s0 + $0x26b] sm:$0xff]
    %v3836 = vld [vmem:[%s0 + $0x273] sm:$0xff]
    %s3837 = scalar_lea.vmem %s1, 16
    %v3838 = vld [vmem:[%s3837] sm:$0xf]
    %v3840 = vsel %vm895, %v3765, 0
    %v3843 = vsel %vm895, %v3766, 0
    %v3846 = vsel %vm895, %v3767, 0
    %v3849 = vsel %vm895, %v3768, 0
    %v3852 = vsel %vm895, %v3769, 0
    %v3855 = vsel %vm895, %v3770, 0
    %v3858 = vsel %vm895, %v3771, 0
    %v3861 = vsel %vm895, %v3772, 0
    %v3864 = vsel %vm895, %v3773, 0
    %v3867 = vsel %vm895, %v3774, 0
    %v3870 = vsel %vm895, %v3775, 0
    %v3873 = vsel %vm895, %v3776, 0
    %v3876 = vsel %vm895, %v3777, 0
    %v3879 = vsel %vm895, %v3778, 0
    %v3882 = vsel %vm895, %v3779, 0
    %v3885 = vsel %vm895, %v3780, 0
    %v3888 = vsel %vm895, %v3781, 0
    %v3891 = vsel %vm895, %v3782, 0
    %v3894 = vsel %vm895, %v3783, 0
    %v3897 = vsel %vm895, %v3784, 0
    %v3900 = vsel %vm895, %v3785, 0
    %v3903 = vsel %vm895, %v3786, 0
    %v3906 = vsel %vm895, %v3787, 0
    %v3909 = vsel %vm895, %v3788, 0
    %v3912 = vsel %vm895, %v3789, 0
    %v3915 = vsel %vm895, %v3790, 0
    %v3918 = vsel %vm895, %v3791, 0
    %v3921 = vsel %vm895, %v3792, 0
    %v3924 = vsel %vm895, %v3793, 0
    %v3927 = vsel %vm895, %v3794, 0
    %v3930 = vsel %vm895, %v3795, 0
    %v3933 = vsel %vm895, %v3796, 0
    %v3936 = vsel %vm895, %v3797, 0
    %v3939 = vsel %vm895, %v3798, 0
    %v3942 = vsel %vm895, %v3799, 0
    %v3945 = vsel %vm895, %v3800, 0
    %v3948 = vsel %vm895, %v3801, 0
    %v3951 = vsel %vm895, %v3802, 0
    %v3954 = vsel %vm895, %v3803, 0
    %v3957 = vsel %vm895, %v3804, 0
    %v3960 = vsel %vm895, %v3805, 0
    %v3963 = vsel %vm895, %v3806, 0
    %v3966 = vsel %vm895, %v3807, 0
    %v3969 = vsel %vm895, %v3808, 0
    %v3972 = vsel %vm895, %v3809, 0
    %v3975 = vsel %vm895, %v3810, 0
    %v3978 = vsel %vm895, %v3811, 0
    %v3981 = vsel %vm895, %v3812, 0
    %v3984 = vsel %vm895, %v3813, 0
    %v3987 = vsel %vm895, %v3814, 0
    %v3990 = vsel %vm895, %v3815, 0
    %v3993 = vsel %vm895, %v3816, 0
    %v3996 = vsel %vm895, %v3817, 0
    %v3999 = vsel %vm895, %v3818, 0
    %v4002 = vsel %vm895, %v3819, 0
    %v4005 = vsel %vm895, %v3820, 0
    %v4008 = vsel %vm895, %v3821, 0
    %v4011 = vsel %vm895, %v3822, 0
    %v4014 = vsel %vm895, %v3823, 0
    %v4017 = vsel %vm895, %v3824, 0
    %v4020 = vsel %vm895, %v3825, 0
    %v4023 = vsel %vm895, %v3826, 0
    %v4026 = vsel %vm895, %v3827, 0
    %v4029 = vsel %vm895, %v3828, 0
    %v4032 = vsel %vm895, %v3829, 0
    %v4035 = vsel %vm895, %v3830, 0
    %v4038 = vsel %vm895, %v3831, 0
    %v4041 = vsel %vm895, %v3832, 0
    %v4044 = vsel %vm895, %v3833, 0
    %v4047 = vsel %vm895, %v3834, 0
    %v4050 = vsel %vm895, %v3835, 0
    %v4053 = vsel %vm895, %v3836, 0
    %v4056 = vsel %vm1112, %v3838, 0
    %4058 = vmatprep.subr.mxu0 0.0
    %4059 = vmatpush1.msra.mxu0 %v4056
    %4060 = vmatprep.subr.mxu0 0.0
    %4061 = vmatpush1.msra.mxu0 0.0
    %4062 = vmatprep.subr.mxu0 0.0
    %4063 = vmatpush1.msra.mxu0 0.0
    %4064 = vmatprep.subr.mxu0 0.0
    %4065 = vmatpush1.msra.mxu0 0.0
    %4066 = vmatprep.subr.mxu0 0.0
    %4067 = vmatpush1.msra.mxu0 0.0
    %4068 = vmatprep.subr.mxu0 0.0
    %4069 = vmatpush1.msra.mxu0 0.0
    %4070 = vmatprep.subr.mxu0 0.0
    %4071 = vmatpush1.msra.mxu0 0.0
    %4072 = vmatprep.subr.mxu0 0.0
    %4073 = vmatpush1.msra.mxu0 0.0
    %4074 = vmatprep.subr.mxu0 0.0
    %4075 = vmatpush1.msra.mxu0 0.0
    %4076 = vmatprep.subr.mxu0 0.0
    %4077 = vmatpush1.msra.mxu0 0.0
    %4078 = vmatprep.subr.mxu0 0.0
    %4079 = vmatpush1.msra.mxu0 0.0
    %4080 = vmatprep.subr.mxu0 0.0
    %4081 = vmatpush1.msra.mxu0 0.0
    %4082 = vmatprep.subr.mxu0 0.0
    %4083 = vmatpush1.msra.mxu0 0.0
    %4084 = vmatprep.subr.mxu0 0.0
    %4085 = vmatpush1.msra.mxu0 0.0
    %4086 = vmatprep.subr.mxu0 0.0
    %4087 = vmatpush1.msra.mxu0 0.0
    %4088 = vmatprep.subr.mxu0 0.0
    %4089 = vmatpush1.msra.mxu0 0.0
    %4090 = vmatprep.subr.mxu0 0.0
    %4091 = vmatpush1.msra.mxu0 0.0
    %4092 = vmatprep.subr.mxu0 0.0
    %4093 = vmatpush1.msra.mxu0 0.0
    %4094 = vmatprep.subr.mxu0 0.0
    %4095 = vmatpush1.msra.mxu0 0.0
    %4096 = vmatprep.subr.mxu0 0.0
    %4097 = vmatpush1.msra.mxu0 0.0
    %4098 = vmatprep.subr.mxu0 0.0
    %4099 = vmatpush1.msra.mxu0 0.0
    %4100 = vmatprep.subr.mxu0 0.0
    %4101 = vmatpush1.msra.mxu0 0.0
    %4102 = vmatprep.subr.mxu0 0.0
    %4103 = vmatpush1.msra.mxu0 0.0
    %4104 = vmatprep.subr.mxu0 0.0
    %4105 = vmatpush1.msra.mxu0 0.0
    %4106 = vmatprep.subr.mxu0 0.0
    %4107 = vmatpush1.msra.mxu0 0.0
    %4108 = vmatprep.subr.mxu0 0.0
    %4109 = vmatpush1.msra.mxu0 0.0
    %4110 = vmatprep.subr.mxu0 0.0
    %4111 = vmatpush1.msra.mxu0 0.0
    %4112 = vmatprep.subr.mxu0 0.0
    %4113 = vmatpush1.msra.mxu0 0.0
    %4114 = vmatprep.subr.mxu0 0.0
    %4115 = vmatpush1.msra.mxu0 0.0
    %4116 = vmatprep.subr.mxu0 0.0
    %4117 = vmatpush1.msra.mxu0 0.0
    %4118 = vmatprep.subr.mxu0 0.0
    %4119 = vmatpush1.msra.mxu0 0.0
    %4120 = vmatprep.subr.mxu0 0.0
    %4121 = vmatpush1.msra.mxu0 0.0
    %4122 = vmatprep.mubr.f32.mxu0 0.0
    %4123 = vmatmul.mubr.f32.gmra.mrb[0].mxu0 %v3840
    %v4124 = vpop.f32.mrb[0].mxu0
    %v4125 = vadd.f32 0.0, %v4124
    %v4126 = vpop.f32.mrb[0].mxu0
    %4127 = vmatprep.mubr.f32.mxu0 0.0
    %4128 = vmatmul.mubr.f32.gmra.mrb[0].mxu0 %v3843
    %v4129 = vpop.f32.mrb[0].mxu0
    %v4130 = vadd.f32 0.0, %v4129
    %v4131 = vpop.f32.mrb[0].mxu0
    %4132 = vmatprep.mubr.f32.mxu0 0.0
    %4133 = vmatmul.mubr.f32.gmra.mrb[0].mxu0 %v3846
    %v4134 = vpop.f32.mrb[0].mxu0
    %v4135 = vadd.f32 0.0, %v4134
    %v4136 = vpop.f32.mrb[0].mxu0
    %4137 = vmatprep.mubr.f32.mxu0 0.0
    %4138 = vmatmul.mubr.f32.gmra.mrb[0].mxu0 %v3849
    %v4139 = vpop.f32.mrb[0].mxu0
    %v4140 = vadd.f32 0.0, %v4139
    %v4141 = vpop.f32.mrb[0].mxu0
    %4142 = vmatprep.mubr.f32.mxu0 0.0
    %4143 = vmatmul.mubr.f32.gmra.mrb[0].mxu0 %v3852
    %v4144 = vpop.f32.mrb[0].mxu0
    %v4145 = vadd.f32 0.0, %v4144
    %v4146 = vpop.f32.mrb[0].mxu0
    %4147 = vmatprep.mubr.f32.mxu0 0.0
    %4148 = vmatmul.mubr.f32.gmra.mrb[0].mxu0 %v3855
    %v4149 = vpop.f32.mrb[0].mxu0
    %v4150 = vadd.f32 0.0, %v4149
    %v4151 = vpop.f32.mrb[0].mxu0
    %4152 = vmatprep.mubr.f32.mxu0 0.0
    %4153 = vmatmul.mubr.f32.gmra.mrb[0].mxu0 %v3858
    %v4154 = vpop.f32.mrb[0].mxu0
    %v4155 = vadd.f32 0.0, %v4154
    %v4156 = vpop.f32.mrb[0].mxu0
    %4157 = vmatprep.mubr.f32.mxu0 0.0
    %4158 = vmatmul.mubr.f32.gmra.mrb[0].mxu0 %v3861
    %v4159 = vpop.f32.mrb[0].mxu0
    %v4160 = vadd.f32 0.0, %v4159
    %v4161 = vpop.f32.mrb[0].mxu0
    %4162 = vmatprep.mubr.f32.mxu0 0.0
    %4163 = vmatmul.mubr.f32.gmra.mrb[0].mxu0 %v3864
    %v4164 = vpop.f32.mrb[0].mxu0
    %v4165 = vadd.f32 0.0, %v4164
    %v4166 = vpop.f32.mrb[0].mxu0
    %4167 = vmatprep.mubr.f32.mxu0 0.0
    %4168 = vmatmul.mubr.f32.gmra.mrb[0].mxu0 %v3867
    %v4169 = vpop.f32.mrb[0].mxu0
    %v4170 = vadd.f32 0.0, %v4169
    %v4171 = vpop.f32.mrb[0].mxu0
    %4172 = vmatprep.mubr.f32.mxu0 0.0
    %4173 = vmatmul.mubr.f32.gmra.mrb[0].mxu0 %v3870
    %v4174 = vpop.f32.mrb[0].mxu0
    %v4175 = vadd.f32 0.0, %v4174
    %v4176 = vpop.f32.mrb[0].mxu0
    %4177 = vmatprep.mubr.f32.mxu0 0.0
    %4178 = vmatmul.mubr.f32.gmra.mrb[0].mxu0 %v3873
    %v4179 = vpop.f32.mrb[0].mxu0
    %v4180 = vadd.f32 0.0, %v4179
    %v4181 = vpop.f32.mrb[0].mxu0
    %4182 = vmatprep.mubr.f32.mxu0 0.0
    %4183 = vmatmul.mubr.f32.gmra.mrb[0].mxu0 %v3876
    %v4184 = vpop.f32.mrb[0].mxu0
    %v4185 = vadd.f32 0.0, %v4184
    %v4186 = vpop.f32.mrb[0].mxu0
    %4187 = vmatprep.mubr.f32.mxu0 0.0
    %4188 = vmatmul.mubr.f32.gmra.mrb[0].mxu0 %v3879
    %v4189 = vpop.f32.mrb[0].mxu0
    %v4190 = vadd.f32 0.0, %v4189
    %v4191 = vpop.f32.mrb[0].mxu0
    %4192 = vmatprep.mubr.f32.mxu0 0.0
    %4193 = vmatmul.mubr.f32.gmra.mrb[0].mxu0 %v3882
    %v4194 = vpop.f32.mrb[0].mxu0
    %v4195 = vadd.f32 0.0, %v4194
    %v4196 = vpop.f32.mrb[0].mxu0
    %4197 = vmatprep.mubr.f32.mxu0 0.0
    %4198 = vmatmul.mubr.f32.gmra.mrb[0].mxu0 %v3885
    %v4199 = vpop.f32.mrb[0].mxu0
    %v4200 = vadd.f32 0.0, %v4199
    %v4201 = vpop.f32.mrb[0].mxu0
    %4202 = vmatprep.mubr.f32.mxu0 0.0
    %4203 = vmatmul.mubr.f32.gmra.mrb[0].mxu0 %v3888
    %v4204 = vpop.f32.mrb[0].mxu0
    %v4205 = vadd.f32 0.0, %v4204
    %v4206 = vpop.f32.mrb[0].mxu0
    %4207 = vmatprep.mubr.f32.mxu0 0.0
    %4208 = vmatmul.mubr.f32.gmra.mrb[0].mxu0 %v3891
    %v4209 = vpop.f32.mrb[0].mxu0
    %v4210 = vadd.f32 0.0, %v4209
    %v4211 = vpop.f32.mrb[0].mxu0
    %4212 = vmatprep.mubr.f32.mxu0 0.0
    %4213 = vmatmul.mubr.f32.gmra.mrb[0].mxu0 %v3894
    %v4214 = vpop.f32.mrb[0].mxu0
    %v4215 = vadd.f32 0.0, %v4214
    %v4216 = vpop.f32.mrb[0].mxu0
    %4217 = vmatprep.mubr.f32.mxu0 0.0
    %4218 = vmatmul.mubr.f32.gmra.mrb[0].mxu0 %v3897
    %v4219 = vpop.f32.mrb[0].mxu0
    %v4220 = vadd.f32 0.0, %v4219
    %v4221 = vpop.f32.mrb[0].mxu0
    %4222 = vmatprep.mubr.f32.mxu0 0.0
    %4223 = vmatmul.mubr.f32.gmra.mrb[0].mxu0 %v3900
    %v4224 = vpop.f32.mrb[0].mxu0
    %v4225 = vadd.f32 0.0, %v4224
    %v4226 = vpop.f32.mrb[0].mxu0
    %4227 = vmatprep.mubr.f32.mxu0 0.0
    %4228 = vmatmul.mubr.f32.gmra.mrb[0].mxu0 %v3903
    %v4229 = vpop.f32.mrb[0].mxu0
    %v4230 = vadd.f32 0.0, %v4229
    %v4231 = vpop.f32.mrb[0].mxu0
    %4232 = vmatprep.mubr.f32.mxu0 0.0
    %4233 = vmatmul.mubr.f32.gmra.mrb[0].mxu0 %v3906
    %v4234 = vpop.f32.mrb[0].mxu0
    %v4235 = vadd.f32 0.0, %v4234
    %v4236 = vpop.f32.mrb[0].mxu0
    %4237 = vmatprep.mubr.f32.mxu0 0.0
    %4238 = vmatmul.mubr.f32.gmra.mrb[0].mxu0 %v3909
    %v4239 = vpop.f32.mrb[0].mxu0
    %v4240 = vadd.f32 0.0, %v4239
    %v4241 = vpop.f32.mrb[0].mxu0
    %4242 = vmatprep.mubr.f32.mxu0 0.0
    %4243 = vmatmul.mubr.f32.gmra.mrb[0].mxu0 %v3912
    %v4244 = vpop.f32.mrb[0].mxu0
    %v4245 = vadd.f32 0.0, %v4244
    %v4246 = vpop.f32.mrb[0].mxu0
    %4247 = vmatprep.mubr.f32.mxu0 0.0
    %4248 = vmatmul.mubr.f32.gmra.mrb[0].mxu0 %v3915
    %v4249 = vpop.f32.mrb[0].mxu0
    %v4250 = vadd.f32 0.0, %v4249
    %v4251 = vpop.f32.mrb[0].mxu0
    %4252 = vmatprep.mubr.f32.mxu0 0.0
    %4253 = vmatmul.mubr.f32.gmra.mrb[0].mxu0 %v3918
    %v4254 = vpop.f32.mrb[0].mxu0
    %v4255 = vadd.f32 0.0, %v4254
    %v4256 = vpop.f32.mrb[0].mxu0
    %4257 = vmatprep.mubr.f32.mxu0 0.0
    %4258 = vmatmul.mubr.f32.gmra.mrb[0].mxu0 %v3921
    %v4259 = vpop.f32.mrb[0].mxu0
    %v4260 = vadd.f32 0.0, %v4259
    %v4261 = vpop.f32.mrb[0].mxu0
    %4262 = vmatprep.mubr.f32.mxu0 0.0
    %4263 = vmatmul.mubr.f32.gmra.mrb[0].mxu0 %v3924
    %v4264 = vpop.f32.mrb[0].mxu0
    %v4265 = vadd.f32 0.0, %v4264
    %v4266 = vpop.f32.mrb[0].mxu0
    %4267 = vmatprep.mubr.f32.mxu0 0.0
    %4268 = vmatmul.mubr.f32.gmra.mrb[0].mxu0 %v3927
    %v4269 = vpop.f32.mrb[0].mxu0
    %v4270 = vadd.f32 0.0, %v4269
    %v4271 = vpop.f32.mrb[0].mxu0
    %4272 = vmatprep.mubr.f32.mxu0 0.0
    %4273 = vmatmul.mubr.f32.gmra.mrb[0].mxu0 %v3930
    %v4274 = vpop.f32.mrb[0].mxu0
    %v4275 = vadd.f32 0.0, %v4274
    %v4276 = vpop.f32.mrb[0].mxu0
    %4277 = vmatprep.mubr.f32.mxu0 0.0
    %4278 = vmatmul.mubr.f32.gmra.mrb[0].mxu0 %v3933
    %v4279 = vpop.f32.mrb[0].mxu0
    %v4280 = vadd.f32 0.0, %v4279
    %v4281 = vpop.f32.mrb[0].mxu0
    %4282 = vmatprep.mubr.f32.mxu0 0.0
    %4283 = vmatmul.mubr.f32.gmra.mrb[0].mxu0 %v3936
    %v4284 = vpop.f32.mrb[0].mxu0
    %v4285 = vadd.f32 0.0, %v4284
    %v4286 = vpop.f32.mrb[0].mxu0
    %4287 = vmatprep.mubr.f32.mxu0 0.0
    %4288 = vmatmul.mubr.f32.gmra.mrb[0].mxu0 %v3939
    %v4289 = vpop.f32.mrb[0].mxu0
    %v4290 = vadd.f32 0.0, %v4289
    %v4291 = vpop.f32.mrb[0].mxu0
    %4292 = vmatprep.mubr.f32.mxu0 0.0
    %4293 = vmatmul.mubr.f32.gmra.mrb[0].mxu0 %v3942
    %v4294 = vpop.f32.mrb[0].mxu0
    %v4295 = vadd.f32 0.0, %v4294
    %v4296 = vpop.f32.mrb[0].mxu0
    %4297 = vmatprep.mubr.f32.mxu0 0.0
    %4298 = vmatmul.mubr.f32.gmra.mrb[0].mxu0 %v3945
    %v4299 = vpop.f32.mrb[0].mxu0
    %v4300 = vadd.f32 0.0, %v4299
    %v4301 = vpop.f32.mrb[0].mxu0
    %4302 = vmatprep.mubr.f32.mxu0 0.0
    %4303 = vmatmul.mubr.f32.gmra.mrb[0].mxu0 %v3948
    %v4304 = vpop.f32.mrb[0].mxu0
    %v4305 = vadd.f32 0.0, %v4304
    %v4306 = vpop.f32.mrb[0].mxu0
    %4307 = vmatprep.mubr.f32.mxu0 0.0
    %4308 = vmatmul.mubr.f32.gmra.mrb[0].mxu0 %v3951
    %v4309 = vpop.f32.mrb[0].mxu0
    %v4310 = vadd.f32 0.0, %v4309
    %v4311 = vpop.f32.mrb[0].mxu0
    %4312 = vmatprep.mubr.f32.mxu0 0.0
    %4313 = vmatmul.mubr.f32.gmra.mrb[0].mxu0 %v3954
    %v4314 = vpop.f32.mrb[0].mxu0
    %v4315 = vadd.f32 0.0, %v4314
    %v4316 = vpop.f32.mrb[0].mxu0
    %4317 = vmatprep.mubr.f32.mxu0 0.0
    %4318 = vmatmul.mubr.f32.gmra.mrb[0].mxu0 %v3957
    %v4319 = vpop.f32.mrb[0].mxu0
    %v4320 = vadd.f32 0.0, %v4319
    %v4321 = vpop.f32.mrb[0].mxu0
    %4322 = vmatprep.mubr.f32.mxu0 0.0
    %4323 = vmatmul.mubr.f32.gmra.mrb[0].mxu0 %v3960
    %v4324 = vpop.f32.mrb[0].mxu0
    %v4325 = vadd.f32 0.0, %v4324
    %v4326 = vpop.f32.mrb[0].mxu0
    %4327 = vmatprep.mubr.f32.mxu0 0.0
    %4328 = vmatmul.mubr.f32.gmra.mrb[0].mxu0 %v3963
    %v4329 = vpop.f32.mrb[0].mxu0
    %v4330 = vadd.f32 0.0, %v4329
    %v4331 = vpop.f32.mrb[0].mxu0
    %4332 = vmatprep.mubr.f32.mxu0 0.0
    %4333 = vmatmul.mubr.f32.gmra.mrb[0].mxu0 %v3966
    %v4334 = vpop.f32.mrb[0].mxu0
    %v4335 = vadd.f32 0.0, %v4334
    %v4336 = vpop.f32.mrb[0].mxu0
    %4337 = vmatprep.mubr.f32.mxu0 0.0
    %4338 = vmatmul.mubr.f32.gmra.mrb[0].mxu0 %v3969
    %v4339 = vpop.f32.mrb[0].mxu0
    %v4340 = vadd.f32 0.0, %v4339
    %v4341 = vpop.f32.mrb[0].mxu0
    %4342 = vmatprep.mubr.f32.mxu0 0.0
    %4343 = vmatmul.mubr.f32.gmra.mrb[0].mxu0 %v3972
    %v4344 = vpop.f32.mrb[0].mxu0
    %v4345 = vadd.f32 0.0, %v4344
    %v4346 = vpop.f32.mrb[0].mxu0
    %4347 = vmatprep.mubr.f32.mxu0 0.0
    %4348 = vmatmul.mubr.f32.gmra.mrb[0].mxu0 %v3975
    %v4349 = vpop.f32.mrb[0].mxu0
    %v4350 = vadd.f32 0.0, %v4349
    %v4351 = vpop.f32.mrb[0].mxu0
    %4352 = vmatprep.mubr.f32.mxu0 0.0
    %4353 = vmatmul.mubr.f32.gmra.mrb[0].mxu0 %v3978
    %v4354 = vpop.f32.mrb[0].mxu0
    %v4355 = vadd.f32 0.0, %v4354
    %v4356 = vpop.f32.mrb[0].mxu0
    %4357 = vmatprep.mubr.f32.mxu0 0.0
    %4358 = vmatmul.mubr.f32.gmra.mrb[0].mxu0 %v3981
    %v4359 = vpop.f32.mrb[0].mxu0
    %v4360 = vadd.f32 0.0, %v4359
    %v4361 = vpop.f32.mrb[0].mxu0
    %4362 = vmatprep.mubr.f32.mxu0 0.0
    %4363 = vmatmul.mubr.f32.gmra.mrb[0].mxu0 %v3984
    %v4364 = vpop.f32.mrb[0].mxu0
    %v4365 = vadd.f32 0.0, %v4364
    %v4366 = vpop.f32.mrb[0].mxu0
    %4367 = vmatprep.mubr.f32.mxu0 0.0
    %4368 = vmatmul.mubr.f32.gmra.mrb[0].mxu0 %v3987
    %v4369 = vpop.f32.mrb[0].mxu0
    %v4370 = vadd.f32 0.0, %v4369
    %v4371 = vpop.f32.mrb[0].mxu0
    %4372 = vmatprep.mubr.f32.mxu0 0.0
    %4373 = vmatmul.mubr.f32.gmra.mrb[0].mxu0 %v3990
    %v4374 = vpop.f32.mrb[0].mxu0
    %v4375 = vadd.f32 0.0, %v4374
    %v4376 = vpop.f32.mrb[0].mxu0
    %4377 = vmatprep.mubr.f32.mxu0 0.0
    %4378 = vmatmul.mubr.f32.gmra.mrb[0].mxu0 %v3993
    %v4379 = vpop.f32.mrb[0].mxu0
    %v4380 = vadd.f32 0.0, %v4379
    %v4381 = vpop.f32.mrb[0].mxu0
    %4382 = vmatprep.mubr.f32.mxu0 0.0
    %4383 = vmatmul.mubr.f32.gmra.mrb[0].mxu0 %v3996
    %v4384 = vpop.f32.mrb[0].mxu0
    %v4385 = vadd.f32 0.0, %v4384
    %v4386 = vpop.f32.mrb[0].mxu0
    %4387 = vmatprep.mubr.f32.mxu0 0.0
    %4388 = vmatmul.mubr.f32.gmra.mrb[0].mxu0 %v3999
    %v4389 = vpop.f32.mrb[0].mxu0
    %v4390 = vadd.f32 0.0, %v4389
    %v4391 = vpop.f32.mrb[0].mxu0
    %4392 = vmatprep.mubr.f32.mxu0 0.0
    %4393 = vmatmul.mubr.f32.gmra.mrb[0].mxu0 %v4002
    %v4394 = vpop.f32.mrb[0].mxu0
    %v4395 = vadd.f32 0.0, %v4394
    %v4396 = vpop.f32.mrb[0].mxu0
    %4397 = vmatprep.mubr.f32.mxu0 0.0
    %4398 = vmatmul.mubr.f32.gmra.mrb[0].mxu0 %v4005
    %v4399 = vpop.f32.mrb[0].mxu0
    %v4400 = vadd.f32 0.0, %v4399
    %v4401 = vpop.f32.mrb[0].mxu0
    %4402 = vmatprep.mubr.f32.mxu0 0.0
    %4403 = vmatmul.mubr.f32.gmra.mrb[0].mxu0 %v4008
    %v4404 = vpop.f32.mrb[0].mxu0
    %v4405 = vadd.f32 0.0, %v4404
    %v4406 = vpop.f32.mrb[0].mxu0
    %4407 = vmatprep.mubr.f32.mxu0 0.0
    %4408 = vmatmul.mubr.f32.gmra.mrb[0].mxu0 %v4011
    %v4409 = vpop.f32.mrb[0].mxu0
    %v4410 = vadd.f32 0.0, %v4409
    %v4411 = vpop.f32.mrb[0].mxu0
    %4412 = vmatprep.mubr.f32.mxu0 0.0
    %4413 = vmatmul.mubr.f32.gmra.mrb[0].mxu0 %v4014
    %v4414 = vpop.f32.mrb[0].mxu0
    %v4415 = vadd.f32 0.0, %v4414
    %v4416 = vpop.f32.mrb[0].mxu0
    %4417 = vmatprep.mubr.f32.mxu0 0.0
    %4418 = vmatmul.mubr.f32.gmra.mrb[0].mxu0 %v4017
    %v4419 = vpop.f32.mrb[0].mxu0
    %v4420 = vadd.f32 0.0, %v4419
    %v4421 = vpop.f32.mrb[0].mxu0
    %4422 = vmatprep.mubr.f32.mxu0 0.0
    %4423 = vmatmul.mubr.f32.gmra.mrb[0].mxu0 %v4020
    %v4424 = vpop.f32.mrb[0].mxu0
    %v4425 = vadd.f32 0.0, %v4424
    %v4426 = vpop.f32.mrb[0].mxu0
    %4427 = vmatprep.mubr.f32.mxu0 0.0
    %4428 = vmatmul.mubr.f32.gmra.mrb[0].mxu0 %v4023
    %v4429 = vpop.f32.mrb[0].mxu0
    %v4430 = vadd.f32 0.0, %v4429
    %v4431 = vpop.f32.mrb[0].mxu0
    %4432 = vmatprep.mubr.f32.mxu0 0.0
    %4433 = vmatmul.mubr.f32.gmra.mrb[0].mxu0 %v4026
    %v4434 = vpop.f32.mrb[0].mxu0
    %v4435 = vadd.f32 0.0, %v4434
    %v4436 = vpop.f32.mrb[0].mxu0
    %4437 = vmatprep.mubr.f32.mxu0 0.0
    %4438 = vmatmul.mubr.f32.gmra.mrb[0].mxu0 %v4029
    %v4439 = vpop.f32.mrb[0].mxu0
    %v4440 = vadd.f32 0.0, %v4439
    %v4441 = vpop.f32.mrb[0].mxu0
    %4442 = vmatprep.mubr.f32.mxu0 0.0
    %4443 = vmatmul.mubr.f32.gmra.mrb[0].mxu0 %v4032
    %v4444 = vpop.f32.mrb[0].mxu0
    %v4445 = vadd.f32 0.0, %v4444
    %v4446 = vpop.f32.mrb[0].mxu0
    %4447 = vmatprep.mubr.f32.mxu0 0.0
    %4448 = vmatmul.mubr.f32.gmra.mrb[0].mxu0 %v4035
    %v4449 = vpop.f32.mrb[0].mxu0
    %v4450 = vadd.f32 0.0, %v4449
    %v4451 = vpop.f32.mrb[0].mxu0
    %4452 = vmatprep.mubr.f32.mxu0 0.0
    %4453 = vmatmul.mubr.f32.gmra.mrb[0].mxu0 %v4038
    %v4454 = vpop.f32.mrb[0].mxu0
    %v4455 = vadd.f32 0.0, %v4454
    %v4456 = vpop.f32.mrb[0].mxu0
    %4457 = vmatprep.mubr.f32.mxu0 0.0
    %4458 = vmatmul.mubr.f32.gmra.mrb[0].mxu0 %v4041
    %v4459 = vpop.f32.mrb[0].mxu0
    %v4460 = vadd.f32 0.0, %v4459
    %v4461 = vpop.f32.mrb[0].mxu0
    %4462 = vmatprep.mubr.f32.mxu0 0.0
    %4463 = vmatmul.mubr.f32.gmra.mrb[0].mxu0 %v4044
    %v4464 = vpop.f32.mrb[0].mxu0
    %v4465 = vadd.f32 0.0, %v4464
    %v4466 = vpop.f32.mrb[0].mxu0
    %4467 = vmatprep.mubr.f32.mxu0 0.0
    %4468 = vmatmul.mubr.f32.gmra.mrb[0].mxu0 %v4047
    %v4469 = vpop.f32.mrb[0].mxu0
    %v4470 = vadd.f32 0.0, %v4469
    %v4471 = vpop.f32.mrb[0].mxu0
    %4472 = vmatprep.mubr.f32.mxu0 0.0
    %4473 = vmatmul.mubr.f32.gmra.mrb[0].mxu0 %v4050
    %v4474 = vpop.f32.mrb[0].mxu0
    %v4475 = vadd.f32 0.0, %v4474
    %v4476 = vpop.f32.mrb[0].mxu0
    %4477 = vmatprep.mubr.f32.mxu0 0.0
    %4478 = vmatmul.mubr.f32.gmra.mrb[0].mxu0 %v4053
    %v4479 = vpop.f32.mrb[0].mxu0
    %v4480 = vadd.f32 0.0, %v4479
    %v4481 = vpop.f32.mrb[0].mxu0
    %4482 = vdwg.mxu0
    %v4483 = vadd.f32 %v3693, %v4125
    %v4484 = vadd.f32 %v3694, %v4130
    %v4485 = vadd.f32 %v3695, %v4135
    %v4486 = vadd.f32 %v3696, %v4140
    %v4487 = vadd.f32 %v3697, %v4145
    %v4488 = vadd.f32 %v3698, %v4150
    %v4489 = vadd.f32 %v3699, %v4155
    %v4490 = vadd.f32 %v3700, %v4160
    %v4491 = vadd.f32 %v3701, %v4165
    %v4492 = vadd.f32 %v3702, %v4170
    %v4493 = vadd.f32 %v3703, %v4175
    %v4494 = vadd.f32 %v3704, %v4180
    %v4495 = vadd.f32 %v3705, %v4185
    %v4496 = vadd.f32 %v3706, %v4190
    %v4497 = vadd.f32 %v3707, %v4195
    %v4498 = vadd.f32 %v3708, %v4200
    %v4499 = vadd.f32 %v3709, %v4205
    %v4500 = vadd.f32 %v3710, %v4210
    %v4501 = vadd.f32 %v3711, %v4215
    %v4502 = vadd.f32 %v3712, %v4220
    %v4503 = vadd.f32 %v3713, %v4225
    %v4504 = vadd.f32 %v3714, %v4230
    %v4505 = vadd.f32 %v3715, %v4235
    %v4506 = vadd.f32 %v3716, %v4240
    %v4507 = vadd.f32 %v3717, %v4245
    %v4508 = vadd.f32 %v3718, %v4250
    %v4509 = vadd.f32 %v3719, %v4255
    %v4510 = vadd.f32 %v3720, %v4260
    %v4511 = vadd.f32 %v3721, %v4265
    %v4512 = vadd.f32 %v3722, %v4270
    %v4513 = vadd.f32 %v3723, %v4275
    %v4514 = vadd.f32 %v3724, %v4280
    %v4515 = vadd.f32 %v3725, %v4285
    %v4516 = vadd.f32 %v3726, %v4290
    %v4517 = vadd.f32 %v3727, %v4295
    %v4518 = vadd.f32 %v3728, %v4300
    %v4519 = vadd.f32 %v3729, %v4305
    %v4520 = vadd.f32 %v3730, %v4310
    %v4521 = vadd.f32 %v3731, %v4315
    %v4522 = vadd.f32 %v3732, %v4320
    %v4523 = vadd.f32 %v3733, %v4325
    %v4524 = vadd.f32 %v3734, %v4330
    %v4525 = vadd.f32 %v3735, %v4335
    %v4526 = vadd.f32 %v3736, %v4340
    %v4527 = vadd.f32 %v3737, %v4345
    %v4528 = vadd.f32 %v3738, %v4350
    %v4529 = vadd.f32 %v3739, %v4355
    %v4530 = vadd.f32 %v3740, %v4360
    %v4531 = vadd.f32 %v3741, %v4365
    %v4532 = vadd.f32 %v3742, %v4370
    %v4533 = vadd.f32 %v3743, %v4375
    %v4534 = vadd.f32 %v3744, %v4380
    %v4535 = vadd.f32 %v3745, %v4385
    %v4536 = vadd.f32 %v3746, %v4390
    %v4537 = vadd.f32 %v3747, %v4395
    %v4538 = vadd.f32 %v3748, %v4400
    %v4539 = vadd.f32 %v3749, %v4405
    %v4540 = vadd.f32 %v3750, %v4410
    %v4541 = vadd.f32 %v3751, %v4415
    %v4542 = vadd.f32 %v3752, %v4420
    %v4543 = vadd.f32 %v3753, %v4425
    %v4544 = vadd.f32 %v3754, %v4430
    %v4545 = vadd.f32 %v3755, %v4435
    %v4546 = vadd.f32 %v3756, %v4440
    %v4547 = vadd.f32 %v3757, %v4445
    %v4548 = vadd.f32 %v3758, %v4450
    %v4549 = vadd.f32 %v3759, %v4455
    %v4550 = vadd.f32 %v3760, %v4460
    %v4551 = vadd.f32 %v3761, %v4465
    %v4552 = vadd.f32 %v3762, %v4470
    %v4553 = vadd.f32 %v3763, %v4475
    %v4554 = vadd.f32 %v3764, %v4480
    %v4555 = vld [vmem:[%s0 + $0x14] sm:$0xff]
    %v4556 = vld [vmem:[%s0 + $0x1c] sm:$0xff]
    %v4557 = vld [vmem:[%s0 + $0x24] sm:$0xff]
    %v4558 = vld [vmem:[%s0 + $0x2c] sm:$0xff]
    %v4559 = vld [vmem:[%s0 + $0x34] sm:$0xff]
    %v4560 = vld [vmem:[%s0 + $0x3c] sm:$0xff]
    %v4561 = vld [vmem:[%s0 + $0x44] sm:$0xff]
    %v4562 = vld [vmem:[%s0 + $0x4c] sm:$0xff]
    %v4563 = vld [vmem:[%s0 + $0x54] sm:$0xff]
    %v4564 = vld [vmem:[%s0 + $0x5c] sm:$0xff]
    %v4565 = vld [vmem:[%s0 + $0x64] sm:$0xff]
    %v4566 = vld [vmem:[%s0 + $0x6c] sm:$0xff]
    %v4567 = vld [vmem:[%s0 + $0x74] sm:$0xff]
    %v4568 = vld [vmem:[%s0 + $0x7c] sm:$0xff]
    %v4569 = vld [vmem:[%s0 + $0x84] sm:$0xff]
    %v4570 = vld [vmem:[%s0 + $0x8c] sm:$0xff]
    %v4571 = vld [vmem:[%s0 + $0x94] sm:$0xff]
    %v4572 = vld [vmem:[%s0 + $0x9c] sm:$0xff]
    %v4573 = vld [vmem:[%s0 + $0xa4] sm:$0xff]
    %v4574 = vld [vmem:[%s0 + $0xac] sm:$0xff]
    %v4575 = vld [vmem:[%s0 + $0xb4] sm:$0xff]
    %v4576 = vld [vmem:[%s0 + $0xbc] sm:$0xff]
    %v4577 = vld [vmem:[%s0 + $0xc4] sm:$0xff]
    %v4578 = vld [vmem:[%s0 + $0xcc] sm:$0xff]
    %v4579 = vld [vmem:[%s0 + $0xd4] sm:$0xff]
    %v4580 = vld [vmem:[%s0 + $0xdc] sm:$0xff]
    %v4581 = vld [vmem:[%s0 + $0xe4] sm:$0xff]
    %v4582 = vld [vmem:[%s0 + $0xec] sm:$0xff]
    %v4583 = vld [vmem:[%s0 + $0xf4] sm:$0xff]
    %v4584 = vld [vmem:[%s0 + $0xfc] sm:$0xff]
    %v4585 = vld [vmem:[%s0 + $0x104] sm:$0xff]
    %v4586 = vld [vmem:[%s0 + $0x10c] sm:$0xff]
    %v4587 = vld [vmem:[%s0 + $0x114] sm:$0xff]
    %v4588 = vld [vmem:[%s0 + $0x11c] sm:$0xff]
    %v4589 = vld [vmem:[%s0 + $0x124] sm:$0xff]
    %v4590 = vld [vmem:[%s0 + $0x12c] sm:$0xff]
    %v4591 = vld [vmem:[%s0 + $0x15c] sm:$0xff]
    %v4592 = vld [vmem:[%s0 + $0x164] sm:$0xff]
    %v4593 = vld [vmem:[%s0 + $0x16c] sm:$0xff]
    %v4594 = vld [vmem:[%s0 + $0x174] sm:$0xff]
    %v4595 = vld [vmem:[%s0 + $0x17c] sm:$0xff]
    %v4596 = vld [vmem:[%s0 + $0x184] sm:$0xff]
    %v4597 = vld [vmem:[%s0 + $0x18c] sm:$0xff]
    %v4598 = vld [vmem:[%s0 + $0x194] sm:$0xff]
    %v4599 = vld [vmem:[%s0 + $0x19c] sm:$0xff]
    %v4600 = vld [vmem:[%s0 + $0x1a4] sm:$0xff]
    %v4601 = vld [vmem:[%s0 + $0x1ac] sm:$0xff]
    %v4602 = vld [vmem:[%s0 + $0x1b4] sm:$0xff]
    %v4603 = vld [vmem:[%s0 + $0x1bc] sm:$0xff]
    %v4604 = vld [vmem:[%s0 + $0x1c4] sm:$0xff]
    %v4605 = vld [vmem:[%s0 + $0x1cc] sm:$0xff]
    %v4606 = vld [vmem:[%s0 + $0x1d4] sm:$0xff]
    %v4607 = vld [vmem:[%s0 + $0x1dc] sm:$0xff]
    %v4608 = vld [vmem:[%s0 + $0x1e4] sm:$0xff]
    %v4609 = vld [vmem:[%s0 + $0x1ec] sm:$0xff]
    %v4610 = vld [vmem:[%s0 + $0x1f4] sm:$0xff]
    %v4611 = vld [vmem:[%s0 + $0x1fc] sm:$0xff]
    %v4612 = vld [vmem:[%s0 + $0x204] sm:$0xff]
    %v4613 = vld [vmem:[%s0 + $0x20c] sm:$0xff]
    %v4614 = vld [vmem:[%s0 + $0x214] sm:$0xff]
    %v4615 = vld [vmem:[%s0 + $0x21c] sm:$0xff]
    %v4616 = vld [vmem:[%s0 + $0x224] sm:$0xff]
    %v4617 = vld [vmem:[%s0 + $0x22c] sm:$0xff]
    %v4618 = vld [vmem:[%s0 + $0x234] sm:$0xff]
    %v4619 = vld [vmem:[%s0 + $0x23c] sm:$0xff]
    %v4620 = vld [vmem:[%s0 + $0x244] sm:$0xff]
    %v4621 = vld [vmem:[%s0 + $0x24c] sm:$0xff]
    %v4622 = vld [vmem:[%s0 + $0x254] sm:$0xff]
    %v4623 = vld [vmem:[%s0 + $0x25c] sm:$0xff]
    %v4624 = vld [vmem:[%s0 + $0x264] sm:$0xff]
    %v4625 = vld [vmem:[%s0 + $0x26c] sm:$0xff]
    %v4626 = vld [vmem:[%s0 + $0x274] sm:$0xff]
    %s4627 = scalar_lea.vmem %s1, 20
    %v4628 = vld [vmem:[%s4627] sm:$0xf]
    %v4630 = vsel %vm895, %v4555, 0
    %v4633 = vsel %vm895, %v4556, 0
    %v4636 = vsel %vm895, %v4557, 0
    %v4639 = vsel %vm895, %v4558, 0
    %v4642 = vsel %vm895, %v4559, 0
    %v4645 = vsel %vm895, %v4560, 0
    %v4648 = vsel %vm895, %v4561, 0
    %v4651 = vsel %vm895, %v4562, 0
    %v4654 = vsel %vm895, %v4563, 0
    %v4657 = vsel %vm895, %v4564, 0
    %v4660 = vsel %vm895, %v4565, 0
    %v4663 = vsel %vm895, %v4566, 0
    %v4666 = vsel %vm895, %v4567, 0
    %v4669 = vsel %vm895, %v4568, 0
    %v4672 = vsel %vm895, %v4569, 0
    %v4675 = vsel %vm895, %v4570, 0
    %v4678 = vsel %vm895, %v4571, 0
    %v4681 = vsel %vm895, %v4572, 0
    %v4684 = vsel %vm895, %v4573, 0
    %v4687 = vsel %vm895, %v4574, 0
    %v4690 = vsel %vm895, %v4575, 0
    %v4693 = vsel %vm895, %v4576, 0
    %v4696 = vsel %vm895, %v4577, 0
    %v4699 = vsel %vm895, %v4578, 0
    %v4702 = vsel %vm895, %v4579, 0
    %v4705 = vsel %vm895, %v4580, 0
    %v4708 = vsel %vm895, %v4581, 0
    %v4711 = vsel %vm895, %v4582, 0
    %v4714 = vsel %vm895, %v4583, 0
    %v4717 = vsel %vm895, %v4584, 0
    %v4720 = vsel %vm895, %v4585, 0
    %v4723 = vsel %vm895, %v4586, 0
    %v4726 = vsel %vm895, %v4587, 0
    %v4729 = vsel %vm895, %v4588, 0
    %v4732 = vsel %vm895, %v4589, 0
    %v4735 = vsel %vm895, %v4590, 0
    %v4738 = vsel %vm895, %v4591, 0
    %v4741 = vsel %vm895, %v4592, 0
    %v4744 = vsel %vm895, %v4593, 0
    %v4747 = vsel %vm895, %v4594, 0
    %v4750 = vsel %vm895, %v4595, 0
    %v4753 = vsel %vm895, %v4596, 0
    %v4756 = vsel %vm895, %v4597, 0
    %v4759 = vsel %vm895, %v4598, 0
    %v4762 = vsel %vm895, %v4599, 0
    %v4765 = vsel %vm895, %v4600, 0
    %v4768 = vsel %vm895, %v4601, 0
    %v4771 = vsel %vm895, %v4602, 0
    %v4774 = vsel %vm895, %v4603, 0
    %v4777 = vsel %vm895, %v4604, 0
    %v4780 = vsel %vm895, %v4605, 0
    %v4783 = vsel %vm895, %v4606, 0
    %v4786 = vsel %vm895, %v4607, 0
    %v4789 = vsel %vm895, %v4608, 0
    %v4792 = vsel %vm895, %v4609, 0
    %v4795 = vsel %vm895, %v4610, 0
    %v4798 = vsel %vm895, %v4611, 0
    %v4801 = vsel %vm895, %v4612, 0
    %v4804 = vsel %vm895, %v4613, 0
    %v4807 = vsel %vm895, %v4614, 0
    %v4810 = vsel %vm895, %v4615, 0
    %v4813 = vsel %vm895, %v4616, 0
    %v4816 = vsel %vm895, %v4617, 0
    %v4819 = vsel %vm895, %v4618, 0
    %v4822 = vsel %vm895, %v4619, 0
    %v4825 = vsel %vm895, %v4620, 0
    %v4828 = vsel %vm895, %v4621, 0
    %v4831 = vsel %vm895, %v4622, 0
    %v4834 = vsel %vm895, %v4623, 0
    %v4837 = vsel %vm895, %v4624, 0
    %v4840 = vsel %vm895, %v4625, 0
    %v4843 = vsel %vm895, %v4626, 0
    %v4846 = vsel %vm1112, %v4628, 0
    %4848 = vmatprep.subr.mxu0 0.0
    %4849 = vmatpush1.msra.mxu0 %v4846
    %4850 = vmatprep.subr.mxu0 0.0
    %4851 = vmatpush1.msra.mxu0 0.0
    %4852 = vmatprep.subr.mxu0 0.0
    %4853 = vmatpush1.msra.mxu0 0.0
    %4854 = vmatprep.subr.mxu0 0.0
    %4855 = vmatpush1.msra.mxu0 0.0
    %4856 = vmatprep.subr.mxu0 0.0
    %4857 = vmatpush1.msra.mxu0 0.0
    %4858 = vmatprep.subr.mxu0 0.0
    %4859 = vmatpush1.msra.mxu0 0.0
    %4860 = vmatprep.subr.mxu0 0.0
    %4861 = vmatpush1.msra.mxu0 0.0
    %4862 = vmatprep.subr.mxu0 0.0
    %4863 = vmatpush1.msra.mxu0 0.0
    %4864 = vmatprep.subr.mxu0 0.0
    %4865 = vmatpush1.msra.mxu0 0.0
    %4866 = vmatprep.subr.mxu0 0.0
    %4867 = vmatpush1.msra.mxu0 0.0
    %4868 = vmatprep.subr.mxu0 0.0
    %4869 = vmatpush1.msra.mxu0 0.0
    %4870 = vmatprep.subr.mxu0 0.0
    %4871 = vmatpush1.msra.mxu0 0.0
    %4872 = vmatprep.subr.mxu0 0.0
    %4873 = vmatpush1.msra.mxu0 0.0
    %4874 = vmatprep.subr.mxu0 0.0
    %4875 = vmatpush1.msra.mxu0 0.0
    %4876 = vmatprep.subr.mxu0 0.0
    %4877 = vmatpush1.msra.mxu0 0.0
    %4878 = vmatprep.subr.mxu0 0.0
    %4879 = vmatpush1.msra.mxu0 0.0
    %4880 = vmatprep.subr.mxu0 0.0
    %4881 = vmatpush1.msra.mxu0 0.0
    %4882 = vmatprep.subr.mxu0 0.0
    %4883 = vmatpush1.msra.mxu0 0.0
    %4884 = vmatprep.subr.mxu0 0.0
    %4885 = vmatpush1.msra.mxu0 0.0
    %4886 = vmatprep.subr.mxu0 0.0
    %4887 = vmatpush1.msra.mxu0 0.0
    %4888 = vmatprep.subr.mxu0 0.0
    %4889 = vmatpush1.msra.mxu0 0.0
    %4890 = vmatprep.subr.mxu0 0.0
    %4891 = vmatpush1.msra.mxu0 0.0
    %4892 = vmatprep.subr.mxu0 0.0
    %4893 = vmatpush1.msra.mxu0 0.0
    %4894 = vmatprep.subr.mxu0 0.0
    %4895 = vmatpush1.msra.mxu0 0.0
    %4896 = vmatprep.subr.mxu0 0.0
    %4897 = vmatpush1.msra.mxu0 0.0
    %4898 = vmatprep.subr.mxu0 0.0
    %4899 = vmatpush1.msra.mxu0 0.0
    %4900 = vmatprep.subr.mxu0 0.0
    %4901 = vmatpush1.msra.mxu0 0.0
    %4902 = vmatprep.subr.mxu0 0.0
    %4903 = vmatpush1.msra.mxu0 0.0
    %4904 = vmatprep.subr.mxu0 0.0
    %4905 = vmatpush1.msra.mxu0 0.0
    %4906 = vmatprep.subr.mxu0 0.0
    %4907 = vmatpush1.msra.mxu0 0.0
    %4908 = vmatprep.subr.mxu0 0.0
    %4909 = vmatpush1.msra.mxu0 0.0
    %4910 = vmatprep.subr.mxu0 0.0
    %4911 = vmatpush1.msra.mxu0 0.0
    %4912 = vmatprep.mubr.f32.mxu0 0.0
    %4913 = vmatmul.mubr.f32.gmra.mrb[0].mxu0 %v4630
    %v4914 = vpop.f32.mrb[0].mxu0
    %v4915 = vadd.f32 0.0, %v4914
    %v4916 = vpop.f32.mrb[0].mxu0
    %4917 = vmatprep.mubr.f32.mxu0 0.0
    %4918 = vmatmul.mubr.f32.gmra.mrb[0].mxu0 %v4633
    %v4919 = vpop.f32.mrb[0].mxu0
    %v4920 = vadd.f32 0.0, %v4919
    %v4921 = vpop.f32.mrb[0].mxu0
    %4922 = vmatprep.mubr.f32.mxu0 0.0
    %4923 = vmatmul.mubr.f32.gmra.mrb[0].mxu0 %v4636
    %v4924 = vpop.f32.mrb[0].mxu0
    %v4925 = vadd.f32 0.0, %v4924
    %v4926 = vpop.f32.mrb[0].mxu0
    %4927 = vmatprep.mubr.f32.mxu0 0.0
    %4928 = vmatmul.mubr.f32.gmra.mrb[0].mxu0 %v4639
    %v4929 = vpop.f32.mrb[0].mxu0
    %v4930 = vadd.f32 0.0, %v4929
    %v4931 = vpop.f32.mrb[0].mxu0
    %4932 = vmatprep.mubr.f32.mxu0 0.0
    %4933 = vmatmul.mubr.f32.gmra.mrb[0].mxu0 %v4642
    %v4934 = vpop.f32.mrb[0].mxu0
    %v4935 = vadd.f32 0.0, %v4934
    %v4936 = vpop.f32.mrb[0].mxu0
    %4937 = vmatprep.mubr.f32.mxu0 0.0
    %4938 = vmatmul.mubr.f32.gmra.mrb[0].mxu0 %v4645
    %v4939 = vpop.f32.mrb[0].mxu0
    %v4940 = vadd.f32 0.0, %v4939
    %v4941 = vpop.f32.mrb[0].mxu0
    %4942 = vmatprep.mubr.f32.mxu0 0.0
    %4943 = vmatmul.mubr.f32.gmra.mrb[0].mxu0 %v4648
    %v4944 = vpop.f32.mrb[0].mxu0
    %v4945 = vadd.f32 0.0, %v4944
    %v4946 = vpop.f32.mrb[0].mxu0
    %4947 = vmatprep.mubr.f32.mxu0 0.0
    %4948 = vmatmul.mubr.f32.gmra.mrb[0].mxu0 %v4651
    %v4949 = vpop.f32.mrb[0].mxu0
    %v4950 = vadd.f32 0.0, %v4949
    %v4951 = vpop.f32.mrb[0].mxu0
    %4952 = vmatprep.mubr.f32.mxu0 0.0
    %4953 = vmatmul.mubr.f32.gmra.mrb[0].mxu0 %v4654
    %v4954 = vpop.f32.mrb[0].mxu0
    %v4955 = vadd.f32 0.0, %v4954
    %v4956 = vpop.f32.mrb[0].mxu0
    %4957 = vmatprep.mubr.f32.mxu0 0.0
    %4958 = vmatmul.mubr.f32.gmra.mrb[0].mxu0 %v4657
    %v4959 = vpop.f32.mrb[0].mxu0
    %v4960 = vadd.f32 0.0, %v4959
    %v4961 = vpop.f32.mrb[0].mxu0
    %4962 = vmatprep.mubr.f32.mxu0 0.0
    %4963 = vmatmul.mubr.f32.gmra.mrb[0].mxu0 %v4660
    %v4964 = vpop.f32.mrb[0].mxu0
    %v4965 = vadd.f32 0.0, %v4964
    %v4966 = vpop.f32.mrb[0].mxu0
    %4967 = vmatprep.mubr.f32.mxu0 0.0
    %4968 = vmatmul.mubr.f32.gmra.mrb[0].mxu0 %v4663
    %v4969 = vpop.f32.mrb[0].mxu0
    %v4970 = vadd.f32 0.0, %v4969
    %v4971 = vpop.f32.mrb[0].mxu0
    %4972 = vmatprep.mubr.f32.mxu0 0.0
    %4973 = vmatmul.mubr.f32.gmra.mrb[0].mxu0 %v4666
    %v4974 = vpop.f32.mrb[0].mxu0
    %v4975 = vadd.f32 0.0, %v4974
    %v4976 = vpop.f32.mrb[0].mxu0
    %4977 = vmatprep.mubr.f32.mxu0 0.0
    %4978 = vmatmul.mubr.f32.gmra.mrb[0].mxu0 %v4669
    %v4979 = vpop.f32.mrb[0].mxu0
    %v4980 = vadd.f32 0.0, %v4979
    %v4981 = vpop.f32.mrb[0].mxu0
    %4982 = vmatprep.mubr.f32.mxu0 0.0
    %4983 = vmatmul.mubr.f32.gmra.mrb[0].mxu0 %v4672
    %v4984 = vpop.f32.mrb[0].mxu0
    %v4985 = vadd.f32 0.0, %v4984
    %v4986 = vpop.f32.mrb[0].mxu0
    %4987 = vmatprep.mubr.f32.mxu0 0.0
    %4988 = vmatmul.mubr.f32.gmra.mrb[0].mxu0 %v4675
    %v4989 = vpop.f32.mrb[0].mxu0
    %v4990 = vadd.f32 0.0, %v4989
    %v4991 = vpop.f32.mrb[0].mxu0
    %4992 = vmatprep.mubr.f32.mxu0 0.0
    %4993 = vmatmul.mubr.f32.gmra.mrb[0].mxu0 %v4678
    %v4994 = vpop.f32.mrb[0].mxu0
    %v4995 = vadd.f32 0.0, %v4994
    %v4996 = vpop.f32.mrb[0].mxu0
    %4997 = vmatprep.mubr.f32.mxu0 0.0
    %4998 = vmatmul.mubr.f32.gmra.mrb[0].mxu0 %v4681
    %v4999 = vpop.f32.mrb[0].mxu0
    %v5000 = vadd.f32 0.0, %v4999
    %v5001 = vpop.f32.mrb[0].mxu0
    %5002 = vmatprep.mubr.f32.mxu0 0.0
    %5003 = vmatmul.mubr.f32.gmra.mrb[0].mxu0 %v4684
    %v5004 = vpop.f32.mrb[0].mxu0
    %v5005 = vadd.f32 0.0, %v5004
    %v5006 = vpop.f32.mrb[0].mxu0
    %5007 = vmatprep.mubr.f32.mxu0 0.0
    %5008 = vmatmul.mubr.f32.gmra.mrb[0].mxu0 %v4687
    %v5009 = vpop.f32.mrb[0].mxu0
    %v5010 = vadd.f32 0.0, %v5009
    %v5011 = vpop.f32.mrb[0].mxu0
    %5012 = vmatprep.mubr.f32.mxu0 0.0
    %5013 = vmatmul.mubr.f32.gmra.mrb[0].mxu0 %v4690
    %v5014 = vpop.f32.mrb[0].mxu0
    %v5015 = vadd.f32 0.0, %v5014
    %v5016 = vpop.f32.mrb[0].mxu0
    %5017 = vmatprep.mubr.f32.mxu0 0.0
    %5018 = vmatmul.mubr.f32.gmra.mrb[0].mxu0 %v4693
    %v5019 = vpop.f32.mrb[0].mxu0
    %v5020 = vadd.f32 0.0, %v5019
    %v5021 = vpop.f32.mrb[0].mxu0
    %5022 = vmatprep.mubr.f32.mxu0 0.0
    %5023 = vmatmul.mubr.f32.gmra.mrb[0].mxu0 %v4696
    %v5024 = vpop.f32.mrb[0].mxu0
    %v5025 = vadd.f32 0.0, %v5024
    %v5026 = vpop.f32.mrb[0].mxu0
    %5027 = vmatprep.mubr.f32.mxu0 0.0
    %5028 = vmatmul.mubr.f32.gmra.mrb[0].mxu0 %v4699
    %v5029 = vpop.f32.mrb[0].mxu0
    %v5030 = vadd.f32 0.0, %v5029
    %v5031 = vpop.f32.mrb[0].mxu0
    %5032 = vmatprep.mubr.f32.mxu0 0.0
    %5033 = vmatmul.mubr.f32.gmra.mrb[0].mxu0 %v4702
    %v5034 = vpop.f32.mrb[0].mxu0
    %v5035 = vadd.f32 0.0, %v5034
    %v5036 = vpop.f32.mrb[0].mxu0
    %5037 = vmatprep.mubr.f32.mxu0 0.0
    %5038 = vmatmul.mubr.f32.gmra.mrb[0].mxu0 %v4705
    %v5039 = vpop.f32.mrb[0].mxu0
    %v5040 = vadd.f32 0.0, %v5039
    %v5041 = vpop.f32.mrb[0].mxu0
    %5042 = vmatprep.mubr.f32.mxu0 0.0
    %5043 = vmatmul.mubr.f32.gmra.mrb[0].mxu0 %v4708
    %v5044 = vpop.f32.mrb[0].mxu0
    %v5045 = vadd.f32 0.0, %v5044
    %v5046 = vpop.f32.mrb[0].mxu0
    %5047 = vmatprep.mubr.f32.mxu0 0.0
    %5048 = vmatmul.mubr.f32.gmra.mrb[0].mxu0 %v4711
    %v5049 = vpop.f32.mrb[0].mxu0
    %v5050 = vadd.f32 0.0, %v5049
    %v5051 = vpop.f32.mrb[0].mxu0
    %5052 = vmatprep.mubr.f32.mxu0 0.0
    %5053 = vmatmul.mubr.f32.gmra.mrb[0].mxu0 %v4714
    %v5054 = vpop.f32.mrb[0].mxu0
    %v5055 = vadd.f32 0.0, %v5054
    %v5056 = vpop.f32.mrb[0].mxu0
    %5057 = vmatprep.mubr.f32.mxu0 0.0
    %5058 = vmatmul.mubr.f32.gmra.mrb[0].mxu0 %v4717
    %v5059 = vpop.f32.mrb[0].mxu0
    %v5060 = vadd.f32 0.0, %v5059
    %v5061 = vpop.f32.mrb[0].mxu0
    %5062 = vmatprep.mubr.f32.mxu0 0.0
    %5063 = vmatmul.mubr.f32.gmra.mrb[0].mxu0 %v4720
    %v5064 = vpop.f32.mrb[0].mxu0
    %v5065 = vadd.f32 0.0, %v5064
    %v5066 = vpop.f32.mrb[0].mxu0
    %5067 = vmatprep.mubr.f32.mxu0 0.0
    %5068 = vmatmul.mubr.f32.gmra.mrb[0].mxu0 %v4723
    %v5069 = vpop.f32.mrb[0].mxu0
    %v5070 = vadd.f32 0.0, %v5069
    %v5071 = vpop.f32.mrb[0].mxu0
    %5072 = vmatprep.mubr.f32.mxu0 0.0
    %5073 = vmatmul.mubr.f32.gmra.mrb[0].mxu0 %v4726
    %v5074 = vpop.f32.mrb[0].mxu0
    %v5075 = vadd.f32 0.0, %v5074
    %v5076 = vpop.f32.mrb[0].mxu0
    %5077 = vmatprep.mubr.f32.mxu0 0.0
    %5078 = vmatmul.mubr.f32.gmra.mrb[0].mxu0 %v4729
    %v5079 = vpop.f32.mrb[0].mxu0
    %v5080 = vadd.f32 0.0, %v5079
    %v5081 = vpop.f32.mrb[0].mxu0
    %5082 = vmatprep.mubr.f32.mxu0 0.0
    %5083 = vmatmul.mubr.f32.gmra.mrb[0].mxu0 %v4732
    %v5084 = vpop.f32.mrb[0].mxu0
    %v5085 = vadd.f32 0.0, %v5084
    %v5086 = vpop.f32.mrb[0].mxu0
    %5087 = vmatprep.mubr.f32.mxu0 0.0
    %5088 = vmatmul.mubr.f32.gmra.mrb[0].mxu0 %v4735
    %v5089 = vpop.f32.mrb[0].mxu0
    %v5090 = vadd.f32 0.0, %v5089
    %v5091 = vpop.f32.mrb[0].mxu0
    %5092 = vmatprep.mubr.f32.mxu0 0.0
    %5093 = vmatmul.mubr.f32.gmra.mrb[0].mxu0 %v4738
    %v5094 = vpop.f32.mrb[0].mxu0
    %v5095 = vadd.f32 0.0, %v5094
    %v5096 = vpop.f32.mrb[0].mxu0
    %5097 = vmatprep.mubr.f32.mxu0 0.0
    %5098 = vmatmul.mubr.f32.gmra.mrb[0].mxu0 %v4741
    %v5099 = vpop.f32.mrb[0].mxu0
    %v5100 = vadd.f32 0.0, %v5099
    %v5101 = vpop.f32.mrb[0].mxu0
    %5102 = vmatprep.mubr.f32.mxu0 0.0
    %5103 = vmatmul.mubr.f32.gmra.mrb[0].mxu0 %v4744
    %v5104 = vpop.f32.mrb[0].mxu0
    %v5105 = vadd.f32 0.0, %v5104
    %v5106 = vpop.f32.mrb[0].mxu0
    %5107 = vmatprep.mubr.f32.mxu0 0.0
    %5108 = vmatmul.mubr.f32.gmra.mrb[0].mxu0 %v4747
    %v5109 = vpop.f32.mrb[0].mxu0
    %v5110 = vadd.f32 0.0, %v5109
    %v5111 = vpop.f32.mrb[0].mxu0
    %5112 = vmatprep.mubr.f32.mxu0 0.0
    %5113 = vmatmul.mubr.f32.gmra.mrb[0].mxu0 %v4750
    %v5114 = vpop.f32.mrb[0].mxu0
    %v5115 = vadd.f32 0.0, %v5114
    %v5116 = vpop.f32.mrb[0].mxu0
    %5117 = vmatprep.mubr.f32.mxu0 0.0
    %5118 = vmatmul.mubr.f32.gmra.mrb[0].mxu0 %v4753
    %v5119 = vpop.f32.mrb[0].mxu0
    %v5120 = vadd.f32 0.0, %v5119
    %v5121 = vpop.f32.mrb[0].mxu0
    %5122 = vmatprep.mubr.f32.mxu0 0.0
    %5123 = vmatmul.mubr.f32.gmra.mrb[0].mxu0 %v4756
    %v5124 = vpop.f32.mrb[0].mxu0
    %v5125 = vadd.f32 0.0, %v5124
    %v5126 = vpop.f32.mrb[0].mxu0
    %5127 = vmatprep.mubr.f32.mxu0 0.0
    %5128 = vmatmul.mubr.f32.gmra.mrb[0].mxu0 %v4759
    %v5129 = vpop.f32.mrb[0].mxu0
    %v5130 = vadd.f32 0.0, %v5129
    %v5131 = vpop.f32.mrb[0].mxu0
    %5132 = vmatprep.mubr.f32.mxu0 0.0
    %5133 = vmatmul.mubr.f32.gmra.mrb[0].mxu0 %v4762
    %v5134 = vpop.f32.mrb[0].mxu0
    %v5135 = vadd.f32 0.0, %v5134
    %v5136 = vpop.f32.mrb[0].mxu0
    %5137 = vmatprep.mubr.f32.mxu0 0.0
    %5138 = vmatmul.mubr.f32.gmra.mrb[0].mxu0 %v4765
    %v5139 = vpop.f32.mrb[0].mxu0
    %v5140 = vadd.f32 0.0, %v5139
    %v5141 = vpop.f32.mrb[0].mxu0
    %5142 = vmatprep.mubr.f32.mxu0 0.0
    %5143 = vmatmul.mubr.f32.gmra.mrb[0].mxu0 %v4768
    %v5144 = vpop.f32.mrb[0].mxu0
    %v5145 = vadd.f32 0.0, %v5144
    %v5146 = vpop.f32.mrb[0].mxu0
    %5147 = vmatprep.mubr.f32.mxu0 0.0
    %5148 = vmatmul.mubr.f32.gmra.mrb[0].mxu0 %v4771
    %v5149 = vpop.f32.mrb[0].mxu0
    %v5150 = vadd.f32 0.0, %v5149
    %v5151 = vpop.f32.mrb[0].mxu0
    %5152 = vmatprep.mubr.f32.mxu0 0.0
    %5153 = vmatmul.mubr.f32.gmra.mrb[0].mxu0 %v4774
    %v5154 = vpop.f32.mrb[0].mxu0
    %v5155 = vadd.f32 0.0, %v5154
    %v5156 = vpop.f32.mrb[0].mxu0
    %5157 = vmatprep.mubr.f32.mxu0 0.0
    %5158 = vmatmul.mubr.f32.gmra.mrb[0].mxu0 %v4777
    %v5159 = vpop.f32.mrb[0].mxu0
    %v5160 = vadd.f32 0.0, %v5159
    %v5161 = vpop.f32.mrb[0].mxu0
    %5162 = vmatprep.mubr.f32.mxu0 0.0
    %5163 = vmatmul.mubr.f32.gmra.mrb[0].mxu0 %v4780
    %v5164 = vpop.f32.mrb[0].mxu0
    %v5165 = vadd.f32 0.0, %v5164
    %v5166 = vpop.f32.mrb[0].mxu0
    %5167 = vmatprep.mubr.f32.mxu0 0.0
    %5168 = vmatmul.mubr.f32.gmra.mrb[0].mxu0 %v4783
    %v5169 = vpop.f32.mrb[0].mxu0
    %v5170 = vadd.f32 0.0, %v5169
    %v5171 = vpop.f32.mrb[0].mxu0
    %5172 = vmatprep.mubr.f32.mxu0 0.0
    %5173 = vmatmul.mubr.f32.gmra.mrb[0].mxu0 %v4786
    %v5174 = vpop.f32.mrb[0].mxu0
    %v5175 = vadd.f32 0.0, %v5174
    %v5176 = vpop.f32.mrb[0].mxu0
    %5177 = vmatprep.mubr.f32.mxu0 0.0
    %5178 = vmatmul.mubr.f32.gmra.mrb[0].mxu0 %v4789
    %v5179 = vpop.f32.mrb[0].mxu0
    %v5180 = vadd.f32 0.0, %v5179
    %v5181 = vpop.f32.mrb[0].mxu0
    %5182 = vmatprep.mubr.f32.mxu0 0.0
    %5183 = vmatmul.mubr.f32.gmra.mrb[0].mxu0 %v4792
    %v5184 = vpop.f32.mrb[0].mxu0
    %v5185 = vadd.f32 0.0, %v5184
    %v5186 = vpop.f32.mrb[0].mxu0
    %5187 = vmatprep.mubr.f32.mxu0 0.0
    %5188 = vmatmul.mubr.f32.gmra.mrb[0].mxu0 %v4795
    %v5189 = vpop.f32.mrb[0].mxu0
    %v5190 = vadd.f32 0.0, %v5189
    %v5191 = vpop.f32.mrb[0].mxu0
    %5192 = vmatprep.mubr.f32.mxu0 0.0
    %5193 = vmatmul.mubr.f32.gmra.mrb[0].mxu0 %v4798
    %v5194 = vpop.f32.mrb[0].mxu0
    %v5195 = vadd.f32 0.0, %v5194
    %v5196 = vpop.f32.mrb[0].mxu0
    %5197 = vmatprep.mubr.f32.mxu0 0.0
    %5198 = vmatmul.mubr.f32.gmra.mrb[0].mxu0 %v4801
    %v5199 = vpop.f32.mrb[0].mxu0
    %v5200 = vadd.f32 0.0, %v5199
    %v5201 = vpop.f32.mrb[0].mxu0
    %5202 = vmatprep.mubr.f32.mxu0 0.0
    %5203 = vmatmul.mubr.f32.gmra.mrb[0].mxu0 %v4804
    %v5204 = vpop.f32.mrb[0].mxu0
    %v5205 = vadd.f32 0.0, %v5204
    %v5206 = vpop.f32.mrb[0].mxu0
    %5207 = vmatprep.mubr.f32.mxu0 0.0
    %5208 = vmatmul.mubr.f32.gmra.mrb[0].mxu0 %v4807
    %v5209 = vpop.f32.mrb[0].mxu0
    %v5210 = vadd.f32 0.0, %v5209
    %v5211 = vpop.f32.mrb[0].mxu0
    %5212 = vmatprep.mubr.f32.mxu0 0.0
    %5213 = vmatmul.mubr.f32.gmra.mrb[0].mxu0 %v4810
    %v5214 = vpop.f32.mrb[0].mxu0
    %v5215 = vadd.f32 0.0, %v5214
    %v5216 = vpop.f32.mrb[0].mxu0
    %5217 = vmatprep.mubr.f32.mxu0 0.0
    %5218 = vmatmul.mubr.f32.gmra.mrb[0].mxu0 %v4813
    %v5219 = vpop.f32.mrb[0].mxu0
    %v5220 = vadd.f32 0.0, %v5219
    %v5221 = vpop.f32.mrb[0].mxu0
    %5222 = vmatprep.mubr.f32.mxu0 0.0
    %5223 = vmatmul.mubr.f32.gmra.mrb[0].mxu0 %v4816
    %v5224 = vpop.f32.mrb[0].mxu0
    %v5225 = vadd.f32 0.0, %v5224
    %v5226 = vpop.f32.mrb[0].mxu0
    %5227 = vmatprep.mubr.f32.mxu0 0.0
    %5228 = vmatmul.mubr.f32.gmra.mrb[0].mxu0 %v4819
    %v5229 = vpop.f32.mrb[0].mxu0
    %v5230 = vadd.f32 0.0, %v5229
    %v5231 = vpop.f32.mrb[0].mxu0
    %5232 = vmatprep.mubr.f32.mxu0 0.0
    %5233 = vmatmul.mubr.f32.gmra.mrb[0].mxu0 %v4822
    %v5234 = vpop.f32.mrb[0].mxu0
    %v5235 = vadd.f32 0.0, %v5234
    %v5236 = vpop.f32.mrb[0].mxu0
    %5237 = vmatprep.mubr.f32.mxu0 0.0
    %5238 = vmatmul.mubr.f32.gmra.mrb[0].mxu0 %v4825
    %v5239 = vpop.f32.mrb[0].mxu0
    %v5240 = vadd.f32 0.0, %v5239
    %v5241 = vpop.f32.mrb[0].mxu0
    %5242 = vmatprep.mubr.f32.mxu0 0.0
    %5243 = vmatmul.mubr.f32.gmra.mrb[0].mxu0 %v4828
    %v5244 = vpop.f32.mrb[0].mxu0
    %v5245 = vadd.f32 0.0, %v5244
    %v5246 = vpop.f32.mrb[0].mxu0
    %5247 = vmatprep.mubr.f32.mxu0 0.0
    %5248 = vmatmul.mubr.f32.gmra.mrb[0].mxu0 %v4831
    %v5249 = vpop.f32.mrb[0].mxu0
    %v5250 = vadd.f32 0.0, %v5249
    %v5251 = vpop.f32.mrb[0].mxu0
    %5252 = vmatprep.mubr.f32.mxu0 0.0
    %5253 = vmatmul.mubr.f32.gmra.mrb[0].mxu0 %v4834
    %v5254 = vpop.f32.mrb[0].mxu0
    %v5255 = vadd.f32 0.0, %v5254
    %v5256 = vpop.f32.mrb[0].mxu0
    %5257 = vmatprep.mubr.f32.mxu0 0.0
    %5258 = vmatmul.mubr.f32.gmra.mrb[0].mxu0 %v4837
    %v5259 = vpop.f32.mrb[0].mxu0
    %v5260 = vadd.f32 0.0, %v5259
    %v5261 = vpop.f32.mrb[0].mxu0
    %5262 = vmatprep.mubr.f32.mxu0 0.0
    %5263 = vmatmul.mubr.f32.gmra.mrb[0].mxu0 %v4840
    %v5264 = vpop.f32.mrb[0].mxu0
    %v5265 = vadd.f32 0.0, %v5264
    %v5266 = vpop.f32.mrb[0].mxu0
    %5267 = vmatprep.mubr.f32.mxu0 0.0
    %5268 = vmatmul.mubr.f32.gmra.mrb[0].mxu0 %v4843
    %v5269 = vpop.f32.mrb[0].mxu0
    %v5270 = vadd.f32 0.0, %v5269
    %v5271 = vpop.f32.mrb[0].mxu0
    %5272 = vdwg.mxu0
    %v5273 = vadd.f32 %v4483, %v4915
    %v5274 = vadd.f32 %v4484, %v4920
    %v5275 = vadd.f32 %v4485, %v4925
    %v5276 = vadd.f32 %v4486, %v4930
    %v5277 = vadd.f32 %v4487, %v4935
    %v5278 = vadd.f32 %v4488, %v4940
    %v5279 = vadd.f32 %v4489, %v4945
    %v5280 = vadd.f32 %v4490, %v4950
    %v5281 = vadd.f32 %v4491, %v4955
    %v5282 = vadd.f32 %v4492, %v4960
    %v5283 = vadd.f32 %v4493, %v4965
    %v5284 = vadd.f32 %v4494, %v4970
    %v5285 = vadd.f32 %v4495, %v4975
    %v5286 = vadd.f32 %v4496, %v4980
    %v5287 = vadd.f32 %v4497, %v4985
    %v5288 = vadd.f32 %v4498, %v4990
    %v5289 = vadd.f32 %v4499, %v4995
    %v5290 = vadd.f32 %v4500, %v5000
    %v5291 = vadd.f32 %v4501, %v5005
    %v5292 = vadd.f32 %v4502, %v5010
    %v5293 = vadd.f32 %v4503, %v5015
    %v5294 = vadd.f32 %v4504, %v5020
    %v5295 = vadd.f32 %v4505, %v5025
    %v5296 = vadd.f32 %v4506, %v5030
    %v5297 = vadd.f32 %v4507, %v5035
    %v5298 = vadd.f32 %v4508, %v5040
    %v5299 = vadd.f32 %v4509, %v5045
    %v5300 = vadd.f32 %v4510, %v5050
    %v5301 = vadd.f32 %v4511, %v5055
    %v5302 = vadd.f32 %v4512, %v5060
    %v5303 = vadd.f32 %v4513, %v5065
    %v5304 = vadd.f32 %v4514, %v5070
    %v5305 = vadd.f32 %v4515, %v5075
    %v5306 = vadd.f32 %v4516, %v5080
    %v5307 = vadd.f32 %v4517, %v5085
    %v5308 = vadd.f32 %v4518, %v5090
    %v5309 = vadd.f32 %v4519, %v5095
    %v5310 = vadd.f32 %v4520, %v5100
    %v5311 = vadd.f32 %v4521, %v5105
    %v5312 = vadd.f32 %v4522, %v5110
    %v5313 = vadd.f32 %v4523, %v5115
    %v5314 = vadd.f32 %v4524, %v5120
    %v5315 = vadd.f32 %v4525, %v5125
    %v5316 = vadd.f32 %v4526, %v5130
    %v5317 = vadd.f32 %v4527, %v5135
    %v5318 = vadd.f32 %v4528, %v5140
    %v5319 = vadd.f32 %v4529, %v5145
    %v5320 = vadd.f32 %v4530, %v5150
    %v5321 = vadd.f32 %v4531, %v5155
    %v5322 = vadd.f32 %v4532, %v5160
    %v5323 = vadd.f32 %v4533, %v5165
    %v5324 = vadd.f32 %v4534, %v5170
    %v5325 = vadd.f32 %v4535, %v5175
    %v5326 = vadd.f32 %v4536, %v5180
    %v5327 = vadd.f32 %v4537, %v5185
    %v5328 = vadd.f32 %v4538, %v5190
    %v5329 = vadd.f32 %v4539, %v5195
    %v5330 = vadd.f32 %v4540, %v5200
    %v5331 = vadd.f32 %v4541, %v5205
    %v5332 = vadd.f32 %v4542, %v5210
    %v5333 = vadd.f32 %v4543, %v5215
    %v5334 = vadd.f32 %v4544, %v5220
    %v5335 = vadd.f32 %v4545, %v5225
    %v5336 = vadd.f32 %v4546, %v5230
    %v5337 = vadd.f32 %v4547, %v5235
    %v5338 = vadd.f32 %v4548, %v5240
    %v5339 = vadd.f32 %v4549, %v5245
    %v5340 = vadd.f32 %v4550, %v5250
    %v5341 = vadd.f32 %v4551, %v5255
    %v5342 = vadd.f32 %v4552, %v5260
    %v5343 = vadd.f32 %v4553, %v5265
    %v5344 = vadd.f32 %v4554, %v5270
    %v5345 = vld [vmem:[%s0 + $0x24] sm:$0xff]
    %v5346 = vld [vmem:[%s0 + $0x2c] sm:$0xff]
    %v5347 = vld [vmem:[%s0 + $0x34] sm:$0xff]
    %v5348 = vld [vmem:[%s0 + $0x3c] sm:$0xff]
    %v5349 = vld [vmem:[%s0 + $0x44] sm:$0xff]
    %v5350 = vld [vmem:[%s0 + $0x4c] sm:$0xff]
    %v5351 = vld [vmem:[%s0 + $0x54] sm:$0xff]
    %v5352 = vld [vmem:[%s0 + $0x5c] sm:$0xff]
    %v5353 = vld [vmem:[%s0 + $0x64] sm:$0xff]
    %v5354 = vld [vmem:[%s0 + $0x6c] sm:$0xff]
    %v5355 = vld [vmem:[%s0 + $0x74] sm:$0xff]
    %v5356 = vld [vmem:[%s0 + $0x7c] sm:$0xff]
    %v5357 = vld [vmem:[%s0 + $0x84] sm:$0xff]
    %v5358 = vld [vmem:[%s0 + $0x8c] sm:$0xff]
    %v5359 = vld [vmem:[%s0 + $0x94] sm:$0xff]
    %v5360 = vld [vmem:[%s0 + $0x9c] sm:$0xff]
    %v5361 = vld [vmem:[%s0 + $0xa4] sm:$0xff]
    %v5362 = vld [vmem:[%s0 + $0xac] sm:$0xff]
    %v5363 = vld [vmem:[%s0 + $0xb4] sm:$0xff]
    %v5364 = vld [vmem:[%s0 + $0xbc] sm:$0xff]
    %v5365 = vld [vmem:[%s0 + $0xc4] sm:$0xff]
    %v5366 = vld [vmem:[%s0 + $0xcc] sm:$0xff]
    %v5367 = vld [vmem:[%s0 + $0xd4] sm:$0xff]
    %v5368 = vld [vmem:[%s0 + $0xdc] sm:$0xff]
    %v5369 = vld [vmem:[%s0 + $0xe4] sm:$0xff]
    %v5370 = vld [vmem:[%s0 + $0xec] sm:$0xff]
    %v5371 = vld [vmem:[%s0 + $0xf4] sm:$0xff]
    %v5372 = vld [vmem:[%s0 + $0xfc] sm:$0xff]
    %v5373 = vld [vmem:[%s0 + $0x104] sm:$0xff]
    %v5374 = vld [vmem:[%s0 + $0x10c] sm:$0xff]
    %v5375 = vld [vmem:[%s0 + $0x114] sm:$0xff]
    %v5376 = vld [vmem:[%s0 + $0x11c] sm:$0xff]
    %v5377 = vld [vmem:[%s0 + $0x124] sm:$0xff]
    %v5378 = vld [vmem:[%s0 + $0x12c] sm:$0xff]
    %v5379 = vld [vmem:[%s0 + $0x134] sm:$0xff]
    %v5380 = vld [vmem:[%s0 + $0x13c] sm:$0xff]
    %v5381 = vld [vmem:[%s0 + $0x16c] sm:$0xff]
    %v5382 = vld [vmem:[%s0 + $0x174] sm:$0xff]
    %v5383 = vld [vmem:[%s0 + $0x17c] sm:$0xff]
    %v5384 = vld [vmem:[%s0 + $0x184] sm:$0xff]
    %v5385 = vld [vmem:[%s0 + $0x18c] sm:$0xff]
    %v5386 = vld [vmem:[%s0 + $0x194] sm:$0xff]
    %v5387 = vld [vmem:[%s0 + $0x19c] sm:$0xff]
    %v5388 = vld [vmem:[%s0 + $0x1a4] sm:$0xff]
    %v5389 = vld [vmem:[%s0 + $0x1ac] sm:$0xff]
    %v5390 = vld [vmem:[%s0 + $0x1b4] sm:$0xff]
    %v5391 = vld [vmem:[%s0 + $0x1bc] sm:$0xff]
    %v5392 = vld [vmem:[%s0 + $0x1c4] sm:$0xff]
    %v5393 = vld [vmem:[%s0 + $0x1cc] sm:$0xff]
    %v5394 = vld [vmem:[%s0 + $0x1d4] sm:$0xff]
    %v5395 = vld [vmem:[%s0 + $0x1dc] sm:$0xff]
    %v5396 = vld [vmem:[%s0 + $0x1e4] sm:$0xff]
    %v5397 = vld [vmem:[%s0 + $0x1ec] sm:$0xff]
    %v5398 = vld [vmem:[%s0 + $0x1f4] sm:$0xff]
    %v5399 = vld [vmem:[%s0 + $0x1fc] sm:$0xff]
    %v5400 = vld [vmem:[%s0 + $0x204] sm:$0xff]
    %v5401 = vld [vmem:[%s0 + $0x20c] sm:$0xff]
    %v5402 = vld [vmem:[%s0 + $0x214] sm:$0xff]
    %v5403 = vld [vmem:[%s0 + $0x21c] sm:$0xff]
    %v5404 = vld [vmem:[%s0 + $0x224] sm:$0xff]
    %v5405 = vld [vmem:[%s0 + $0x22c] sm:$0xff]
    %v5406 = vld [vmem:[%s0 + $0x234] sm:$0xff]
    %v5407 = vld [vmem:[%s0 + $0x23c] sm:$0xff]
    %v5408 = vld [vmem:[%s0 + $0x244] sm:$0xff]
    %v5409 = vld [vmem:[%s0 + $0x24c] sm:$0xff]
    %v5410 = vld [vmem:[%s0 + $0x254] sm:$0xff]
    %v5411 = vld [vmem:[%s0 + $0x25c] sm:$0xff]
    %v5412 = vld [vmem:[%s0 + $0x264] sm:$0xff]
    %v5413 = vld [vmem:[%s0 + $0x26c] sm:$0xff]
    %v5414 = vld [vmem:[%s0 + $0x274] sm:$0xff]
    %v5415 = vld [vmem:[%s0 + $0x27c] sm:$0xff]
    %v5416 = vld [vmem:[%s0 + $0x284] sm:$0xff]
    %s5417 = scalar_lea.vmem %s1, 24
    %v5418 = vld [vmem:[%s5417] sm:$0xf]
    %v5420 = vsel %vm895, %v5345, 0
    %v5423 = vsel %vm895, %v5346, 0
    %v5426 = vsel %vm895, %v5347, 0
    %v5429 = vsel %vm895, %v5348, 0
    %v5432 = vsel %vm895, %v5349, 0
    %v5435 = vsel %vm895, %v5350, 0
    %v5438 = vsel %vm895, %v5351, 0
    %v5441 = vsel %vm895, %v5352, 0
    %v5444 = vsel %vm895, %v5353, 0
    %v5447 = vsel %vm895, %v5354, 0
    %v5450 = vsel %vm895, %v5355, 0
    %v5453 = vsel %vm895, %v5356, 0
    %v5456 = vsel %vm895, %v5357, 0
    %v5459 = vsel %vm895, %v5358, 0
    %v5462 = vsel %vm895, %v5359, 0
    %v5465 = vsel %vm895, %v5360, 0
    %v5468 = vsel %vm895, %v5361, 0
    %v5471 = vsel %vm895, %v5362, 0
    %v5474 = vsel %vm895, %v5363, 0
    %v5477 = vsel %vm895, %v5364, 0
    %v5480 = vsel %vm895, %v5365, 0
    %v5483 = vsel %vm895, %v5366, 0
    %v5486 = vsel %vm895, %v5367, 0
    %v5489 = vsel %vm895, %v5368, 0
    %v5492 = vsel %vm895, %v5369, 0
    %v5495 = vsel %vm895, %v5370, 0
    %v5498 = vsel %vm895, %v5371, 0
    %v5501 = vsel %vm895, %v5372, 0
    %v5504 = vsel %vm895, %v5373, 0
    %v5507 = vsel %vm895, %v5374, 0
    %v5510 = vsel %vm895, %v5375, 0
    %v5513 = vsel %vm895, %v5376, 0
    %v5516 = vsel %vm895, %v5377, 0
    %v5519 = vsel %vm895, %v5378, 0
    %v5522 = vsel %vm895, %v5379, 0
    %v5525 = vsel %vm895, %v5380, 0
    %v5528 = vsel %vm895, %v5381, 0
    %v5531 = vsel %vm895, %v5382, 0
    %v5534 = vsel %vm895, %v5383, 0
    %v5537 = vsel %vm895, %v5384, 0
    %v5540 = vsel %vm895, %v5385, 0
    %v5543 = vsel %vm895, %v5386, 0
    %v5546 = vsel %vm895, %v5387, 0
    %v5549 = vsel %vm895, %v5388, 0
    %v5552 = vsel %vm895, %v5389, 0
    %v5555 = vsel %vm895, %v5390, 0
    %v5558 = vsel %vm895, %v5391, 0
    %v5561 = vsel %vm895, %v5392, 0
    %v5564 = vsel %vm895, %v5393, 0
    %v5567 = vsel %vm895, %v5394, 0
    %v5570 = vsel %vm895, %v5395, 0
    %v5573 = vsel %vm895, %v5396, 0
    %v5576 = vsel %vm895, %v5397, 0
    %v5579 = vsel %vm895, %v5398, 0
    %v5582 = vsel %vm895, %v5399, 0
    %v5585 = vsel %vm895, %v5400, 0
    %v5588 = vsel %vm895, %v5401, 0
    %v5591 = vsel %vm895, %v5402, 0
    %v5594 = vsel %vm895, %v5403, 0
    %v5597 = vsel %vm895, %v5404, 0
    %v5600 = vsel %vm895, %v5405, 0
    %v5603 = vsel %vm895, %v5406, 0
    %v5606 = vsel %vm895, %v5407, 0
    %v5609 = vsel %vm895, %v5408, 0
    %v5612 = vsel %vm895, %v5409, 0
    %v5615 = vsel %vm895, %v5410, 0
    %v5618 = vsel %vm895, %v5411, 0
    %v5621 = vsel %vm895, %v5412, 0
    %v5624 = vsel %vm895, %v5413, 0
    %v5627 = vsel %vm895, %v5414, 0
    %v5630 = vsel %vm895, %v5415, 0
    %v5633 = vsel %vm895, %v5416, 0
    %v5636 = vsel %vm1112, %v5418, 0
    %5638 = vmatprep.subr.mxu0 0.0
    %5639 = vmatpush1.msra.mxu0 %v5636
    %5640 = vmatprep.subr.mxu0 0.0
    %5641 = vmatpush1.msra.mxu0 0.0
    %5642 = vmatprep.subr.mxu0 0.0
    %5643 = vmatpush1.msra.mxu0 0.0
    %5644 = vmatprep.subr.mxu0 0.0
    %5645 = vmatpush1.msra.mxu0 0.0
    %5646 = vmatprep.subr.mxu0 0.0
    %5647 = vmatpush1.msra.mxu0 0.0
    %5648 = vmatprep.subr.mxu0 0.0
    %5649 = vmatpush1.msra.mxu0 0.0
    %5650 = vmatprep.subr.mxu0 0.0
    %5651 = vmatpush1.msra.mxu0 0.0
    %5652 = vmatprep.subr.mxu0 0.0
    %5653 = vmatpush1.msra.mxu0 0.0
    %5654 = vmatprep.subr.mxu0 0.0
    %5655 = vmatpush1.msra.mxu0 0.0
    %5656 = vmatprep.subr.mxu0 0.0
    %5657 = vmatpush1.msra.mxu0 0.0
    %5658 = vmatprep.subr.mxu0 0.0
    %5659 = vmatpush1.msra.mxu0 0.0
    %5660 = vmatprep.subr.mxu0 0.0
    %5661 = vmatpush1.msra.mxu0 0.0
    %5662 = vmatprep.subr.mxu0 0.0
    %5663 = vmatpush1.msra.mxu0 0.0
    %5664 = vmatprep.subr.mxu0 0.0
    %5665 = vmatpush1.msra.mxu0 0.0
    %5666 = vmatprep.subr.mxu0 0.0
    %5667 = vmatpush1.msra.mxu0 0.0
    %5668 = vmatprep.subr.mxu0 0.0
    %5669 = vmatpush1.msra.mxu0 0.0
    %5670 = vmatprep.subr.mxu0 0.0
    %5671 = vmatpush1.msra.mxu0 0.0
    %5672 = vmatprep.subr.mxu0 0.0
    %5673 = vmatpush1.msra.mxu0 0.0
    %5674 = vmatprep.subr.mxu0 0.0
    %5675 = vmatpush1.msra.mxu0 0.0
    %5676 = vmatprep.subr.mxu0 0.0
    %5677 = vmatpush1.msra.mxu0 0.0
    %5678 = vmatprep.subr.mxu0 0.0
    %5679 = vmatpush1.msra.mxu0 0.0
    %5680 = vmatprep.subr.mxu0 0.0
    %5681 = vmatpush1.msra.mxu0 0.0
    %5682 = vmatprep.subr.mxu0 0.0
    %5683 = vmatpush1.msra.mxu0 0.0
    %5684 = vmatprep.subr.mxu0 0.0
    %5685 = vmatpush1.msra.mxu0 0.0
    %5686 = vmatprep.subr.mxu0 0.0
    %5687 = vmatpush1.msra.mxu0 0.0
    %5688 = vmatprep.subr.mxu0 0.0
    %5689 = vmatpush1.msra.mxu0 0.0
    %5690 = vmatprep.subr.mxu0 0.0
    %5691 = vmatpush1.msra.mxu0 0.0
    %5692 = vmatprep.subr.mxu0 0.0
    %5693 = vmatpush1.msra.mxu0 0.0
    %5694 = vmatprep.subr.mxu0 0.0
    %5695 = vmatpush1.msra.mxu0 0.0
    %5696 = vmatprep.subr.mxu0 0.0
    %5697 = vmatpush1.msra.mxu0 0.0
    %5698 = vmatprep.subr.mxu0 0.0
    %5699 = vmatpush1.msra.mxu0 0.0
    %5700 = vmatprep.subr.mxu0 0.0
    %5701 = vmatpush1.msra.mxu0 0.0
    %5702 = vmatprep.mubr.f32.mxu0 0.0
    %5703 = vmatmul.mubr.f32.gmra.mrb[0].mxu0 %v5420
    %v5704 = vpop.f32.mrb[0].mxu0
    %v5705 = vadd.f32 0.0, %v5704
    %v5706 = vpop.f32.mrb[0].mxu0
    %5707 = vmatprep.mubr.f32.mxu0 0.0
    %5708 = vmatmul.mubr.f32.gmra.mrb[0].mxu0 %v5423
    %v5709 = vpop.f32.mrb[0].mxu0
    %v5710 = vadd.f32 0.0, %v5709
    %v5711 = vpop.f32.mrb[0].mxu0
    %5712 = vmatprep.mubr.f32.mxu0 0.0
    %5713 = vmatmul.mubr.f32.gmra.mrb[0].mxu0 %v5426
    %v5714 = vpop.f32.mrb[0].mxu0
    %v5715 = vadd.f32 0.0, %v5714
    %v5716 = vpop.f32.mrb[0].mxu0
    %5717 = vmatprep.mubr.f32.mxu0 0.0
    %5718 = vmatmul.mubr.f32.gmra.mrb[0].mxu0 %v5429
    %v5719 = vpop.f32.mrb[0].mxu0
    %v5720 = vadd.f32 0.0, %v5719
    %v5721 = vpop.f32.mrb[0].mxu0
    %5722 = vmatprep.mubr.f32.mxu0 0.0
    %5723 = vmatmul.mubr.f32.gmra.mrb[0].mxu0 %v5432
    %v5724 = vpop.f32.mrb[0].mxu0
    %v5725 = vadd.f32 0.0, %v5724
    %v5726 = vpop.f32.mrb[0].mxu0
    %5727 = vmatprep.mubr.f32.mxu0 0.0
    %5728 = vmatmul.mubr.f32.gmra.mrb[0].mxu0 %v5435
    %v5729 = vpop.f32.mrb[0].mxu0
    %v5730 = vadd.f32 0.0, %v5729
    %v5731 = vpop.f32.mrb[0].mxu0
    %5732 = vmatprep.mubr.f32.mxu0 0.0
    %5733 = vmatmul.mubr.f32.gmra.mrb[0].mxu0 %v5438
    %v5734 = vpop.f32.mrb[0].mxu0
    %v5735 = vadd.f32 0.0, %v5734
    %v5736 = vpop.f32.mrb[0].mxu0
    %5737 = vmatprep.mubr.f32.mxu0 0.0
    %5738 = vmatmul.mubr.f32.gmra.mrb[0].mxu0 %v5441
    %v5739 = vpop.f32.mrb[0].mxu0
    %v5740 = vadd.f32 0.0, %v5739
    %v5741 = vpop.f32.mrb[0].mxu0
    %5742 = vmatprep.mubr.f32.mxu0 0.0
    %5743 = vmatmul.mubr.f32.gmra.mrb[0].mxu0 %v5444
    %v5744 = vpop.f32.mrb[0].mxu0
    %v5745 = vadd.f32 0.0, %v5744
    %v5746 = vpop.f32.mrb[0].mxu0
    %5747 = vmatprep.mubr.f32.mxu0 0.0
    %5748 = vmatmul.mubr.f32.gmra.mrb[0].mxu0 %v5447
    %v5749 = vpop.f32.mrb[0].mxu0
    %v5750 = vadd.f32 0.0, %v5749
    %v5751 = vpop.f32.mrb[0].mxu0
    %5752 = vmatprep.mubr.f32.mxu0 0.0
    %5753 = vmatmul.mubr.f32.gmra.mrb[0].mxu0 %v5450
    %v5754 = vpop.f32.mrb[0].mxu0
    %v5755 = vadd.f32 0.0, %v5754
    %v5756 = vpop.f32.mrb[0].mxu0
    %5757 = vmatprep.mubr.f32.mxu0 0.0
    %5758 = vmatmul.mubr.f32.gmra.mrb[0].mxu0 %v5453
    %v5759 = vpop.f32.mrb[0].mxu0
    %v5760 = vadd.f32 0.0, %v5759
    %v5761 = vpop.f32.mrb[0].mxu0
    %5762 = vmatprep.mubr.f32.mxu0 0.0
    %5763 = vmatmul.mubr.f32.gmra.mrb[0].mxu0 %v5456
    %v5764 = vpop.f32.mrb[0].mxu0
    %v5765 = vadd.f32 0.0, %v5764
    %v5766 = vpop.f32.mrb[0].mxu0
    %5767 = vmatprep.mubr.f32.mxu0 0.0
    %5768 = vmatmul.mubr.f32.gmra.mrb[0].mxu0 %v5459
    %v5769 = vpop.f32.mrb[0].mxu0
    %v5770 = vadd.f32 0.0, %v5769
    %v5771 = vpop.f32.mrb[0].mxu0
    %5772 = vmatprep.mubr.f32.mxu0 0.0
    %5773 = vmatmul.mubr.f32.gmra.mrb[0].mxu0 %v5462
    %v5774 = vpop.f32.mrb[0].mxu0
    %v5775 = vadd.f32 0.0, %v5774
    %v5776 = vpop.f32.mrb[0].mxu0
    %5777 = vmatprep.mubr.f32.mxu0 0.0
    %5778 = vmatmul.mubr.f32.gmra.mrb[0].mxu0 %v5465
    %v5779 = vpop.f32.mrb[0].mxu0
    %v5780 = vadd.f32 0.0, %v5779
    %v5781 = vpop.f32.mrb[0].mxu0
    %5782 = vmatprep.mubr.f32.mxu0 0.0
    %5783 = vmatmul.mubr.f32.gmra.mrb[0].mxu0 %v5468
    %v5784 = vpop.f32.mrb[0].mxu0
    %v5785 = vadd.f32 0.0, %v5784
    %v5786 = vpop.f32.mrb[0].mxu0
    %5787 = vmatprep.mubr.f32.mxu0 0.0
    %5788 = vmatmul.mubr.f32.gmra.mrb[0].mxu0 %v5471
    %v5789 = vpop.f32.mrb[0].mxu0
    %v5790 = vadd.f32 0.0, %v5789
    %v5791 = vpop.f32.mrb[0].mxu0
    %5792 = vmatprep.mubr.f32.mxu0 0.0
    %5793 = vmatmul.mubr.f32.gmra.mrb[0].mxu0 %v5474
    %v5794 = vpop.f32.mrb[0].mxu0
    %v5795 = vadd.f32 0.0, %v5794
    %v5796 = vpop.f32.mrb[0].mxu0
    %5797 = vmatprep.mubr.f32.mxu0 0.0
    %5798 = vmatmul.mubr.f32.gmra.mrb[0].mxu0 %v5477
    %v5799 = vpop.f32.mrb[0].mxu0
    %v5800 = vadd.f32 0.0, %v5799
    %v5801 = vpop.f32.mrb[0].mxu0
    %5802 = vmatprep.mubr.f32.mxu0 0.0
    %5803 = vmatmul.mubr.f32.gmra.mrb[0].mxu0 %v5480
    %v5804 = vpop.f32.mrb[0].mxu0
    %v5805 = vadd.f32 0.0, %v5804
    %v5806 = vpop.f32.mrb[0].mxu0
    %5807 = vmatprep.mubr.f32.mxu0 0.0
    %5808 = vmatmul.mubr.f32.gmra.mrb[0].mxu0 %v5483
    %v5809 = vpop.f32.mrb[0].mxu0
    %v5810 = vadd.f32 0.0, %v5809
    %v5811 = vpop.f32.mrb[0].mxu0
    %5812 = vmatprep.mubr.f32.mxu0 0.0
    %5813 = vmatmul.mubr.f32.gmra.mrb[0].mxu0 %v5486
    %v5814 = vpop.f32.mrb[0].mxu0
    %v5815 = vadd.f32 0.0, %v5814
    %v5816 = vpop.f32.mrb[0].mxu0
    %5817 = vmatprep.mubr.f32.mxu0 0.0
    %5818 = vmatmul.mubr.f32.gmra.mrb[0].mxu0 %v5489
    %v5819 = vpop.f32.mrb[0].mxu0
    %v5820 = vadd.f32 0.0, %v5819
    %v5821 = vpop.f32.mrb[0].mxu0
    %5822 = vmatprep.mubr.f32.mxu0 0.0
    %5823 = vmatmul.mubr.f32.gmra.mrb[0].mxu0 %v5492
    %v5824 = vpop.f32.mrb[0].mxu0
    %v5825 = vadd.f32 0.0, %v5824
    %v5826 = vpop.f32.mrb[0].mxu0
    %5827 = vmatprep.mubr.f32.mxu0 0.0
    %5828 = vmatmul.mubr.f32.gmra.mrb[0].mxu0 %v5495
    %v5829 = vpop.f32.mrb[0].mxu0
    %v5830 = vadd.f32 0.0, %v5829
    %v5831 = vpop.f32.mrb[0].mxu0
    %5832 = vmatprep.mubr.f32.mxu0 0.0
    %5833 = vmatmul.mubr.f32.gmra.mrb[0].mxu0 %v5498
    %v5834 = vpop.f32.mrb[0].mxu0
    %v5835 = vadd.f32 0.0, %v5834
    %v5836 = vpop.f32.mrb[0].mxu0
    %5837 = vmatprep.mubr.f32.mxu0 0.0
    %5838 = vmatmul.mubr.f32.gmra.mrb[0].mxu0 %v5501
    %v5839 = vpop.f32.mrb[0].mxu0
    %v5840 = vadd.f32 0.0, %v5839
    %v5841 = vpop.f32.mrb[0].mxu0
    %5842 = vmatprep.mubr.f32.mxu0 0.0
    %5843 = vmatmul.mubr.f32.gmra.mrb[0].mxu0 %v5504
    %v5844 = vpop.f32.mrb[0].mxu0
    %v5845 = vadd.f32 0.0, %v5844
    %v5846 = vpop.f32.mrb[0].mxu0
    %5847 = vmatprep.mubr.f32.mxu0 0.0
    %5848 = vmatmul.mubr.f32.gmra.mrb[0].mxu0 %v5507
    %v5849 = vpop.f32.mrb[0].mxu0
    %v5850 = vadd.f32 0.0, %v5849
    %v5851 = vpop.f32.mrb[0].mxu0
    %5852 = vmatprep.mubr.f32.mxu0 0.0
    %5853 = vmatmul.mubr.f32.gmra.mrb[0].mxu0 %v5510
    %v5854 = vpop.f32.mrb[0].mxu0
    %v5855 = vadd.f32 0.0, %v5854
    %v5856 = vpop.f32.mrb[0].mxu0
    %5857 = vmatprep.mubr.f32.mxu0 0.0
    %5858 = vmatmul.mubr.f32.gmra.mrb[0].mxu0 %v5513
    %v5859 = vpop.f32.mrb[0].mxu0
    %v5860 = vadd.f32 0.0, %v5859
    %v5861 = vpop.f32.mrb[0].mxu0
    %5862 = vmatprep.mubr.f32.mxu0 0.0
    %5863 = vmatmul.mubr.f32.gmra.mrb[0].mxu0 %v5516
    %v5864 = vpop.f32.mrb[0].mxu0
    %v5865 = vadd.f32 0.0, %v5864
    %v5866 = vpop.f32.mrb[0].mxu0
    %5867 = vmatprep.mubr.f32.mxu0 0.0
    %5868 = vmatmul.mubr.f32.gmra.mrb[0].mxu0 %v5519
    %v5869 = vpop.f32.mrb[0].mxu0
    %v5870 = vadd.f32 0.0, %v5869
    %v5871 = vpop.f32.mrb[0].mxu0
    %5872 = vmatprep.mubr.f32.mxu0 0.0
    %5873 = vmatmul.mubr.f32.gmra.mrb[0].mxu0 %v5522
    %v5874 = vpop.f32.mrb[0].mxu0
    %v5875 = vadd.f32 0.0, %v5874
    %v5876 = vpop.f32.mrb[0].mxu0
    %5877 = vmatprep.mubr.f32.mxu0 0.0
    %5878 = vmatmul.mubr.f32.gmra.mrb[0].mxu0 %v5525
    %v5879 = vpop.f32.mrb[0].mxu0
    %v5880 = vadd.f32 0.0, %v5879
    %v5881 = vpop.f32.mrb[0].mxu0
    %5882 = vmatprep.mubr.f32.mxu0 0.0
    %5883 = vmatmul.mubr.f32.gmra.mrb[0].mxu0 %v5528
    %v5884 = vpop.f32.mrb[0].mxu0
    %v5885 = vadd.f32 0.0, %v5884
    %v5886 = vpop.f32.mrb[0].mxu0
    %5887 = vmatprep.mubr.f32.mxu0 0.0
    %5888 = vmatmul.mubr.f32.gmra.mrb[0].mxu0 %v5531
    %v5889 = vpop.f32.mrb[0].mxu0
    %v5890 = vadd.f32 0.0, %v5889
    %v5891 = vpop.f32.mrb[0].mxu0
    %5892 = vmatprep.mubr.f32.mxu0 0.0
    %5893 = vmatmul.mubr.f32.gmra.mrb[0].mxu0 %v5534
    %v5894 = vpop.f32.mrb[0].mxu0
    %v5895 = vadd.f32 0.0, %v5894
    %v5896 = vpop.f32.mrb[0].mxu0
    %5897 = vmatprep.mubr.f32.mxu0 0.0
    %5898 = vmatmul.mubr.f32.gmra.mrb[0].mxu0 %v5537
    %v5899 = vpop.f32.mrb[0].mxu0
    %v5900 = vadd.f32 0.0, %v5899
    %v5901 = vpop.f32.mrb[0].mxu0
    %5902 = vmatprep.mubr.f32.mxu0 0.0
    %5903 = vmatmul.mubr.f32.gmra.mrb[0].mxu0 %v5540
    %v5904 = vpop.f32.mrb[0].mxu0
    %v5905 = vadd.f32 0.0, %v5904
    %v5906 = vpop.f32.mrb[0].mxu0
    %5907 = vmatprep.mubr.f32.mxu0 0.0
    %5908 = vmatmul.mubr.f32.gmra.mrb[0].mxu0 %v5543
    %v5909 = vpop.f32.mrb[0].mxu0
    %v5910 = vadd.f32 0.0, %v5909
    %v5911 = vpop.f32.mrb[0].mxu0
    %5912 = vmatprep.mubr.f32.mxu0 0.0
    %5913 = vmatmul.mubr.f32.gmra.mrb[0].mxu0 %v5546
    %v5914 = vpop.f32.mrb[0].mxu0
    %v5915 = vadd.f32 0.0, %v5914
    %v5916 = vpop.f32.mrb[0].mxu0
    %5917 = vmatprep.mubr.f32.mxu0 0.0
    %5918 = vmatmul.mubr.f32.gmra.mrb[0].mxu0 %v5549
    %v5919 = vpop.f32.mrb[0].mxu0
    %v5920 = vadd.f32 0.0, %v5919
    %v5921 = vpop.f32.mrb[0].mxu0
    %5922 = vmatprep.mubr.f32.mxu0 0.0
    %5923 = vmatmul.mubr.f32.gmra.mrb[0].mxu0 %v5552
    %v5924 = vpop.f32.mrb[0].mxu0
    %v5925 = vadd.f32 0.0, %v5924
    %v5926 = vpop.f32.mrb[0].mxu0
    %5927 = vmatprep.mubr.f32.mxu0 0.0
    %5928 = vmatmul.mubr.f32.gmra.mrb[0].mxu0 %v5555
    %v5929 = vpop.f32.mrb[0].mxu0
    %v5930 = vadd.f32 0.0, %v5929
    %v5931 = vpop.f32.mrb[0].mxu0
    %5932 = vmatprep.mubr.f32.mxu0 0.0
    %5933 = vmatmul.mubr.f32.gmra.mrb[0].mxu0 %v5558
    %v5934 = vpop.f32.mrb[0].mxu0
    %v5935 = vadd.f32 0.0, %v5934
    %v5936 = vpop.f32.mrb[0].mxu0
    %5937 = vmatprep.mubr.f32.mxu0 0.0
    %5938 = vmatmul.mubr.f32.gmra.mrb[0].mxu0 %v5561
    %v5939 = vpop.f32.mrb[0].mxu0
    %v5940 = vadd.f32 0.0, %v5939
    %v5941 = vpop.f32.mrb[0].mxu0
    %5942 = vmatprep.mubr.f32.mxu0 0.0
    %5943 = vmatmul.mubr.f32.gmra.mrb[0].mxu0 %v5564
    %v5944 = vpop.f32.mrb[0].mxu0
    %v5945 = vadd.f32 0.0, %v5944
    %v5946 = vpop.f32.mrb[0].mxu0
    %5947 = vmatprep.mubr.f32.mxu0 0.0
    %5948 = vmatmul.mubr.f32.gmra.mrb[0].mxu0 %v5567
    %v5949 = vpop.f32.mrb[0].mxu0
    %v5950 = vadd.f32 0.0, %v5949
    %v5951 = vpop.f32.mrb[0].mxu0
    %5952 = vmatprep.mubr.f32.mxu0 0.0
    %5953 = vmatmul.mubr.f32.gmra.mrb[0].mxu0 %v5570
    %v5954 = vpop.f32.mrb[0].mxu0
    %v5955 = vadd.f32 0.0, %v5954
    %v5956 = vpop.f32.mrb[0].mxu0
    %5957 = vmatprep.mubr.f32.mxu0 0.0
    %5958 = vmatmul.mubr.f32.gmra.mrb[0].mxu0 %v5573
    %v5959 = vpop.f32.mrb[0].mxu0
    %v5960 = vadd.f32 0.0, %v5959
    %v5961 = vpop.f32.mrb[0].mxu0
    %5962 = vmatprep.mubr.f32.mxu0 0.0
    %5963 = vmatmul.mubr.f32.gmra.mrb[0].mxu0 %v5576
    %v5964 = vpop.f32.mrb[0].mxu0
    %v5965 = vadd.f32 0.0, %v5964
    %v5966 = vpop.f32.mrb[0].mxu0
    %5967 = vmatprep.mubr.f32.mxu0 0.0
    %5968 = vmatmul.mubr.f32.gmra.mrb[0].mxu0 %v5579
    %v5969 = vpop.f32.mrb[0].mxu0
    %v5970 = vadd.f32 0.0, %v5969
    %v5971 = vpop.f32.mrb[0].mxu0
    %5972 = vmatprep.mubr.f32.mxu0 0.0
    %5973 = vmatmul.mubr.f32.gmra.mrb[0].mxu0 %v5582
    %v5974 = vpop.f32.mrb[0].mxu0
    %v5975 = vadd.f32 0.0, %v5974
    %v5976 = vpop.f32.mrb[0].mxu0
    %5977 = vmatprep.mubr.f32.mxu0 0.0
    %5978 = vmatmul.mubr.f32.gmra.mrb[0].mxu0 %v5585
    %v5979 = vpop.f32.mrb[0].mxu0
    %v5980 = vadd.f32 0.0, %v5979
    %v5981 = vpop.f32.mrb[0].mxu0
    %5982 = vmatprep.mubr.f32.mxu0 0.0
    %5983 = vmatmul.mubr.f32.gmra.mrb[0].mxu0 %v5588
    %v5984 = vpop.f32.mrb[0].mxu0
    %v5985 = vadd.f32 0.0, %v5984
    %v5986 = vpop.f32.mrb[0].mxu0
    %5987 = vmatprep.mubr.f32.mxu0 0.0
    %5988 = vmatmul.mubr.f32.gmra.mrb[0].mxu0 %v5591
    %v5989 = vpop.f32.mrb[0].mxu0
    %v5990 = vadd.f32 0.0, %v5989
    %v5991 = vpop.f32.mrb[0].mxu0
    %5992 = vmatprep.mubr.f32.mxu0 0.0
    %5993 = vmatmul.mubr.f32.gmra.mrb[0].mxu0 %v5594
    %v5994 = vpop.f32.mrb[0].mxu0
    %v5995 = vadd.f32 0.0, %v5994
    %v5996 = vpop.f32.mrb[0].mxu0
    %5997 = vmatprep.mubr.f32.mxu0 0.0
    %5998 = vmatmul.mubr.f32.gmra.mrb[0].mxu0 %v5597
    %v5999 = vpop.f32.mrb[0].mxu0
    %v6000 = vadd.f32 0.0, %v5999
    %v6001 = vpop.f32.mrb[0].mxu0
    %6002 = vmatprep.mubr.f32.mxu0 0.0
    %6003 = vmatmul.mubr.f32.gmra.mrb[0].mxu0 %v5600
    %v6004 = vpop.f32.mrb[0].mxu0
    %v6005 = vadd.f32 0.0, %v6004
    %v6006 = vpop.f32.mrb[0].mxu0
    %6007 = vmatprep.mubr.f32.mxu0 0.0
    %6008 = vmatmul.mubr.f32.gmra.mrb[0].mxu0 %v5603
    %v6009 = vpop.f32.mrb[0].mxu0
    %v6010 = vadd.f32 0.0, %v6009
    %v6011 = vpop.f32.mrb[0].mxu0
    %6012 = vmatprep.mubr.f32.mxu0 0.0
    %6013 = vmatmul.mubr.f32.gmra.mrb[0].mxu0 %v5606
    %v6014 = vpop.f32.mrb[0].mxu0
    %v6015 = vadd.f32 0.0, %v6014
    %v6016 = vpop.f32.mrb[0].mxu0
    %6017 = vmatprep.mubr.f32.mxu0 0.0
    %6018 = vmatmul.mubr.f32.gmra.mrb[0].mxu0 %v5609
    %v6019 = vpop.f32.mrb[0].mxu0
    %v6020 = vadd.f32 0.0, %v6019
    %v6021 = vpop.f32.mrb[0].mxu0
    %6022 = vmatprep.mubr.f32.mxu0 0.0
    %6023 = vmatmul.mubr.f32.gmra.mrb[0].mxu0 %v5612
    %v6024 = vpop.f32.mrb[0].mxu0
    %v6025 = vadd.f32 0.0, %v6024
    %v6026 = vpop.f32.mrb[0].mxu0
    %6027 = vmatprep.mubr.f32.mxu0 0.0
    %6028 = vmatmul.mubr.f32.gmra.mrb[0].mxu0 %v5615
    %v6029 = vpop.f32.mrb[0].mxu0
    %v6030 = vadd.f32 0.0, %v6029
    %v6031 = vpop.f32.mrb[0].mxu0
    %6032 = vmatprep.mubr.f32.mxu0 0.0
    %6033 = vmatmul.mubr.f32.gmra.mrb[0].mxu0 %v5618
    %v6034 = vpop.f32.mrb[0].mxu0
    %v6035 = vadd.f32 0.0, %v6034
    %v6036 = vpop.f32.mrb[0].mxu0
    %6037 = vmatprep.mubr.f32.mxu0 0.0
    %6038 = vmatmul.mubr.f32.gmra.mrb[0].mxu0 %v5621
    %v6039 = vpop.f32.mrb[0].mxu0
    %v6040 = vadd.f32 0.0, %v6039
    %v6041 = vpop.f32.mrb[0].mxu0
    %6042 = vmatprep.mubr.f32.mxu0 0.0
    %6043 = vmatmul.mubr.f32.gmra.mrb[0].mxu0 %v5624
    %v6044 = vpop.f32.mrb[0].mxu0
    %v6045 = vadd.f32 0.0, %v6044
    %v6046 = vpop.f32.mrb[0].mxu0
    %6047 = vmatprep.mubr.f32.mxu0 0.0
    %6048 = vmatmul.mubr.f32.gmra.mrb[0].mxu0 %v5627
    %v6049 = vpop.f32.mrb[0].mxu0
    %v6050 = vadd.f32 0.0, %v6049
    %v6051 = vpop.f32.mrb[0].mxu0
    %6052 = vmatprep.mubr.f32.mxu0 0.0
    %6053 = vmatmul.mubr.f32.gmra.mrb[0].mxu0 %v5630
    %v6054 = vpop.f32.mrb[0].mxu0
    %v6055 = vadd.f32 0.0, %v6054
    %v6056 = vpop.f32.mrb[0].mxu0
    %6057 = vmatprep.mubr.f32.mxu0 0.0
    %6058 = vmatmul.mubr.f32.gmra.mrb[0].mxu0 %v5633
    %v6059 = vpop.f32.mrb[0].mxu0
    %v6060 = vadd.f32 0.0, %v6059
    %v6061 = vpop.f32.mrb[0].mxu0
    %6062 = vdwg.mxu0
    %v6063 = vadd.f32 %v5273, %v5705
    %v6064 = vadd.f32 %v5274, %v5710
    %v6065 = vadd.f32 %v5275, %v5715
    %v6066 = vadd.f32 %v5276, %v5720
    %v6067 = vadd.f32 %v5277, %v5725
    %v6068 = vadd.f32 %v5278, %v5730
    %v6069 = vadd.f32 %v5279, %v5735
    %v6070 = vadd.f32 %v5280, %v5740
    %v6071 = vadd.f32 %v5281, %v5745
    %v6072 = vadd.f32 %v5282, %v5750
    %v6073 = vadd.f32 %v5283, %v5755
    %v6074 = vadd.f32 %v5284, %v5760
    %v6075 = vadd.f32 %v5285, %v5765
    %v6076 = vadd.f32 %v5286, %v5770
    %v6077 = vadd.f32 %v5287, %v5775
    %v6078 = vadd.f32 %v5288, %v5780
    %v6079 = vadd.f32 %v5289, %v5785
    %v6080 = vadd.f32 %v5290, %v5790
    %v6081 = vadd.f32 %v5291, %v5795
    %v6082 = vadd.f32 %v5292, %v5800
    %v6083 = vadd.f32 %v5293, %v5805
    %v6084 = vadd.f32 %v5294, %v5810
    %v6085 = vadd.f32 %v5295, %v5815
    %v6086 = vadd.f32 %v5296, %v5820
    %v6087 = vadd.f32 %v5297, %v5825
    %v6088 = vadd.f32 %v5298, %v5830
    %v6089 = vadd.f32 %v5299, %v5835
    %v6090 = vadd.f32 %v5300, %v5840
    %v6091 = vadd.f32 %v5301, %v5845
    %v6092 = vadd.f32 %v5302, %v5850
    %v6093 = vadd.f32 %v5303, %v5855
    %v6094 = vadd.f32 %v5304, %v5860
    %v6095 = vadd.f32 %v5305, %v5865
    %v6096 = vadd.f32 %v5306, %v5870
    %v6097 = vadd.f32 %v5307, %v5875
    %v6098 = vadd.f32 %v5308, %v5880
    %v6099 = vadd.f32 %v5309, %v5885
    %v6100 = vadd.f32 %v5310, %v5890
    %v6101 = vadd.f32 %v5311, %v5895
    %v6102 = vadd.f32 %v5312, %v5900
    %v6103 = vadd.f32 %v5313, %v5905
    %v6104 = vadd.f32 %v5314, %v5910
    %v6105 = vadd.f32 %v5315, %v5915
    %v6106 = vadd.f32 %v5316, %v5920
    %v6107 = vadd.f32 %v5317, %v5925
    %v6108 = vadd.f32 %v5318, %v5930
    %v6109 = vadd.f32 %v5319, %v5935
    %v6110 = vadd.f32 %v5320, %v5940
    %v6111 = vadd.f32 %v5321, %v5945
    %v6112 = vadd.f32 %v5322, %v5950
    %v6113 = vadd.f32 %v5323, %v5955
    %v6114 = vadd.f32 %v5324, %v5960
    %v6115 = vadd.f32 %v5325, %v5965
    %v6116 = vadd.f32 %v5326, %v5970
    %v6117 = vadd.f32 %v5327, %v5975
    %v6118 = vadd.f32 %v5328, %v5980
    %v6119 = vadd.f32 %v5329, %v5985
    %v6120 = vadd.f32 %v5330, %v5990
    %v6121 = vadd.f32 %v5331, %v5995
    %v6122 = vadd.f32 %v5332, %v6000
    %v6123 = vadd.f32 %v5333, %v6005
    %v6124 = vadd.f32 %v5334, %v6010
    %v6125 = vadd.f32 %v5335, %v6015
    %v6126 = vadd.f32 %v5336, %v6020
    %v6127 = vadd.f32 %v5337, %v6025
    %v6128 = vadd.f32 %v5338, %v6030
    %v6129 = vadd.f32 %v5339, %v6035
    %v6130 = vadd.f32 %v5340, %v6040
    %v6131 = vadd.f32 %v5341, %v6045
    %v6132 = vadd.f32 %v5342, %v6050
    %v6133 = vadd.f32 %v5343, %v6055
    %v6134 = vadd.f32 %v5344, %v6060
    %v6135 = vld [vmem:[%s0 + $0x25] sm:$0xff]
    %v6136 = vld [vmem:[%s0 + $0x2d] sm:$0xff]
    %v6137 = vld [vmem:[%s0 + $0x35] sm:$0xff]
    %v6138 = vld [vmem:[%s0 + $0x3d] sm:$0xff]
    %v6139 = vld [vmem:[%s0 + $0x45] sm:$0xff]
    %v6140 = vld [vmem:[%s0 + $0x4d] sm:$0xff]
    %v6141 = vld [vmem:[%s0 + $0x55] sm:$0xff]
    %v6142 = vld [vmem:[%s0 + $0x5d] sm:$0xff]
    %v6143 = vld [vmem:[%s0 + $0x65] sm:$0xff]
    %v6144 = vld [vmem:[%s0 + $0x6d] sm:$0xff]
    %v6145 = vld [vmem:[%s0 + $0x75] sm:$0xff]
    %v6146 = vld [vmem:[%s0 + $0x7d] sm:$0xff]
    %v6147 = vld [vmem:[%s0 + $0x85] sm:$0xff]
    %v6148 = vld [vmem:[%s0 + $0x8d] sm:$0xff]
    %v6149 = vld [vmem:[%s0 + $0x95] sm:$0xff]
    %v6150 = vld [vmem:[%s0 + $0x9d] sm:$0xff]
    %v6151 = vld [vmem:[%s0 + $0xa5] sm:$0xff]
    %v6152 = vld [vmem:[%s0 + $0xad] sm:$0xff]
    %v6153 = vld [vmem:[%s0 + $0xb5] sm:$0xff]
    %v6154 = vld [vmem:[%s0 + $0xbd] sm:$0xff]
    %v6155 = vld [vmem:[%s0 + $0xc5] sm:$0xff]
    %v6156 = vld [vmem:[%s0 + $0xcd] sm:$0xff]
    %v6157 = vld [vmem:[%s0 + $0xd5] sm:$0xff]
    %v6158 = vld [vmem:[%s0 + $0xdd] sm:$0xff]
    %v6159 = vld [vmem:[%s0 + $0xe5] sm:$0xff]
    %v6160 = vld [vmem:[%s0 + $0xed] sm:$0xff]
    %v6161 = vld [vmem:[%s0 + $0xf5] sm:$0xff]
    %v6162 = vld [vmem:[%s0 + $0xfd] sm:$0xff]
    %v6163 = vld [vmem:[%s0 + $0x105] sm:$0xff]
    %v6164 = vld [vmem:[%s0 + $0x10d] sm:$0xff]
    %v6165 = vld [vmem:[%s0 + $0x115] sm:$0xff]
    %v6166 = vld [vmem:[%s0 + $0x11d] sm:$0xff]
    %v6167 = vld [vmem:[%s0 + $0x125] sm:$0xff]
    %v6168 = vld [vmem:[%s0 + $0x12d] sm:$0xff]
    %v6169 = vld [vmem:[%s0 + $0x135] sm:$0xff]
    %v6170 = vld [vmem:[%s0 + $0x13d] sm:$0xff]
    %v6171 = vld [vmem:[%s0 + $0x16d] sm:$0xff]
    %v6172 = vld [vmem:[%s0 + $0x175] sm:$0xff]
    %v6173 = vld [vmem:[%s0 + $0x17d] sm:$0xff]
    %v6174 = vld [vmem:[%s0 + $0x185] sm:$0xff]
    %v6175 = vld [vmem:[%s0 + $0x18d] sm:$0xff]
    %v6176 = vld [vmem:[%s0 + $0x195] sm:$0xff]
    %v6177 = vld [vmem:[%s0 + $0x19d] sm:$0xff]
    %v6178 = vld [vmem:[%s0 + $0x1a5] sm:$0xff]
    %v6179 = vld [vmem:[%s0 + $0x1ad] sm:$0xff]
    %v6180 = vld [vmem:[%s0 + $0x1b5] sm:$0xff]
    %v6181 = vld [vmem:[%s0 + $0x1bd] sm:$0xff]
    %v6182 = vld [vmem:[%s0 + $0x1c5] sm:$0xff]
    %v6183 = vld [vmem:[%s0 + $0x1cd] sm:$0xff]
    %v6184 = vld [vmem:[%s0 + $0x1d5] sm:$0xff]
    %v6185 = vld [vmem:[%s0 + $0x1dd] sm:$0xff]
    %v6186 = vld [vmem:[%s0 + $0x1e5] sm:$0xff]
    %v6187 = vld [vmem:[%s0 + $0x1ed] sm:$0xff]
    %v6188 = vld [vmem:[%s0 + $0x1f5] sm:$0xff]
    %v6189 = vld [vmem:[%s0 + $0x1fd] sm:$0xff]
    %v6190 = vld [vmem:[%s0 + $0x205] sm:$0xff]
    %v6191 = vld [vmem:[%s0 + $0x20d] sm:$0xff]
    %v6192 = vld [vmem:[%s0 + $0x215] sm:$0xff]
    %v6193 = vld [vmem:[%s0 + $0x21d] sm:$0xff]
    %v6194 = vld [vmem:[%s0 + $0x225] sm:$0xff]
    %v6195 = vld [vmem:[%s0 + $0x22d] sm:$0xff]
    %v6196 = vld [vmem:[%s0 + $0x235] sm:$0xff]
    %v6197 = vld [vmem:[%s0 + $0x23d] sm:$0xff]
    %v6198 = vld [vmem:[%s0 + $0x245] sm:$0xff]
    %v6199 = vld [vmem:[%s0 + $0x24d] sm:$0xff]
    %v6200 = vld [vmem:[%s0 + $0x255] sm:$0xff]
    %v6201 = vld [vmem:[%s0 + $0x25d] sm:$0xff]
    %v6202 = vld [vmem:[%s0 + $0x265] sm:$0xff]
    %v6203 = vld [vmem:[%s0 + $0x26d] sm:$0xff]
    %v6204 = vld [vmem:[%s0 + $0x275] sm:$0xff]
    %v6205 = vld [vmem:[%s0 + $0x27d] sm:$0xff]
    %v6206 = vld [vmem:[%s0 + $0x285] sm:$0xff]
    %s6207 = scalar_lea.vmem %s1, 28
    %v6208 = vld [vmem:[%s6207] sm:$0xf]
    %v6210 = vsel %vm895, %v6135, 0
    %v6213 = vsel %vm895, %v6136, 0
    %v6216 = vsel %vm895, %v6137, 0
    %v6219 = vsel %vm895, %v6138, 0
    %v6222 = vsel %vm895, %v6139, 0
    %v6225 = vsel %vm895, %v6140, 0
    %v6228 = vsel %vm895, %v6141, 0
    %v6231 = vsel %vm895, %v6142, 0
    %v6234 = vsel %vm895, %v6143, 0
    %v6237 = vsel %vm895, %v6144, 0
    %v6240 = vsel %vm895, %v6145, 0
    %v6243 = vsel %vm895, %v6146, 0
    %v6246 = vsel %vm895, %v6147, 0
    %v6249 = vsel %vm895, %v6148, 0
    %v6252 = vsel %vm895, %v6149, 0
    %v6255 = vsel %vm895, %v6150, 0
    %v6258 = vsel %vm895, %v6151, 0
    %v6261 = vsel %vm895, %v6152, 0
    %v6264 = vsel %vm895, %v6153, 0
    %v6267 = vsel %vm895, %v6154, 0
    %v6270 = vsel %vm895, %v6155, 0
    %v6273 = vsel %vm895, %v6156, 0
    %v6276 = vsel %vm895, %v6157, 0
    %v6279 = vsel %vm895, %v6158, 0
    %v6282 = vsel %vm895, %v6159, 0
    %v6285 = vsel %vm895, %v6160, 0
    %v6288 = vsel %vm895, %v6161, 0
    %v6291 = vsel %vm895, %v6162, 0
    %v6294 = vsel %vm895, %v6163, 0
    %v6297 = vsel %vm895, %v6164, 0
    %v6300 = vsel %vm895, %v6165, 0
    %v6303 = vsel %vm895, %v6166, 0
    %v6306 = vsel %vm895, %v6167, 0
    %v6309 = vsel %vm895, %v6168, 0
    %v6312 = vsel %vm895, %v6169, 0
    %v6315 = vsel %vm895, %v6170, 0
    %v6318 = vsel %vm895, %v6171, 0
    %v6321 = vsel %vm895, %v6172, 0
    %v6324 = vsel %vm895, %v6173, 0
    %v6327 = vsel %vm895, %v6174, 0
    %v6330 = vsel %vm895, %v6175, 0
    %v6333 = vsel %vm895, %v6176, 0
    %v6336 = vsel %vm895, %v6177, 0
    %v6339 = vsel %vm895, %v6178, 0
    %v6342 = vsel %vm895, %v6179, 0
    %v6345 = vsel %vm895, %v6180, 0
    %v6348 = vsel %vm895, %v6181, 0
    %v6351 = vsel %vm895, %v6182, 0
    %v6354 = vsel %vm895, %v6183, 0
    %v6357 = vsel %vm895, %v6184, 0
    %v6360 = vsel %vm895, %v6185, 0
    %v6363 = vsel %vm895, %v6186, 0
    %v6366 = vsel %vm895, %v6187, 0
    %v6369 = vsel %vm895, %v6188, 0
    %v6372 = vsel %vm895, %v6189, 0
    %v6375 = vsel %vm895, %v6190, 0
    %v6378 = vsel %vm895, %v6191, 0
    %v6381 = vsel %vm895, %v6192, 0
    %v6384 = vsel %vm895, %v6193, 0
    %v6387 = vsel %vm895, %v6194, 0
    %v6390 = vsel %vm895, %v6195, 0
    %v6393 = vsel %vm895, %v6196, 0
    %v6396 = vsel %vm895, %v6197, 0
    %v6399 = vsel %vm895, %v6198, 0
    %v6402 = vsel %vm895, %v6199, 0
    %v6405 = vsel %vm895, %v6200, 0
    %v6408 = vsel %vm895, %v6201, 0
    %v6411 = vsel %vm895, %v6202, 0
    %v6414 = vsel %vm895, %v6203, 0
    %v6417 = vsel %vm895, %v6204, 0
    %v6420 = vsel %vm895, %v6205, 0
    %v6423 = vsel %vm895, %v6206, 0
    %v6426 = vsel %vm1112, %v6208, 0
    %6428 = vmatprep.subr.mxu0 0.0
    %6429 = vmatpush1.msra.mxu0 %v6426
    %6430 = vmatprep.subr.mxu0 0.0
    %6431 = vmatpush1.msra.mxu0 0.0
    %6432 = vmatprep.subr.mxu0 0.0
    %6433 = vmatpush1.msra.mxu0 0.0
    %6434 = vmatprep.subr.mxu0 0.0
    %6435 = vmatpush1.msra.mxu0 0.0
    %6436 = vmatprep.subr.mxu0 0.0
    %6437 = vmatpush1.msra.mxu0 0.0
    %6438 = vmatprep.subr.mxu0 0.0
    %6439 = vmatpush1.msra.mxu0 0.0
    %6440 = vmatprep.subr.mxu0 0.0
    %6441 = vmatpush1.msra.mxu0 0.0
    %6442 = vmatprep.subr.mxu0 0.0
    %6443 = vmatpush1.msra.mxu0 0.0
    %6444 = vmatprep.subr.mxu0 0.0
    %6445 = vmatpush1.msra.mxu0 0.0
    %6446 = vmatprep.subr.mxu0 0.0
    %6447 = vmatpush1.msra.mxu0 0.0
    %6448 = vmatprep.subr.mxu0 0.0
    %6449 = vmatpush1.msra.mxu0 0.0
    %6450 = vmatprep.subr.mxu0 0.0
    %6451 = vmatpush1.msra.mxu0 0.0
    %6452 = vmatprep.subr.mxu0 0.0
    %6453 = vmatpush1.msra.mxu0 0.0
    %6454 = vmatprep.subr.mxu0 0.0
    %6455 = vmatpush1.msra.mxu0 0.0
    %6456 = vmatprep.subr.mxu0 0.0
    %6457 = vmatpush1.msra.mxu0 0.0
    %6458 = vmatprep.subr.mxu0 0.0
    %6459 = vmatpush1.msra.mxu0 0.0
    %6460 = vmatprep.subr.mxu0 0.0
    %6461 = vmatpush1.msra.mxu0 0.0
    %6462 = vmatprep.subr.mxu0 0.0
    %6463 = vmatpush1.msra.mxu0 0.0
    %6464 = vmatprep.subr.mxu0 0.0
    %6465 = vmatpush1.msra.mxu0 0.0
    %6466 = vmatprep.subr.mxu0 0.0
    %6467 = vmatpush1.msra.mxu0 0.0
    %6468 = vmatprep.subr.mxu0 0.0
    %6469 = vmatpush1.msra.mxu0 0.0
    %6470 = vmatprep.subr.mxu0 0.0
    %6471 = vmatpush1.msra.mxu0 0.0
    %6472 = vmatprep.subr.mxu0 0.0
    %6473 = vmatpush1.msra.mxu0 0.0
    %6474 = vmatprep.subr.mxu0 0.0
    %6475 = vmatpush1.msra.mxu0 0.0
    %6476 = vmatprep.subr.mxu0 0.0
    %6477 = vmatpush1.msra.mxu0 0.0
    %6478 = vmatprep.subr.mxu0 0.0
    %6479 = vmatpush1.msra.mxu0 0.0
    %6480 = vmatprep.subr.mxu0 0.0
    %6481 = vmatpush1.msra.mxu0 0.0
    %6482 = vmatprep.subr.mxu0 0.0
    %6483 = vmatpush1.msra.mxu0 0.0
    %6484 = vmatprep.subr.mxu0 0.0
    %6485 = vmatpush1.msra.mxu0 0.0
    %6486 = vmatprep.subr.mxu0 0.0
    %6487 = vmatpush1.msra.mxu0 0.0
    %6488 = vmatprep.subr.mxu0 0.0
    %6489 = vmatpush1.msra.mxu0 0.0
    %6490 = vmatprep.subr.mxu0 0.0
    %6491 = vmatpush1.msra.mxu0 0.0
    %6492 = vmatprep.mubr.f32.mxu0 0.0
    %6493 = vmatmul.mubr.f32.gmra.mrb[0].mxu0 %v6210
    %v6494 = vpop.f32.mrb[0].mxu0
    %v6495 = vadd.f32 0.0, %v6494
    %v6496 = vpop.f32.mrb[0].mxu0
    %6497 = vmatprep.mubr.f32.mxu0 0.0
    %6498 = vmatmul.mubr.f32.gmra.mrb[0].mxu0 %v6213
    %v6499 = vpop.f32.mrb[0].mxu0
    %v6500 = vadd.f32 0.0, %v6499
    %v6501 = vpop.f32.mrb[0].mxu0
    %6502 = vmatprep.mubr.f32.mxu0 0.0
    %6503 = vmatmul.mubr.f32.gmra.mrb[0].mxu0 %v6216
    %v6504 = vpop.f32.mrb[0].mxu0
    %v6505 = vadd.f32 0.0, %v6504
    %v6506 = vpop.f32.mrb[0].mxu0
    %6507 = vmatprep.mubr.f32.mxu0 0.0
    %6508 = vmatmul.mubr.f32.gmra.mrb[0].mxu0 %v6219
    %v6509 = vpop.f32.mrb[0].mxu0
    %v6510 = vadd.f32 0.0, %v6509
    %v6511 = vpop.f32.mrb[0].mxu0
    %6512 = vmatprep.mubr.f32.mxu0 0.0
    %6513 = vmatmul.mubr.f32.gmra.mrb[0].mxu0 %v6222
    %v6514 = vpop.f32.mrb[0].mxu0
    %v6515 = vadd.f32 0.0, %v6514
    %v6516 = vpop.f32.mrb[0].mxu0
    %6517 = vmatprep.mubr.f32.mxu0 0.0
    %6518 = vmatmul.mubr.f32.gmra.mrb[0].mxu0 %v6225
    %v6519 = vpop.f32.mrb[0].mxu0
    %v6520 = vadd.f32 0.0, %v6519
    %v6521 = vpop.f32.mrb[0].mxu0
    %6522 = vmatprep.mubr.f32.mxu0 0.0
    %6523 = vmatmul.mubr.f32.gmra.mrb[0].mxu0 %v6228
    %v6524 = vpop.f32.mrb[0].mxu0
    %v6525 = vadd.f32 0.0, %v6524
    %v6526 = vpop.f32.mrb[0].mxu0
    %6527 = vmatprep.mubr.f32.mxu0 0.0
    %6528 = vmatmul.mubr.f32.gmra.mrb[0].mxu0 %v6231
    %v6529 = vpop.f32.mrb[0].mxu0
    %v6530 = vadd.f32 0.0, %v6529
    %v6531 = vpop.f32.mrb[0].mxu0
    %6532 = vmatprep.mubr.f32.mxu0 0.0
    %6533 = vmatmul.mubr.f32.gmra.mrb[0].mxu0 %v6234
    %v6534 = vpop.f32.mrb[0].mxu0
    %v6535 = vadd.f32 0.0, %v6534
    %v6536 = vpop.f32.mrb[0].mxu0
    %6537 = vmatprep.mubr.f32.mxu0 0.0
    %6538 = vmatmul.mubr.f32.gmra.mrb[0].mxu0 %v6237
    %v6539 = vpop.f32.mrb[0].mxu0
    %v6540 = vadd.f32 0.0, %v6539
    %v6541 = vpop.f32.mrb[0].mxu0
    %6542 = vmatprep.mubr.f32.mxu0 0.0
    %6543 = vmatmul.mubr.f32.gmra.mrb[0].mxu0 %v6240
    %v6544 = vpop.f32.mrb[0].mxu0
    %v6545 = vadd.f32 0.0, %v6544
    %v6546 = vpop.f32.mrb[0].mxu0
    %6547 = vmatprep.mubr.f32.mxu0 0.0
    %6548 = vmatmul.mubr.f32.gmra.mrb[0].mxu0 %v6243
    %v6549 = vpop.f32.mrb[0].mxu0
    %v6550 = vadd.f32 0.0, %v6549
    %v6551 = vpop.f32.mrb[0].mxu0
    %6552 = vmatprep.mubr.f32.mxu0 0.0
    %6553 = vmatmul.mubr.f32.gmra.mrb[0].mxu0 %v6246
    %v6554 = vpop.f32.mrb[0].mxu0
    %v6555 = vadd.f32 0.0, %v6554
    %v6556 = vpop.f32.mrb[0].mxu0
    %6557 = vmatprep.mubr.f32.mxu0 0.0
    %6558 = vmatmul.mubr.f32.gmra.mrb[0].mxu0 %v6249
    %v6559 = vpop.f32.mrb[0].mxu0
    %v6560 = vadd.f32 0.0, %v6559
    %v6561 = vpop.f32.mrb[0].mxu0
    %6562 = vmatprep.mubr.f32.mxu0 0.0
    %6563 = vmatmul.mubr.f32.gmra.mrb[0].mxu0 %v6252
    %v6564 = vpop.f32.mrb[0].mxu0
    %v6565 = vadd.f32 0.0, %v6564
    %v6566 = vpop.f32.mrb[0].mxu0
    %6567 = vmatprep.mubr.f32.mxu0 0.0
    %6568 = vmatmul.mubr.f32.gmra.mrb[0].mxu0 %v6255
    %v6569 = vpop.f32.mrb[0].mxu0
    %v6570 = vadd.f32 0.0, %v6569
    %v6571 = vpop.f32.mrb[0].mxu0
    %6572 = vmatprep.mubr.f32.mxu0 0.0
    %6573 = vmatmul.mubr.f32.gmra.mrb[0].mxu0 %v6258
    %v6574 = vpop.f32.mrb[0].mxu0
    %v6575 = vadd.f32 0.0, %v6574
    %v6576 = vpop.f32.mrb[0].mxu0
    %6577 = vmatprep.mubr.f32.mxu0 0.0
    %6578 = vmatmul.mubr.f32.gmra.mrb[0].mxu0 %v6261
    %v6579 = vpop.f32.mrb[0].mxu0
    %v6580 = vadd.f32 0.0, %v6579
    %v6581 = vpop.f32.mrb[0].mxu0
    %6582 = vmatprep.mubr.f32.mxu0 0.0
    %6583 = vmatmul.mubr.f32.gmra.mrb[0].mxu0 %v6264
    %v6584 = vpop.f32.mrb[0].mxu0
    %v6585 = vadd.f32 0.0, %v6584
    %v6586 = vpop.f32.mrb[0].mxu0
    %6587 = vmatprep.mubr.f32.mxu0 0.0
    %6588 = vmatmul.mubr.f32.gmra.mrb[0].mxu0 %v6267
    %v6589 = vpop.f32.mrb[0].mxu0
    %v6590 = vadd.f32 0.0, %v6589
    %v6591 = vpop.f32.mrb[0].mxu0
    %6592 = vmatprep.mubr.f32.mxu0 0.0
    %6593 = vmatmul.mubr.f32.gmra.mrb[0].mxu0 %v6270
    %v6594 = vpop.f32.mrb[0].mxu0
    %v6595 = vadd.f32 0.0, %v6594
    %v6596 = vpop.f32.mrb[0].mxu0
    %6597 = vmatprep.mubr.f32.mxu0 0.0
    %6598 = vmatmul.mubr.f32.gmra.mrb[0].mxu0 %v6273
    %v6599 = vpop.f32.mrb[0].mxu0
    %v6600 = vadd.f32 0.0, %v6599
    %v6601 = vpop.f32.mrb[0].mxu0
    %6602 = vmatprep.mubr.f32.mxu0 0.0
    %6603 = vmatmul.mubr.f32.gmra.mrb[0].mxu0 %v6276
    %v6604 = vpop.f32.mrb[0].mxu0
    %v6605 = vadd.f32 0.0, %v6604
    %v6606 = vpop.f32.mrb[0].mxu0
    %6607 = vmatprep.mubr.f32.mxu0 0.0
    %6608 = vmatmul.mubr.f32.gmra.mrb[0].mxu0 %v6279
    %v6609 = vpop.f32.mrb[0].mxu0
    %v6610 = vadd.f32 0.0, %v6609
    %v6611 = vpop.f32.mrb[0].mxu0
    %6612 = vmatprep.mubr.f32.mxu0 0.0
    %6613 = vmatmul.mubr.f32.gmra.mrb[0].mxu0 %v6282
    %v6614 = vpop.f32.mrb[0].mxu0
    %v6615 = vadd.f32 0.0, %v6614
    %v6616 = vpop.f32.mrb[0].mxu0
    %6617 = vmatprep.mubr.f32.mxu0 0.0
    %6618 = vmatmul.mubr.f32.gmra.mrb[0].mxu0 %v6285
    %v6619 = vpop.f32.mrb[0].mxu0
    %v6620 = vadd.f32 0.0, %v6619
    %v6621 = vpop.f32.mrb[0].mxu0
    %6622 = vmatprep.mubr.f32.mxu0 0.0
    %6623 = vmatmul.mubr.f32.gmra.mrb[0].mxu0 %v6288
    %v6624 = vpop.f32.mrb[0].mxu0
    %v6625 = vadd.f32 0.0, %v6624
    %v6626 = vpop.f32.mrb[0].mxu0
    %6627 = vmatprep.mubr.f32.mxu0 0.0
    %6628 = vmatmul.mubr.f32.gmra.mrb[0].mxu0 %v6291
    %v6629 = vpop.f32.mrb[0].mxu0
    %v6630 = vadd.f32 0.0, %v6629
    %v6631 = vpop.f32.mrb[0].mxu0
    %6632 = vmatprep.mubr.f32.mxu0 0.0
    %6633 = vmatmul.mubr.f32.gmra.mrb[0].mxu0 %v6294
    %v6634 = vpop.f32.mrb[0].mxu0
    %v6635 = vadd.f32 0.0, %v6634
    %v6636 = vpop.f32.mrb[0].mxu0
    %6637 = vmatprep.mubr.f32.mxu0 0.0
    %6638 = vmatmul.mubr.f32.gmra.mrb[0].mxu0 %v6297
    %v6639 = vpop.f32.mrb[0].mxu0
    %v6640 = vadd.f32 0.0, %v6639
    %v6641 = vpop.f32.mrb[0].mxu0
    %6642 = vmatprep.mubr.f32.mxu0 0.0
    %6643 = vmatmul.mubr.f32.gmra.mrb[0].mxu0 %v6300
    %v6644 = vpop.f32.mrb[0].mxu0
    %v6645 = vadd.f32 0.0, %v6644
    %v6646 = vpop.f32.mrb[0].mxu0
    %6647 = vmatprep.mubr.f32.mxu0 0.0
    %6648 = vmatmul.mubr.f32.gmra.mrb[0].mxu0 %v6303
    %v6649 = vpop.f32.mrb[0].mxu0
    %v6650 = vadd.f32 0.0, %v6649
    %v6651 = vpop.f32.mrb[0].mxu0
    %6652 = vmatprep.mubr.f32.mxu0 0.0
    %6653 = vmatmul.mubr.f32.gmra.mrb[0].mxu0 %v6306
    %v6654 = vpop.f32.mrb[0].mxu0
    %v6655 = vadd.f32 0.0, %v6654
    %v6656 = vpop.f32.mrb[0].mxu0
    %6657 = vmatprep.mubr.f32.mxu0 0.0
    %6658 = vmatmul.mubr.f32.gmra.mrb[0].mxu0 %v6309
    %v6659 = vpop.f32.mrb[0].mxu0
    %v6660 = vadd.f32 0.0, %v6659
    %v6661 = vpop.f32.mrb[0].mxu0
    %6662 = vmatprep.mubr.f32.mxu0 0.0
    %6663 = vmatmul.mubr.f32.gmra.mrb[0].mxu0 %v6312
    %v6664 = vpop.f32.mrb[0].mxu0
    %v6665 = vadd.f32 0.0, %v6664
    %v6666 = vpop.f32.mrb[0].mxu0
    %6667 = vmatprep.mubr.f32.mxu0 0.0
    %6668 = vmatmul.mubr.f32.gmra.mrb[0].mxu0 %v6315
    %v6669 = vpop.f32.mrb[0].mxu0
    %v6670 = vadd.f32 0.0, %v6669
    %v6671 = vpop.f32.mrb[0].mxu0
    %6672 = vmatprep.mubr.f32.mxu0 0.0
    %6673 = vmatmul.mubr.f32.gmra.mrb[0].mxu0 %v6318
    %v6674 = vpop.f32.mrb[0].mxu0
    %v6675 = vadd.f32 0.0, %v6674
    %v6676 = vpop.f32.mrb[0].mxu0
    %6677 = vmatprep.mubr.f32.mxu0 0.0
    %6678 = vmatmul.mubr.f32.gmra.mrb[0].mxu0 %v6321
    %v6679 = vpop.f32.mrb[0].mxu0
    %v6680 = vadd.f32 0.0, %v6679
    %v6681 = vpop.f32.mrb[0].mxu0
    %6682 = vmatprep.mubr.f32.mxu0 0.0
    %6683 = vmatmul.mubr.f32.gmra.mrb[0].mxu0 %v6324
    %v6684 = vpop.f32.mrb[0].mxu0
    %v6685 = vadd.f32 0.0, %v6684
    %v6686 = vpop.f32.mrb[0].mxu0
    %6687 = vmatprep.mubr.f32.mxu0 0.0
    %6688 = vmatmul.mubr.f32.gmra.mrb[0].mxu0 %v6327
    %v6689 = vpop.f32.mrb[0].mxu0
    %v6690 = vadd.f32 0.0, %v6689
    %v6691 = vpop.f32.mrb[0].mxu0
    %6692 = vmatprep.mubr.f32.mxu0 0.0
    %6693 = vmatmul.mubr.f32.gmra.mrb[0].mxu0 %v6330
    %v6694 = vpop.f32.mrb[0].mxu0
    %v6695 = vadd.f32 0.0, %v6694
    %v6696 = vpop.f32.mrb[0].mxu0
    %6697 = vmatprep.mubr.f32.mxu0 0.0
    %6698 = vmatmul.mubr.f32.gmra.mrb[0].mxu0 %v6333
    %v6699 = vpop.f32.mrb[0].mxu0
    %v6700 = vadd.f32 0.0, %v6699
    %v6701 = vpop.f32.mrb[0].mxu0
    %6702 = vmatprep.mubr.f32.mxu0 0.0
    %6703 = vmatmul.mubr.f32.gmra.mrb[0].mxu0 %v6336
    %v6704 = vpop.f32.mrb[0].mxu0
    %v6705 = vadd.f32 0.0, %v6704
    %v6706 = vpop.f32.mrb[0].mxu0
    %6707 = vmatprep.mubr.f32.mxu0 0.0
    %6708 = vmatmul.mubr.f32.gmra.mrb[0].mxu0 %v6339
    %v6709 = vpop.f32.mrb[0].mxu0
    %v6710 = vadd.f32 0.0, %v6709
    %v6711 = vpop.f32.mrb[0].mxu0
    %6712 = vmatprep.mubr.f32.mxu0 0.0
    %6713 = vmatmul.mubr.f32.gmra.mrb[0].mxu0 %v6342
    %v6714 = vpop.f32.mrb[0].mxu0
    %v6715 = vadd.f32 0.0, %v6714
    %v6716 = vpop.f32.mrb[0].mxu0
    %6717 = vmatprep.mubr.f32.mxu0 0.0
    %6718 = vmatmul.mubr.f32.gmra.mrb[0].mxu0 %v6345
    %v6719 = vpop.f32.mrb[0].mxu0
    %v6720 = vadd.f32 0.0, %v6719
    %v6721 = vpop.f32.mrb[0].mxu0
    %6722 = vmatprep.mubr.f32.mxu0 0.0
    %6723 = vmatmul.mubr.f32.gmra.mrb[0].mxu0 %v6348
    %v6724 = vpop.f32.mrb[0].mxu0
    %v6725 = vadd.f32 0.0, %v6724
    %v6726 = vpop.f32.mrb[0].mxu0
    %6727 = vmatprep.mubr.f32.mxu0 0.0
    %6728 = vmatmul.mubr.f32.gmra.mrb[0].mxu0 %v6351
    %v6729 = vpop.f32.mrb[0].mxu0
    %v6730 = vadd.f32 0.0, %v6729
    %v6731 = vpop.f32.mrb[0].mxu0
    %6732 = vmatprep.mubr.f32.mxu0 0.0
    %6733 = vmatmul.mubr.f32.gmra.mrb[0].mxu0 %v6354
    %v6734 = vpop.f32.mrb[0].mxu0
    %v6735 = vadd.f32 0.0, %v6734
    %v6736 = vpop.f32.mrb[0].mxu0
    %6737 = vmatprep.mubr.f32.mxu0 0.0
    %6738 = vmatmul.mubr.f32.gmra.mrb[0].mxu0 %v6357
    %v6739 = vpop.f32.mrb[0].mxu0
    %v6740 = vadd.f32 0.0, %v6739
    %v6741 = vpop.f32.mrb[0].mxu0
    %6742 = vmatprep.mubr.f32.mxu0 0.0
    %6743 = vmatmul.mubr.f32.gmra.mrb[0].mxu0 %v6360
    %v6744 = vpop.f32.mrb[0].mxu0
    %v6745 = vadd.f32 0.0, %v6744
    %v6746 = vpop.f32.mrb[0].mxu0
    %6747 = vmatprep.mubr.f32.mxu0 0.0
    %6748 = vmatmul.mubr.f32.gmra.mrb[0].mxu0 %v6363
    %v6749 = vpop.f32.mrb[0].mxu0
    %v6750 = vadd.f32 0.0, %v6749
    %v6751 = vpop.f32.mrb[0].mxu0
    %6752 = vmatprep.mubr.f32.mxu0 0.0
    %6753 = vmatmul.mubr.f32.gmra.mrb[0].mxu0 %v6366
    %v6754 = vpop.f32.mrb[0].mxu0
    %v6755 = vadd.f32 0.0, %v6754
    %v6756 = vpop.f32.mrb[0].mxu0
    %6757 = vmatprep.mubr.f32.mxu0 0.0
    %6758 = vmatmul.mubr.f32.gmra.mrb[0].mxu0 %v6369
    %v6759 = vpop.f32.mrb[0].mxu0
    %v6760 = vadd.f32 0.0, %v6759
    %v6761 = vpop.f32.mrb[0].mxu0
    %6762 = vmatprep.mubr.f32.mxu0 0.0
    %6763 = vmatmul.mubr.f32.gmra.mrb[0].mxu0 %v6372
    %v6764 = vpop.f32.mrb[0].mxu0
    %v6765 = vadd.f32 0.0, %v6764
    %v6766 = vpop.f32.mrb[0].mxu0
    %6767 = vmatprep.mubr.f32.mxu0 0.0
    %6768 = vmatmul.mubr.f32.gmra.mrb[0].mxu0 %v6375
    %v6769 = vpop.f32.mrb[0].mxu0
    %v6770 = vadd.f32 0.0, %v6769
    %v6771 = vpop.f32.mrb[0].mxu0
    %6772 = vmatprep.mubr.f32.mxu0 0.0
    %6773 = vmatmul.mubr.f32.gmra.mrb[0].mxu0 %v6378
    %v6774 = vpop.f32.mrb[0].mxu0
    %v6775 = vadd.f32 0.0, %v6774
    %v6776 = vpop.f32.mrb[0].mxu0
    %6777 = vmatprep.mubr.f32.mxu0 0.0
    %6778 = vmatmul.mubr.f32.gmra.mrb[0].mxu0 %v6381
    %v6779 = vpop.f32.mrb[0].mxu0
    %v6780 = vadd.f32 0.0, %v6779
    %v6781 = vpop.f32.mrb[0].mxu0
    %6782 = vmatprep.mubr.f32.mxu0 0.0
    %6783 = vmatmul.mubr.f32.gmra.mrb[0].mxu0 %v6384
    %v6784 = vpop.f32.mrb[0].mxu0
    %v6785 = vadd.f32 0.0, %v6784
    %v6786 = vpop.f32.mrb[0].mxu0
    %6787 = vmatprep.mubr.f32.mxu0 0.0
    %6788 = vmatmul.mubr.f32.gmra.mrb[0].mxu0 %v6387
    %v6789 = vpop.f32.mrb[0].mxu0
    %v6790 = vadd.f32 0.0, %v6789
    %v6791 = vpop.f32.mrb[0].mxu0
    %6792 = vmatprep.mubr.f32.mxu0 0.0
    %6793 = vmatmul.mubr.f32.gmra.mrb[0].mxu0 %v6390
    %v6794 = vpop.f32.mrb[0].mxu0
    %v6795 = vadd.f32 0.0, %v6794
    %v6796 = vpop.f32.mrb[0].mxu0
    %6797 = vmatprep.mubr.f32.mxu0 0.0
    %6798 = vmatmul.mubr.f32.gmra.mrb[0].mxu0 %v6393
    %v6799 = vpop.f32.mrb[0].mxu0
    %v6800 = vadd.f32 0.0, %v6799
    %v6801 = vpop.f32.mrb[0].mxu0
    %6802 = vmatprep.mubr.f32.mxu0 0.0
    %6803 = vmatmul.mubr.f32.gmra.mrb[0].mxu0 %v6396
    %v6804 = vpop.f32.mrb[0].mxu0
    %v6805 = vadd.f32 0.0, %v6804
    %v6806 = vpop.f32.mrb[0].mxu0
    %6807 = vmatprep.mubr.f32.mxu0 0.0
    %6808 = vmatmul.mubr.f32.gmra.mrb[0].mxu0 %v6399
    %v6809 = vpop.f32.mrb[0].mxu0
    %v6810 = vadd.f32 0.0, %v6809
    %v6811 = vpop.f32.mrb[0].mxu0
    %6812 = vmatprep.mubr.f32.mxu0 0.0
    %6813 = vmatmul.mubr.f32.gmra.mrb[0].mxu0 %v6402
    %v6814 = vpop.f32.mrb[0].mxu0
    %v6815 = vadd.f32 0.0, %v6814
    %v6816 = vpop.f32.mrb[0].mxu0
    %6817 = vmatprep.mubr.f32.mxu0 0.0
    %6818 = vmatmul.mubr.f32.gmra.mrb[0].mxu0 %v6405
    %v6819 = vpop.f32.mrb[0].mxu0
    %v6820 = vadd.f32 0.0, %v6819
    %v6821 = vpop.f32.mrb[0].mxu0
    %6822 = vmatprep.mubr.f32.mxu0 0.0
    %6823 = vmatmul.mubr.f32.gmra.mrb[0].mxu0 %v6408
    %v6824 = vpop.f32.mrb[0].mxu0
    %v6825 = vadd.f32 0.0, %v6824
    %v6826 = vpop.f32.mrb[0].mxu0
    %6827 = vmatprep.mubr.f32.mxu0 0.0
    %6828 = vmatmul.mubr.f32.gmra.mrb[0].mxu0 %v6411
    %v6829 = vpop.f32.mrb[0].mxu0
    %v6830 = vadd.f32 0.0, %v6829
    %v6831 = vpop.f32.mrb[0].mxu0
    %6832 = vmatprep.mubr.f32.mxu0 0.0
    %6833 = vmatmul.mubr.f32.gmra.mrb[0].mxu0 %v6414
    %v6834 = vpop.f32.mrb[0].mxu0
    %v6835 = vadd.f32 0.0, %v6834
    %v6836 = vpop.f32.mrb[0].mxu0
    %6837 = vmatprep.mubr.f32.mxu0 0.0
    %6838 = vmatmul.mubr.f32.gmra.mrb[0].mxu0 %v6417
    %v6839 = vpop.f32.mrb[0].mxu0
    %v6840 = vadd.f32 0.0, %v6839
    %v6841 = vpop.f32.mrb[0].mxu0
    %6842 = vmatprep.mubr.f32.mxu0 0.0
    %6843 = vmatmul.mubr.f32.gmra.mrb[0].mxu0 %v6420
    %v6844 = vpop.f32.mrb[0].mxu0
    %v6845 = vadd.f32 0.0, %v6844
    %v6846 = vpop.f32.mrb[0].mxu0
    %6847 = vmatprep.mubr.f32.mxu0 0.0
    %6848 = vmatmul.mubr.f32.gmra.mrb[0].mxu0 %v6423
    %v6849 = vpop.f32.mrb[0].mxu0
    %v6850 = vadd.f32 0.0, %v6849
    %v6851 = vpop.f32.mrb[0].mxu0
    %6852 = vdwg.mxu0
    %v6853 = vadd.f32 %v6063, %v6495
    %v6854 = vadd.f32 %v6064, %v6500
    %v6855 = vadd.f32 %v6065, %v6505
    %v6856 = vadd.f32 %v6066, %v6510
    %v6857 = vadd.f32 %v6067, %v6515
    %v6858 = vadd.f32 %v6068, %v6520
    %v6859 = vadd.f32 %v6069, %v6525
    %v6860 = vadd.f32 %v6070, %v6530
    %v6861 = vadd.f32 %v6071, %v6535
    %v6862 = vadd.f32 %v6072, %v6540
    %v6863 = vadd.f32 %v6073, %v6545
    %v6864 = vadd.f32 %v6074, %v6550
    %v6865 = vadd.f32 %v6075, %v6555
    %v6866 = vadd.f32 %v6076, %v6560
    %v6867 = vadd.f32 %v6077, %v6565
    %v6868 = vadd.f32 %v6078, %v6570
    %v6869 = vadd.f32 %v6079, %v6575
    %v6870 = vadd.f32 %v6080, %v6580
    %v6871 = vadd.f32 %v6081, %v6585
    %v6872 = vadd.f32 %v6082, %v6590
    %v6873 = vadd.f32 %v6083, %v6595
    %v6874 = vadd.f32 %v6084, %v6600
    %v6875 = vadd.f32 %v6085, %v6605
    %v6876 = vadd.f32 %v6086, %v6610
    %v6877 = vadd.f32 %v6087, %v6615
    %v6878 = vadd.f32 %v6088, %v6620
    %v6879 = vadd.f32 %v6089, %v6625
    %v6880 = vadd.f32 %v6090, %v6630
    %v6881 = vadd.f32 %v6091, %v6635
    %v6882 = vadd.f32 %v6092, %v6640
    %v6883 = vadd.f32 %v6093, %v6645
    %v6884 = vadd.f32 %v6094, %v6650
    %v6885 = vadd.f32 %v6095, %v6655
    %v6886 = vadd.f32 %v6096, %v6660
    %v6887 = vadd.f32 %v6097, %v6665
    %v6888 = vadd.f32 %v6098, %v6670
    %v6889 = vadd.f32 %v6099, %v6675
    %v6890 = vadd.f32 %v6100, %v6680
    %v6891 = vadd.f32 %v6101, %v6685
    %v6892 = vadd.f32 %v6102, %v6690
    %v6893 = vadd.f32 %v6103, %v6695
    %v6894 = vadd.f32 %v6104, %v6700
    %v6895 = vadd.f32 %v6105, %v6705
    %v6896 = vadd.f32 %v6106, %v6710
    %v6897 = vadd.f32 %v6107, %v6715
    %v6898 = vadd.f32 %v6108, %v6720
    %v6899 = vadd.f32 %v6109, %v6725
    %v6900 = vadd.f32 %v6110, %v6730
    %v6901 = vadd.f32 %v6111, %v6735
    %v6902 = vadd.f32 %v6112, %v6740
    %v6903 = vadd.f32 %v6113, %v6745
    %v6904 = vadd.f32 %v6114, %v6750
    %v6905 = vadd.f32 %v6115, %v6755
    %v6906 = vadd.f32 %v6116, %v6760
    %v6907 = vadd.f32 %v6117, %v6765
    %v6908 = vadd.f32 %v6118, %v6770
    %v6909 = vadd.f32 %v6119, %v6775
    %v6910 = vadd.f32 %v6120, %v6780
    %v6911 = vadd.f32 %v6121, %v6785
    %v6912 = vadd.f32 %v6122, %v6790
    %v6913 = vadd.f32 %v6123, %v6795
    %v6914 = vadd.f32 %v6124, %v6800
    %v6915 = vadd.f32 %v6125, %v6805
    %v6916 = vadd.f32 %v6126, %v6810
    %v6917 = vadd.f32 %v6127, %v6815
    %v6918 = vadd.f32 %v6128, %v6820
    %v6919 = vadd.f32 %v6129, %v6825
    %v6920 = vadd.f32 %v6130, %v6830
    %v6921 = vadd.f32 %v6131, %v6835
    %v6922 = vadd.f32 %v6132, %v6840
    %v6923 = vadd.f32 %v6133, %v6845
    %v6924 = vadd.f32 %v6134, %v6850
    %v6925 = vld [vmem:[%s0 + $0x26] sm:$0xff]
    %v6926 = vld [vmem:[%s0 + $0x2e] sm:$0xff]
    %v6927 = vld [vmem:[%s0 + $0x36] sm:$0xff]
    %v6928 = vld [vmem:[%s0 + $0x3e] sm:$0xff]
    %v6929 = vld [vmem:[%s0 + $0x46] sm:$0xff]
    %v6930 = vld [vmem:[%s0 + $0x4e] sm:$0xff]
    %v6931 = vld [vmem:[%s0 + $0x56] sm:$0xff]
    %v6932 = vld [vmem:[%s0 + $0x5e] sm:$0xff]
    %v6933 = vld [vmem:[%s0 + $0x66] sm:$0xff]
    %v6934 = vld [vmem:[%s0 + $0x6e] sm:$0xff]
    %v6935 = vld [vmem:[%s0 + $0x76] sm:$0xff]
    %v6936 = vld [vmem:[%s0 + $0x7e] sm:$0xff]
    %v6937 = vld [vmem:[%s0 + $0x86] sm:$0xff]
    %v6938 = vld [vmem:[%s0 + $0x8e] sm:$0xff]
    %v6939 = vld [vmem:[%s0 + $0x96] sm:$0xff]
    %v6940 = vld [vmem:[%s0 + $0x9e] sm:$0xff]
    %v6941 = vld [vmem:[%s0 + $0xa6] sm:$0xff]
    %v6942 = vld [vmem:[%s0 + $0xae] sm:$0xff]
    %v6943 = vld [vmem:[%s0 + $0xb6] sm:$0xff]
    %v6944 = vld [vmem:[%s0 + $0xbe] sm:$0xff]
    %v6945 = vld [vmem:[%s0 + $0xc6] sm:$0xff]
    %v6946 = vld [vmem:[%s0 + $0xce] sm:$0xff]
    %v6947 = vld [vmem:[%s0 + $0xd6] sm:$0xff]
    %v6948 = vld [vmem:[%s0 + $0xde] sm:$0xff]
    %v6949 = vld [vmem:[%s0 + $0xe6] sm:$0xff]
    %v6950 = vld [vmem:[%s0 + $0xee] sm:$0xff]
    %v6951 = vld [vmem:[%s0 + $0xf6] sm:$0xff]
    %v6952 = vld [vmem:[%s0 + $0xfe] sm:$0xff]
    %v6953 = vld [vmem:[%s0 + $0x106] sm:$0xff]
    %v6954 = vld [vmem:[%s0 + $0x10e] sm:$0xff]
    %v6955 = vld [vmem:[%s0 + $0x116] sm:$0xff]
    %v6956 = vld [vmem:[%s0 + $0x11e] sm:$0xff]
    %v6957 = vld [vmem:[%s0 + $0x126] sm:$0xff]
    %v6958 = vld [vmem:[%s0 + $0x12e] sm:$0xff]
    %v6959 = vld [vmem:[%s0 + $0x136] sm:$0xff]
    %v6960 = vld [vmem:[%s0 + $0x13e] sm:$0xff]
    %v6961 = vld [vmem:[%s0 + $0x16e] sm:$0xff]
    %v6962 = vld [vmem:[%s0 + $0x176] sm:$0xff]
    %v6963 = vld [vmem:[%s0 + $0x17e] sm:$0xff]
    %v6964 = vld [vmem:[%s0 + $0x186] sm:$0xff]
    %v6965 = vld [vmem:[%s0 + $0x18e] sm:$0xff]
    %v6966 = vld [vmem:[%s0 + $0x196] sm:$0xff]
    %v6967 = vld [vmem:[%s0 + $0x19e] sm:$0xff]
    %v6968 = vld [vmem:[%s0 + $0x1a6] sm:$0xff]
    %v6969 = vld [vmem:[%s0 + $0x1ae] sm:$0xff]
    %v6970 = vld [vmem:[%s0 + $0x1b6] sm:$0xff]
    %v6971 = vld [vmem:[%s0 + $0x1be] sm:$0xff]
    %v6972 = vld [vmem:[%s0 + $0x1c6] sm:$0xff]
    %v6973 = vld [vmem:[%s0 + $0x1ce] sm:$0xff]
    %v6974 = vld [vmem:[%s0 + $0x1d6] sm:$0xff]
    %v6975 = vld [vmem:[%s0 + $0x1de] sm:$0xff]
    %v6976 = vld [vmem:[%s0 + $0x1e6] sm:$0xff]
    %v6977 = vld [vmem:[%s0 + $0x1ee] sm:$0xff]
    %v6978 = vld [vmem:[%s0 + $0x1f6] sm:$0xff]
    %v6979 = vld [vmem:[%s0 + $0x1fe] sm:$0xff]
    %v6980 = vld [vmem:[%s0 + $0x206] sm:$0xff]
    %v6981 = vld [vmem:[%s0 + $0x20e] sm:$0xff]
    %v6982 = vld [vmem:[%s0 + $0x216] sm:$0xff]
    %v6983 = vld [vmem:[%s0 + $0x21e] sm:$0xff]
    %v6984 = vld [vmem:[%s0 + $0x226] sm:$0xff]
    %v6985 = vld [vmem:[%s0 + $0x22e] sm:$0xff]
    %v6986 = vld [vmem:[%s0 + $0x236] sm:$0xff]
    %v6987 = vld [vmem:[%s0 + $0x23e] sm:$0xff]
    %v6988 = vld [vmem:[%s0 + $0x246] sm:$0xff]
    %v6989 = vld [vmem:[%s0 + $0x24e] sm:$0xff]
    %v6990 = vld [vmem:[%s0 + $0x256] sm:$0xff]
    %v6991 = vld [vmem:[%s0 + $0x25e] sm:$0xff]
    %v6992 = vld [vmem:[%s0 + $0x266] sm:$0xff]
    %v6993 = vld [vmem:[%s0 + $0x26e] sm:$0xff]
    %v6994 = vld [vmem:[%s0 + $0x276] sm:$0xff]
    %v6995 = vld [vmem:[%s0 + $0x27e] sm:$0xff]
    %v6996 = vld [vmem:[%s0 + $0x286] sm:$0xff]
    %s6997 = scalar_lea.vmem %s1, 32
    %v6998 = vld [vmem:[%s6997] sm:$0xf]
    %v7000 = vsel %vm895, %v6925, 0
    %v7003 = vsel %vm895, %v6926, 0
    %v7006 = vsel %vm895, %v6927, 0
    %v7009 = vsel %vm895, %v6928, 0
    %v7012 = vsel %vm895, %v6929, 0
    %v7015 = vsel %vm895, %v6930, 0
    %v7018 = vsel %vm895, %v6931, 0
    %v7021 = vsel %vm895, %v6932, 0
    %v7024 = vsel %vm895, %v6933, 0
    %v7027 = vsel %vm895, %v6934, 0
    %v7030 = vsel %vm895, %v6935, 0
    %v7033 = vsel %vm895, %v6936, 0
    %v7036 = vsel %vm895, %v6937, 0
    %v7039 = vsel %vm895, %v6938, 0
    %v7042 = vsel %vm895, %v6939, 0
    %v7045 = vsel %vm895, %v6940, 0
    %v7048 = vsel %vm895, %v6941, 0
    %v7051 = vsel %vm895, %v6942, 0
    %v7054 = vsel %vm895, %v6943, 0
    %v7057 = vsel %vm895, %v6944, 0
    %v7060 = vsel %vm895, %v6945, 0
    %v7063 = vsel %vm895, %v6946, 0
    %v7066 = vsel %vm895, %v6947, 0
    %v7069 = vsel %vm895, %v6948, 0
    %v7072 = vsel %vm895, %v6949, 0
    %v7075 = vsel %vm895, %v6950, 0
    %v7078 = vsel %vm895, %v6951, 0
    %v7081 = vsel %vm895, %v6952, 0
    %v7084 = vsel %vm895, %v6953, 0
    %v7087 = vsel %vm895, %v6954, 0
    %v7090 = vsel %vm895, %v6955, 0
    %v7093 = vsel %vm895, %v6956, 0
    %v7096 = vsel %vm895, %v6957, 0
    %v7099 = vsel %vm895, %v6958, 0
    %v7102 = vsel %vm895, %v6959, 0
    %v7105 = vsel %vm895, %v6960, 0
    %v7108 = vsel %vm895, %v6961, 0
    %v7111 = vsel %vm895, %v6962, 0
    %v7114 = vsel %vm895, %v6963, 0
    %v7117 = vsel %vm895, %v6964, 0
    %v7120 = vsel %vm895, %v6965, 0
    %v7123 = vsel %vm895, %v6966, 0
    %v7126 = vsel %vm895, %v6967, 0
    %v7129 = vsel %vm895, %v6968, 0
    %v7132 = vsel %vm895, %v6969, 0
    %v7135 = vsel %vm895, %v6970, 0
    %v7138 = vsel %vm895, %v6971, 0
    %v7141 = vsel %vm895, %v6972, 0
    %v7144 = vsel %vm895, %v6973, 0
    %v7147 = vsel %vm895, %v6974, 0
    %v7150 = vsel %vm895, %v6975, 0
    %v7153 = vsel %vm895, %v6976, 0
    %v7156 = vsel %vm895, %v6977, 0
    %v7159 = vsel %vm895, %v6978, 0
    %v7162 = vsel %vm895, %v6979, 0
    %v7165 = vsel %vm895, %v6980, 0
    %v7168 = vsel %vm895, %v6981, 0
    %v7171 = vsel %vm895, %v6982, 0
    %v7174 = vsel %vm895, %v6983, 0
    %v7177 = vsel %vm895, %v6984, 0
    %v7180 = vsel %vm895, %v6985, 0
    %v7183 = vsel %vm895, %v6986, 0
    %v7186 = vsel %vm895, %v6987, 0
    %v7189 = vsel %vm895, %v6988, 0
    %v7192 = vsel %vm895, %v6989, 0
    %v7195 = vsel %vm895, %v6990, 0
    %v7198 = vsel %vm895, %v6991, 0
    %v7201 = vsel %vm895, %v6992, 0
    %v7204 = vsel %vm895, %v6993, 0
    %v7207 = vsel %vm895, %v6994, 0
    %v7210 = vsel %vm895, %v6995, 0
    %v7213 = vsel %vm895, %v6996, 0
    %v7216 = vsel %vm1112, %v6998, 0
    %7218 = vmatprep.subr.mxu0 0.0
    %7219 = vmatpush1.msra.mxu0 %v7216
    %7220 = vmatprep.subr.mxu0 0.0
    %7221 = vmatpush1.msra.mxu0 0.0
    %7222 = vmatprep.subr.mxu0 0.0
    %7223 = vmatpush1.msra.mxu0 0.0
    %7224 = vmatprep.subr.mxu0 0.0
    %7225 = vmatpush1.msra.mxu0 0.0
    %7226 = vmatprep.subr.mxu0 0.0
    %7227 = vmatpush1.msra.mxu0 0.0
    %7228 = vmatprep.subr.mxu0 0.0
    %7229 = vmatpush1.msra.mxu0 0.0
    %7230 = vmatprep.subr.mxu0 0.0
    %7231 = vmatpush1.msra.mxu0 0.0
    %7232 = vmatprep.subr.mxu0 0.0
    %7233 = vmatpush1.msra.mxu0 0.0
    %7234 = vmatprep.subr.mxu0 0.0
    %7235 = vmatpush1.msra.mxu0 0.0
    %7236 = vmatprep.subr.mxu0 0.0
    %7237 = vmatpush1.msra.mxu0 0.0
    %7238 = vmatprep.subr.mxu0 0.0
    %7239 = vmatpush1.msra.mxu0 0.0
    %7240 = vmatprep.subr.mxu0 0.0
    %7241 = vmatpush1.msra.mxu0 0.0
    %7242 = vmatprep.subr.mxu0 0.0
    %7243 = vmatpush1.msra.mxu0 0.0
    %7244 = vmatprep.subr.mxu0 0.0
    %7245 = vmatpush1.msra.mxu0 0.0
    %7246 = vmatprep.subr.mxu0 0.0
    %7247 = vmatpush1.msra.mxu0 0.0
    %7248 = vmatprep.subr.mxu0 0.0
    %7249 = vmatpush1.msra.mxu0 0.0
    %7250 = vmatprep.subr.mxu0 0.0
    %7251 = vmatpush1.msra.mxu0 0.0
    %7252 = vmatprep.subr.mxu0 0.0
    %7253 = vmatpush1.msra.mxu0 0.0
    %7254 = vmatprep.subr.mxu0 0.0
    %7255 = vmatpush1.msra.mxu0 0.0
    %7256 = vmatprep.subr.mxu0 0.0
    %7257 = vmatpush1.msra.mxu0 0.0
    %7258 = vmatprep.subr.mxu0 0.0
    %7259 = vmatpush1.msra.mxu0 0.0
    %7260 = vmatprep.subr.mxu0 0.0
    %7261 = vmatpush1.msra.mxu0 0.0
    %7262 = vmatprep.subr.mxu0 0.0
    %7263 = vmatpush1.msra.mxu0 0.0
    %7264 = vmatprep.subr.mxu0 0.0
    %7265 = vmatpush1.msra.mxu0 0.0
    %7266 = vmatprep.subr.mxu0 0.0
    %7267 = vmatpush1.msra.mxu0 0.0
    %7268 = vmatprep.subr.mxu0 0.0
    %7269 = vmatpush1.msra.mxu0 0.0
    %7270 = vmatprep.subr.mxu0 0.0
    %7271 = vmatpush1.msra.mxu0 0.0
    %7272 = vmatprep.subr.mxu0 0.0
    %7273 = vmatpush1.msra.mxu0 0.0
    %7274 = vmatprep.subr.mxu0 0.0
    %7275 = vmatpush1.msra.mxu0 0.0
    %7276 = vmatprep.subr.mxu0 0.0
    %7277 = vmatpush1.msra.mxu0 0.0
    %7278 = vmatprep.subr.mxu0 0.0
    %7279 = vmatpush1.msra.mxu0 0.0
    %7280 = vmatprep.subr.mxu0 0.0
    %7281 = vmatpush1.msra.mxu0 0.0
    %7282 = vmatprep.mubr.f32.mxu0 0.0
    %7283 = vmatmul.mubr.f32.gmra.mrb[0].mxu0 %v7000
    %v7284 = vpop.f32.mrb[0].mxu0
    %v7285 = vadd.f32 0.0, %v7284
    %v7286 = vpop.f32.mrb[0].mxu0
    %7287 = vmatprep.mubr.f32.mxu0 0.0
    %7288 = vmatmul.mubr.f32.gmra.mrb[0].mxu0 %v7003
    %v7289 = vpop.f32.mrb[0].mxu0
    %v7290 = vadd.f32 0.0, %v7289
    %v7291 = vpop.f32.mrb[0].mxu0
    %7292 = vmatprep.mubr.f32.mxu0 0.0
    %7293 = vmatmul.mubr.f32.gmra.mrb[0].mxu0 %v7006
    %v7294 = vpop.f32.mrb[0].mxu0
    %v7295 = vadd.f32 0.0, %v7294
    %v7296 = vpop.f32.mrb[0].mxu0
    %7297 = vmatprep.mubr.f32.mxu0 0.0
    %7298 = vmatmul.mubr.f32.gmra.mrb[0].mxu0 %v7009
    %v7299 = vpop.f32.mrb[0].mxu0
    %v7300 = vadd.f32 0.0, %v7299
    %v7301 = vpop.f32.mrb[0].mxu0
    %7302 = vmatprep.mubr.f32.mxu0 0.0
    %7303 = vmatmul.mubr.f32.gmra.mrb[0].mxu0 %v7012
    %v7304 = vpop.f32.mrb[0].mxu0
    %v7305 = vadd.f32 0.0, %v7304
    %v7306 = vpop.f32.mrb[0].mxu0
    %7307 = vmatprep.mubr.f32.mxu0 0.0
    %7308 = vmatmul.mubr.f32.gmra.mrb[0].mxu0 %v7015
    %v7309 = vpop.f32.mrb[0].mxu0
    %v7310 = vadd.f32 0.0, %v7309
    %v7311 = vpop.f32.mrb[0].mxu0
    %7312 = vmatprep.mubr.f32.mxu0 0.0
    %7313 = vmatmul.mubr.f32.gmra.mrb[0].mxu0 %v7018
    %v7314 = vpop.f32.mrb[0].mxu0
    %v7315 = vadd.f32 0.0, %v7314
    %v7316 = vpop.f32.mrb[0].mxu0
    %7317 = vmatprep.mubr.f32.mxu0 0.0
    %7318 = vmatmul.mubr.f32.gmra.mrb[0].mxu0 %v7021
    %v7319 = vpop.f32.mrb[0].mxu0
    %v7320 = vadd.f32 0.0, %v7319
    %v7321 = vpop.f32.mrb[0].mxu0
    %7322 = vmatprep.mubr.f32.mxu0 0.0
    %7323 = vmatmul.mubr.f32.gmra.mrb[0].mxu0 %v7024
    %v7324 = vpop.f32.mrb[0].mxu0
    %v7325 = vadd.f32 0.0, %v7324
    %v7326 = vpop.f32.mrb[0].mxu0
    %7327 = vmatprep.mubr.f32.mxu0 0.0
    %7328 = vmatmul.mubr.f32.gmra.mrb[0].mxu0 %v7027
    %v7329 = vpop.f32.mrb[0].mxu0
    %v7330 = vadd.f32 0.0, %v7329
    %v7331 = vpop.f32.mrb[0].mxu0
    %7332 = vmatprep.mubr.f32.mxu0 0.0
    %7333 = vmatmul.mubr.f32.gmra.mrb[0].mxu0 %v7030
    %v7334 = vpop.f32.mrb[0].mxu0
    %v7335 = vadd.f32 0.0, %v7334
    %v7336 = vpop.f32.mrb[0].mxu0
    %7337 = vmatprep.mubr.f32.mxu0 0.0
    %7338 = vmatmul.mubr.f32.gmra.mrb[0].mxu0 %v7033
    %v7339 = vpop.f32.mrb[0].mxu0
    %v7340 = vadd.f32 0.0, %v7339
    %v7341 = vpop.f32.mrb[0].mxu0
    %7342 = vmatprep.mubr.f32.mxu0 0.0
    %7343 = vmatmul.mubr.f32.gmra.mrb[0].mxu0 %v7036
    %v7344 = vpop.f32.mrb[0].mxu0
    %v7345 = vadd.f32 0.0, %v7344
    %v7346 = vpop.f32.mrb[0].mxu0
    %7347 = vmatprep.mubr.f32.mxu0 0.0
    %7348 = vmatmul.mubr.f32.gmra.mrb[0].mxu0 %v7039
    %v7349 = vpop.f32.mrb[0].mxu0
    %v7350 = vadd.f32 0.0, %v7349
    %v7351 = vpop.f32.mrb[0].mxu0
    %7352 = vmatprep.mubr.f32.mxu0 0.0
    %7353 = vmatmul.mubr.f32.gmra.mrb[0].mxu0 %v7042
    %v7354 = vpop.f32.mrb[0].mxu0
    %v7355 = vadd.f32 0.0, %v7354
    %v7356 = vpop.f32.mrb[0].mxu0
    %7357 = vmatprep.mubr.f32.mxu0 0.0
    %7358 = vmatmul.mubr.f32.gmra.mrb[0].mxu0 %v7045
    %v7359 = vpop.f32.mrb[0].mxu0
    %v7360 = vadd.f32 0.0, %v7359
    %v7361 = vpop.f32.mrb[0].mxu0
    %7362 = vmatprep.mubr.f32.mxu0 0.0
    %7363 = vmatmul.mubr.f32.gmra.mrb[0].mxu0 %v7048
    %v7364 = vpop.f32.mrb[0].mxu0
    %v7365 = vadd.f32 0.0, %v7364
    %v7366 = vpop.f32.mrb[0].mxu0
    %7367 = vmatprep.mubr.f32.mxu0 0.0
    %7368 = vmatmul.mubr.f32.gmra.mrb[0].mxu0 %v7051
    %v7369 = vpop.f32.mrb[0].mxu0
    %v7370 = vadd.f32 0.0, %v7369
    %v7371 = vpop.f32.mrb[0].mxu0
    %7372 = vmatprep.mubr.f32.mxu0 0.0
    %7373 = vmatmul.mubr.f32.gmra.mrb[0].mxu0 %v7054
    %v7374 = vpop.f32.mrb[0].mxu0
    %v7375 = vadd.f32 0.0, %v7374
    %v7376 = vpop.f32.mrb[0].mxu0
    %7377 = vmatprep.mubr.f32.mxu0 0.0
    %7378 = vmatmul.mubr.f32.gmra.mrb[0].mxu0 %v7057
    %v7379 = vpop.f32.mrb[0].mxu0
    %v7380 = vadd.f32 0.0, %v7379
    %v7381 = vpop.f32.mrb[0].mxu0
    %7382 = vmatprep.mubr.f32.mxu0 0.0
    %7383 = vmatmul.mubr.f32.gmra.mrb[0].mxu0 %v7060
    %v7384 = vpop.f32.mrb[0].mxu0
    %v7385 = vadd.f32 0.0, %v7384
    %v7386 = vpop.f32.mrb[0].mxu0
    %7387 = vmatprep.mubr.f32.mxu0 0.0
    %7388 = vmatmul.mubr.f32.gmra.mrb[0].mxu0 %v7063
    %v7389 = vpop.f32.mrb[0].mxu0
    %v7390 = vadd.f32 0.0, %v7389
    %v7391 = vpop.f32.mrb[0].mxu0
    %7392 = vmatprep.mubr.f32.mxu0 0.0
    %7393 = vmatmul.mubr.f32.gmra.mrb[0].mxu0 %v7066
    %v7394 = vpop.f32.mrb[0].mxu0
    %v7395 = vadd.f32 0.0, %v7394
    %v7396 = vpop.f32.mrb[0].mxu0
    %7397 = vmatprep.mubr.f32.mxu0 0.0
    %7398 = vmatmul.mubr.f32.gmra.mrb[0].mxu0 %v7069
    %v7399 = vpop.f32.mrb[0].mxu0
    %v7400 = vadd.f32 0.0, %v7399
    %v7401 = vpop.f32.mrb[0].mxu0
    %7402 = vmatprep.mubr.f32.mxu0 0.0
    %7403 = vmatmul.mubr.f32.gmra.mrb[0].mxu0 %v7072
    %v7404 = vpop.f32.mrb[0].mxu0
    %v7405 = vadd.f32 0.0, %v7404
    %v7406 = vpop.f32.mrb[0].mxu0
    %7407 = vmatprep.mubr.f32.mxu0 0.0
    %7408 = vmatmul.mubr.f32.gmra.mrb[0].mxu0 %v7075
    %v7409 = vpop.f32.mrb[0].mxu0
    %v7410 = vadd.f32 0.0, %v7409
    %v7411 = vpop.f32.mrb[0].mxu0
    %7412 = vmatprep.mubr.f32.mxu0 0.0
    %7413 = vmatmul.mubr.f32.gmra.mrb[0].mxu0 %v7078
    %v7414 = vpop.f32.mrb[0].mxu0
    %v7415 = vadd.f32 0.0, %v7414
    %v7416 = vpop.f32.mrb[0].mxu0
    %7417 = vmatprep.mubr.f32.mxu0 0.0
    %7418 = vmatmul.mubr.f32.gmra.mrb[0].mxu0 %v7081
    %v7419 = vpop.f32.mrb[0].mxu0
    %v7420 = vadd.f32 0.0, %v7419
    %v7421 = vpop.f32.mrb[0].mxu0
    %7422 = vmatprep.mubr.f32.mxu0 0.0
    %7423 = vmatmul.mubr.f32.gmra.mrb[0].mxu0 %v7084
    %v7424 = vpop.f32.mrb[0].mxu0
    %v7425 = vadd.f32 0.0, %v7424
    %v7426 = vpop.f32.mrb[0].mxu0
    %7427 = vmatprep.mubr.f32.mxu0 0.0
    %7428 = vmatmul.mubr.f32.gmra.mrb[0].mxu0 %v7087
    %v7429 = vpop.f32.mrb[0].mxu0
    %v7430 = vadd.f32 0.0, %v7429
    %v7431 = vpop.f32.mrb[0].mxu0
    %7432 = vmatprep.mubr.f32.mxu0 0.0
    %7433 = vmatmul.mubr.f32.gmra.mrb[0].mxu0 %v7090
    %v7434 = vpop.f32.mrb[0].mxu0
    %v7435 = vadd.f32 0.0, %v7434
    %v7436 = vpop.f32.mrb[0].mxu0
    %7437 = vmatprep.mubr.f32.mxu0 0.0
    %7438 = vmatmul.mubr.f32.gmra.mrb[0].mxu0 %v7093
    %v7439 = vpop.f32.mrb[0].mxu0
    %v7440 = vadd.f32 0.0, %v7439
    %v7441 = vpop.f32.mrb[0].mxu0
    %7442 = vmatprep.mubr.f32.mxu0 0.0
    %7443 = vmatmul.mubr.f32.gmra.mrb[0].mxu0 %v7096
    %v7444 = vpop.f32.mrb[0].mxu0
    %v7445 = vadd.f32 0.0, %v7444
    %v7446 = vpop.f32.mrb[0].mxu0
    %7447 = vmatprep.mubr.f32.mxu0 0.0
    %7448 = vmatmul.mubr.f32.gmra.mrb[0].mxu0 %v7099
    %v7449 = vpop.f32.mrb[0].mxu0
    %v7450 = vadd.f32 0.0, %v7449
    %v7451 = vpop.f32.mrb[0].mxu0
    %7452 = vmatprep.mubr.f32.mxu0 0.0
    %7453 = vmatmul.mubr.f32.gmra.mrb[0].mxu0 %v7102
    %v7454 = vpop.f32.mrb[0].mxu0
    %v7455 = vadd.f32 0.0, %v7454
    %v7456 = vpop.f32.mrb[0].mxu0
    %7457 = vmatprep.mubr.f32.mxu0 0.0
    %7458 = vmatmul.mubr.f32.gmra.mrb[0].mxu0 %v7105
    %v7459 = vpop.f32.mrb[0].mxu0
    %v7460 = vadd.f32 0.0, %v7459
    %v7461 = vpop.f32.mrb[0].mxu0
    %7462 = vmatprep.mubr.f32.mxu0 0.0
    %7463 = vmatmul.mubr.f32.gmra.mrb[0].mxu0 %v7108
    %v7464 = vpop.f32.mrb[0].mxu0
    %v7465 = vadd.f32 0.0, %v7464
    %v7466 = vpop.f32.mrb[0].mxu0
    %7467 = vmatprep.mubr.f32.mxu0 0.0
    %7468 = vmatmul.mubr.f32.gmra.mrb[0].mxu0 %v7111
    %v7469 = vpop.f32.mrb[0].mxu0
    %v7470 = vadd.f32 0.0, %v7469
    %v7471 = vpop.f32.mrb[0].mxu0
    %7472 = vmatprep.mubr.f32.mxu0 0.0
    %7473 = vmatmul.mubr.f32.gmra.mrb[0].mxu0 %v7114
    %v7474 = vpop.f32.mrb[0].mxu0
    %v7475 = vadd.f32 0.0, %v7474
    %v7476 = vpop.f32.mrb[0].mxu0
    %7477 = vmatprep.mubr.f32.mxu0 0.0
    %7478 = vmatmul.mubr.f32.gmra.mrb[0].mxu0 %v7117
    %v7479 = vpop.f32.mrb[0].mxu0
    %v7480 = vadd.f32 0.0, %v7479
    %v7481 = vpop.f32.mrb[0].mxu0
    %7482 = vmatprep.mubr.f32.mxu0 0.0
    %7483 = vmatmul.mubr.f32.gmra.mrb[0].mxu0 %v7120
    %v7484 = vpop.f32.mrb[0].mxu0
    %v7485 = vadd.f32 0.0, %v7484
    %v7486 = vpop.f32.mrb[0].mxu0
    %7487 = vmatprep.mubr.f32.mxu0 0.0
    %7488 = vmatmul.mubr.f32.gmra.mrb[0].mxu0 %v7123
    %v7489 = vpop.f32.mrb[0].mxu0
    %v7490 = vadd.f32 0.0, %v7489
    %v7491 = vpop.f32.mrb[0].mxu0
    %7492 = vmatprep.mubr.f32.mxu0 0.0
    %7493 = vmatmul.mubr.f32.gmra.mrb[0].mxu0 %v7126
    %v7494 = vpop.f32.mrb[0].mxu0
    %v7495 = vadd.f32 0.0, %v7494
    %v7496 = vpop.f32.mrb[0].mxu0
    %7497 = vmatprep.mubr.f32.mxu0 0.0
    %7498 = vmatmul.mubr.f32.gmra.mrb[0].mxu0 %v7129
    %v7499 = vpop.f32.mrb[0].mxu0
    %v7500 = vadd.f32 0.0, %v7499
    %v7501 = vpop.f32.mrb[0].mxu0
    %7502 = vmatprep.mubr.f32.mxu0 0.0
    %7503 = vmatmul.mubr.f32.gmra.mrb[0].mxu0 %v7132
    %v7504 = vpop.f32.mrb[0].mxu0
    %v7505 = vadd.f32 0.0, %v7504
    %v7506 = vpop.f32.mrb[0].mxu0
    %7507 = vmatprep.mubr.f32.mxu0 0.0
    %7508 = vmatmul.mubr.f32.gmra.mrb[0].mxu0 %v7135
    %v7509 = vpop.f32.mrb[0].mxu0
    %v7510 = vadd.f32 0.0, %v7509
    %v7511 = vpop.f32.mrb[0].mxu0
    %7512 = vmatprep.mubr.f32.mxu0 0.0
    %7513 = vmatmul.mubr.f32.gmra.mrb[0].mxu0 %v7138
    %v7514 = vpop.f32.mrb[0].mxu0
    %v7515 = vadd.f32 0.0, %v7514
    %v7516 = vpop.f32.mrb[0].mxu0
    %7517 = vmatprep.mubr.f32.mxu0 0.0
    %7518 = vmatmul.mubr.f32.gmra.mrb[0].mxu0 %v7141
    %v7519 = vpop.f32.mrb[0].mxu0
    %v7520 = vadd.f32 0.0, %v7519
    %v7521 = vpop.f32.mrb[0].mxu0
    %7522 = vmatprep.mubr.f32.mxu0 0.0
    %7523 = vmatmul.mubr.f32.gmra.mrb[0].mxu0 %v7144
    %v7524 = vpop.f32.mrb[0].mxu0
    %v7525 = vadd.f32 0.0, %v7524
    %v7526 = vpop.f32.mrb[0].mxu0
    %7527 = vmatprep.mubr.f32.mxu0 0.0
    %7528 = vmatmul.mubr.f32.gmra.mrb[0].mxu0 %v7147
    %v7529 = vpop.f32.mrb[0].mxu0
    %v7530 = vadd.f32 0.0, %v7529
    %v7531 = vpop.f32.mrb[0].mxu0
    %7532 = vmatprep.mubr.f32.mxu0 0.0
    %7533 = vmatmul.mubr.f32.gmra.mrb[0].mxu0 %v7150
    %v7534 = vpop.f32.mrb[0].mxu0
    %v7535 = vadd.f32 0.0, %v7534
    %v7536 = vpop.f32.mrb[0].mxu0
    %7537 = vmatprep.mubr.f32.mxu0 0.0
    %7538 = vmatmul.mubr.f32.gmra.mrb[0].mxu0 %v7153
    %v7539 = vpop.f32.mrb[0].mxu0
    %v7540 = vadd.f32 0.0, %v7539
    %v7541 = vpop.f32.mrb[0].mxu0
    %7542 = vmatprep.mubr.f32.mxu0 0.0
    %7543 = vmatmul.mubr.f32.gmra.mrb[0].mxu0 %v7156
    %v7544 = vpop.f32.mrb[0].mxu0
    %v7545 = vadd.f32 0.0, %v7544
    %v7546 = vpop.f32.mrb[0].mxu0
    %7547 = vmatprep.mubr.f32.mxu0 0.0
    %7548 = vmatmul.mubr.f32.gmra.mrb[0].mxu0 %v7159
    %v7549 = vpop.f32.mrb[0].mxu0
    %v7550 = vadd.f32 0.0, %v7549
    %v7551 = vpop.f32.mrb[0].mxu0
    %7552 = vmatprep.mubr.f32.mxu0 0.0
    %7553 = vmatmul.mubr.f32.gmra.mrb[0].mxu0 %v7162
    %v7554 = vpop.f32.mrb[0].mxu0
    %v7555 = vadd.f32 0.0, %v7554
    %v7556 = vpop.f32.mrb[0].mxu0
    %7557 = vmatprep.mubr.f32.mxu0 0.0
    %7558 = vmatmul.mubr.f32.gmra.mrb[0].mxu0 %v7165
    %v7559 = vpop.f32.mrb[0].mxu0
    %v7560 = vadd.f32 0.0, %v7559
    %v7561 = vpop.f32.mrb[0].mxu0
    %7562 = vmatprep.mubr.f32.mxu0 0.0
    %7563 = vmatmul.mubr.f32.gmra.mrb[0].mxu0 %v7168
    %v7564 = vpop.f32.mrb[0].mxu0
    %v7565 = vadd.f32 0.0, %v7564
    %v7566 = vpop.f32.mrb[0].mxu0
    %7567 = vmatprep.mubr.f32.mxu0 0.0
    %7568 = vmatmul.mubr.f32.gmra.mrb[0].mxu0 %v7171
    %v7569 = vpop.f32.mrb[0].mxu0
    %v7570 = vadd.f32 0.0, %v7569
    %v7571 = vpop.f32.mrb[0].mxu0
    %7572 = vmatprep.mubr.f32.mxu0 0.0
    %7573 = vmatmul.mubr.f32.gmra.mrb[0].mxu0 %v7174
    %v7574 = vpop.f32.mrb[0].mxu0
    %v7575 = vadd.f32 0.0, %v7574
    %v7576 = vpop.f32.mrb[0].mxu0
    %7577 = vmatprep.mubr.f32.mxu0 0.0
    %7578 = vmatmul.mubr.f32.gmra.mrb[0].mxu0 %v7177
    %v7579 = vpop.f32.mrb[0].mxu0
    %v7580 = vadd.f32 0.0, %v7579
    %v7581 = vpop.f32.mrb[0].mxu0
    %7582 = vmatprep.mubr.f32.mxu0 0.0
    %7583 = vmatmul.mubr.f32.gmra.mrb[0].mxu0 %v7180
    %v7584 = vpop.f32.mrb[0].mxu0
    %v7585 = vadd.f32 0.0, %v7584
    %v7586 = vpop.f32.mrb[0].mxu0
    %7587 = vmatprep.mubr.f32.mxu0 0.0
    %7588 = vmatmul.mubr.f32.gmra.mrb[0].mxu0 %v7183
    %v7589 = vpop.f32.mrb[0].mxu0
    %v7590 = vadd.f32 0.0, %v7589
    %v7591 = vpop.f32.mrb[0].mxu0
    %7592 = vmatprep.mubr.f32.mxu0 0.0
    %7593 = vmatmul.mubr.f32.gmra.mrb[0].mxu0 %v7186
    %v7594 = vpop.f32.mrb[0].mxu0
    %v7595 = vadd.f32 0.0, %v7594
    %v7596 = vpop.f32.mrb[0].mxu0
    %7597 = vmatprep.mubr.f32.mxu0 0.0
    %7598 = vmatmul.mubr.f32.gmra.mrb[0].mxu0 %v7189
    %v7599 = vpop.f32.mrb[0].mxu0
    %v7600 = vadd.f32 0.0, %v7599
    %v7601 = vpop.f32.mrb[0].mxu0
    %7602 = vmatprep.mubr.f32.mxu0 0.0
    %7603 = vmatmul.mubr.f32.gmra.mrb[0].mxu0 %v7192
    %v7604 = vpop.f32.mrb[0].mxu0
    %v7605 = vadd.f32 0.0, %v7604
    %v7606 = vpop.f32.mrb[0].mxu0
    %7607 = vmatprep.mubr.f32.mxu0 0.0
    %7608 = vmatmul.mubr.f32.gmra.mrb[0].mxu0 %v7195
    %v7609 = vpop.f32.mrb[0].mxu0
    %v7610 = vadd.f32 0.0, %v7609
    %v7611 = vpop.f32.mrb[0].mxu0
    %7612 = vmatprep.mubr.f32.mxu0 0.0
    %7613 = vmatmul.mubr.f32.gmra.mrb[0].mxu0 %v7198
    %v7614 = vpop.f32.mrb[0].mxu0
    %v7615 = vadd.f32 0.0, %v7614
    %v7616 = vpop.f32.mrb[0].mxu0
    %7617 = vmatprep.mubr.f32.mxu0 0.0
    %7618 = vmatmul.mubr.f32.gmra.mrb[0].mxu0 %v7201
    %v7619 = vpop.f32.mrb[0].mxu0
    %v7620 = vadd.f32 0.0, %v7619
    %v7621 = vpop.f32.mrb[0].mxu0
    %7622 = vmatprep.mubr.f32.mxu0 0.0
    %7623 = vmatmul.mubr.f32.gmra.mrb[0].mxu0 %v7204
    %v7624 = vpop.f32.mrb[0].mxu0
    %v7625 = vadd.f32 0.0, %v7624
    %v7626 = vpop.f32.mrb[0].mxu0
    %7627 = vmatprep.mubr.f32.mxu0 0.0
    %7628 = vmatmul.mubr.f32.gmra.mrb[0].mxu0 %v7207
    %v7629 = vpop.f32.mrb[0].mxu0
    %v7630 = vadd.f32 0.0, %v7629
    %v7631 = vpop.f32.mrb[0].mxu0
    %7632 = vmatprep.mubr.f32.mxu0 0.0
    %7633 = vmatmul.mubr.f32.gmra.mrb[0].mxu0 %v7210
    %v7634 = vpop.f32.mrb[0].mxu0
    %v7635 = vadd.f32 0.0, %v7634
    %v7636 = vpop.f32.mrb[0].mxu0
    %7637 = vmatprep.mubr.f32.mxu0 0.0
    %7638 = vmatmul.mubr.f32.gmra.mrb[0].mxu0 %v7213
    %v7639 = vpop.f32.mrb[0].mxu0
    %v7640 = vadd.f32 0.0, %v7639
    %v7641 = vpop.f32.mrb[0].mxu0
    %7642 = vdwg.mxu0
    %v7643 = vadd.f32 %v6853, %v7285
    %v7644 = vadd.f32 %v6854, %v7290
    %v7645 = vadd.f32 %v6855, %v7295
    %v7646 = vadd.f32 %v6856, %v7300
    %v7647 = vadd.f32 %v6857, %v7305
    %v7648 = vadd.f32 %v6858, %v7310
    %v7649 = vadd.f32 %v6859, %v7315
    %v7650 = vadd.f32 %v6860, %v7320
    %v7651 = vadd.f32 %v6861, %v7325
    %v7652 = vadd.f32 %v6862, %v7330
    %v7653 = vadd.f32 %v6863, %v7335
    %v7654 = vadd.f32 %v6864, %v7340
    %v7655 = vadd.f32 %v6865, %v7345
    %v7656 = vadd.f32 %v6866, %v7350
    %v7657 = vadd.f32 %v6867, %v7355
    %v7658 = vadd.f32 %v6868, %v7360
    %v7659 = vadd.f32 %v6869, %v7365
    %v7660 = vadd.f32 %v6870, %v7370
    %v7661 = vadd.f32 %v6871, %v7375
    %v7662 = vadd.f32 %v6872, %v7380
    %v7663 = vadd.f32 %v6873, %v7385
    %v7664 = vadd.f32 %v6874, %v7390
    %v7665 = vadd.f32 %v6875, %v7395
    %v7666 = vadd.f32 %v6876, %v7400
    %v7667 = vadd.f32 %v6877, %v7405
    %v7668 = vadd.f32 %v6878, %v7410
    %v7669 = vadd.f32 %v6879, %v7415
    %v7670 = vadd.f32 %v6880, %v7420
    %v7671 = vadd.f32 %v6881, %v7425
    %v7672 = vadd.f32 %v6882, %v7430
    %v7673 = vadd.f32 %v6883, %v7435
    %v7674 = vadd.f32 %v6884, %v7440
    %v7675 = vadd.f32 %v6885, %v7445
    %v7676 = vadd.f32 %v6886, %v7450
    %v7677 = vadd.f32 %v6887, %v7455
    %v7678 = vadd.f32 %v6888, %v7460
    %v7679 = vadd.f32 %v6889, %v7465
    %v7680 = vadd.f32 %v6890, %v7470
    %v7681 = vadd.f32 %v6891, %v7475
    %v7682 = vadd.f32 %v6892, %v7480
    %v7683 = vadd.f32 %v6893, %v7485
    %v7684 = vadd.f32 %v6894, %v7490
    %v7685 = vadd.f32 %v6895, %v7495
    %v7686 = vadd.f32 %v6896, %v7500
    %v7687 = vadd.f32 %v6897, %v7505
    %v7688 = vadd.f32 %v6898, %v7510
    %v7689 = vadd.f32 %v6899, %v7515
    %v7690 = vadd.f32 %v6900, %v7520
    %v7691 = vadd.f32 %v6901, %v7525
    %v7692 = vadd.f32 %v6902, %v7530
    %v7693 = vadd.f32 %v6903, %v7535
    %v7694 = vadd.f32 %v6904, %v7540
    %v7695 = vadd.f32 %v6905, %v7545
    %v7696 = vadd.f32 %v6906, %v7550
    %v7697 = vadd.f32 %v6907, %v7555
    %v7698 = vadd.f32 %v6908, %v7560
    %v7699 = vadd.f32 %v6909, %v7565
    %v7700 = vadd.f32 %v6910, %v7570
    %v7701 = vadd.f32 %v6911, %v7575
    %v7702 = vadd.f32 %v6912, %v7580
    %v7703 = vadd.f32 %v6913, %v7585
    %v7704 = vadd.f32 %v6914, %v7590
    %v7705 = vadd.f32 %v6915, %v7595
    %v7706 = vadd.f32 %v6916, %v7600
    %v7707 = vadd.f32 %v6917, %v7605
    %v7708 = vadd.f32 %v6918, %v7610
    %v7709 = vadd.f32 %v6919, %v7615
    %v7710 = vadd.f32 %v6920, %v7620
    %v7711 = vadd.f32 %v6921, %v7625
    %v7712 = vadd.f32 %v6922, %v7630
    %v7713 = vadd.f32 %v6923, %v7635
    %v7714 = vadd.f32 %v6924, %v7640
    %v7715 = vld [vmem:[%s2] sm:$0x1]
    %v7717 = vlaneseq
    %v7718 = vshrl.u32 %v7717, 7
    %v7719 = vsub.s32 0, %v7718
    %v7720 = vrot.slane %v7715, %v7719
    %v7722 = vadd.f32 %v7643, %v7720
    %v7723 = vadd.f32 %v7644, %v7720
    %v7724 = vadd.f32 %v7645, %v7720
    %v7725 = vadd.f32 %v7646, %v7720
    %v7726 = vadd.f32 %v7647, %v7720
    %v7727 = vadd.f32 %v7648, %v7720
    %v7728 = vadd.f32 %v7649, %v7720
    %v7729 = vadd.f32 %v7650, %v7720
    %v7730 = vadd.f32 %v7651, %v7720
    %v7731 = vadd.f32 %v7652, %v7720
    %v7732 = vadd.f32 %v7653, %v7720
    %v7733 = vadd.f32 %v7654, %v7720
    %v7734 = vadd.f32 %v7655, %v7720
    %v7735 = vadd.f32 %v7656, %v7720
    %v7736 = vadd.f32 %v7657, %v7720
    %v7737 = vadd.f32 %v7658, %v7720
    %v7738 = vadd.f32 %v7659, %v7720
    %v7739 = vadd.f32 %v7660, %v7720
    %v7740 = vadd.f32 %v7661, %v7720
    %v7741 = vadd.f32 %v7662, %v7720
    %v7742 = vadd.f32 %v7663, %v7720
    %v7743 = vadd.f32 %v7664, %v7720
    %v7744 = vadd.f32 %v7665, %v7720
    %v7745 = vadd.f32 %v7666, %v7720
    %v7746 = vadd.f32 %v7667, %v7720
    %v7747 = vadd.f32 %v7668, %v7720
    %v7748 = vadd.f32 %v7669, %v7720
    %v7749 = vadd.f32 %v7670, %v7720
    %v7750 = vadd.f32 %v7671, %v7720
    %v7751 = vadd.f32 %v7672, %v7720
    %v7752 = vadd.f32 %v7673, %v7720
    %v7753 = vadd.f32 %v7674, %v7720
    %v7754 = vadd.f32 %v7675, %v7720
    %v7755 = vadd.f32 %v7676, %v7720
    %v7756 = vadd.f32 %v7677, %v7720
    %v7757 = vadd.f32 %v7678, %v7720
    %v7758 = vadd.f32 %v7679, %v7720
    %v7759 = vadd.f32 %v7680, %v7720
    %v7760 = vadd.f32 %v7681, %v7720
    %v7761 = vadd.f32 %v7682, %v7720
    %v7762 = vadd.f32 %v7683, %v7720
    %v7763 = vadd.f32 %v7684, %v7720
    %v7764 = vadd.f32 %v7685, %v7720
    %v7765 = vadd.f32 %v7686, %v7720
    %v7766 = vadd.f32 %v7687, %v7720
    %v7767 = vadd.f32 %v7688, %v7720
    %v7768 = vadd.f32 %v7689, %v7720
    %v7769 = vadd.f32 %v7690, %v7720
    %v7770 = vadd.f32 %v7691, %v7720
    %v7771 = vadd.f32 %v7692, %v7720
    %v7772 = vadd.f32 %v7693, %v7720
    %v7773 = vadd.f32 %v7694, %v7720
    %v7774 = vadd.f32 %v7695, %v7720
    %v7775 = vadd.f32 %v7696, %v7720
    %v7776 = vadd.f32 %v7697, %v7720
    %v7777 = vadd.f32 %v7698, %v7720
    %v7778 = vadd.f32 %v7699, %v7720
    %v7779 = vadd.f32 %v7700, %v7720
    %v7780 = vadd.f32 %v7701, %v7720
    %v7781 = vadd.f32 %v7702, %v7720
    %v7782 = vadd.f32 %v7703, %v7720
    %v7783 = vadd.f32 %v7704, %v7720
    %v7784 = vadd.f32 %v7705, %v7720
    %v7785 = vadd.f32 %v7706, %v7720
    %v7786 = vadd.f32 %v7707, %v7720
    %v7787 = vadd.f32 %v7708, %v7720
    %v7788 = vadd.f32 %v7709, %v7720
    %v7789 = vadd.f32 %v7710, %v7720
    %v7790 = vadd.f32 %v7711, %v7720
    %v7791 = vadd.f32 %v7712, %v7720
    %v7792 = vadd.f32 %v7713, %v7720
    %v7793 = vadd.f32 %v7714, %v7720
    %v7794 = vmax.f32 %v7722, 0.0
    %v7795 = vmax.f32 %v7723, 0.0
    %v7796 = vmax.f32 %v7724, 0.0
    %v7797 = vmax.f32 %v7725, 0.0
    %v7798 = vmax.f32 %v7726, 0.0
    %v7799 = vmax.f32 %v7727, 0.0
    %v7800 = vmax.f32 %v7728, 0.0
    %v7801 = vmax.f32 %v7729, 0.0
    %v7802 = vmax.f32 %v7730, 0.0
    %v7803 = vmax.f32 %v7731, 0.0
    %v7804 = vmax.f32 %v7732, 0.0
    %v7805 = vmax.f32 %v7733, 0.0
    %v7806 = vmax.f32 %v7734, 0.0
    %v7807 = vmax.f32 %v7735, 0.0
    %v7808 = vmax.f32 %v7736, 0.0
    %v7809 = vmax.f32 %v7737, 0.0
    %v7810 = vmax.f32 %v7738, 0.0
    %v7811 = vmax.f32 %v7739, 0.0
    %v7812 = vmax.f32 %v7740, 0.0
    %v7813 = vmax.f32 %v7741, 0.0
    %v7814 = vmax.f32 %v7742, 0.0
    %v7815 = vmax.f32 %v7743, 0.0
    %v7816 = vmax.f32 %v7744, 0.0
    %v7817 = vmax.f32 %v7745, 0.0
    %v7818 = vmax.f32 %v7746, 0.0
    %v7819 = vmax.f32 %v7747, 0.0
    %v7820 = vmax.f32 %v7748, 0.0
    %v7821 = vmax.f32 %v7749, 0.0
    %v7822 = vmax.f32 %v7750, 0.0
    %v7823 = vmax.f32 %v7751, 0.0
    %v7824 = vmax.f32 %v7752, 0.0
    %v7825 = vmax.f32 %v7753, 0.0
    %v7826 = vmax.f32 %v7754, 0.0
    %v7827 = vmax.f32 %v7755, 0.0
    %v7828 = vmax.f32 %v7756, 0.0
    %v7829 = vmax.f32 %v7757, 0.0
    %v7830 = vmax.f32 %v7758, 0.0
    %v7831 = vmax.f32 %v7759, 0.0
    %v7832 = vmax.f32 %v7760, 0.0
    %v7833 = vmax.f32 %v7761, 0.0
    %v7834 = vmax.f32 %v7762, 0.0
    %v7835 = vmax.f32 %v7763, 0.0
    %v7836 = vmax.f32 %v7764, 0.0
    %v7837 = vmax.f32 %v7765, 0.0
    %v7838 = vmax.f32 %v7766, 0.0
    %v7839 = vmax.f32 %v7767, 0.0
    %v7840 = vmax.f32 %v7768, 0.0
    %v7841 = vmax.f32 %v7769, 0.0
    %v7842 = vmax.f32 %v7770, 0.0
    %v7843 = vmax.f32 %v7771, 0.0
    %v7844 = vmax.f32 %v7772, 0.0
    %v7845 = vmax.f32 %v7773, 0.0
    %v7846 = vmax.f32 %v7774, 0.0
    %v7847 = vmax.f32 %v7775, 0.0
    %v7848 = vmax.f32 %v7776, 0.0
    %v7849 = vmax.f32 %v7777, 0.0
    %v7850 = vmax.f32 %v7778, 0.0
    %v7851 = vmax.f32 %v7779, 0.0
    %v7852 = vmax.f32 %v7780, 0.0
    %v7853 = vmax.f32 %v7781, 0.0
    %v7854 = vmax.f32 %v7782, 0.0
    %v7855 = vmax.f32 %v7783, 0.0
    %v7856 = vmax.f32 %v7784, 0.0
    %v7857 = vmax.f32 %v7785, 0.0
    %v7858 = vmax.f32 %v7786, 0.0
    %v7859 = vmax.f32 %v7787, 0.0
    %v7860 = vmax.f32 %v7788, 0.0
    %v7861 = vmax.f32 %v7789, 0.0
    %v7862 = vmax.f32 %v7790, 0.0
    %v7863 = vmax.f32 %v7791, 0.0
    %v7864 = vmax.f32 %v7792, 0.0
    %v7865 = vmax.f32 %v7793, 0.0
    %v7866 = vmul.f32 %v7794, %v712
    %v7867 = vmul.f32 %v7795, %v713
    %v7868 = vmul.f32 %v7796, %v714
    %v7869 = vmul.f32 %v7797, %v715
    %v7870 = vmul.f32 %v7798, %v716
    %v7871 = vmul.f32 %v7799, %v717
    %v7872 = vmul.f32 %v7800, %v718
    %v7873 = vmul.f32 %v7801, %v719
    %v7874 = vmul.f32 %v7802, %v720
    %v7875 = vmul.f32 %v7803, %v721
    %v7876 = vmul.f32 %v7804, %v722
    %v7877 = vmul.f32 %v7805, %v723
    %v7878 = vmul.f32 %v7806, %v724
    %v7879 = vmul.f32 %v7807, %v725
    %v7880 = vmul.f32 %v7808, %v726
    %v7881 = vmul.f32 %v7809, %v727
    %v7882 = vmul.f32 %v7810, %v728
    %v7883 = vmul.f32 %v7811, %v729
    %v7884 = vmul.f32 %v7812, %v730
    %v7885 = vmul.f32 %v7813, %v731
    %v7886 = vmul.f32 %v7814, %v732
    %v7887 = vmul.f32 %v7815, %v733
    %v7888 = vmul.f32 %v7816, %v734
    %v7889 = vmul.f32 %v7817, %v735
    %v7890 = vmul.f32 %v7818, %v736
    %v7891 = vmul.f32 %v7819, %v737
    %v7892 = vmul.f32 %v7820, %v738
    %v7893 = vmul.f32 %v7821, %v739
    %v7894 = vmul.f32 %v7822, %v740
    %v7895 = vmul.f32 %v7823, %v741
    %v7896 = vmul.f32 %v7824, %v742
    %v7897 = vmul.f32 %v7825, %v743
    %v7898 = vmul.f32 %v7826, %v744
    %v7899 = vmul.f32 %v7827, %v745
    %v7900 = vmul.f32 %v7828, %v746
    %v7901 = vmul.f32 %v7829, %v747
    %v7902 = vmul.f32 %v7830, %v712
    %v7903 = vmul.f32 %v7831, %v713
    %v7904 = vmul.f32 %v7832, %v714
    %v7905 = vmul.f32 %v7833, %v715
    %v7906 = vmul.f32 %v7834, %v716
    %v7907 = vmul.f32 %v7835, %v717
    %v7908 = vmul.f32 %v7836, %v718
    %v7909 = vmul.f32 %v7837, %v719
    %v7910 = vmul.f32 %v7838, %v720
    %v7911 = vmul.f32 %v7839, %v721
    %v7912 = vmul.f32 %v7840, %v722
    %v7913 = vmul.f32 %v7841, %v723
    %v7914 = vmul.f32 %v7842, %v724
    %v7915 = vmul.f32 %v7843, %v725
    %v7916 = vmul.f32 %v7844, %v726
    %v7917 = vmul.f32 %v7845, %v727
    %v7918 = vmul.f32 %v7846, %v728
    %v7919 = vmul.f32 %v7847, %v729
    %v7920 = vmul.f32 %v7848, %v730
    %v7921 = vmul.f32 %v7849, %v731
    %v7922 = vmul.f32 %v7850, %v732
    %v7923 = vmul.f32 %v7851, %v733
    %v7924 = vmul.f32 %v7852, %v734
    %v7925 = vmul.f32 %v7853, %v735
    %v7926 = vmul.f32 %v7854, %v736
    %v7927 = vmul.f32 %v7855, %v737
    %v7928 = vmul.f32 %v7856, %v738
    %v7929 = vmul.f32 %v7857, %v739
    %v7930 = vmul.f32 %v7858, %v740
    %v7931 = vmul.f32 %v7859, %v741
    %v7932 = vmul.f32 %v7860, %v742
    %v7933 = vmul.f32 %v7861, %v743
    %v7934 = vmul.f32 %v7862, %v744
    %v7935 = vmul.f32 %v7863, %v745
    %v7936 = vmul.f32 %v7864, %v746
    %v7937 = vmul.f32 %v7865, %v747
    %vm7938 = vcmask 195584
    %v7939 = vsel %vm7938, %v7866, 0.0
    %v7940 = vsel %vm7938, %v7867, 0.0
    %v7941 = vadd.f32 %v7939, %v7940
    %v7942 = vsel %vm7938, %v7868, 0.0
    %v7943 = vadd.f32 %v7941, %v7942
    %v7944 = vsel %vm7938, %v7869, 0.0
    %v7945 = vadd.f32 %v7943, %v7944
    %v7946 = vsel %vm7938, %v7870, 0.0
    %v7947 = vadd.f32 %v7945, %v7946
    %v7948 = vsel %vm7938, %v7871, 0.0
    %v7949 = vadd.f32 %v7947, %v7948
    %v7950 = vsel %vm7938, %v7872, 0.0
    %v7951 = vadd.f32 %v7949, %v7950
    %v7952 = vsel %vm7938, %v7873, 0.0
    %v7953 = vadd.f32 %v7951, %v7952
    %v7954 = vsel %vm7938, %v7874, 0.0
    %v7955 = vadd.f32 %v7953, %v7954
    %v7956 = vsel %vm7938, %v7875, 0.0
    %v7957 = vadd.f32 %v7955, %v7956
    %v7958 = vsel %vm7938, %v7876, 0.0
    %v7959 = vadd.f32 %v7957, %v7958
    %v7960 = vsel %vm7938, %v7877, 0.0
    %v7961 = vadd.f32 %v7959, %v7960
    %v7962 = vsel %vm7938, %v7878, 0.0
    %v7963 = vadd.f32 %v7961, %v7962
    %v7964 = vsel %vm7938, %v7879, 0.0
    %v7965 = vadd.f32 %v7963, %v7964
    %v7966 = vsel %vm7938, %v7880, 0.0
    %v7967 = vadd.f32 %v7965, %v7966
    %v7968 = vsel %vm7938, %v7881, 0.0
    %v7969 = vadd.f32 %v7967, %v7968
    %v7970 = vsel %vm7938, %v7882, 0.0
    %v7971 = vadd.f32 %v7969, %v7970
    %v7972 = vsel %vm7938, %v7883, 0.0
    %v7973 = vadd.f32 %v7971, %v7972
    %v7974 = vsel %vm7938, %v7884, 0.0
    %v7975 = vadd.f32 %v7973, %v7974
    %v7976 = vsel %vm7938, %v7885, 0.0
    %v7977 = vadd.f32 %v7975, %v7976
    %v7978 = vsel %vm7938, %v7886, 0.0
    %v7979 = vadd.f32 %v7977, %v7978
    %v7980 = vsel %vm7938, %v7887, 0.0
    %v7981 = vadd.f32 %v7979, %v7980
    %v7982 = vsel %vm7938, %v7888, 0.0
    %v7983 = vadd.f32 %v7981, %v7982
    %v7984 = vsel %vm7938, %v7889, 0.0
    %v7985 = vadd.f32 %v7983, %v7984
    %v7986 = vsel %vm7938, %v7890, 0.0
    %v7987 = vadd.f32 %v7985, %v7986
    %v7988 = vsel %vm7938, %v7891, 0.0
    %v7989 = vadd.f32 %v7987, %v7988
    %v7990 = vsel %vm7938, %v7892, 0.0
    %v7991 = vadd.f32 %v7989, %v7990
    %v7992 = vsel %vm7938, %v7893, 0.0
    %v7993 = vadd.f32 %v7991, %v7992
    %v7994 = vsel %vm7938, %v7894, 0.0
    %v7995 = vadd.f32 %v7993, %v7994
    %v7996 = vsel %vm7938, %v7895, 0.0
    %v7997 = vadd.f32 %v7995, %v7996
    %v7998 = vsel %vm7938, %v7896, 0.0
    %v7999 = vadd.f32 %v7997, %v7998
    %v8000 = vsel %vm7938, %v7897, 0.0
    %v8001 = vadd.f32 %v7999, %v8000
    %v8002 = vsel %vm7938, %v7898, 0.0
    %v8003 = vadd.f32 %v8001, %v8002
    %v8004 = vsel %vm7938, %v7899, 0.0
    %v8005 = vadd.f32 %v8003, %v8004
    %v8006 = vsel %vm7938, %v7900, 0.0
    %v8007 = vadd.f32 %v8005, %v8006
    %v8008 = vsel %vm7938, %v7901, 0.0
    %v8009 = vadd.f32 %v8007, %v8008
    %v8010 = vrot.slane %v8009, 4
    %v8011 = vadd.f32 %v8009, %v8010
    %v8012 = vrot.slane %v8011, 2
    %v8013 = vadd.f32 %v8011, %v8012
    %v8014 = vrot.slane %v8013, 1
    %v8015 = vadd.f32 %v8013, %v8014
    %v8016 = vsel %vm7938, %v7902, 0.0
    %v8017 = vsel %vm7938, %v7903, 0.0
    %v8018 = vadd.f32 %v8016, %v8017
    %v8019 = vsel %vm7938, %v7904, 0.0
    %v8020 = vadd.f32 %v8018, %v8019
    %v8021 = vsel %vm7938, %v7905, 0.0
    %v8022 = vadd.f32 %v8020, %v8021
    %v8023 = vsel %vm7938, %v7906, 0.0
    %v8024 = vadd.f32 %v8022, %v8023
    %v8025 = vsel %vm7938, %v7907, 0.0
    %v8026 = vadd.f32 %v8024, %v8025
    %v8027 = vsel %vm7938, %v7908, 0.0
    %v8028 = vadd.f32 %v8026, %v8027
    %v8029 = vsel %vm7938, %v7909, 0.0
    %v8030 = vadd.f32 %v8028, %v8029
    %v8031 = vsel %vm7938, %v7910, 0.0
    %v8032 = vadd.f32 %v8030, %v8031
    %v8033 = vsel %vm7938, %v7911, 0.0
    %v8034 = vadd.f32 %v8032, %v8033
    %v8035 = vsel %vm7938, %v7912, 0.0
    %v8036 = vadd.f32 %v8034, %v8035
    %v8037 = vsel %vm7938, %v7913, 0.0
    %v8038 = vadd.f32 %v8036, %v8037
    %v8039 = vsel %vm7938, %v7914, 0.0
    %v8040 = vadd.f32 %v8038, %v8039
    %v8041 = vsel %vm7938, %v7915, 0.0
    %v8042 = vadd.f32 %v8040, %v8041
    %v8043 = vsel %vm7938, %v7916, 0.0
    %v8044 = vadd.f32 %v8042, %v8043
    %v8045 = vsel %vm7938, %v7917, 0.0
    %v8046 = vadd.f32 %v8044, %v8045
    %v8047 = vsel %vm7938, %v7918, 0.0
    %v8048 = vadd.f32 %v8046, %v8047
    %v8049 = vsel %vm7938, %v7919, 0.0
    %v8050 = vadd.f32 %v8048, %v8049
    %v8051 = vsel %vm7938, %v7920, 0.0
    %v8052 = vadd.f32 %v8050, %v8051
    %v8053 = vsel %vm7938, %v7921, 0.0
    %v8054 = vadd.f32 %v8052, %v8053
    %v8055 = vsel %vm7938, %v7922, 0.0
    %v8056 = vadd.f32 %v8054, %v8055
    %v8057 = vsel %vm7938, %v7923, 0.0
    %v8058 = vadd.f32 %v8056, %v8057
    %v8059 = vsel %vm7938, %v7924, 0.0
    %v8060 = vadd.f32 %v8058, %v8059
    %v8061 = vsel %vm7938, %v7925, 0.0
    %v8062 = vadd.f32 %v8060, %v8061
    %v8063 = vsel %vm7938, %v7926, 0.0
    %v8064 = vadd.f32 %v8062, %v8063
    %v8065 = vsel %vm7938, %v7927, 0.0
    %v8066 = vadd.f32 %v8064, %v8065
    %v8067 = vsel %vm7938, %v7928, 0.0
    %v8068 = vadd.f32 %v8066, %v8067
    %v8069 = vsel %vm7938, %v7929, 0.0
    %v8070 = vadd.f32 %v8068, %v8069
    %v8071 = vsel %vm7938, %v7930, 0.0
    %v8072 = vadd.f32 %v8070, %v8071
    %v8073 = vsel %vm7938, %v7931, 0.0
    %v8074 = vadd.f32 %v8072, %v8073
    %v8075 = vsel %vm7938, %v7932, 0.0
    %v8076 = vadd.f32 %v8074, %v8075
    %v8077 = vsel %vm7938, %v7933, 0.0
    %v8078 = vadd.f32 %v8076, %v8077
    %v8079 = vsel %vm7938, %v7934, 0.0
    %v8080 = vadd.f32 %v8078, %v8079
    %v8081 = vsel %vm7938, %v7935, 0.0
    %v8082 = vadd.f32 %v8080, %v8081
    %v8083 = vsel %vm7938, %v7936, 0.0
    %v8084 = vadd.f32 %v8082, %v8083
    %v8085 = vsel %vm7938, %v7937, 0.0
    %v8086 = vadd.f32 %v8084, %v8085
    %v8087 = vrot.slane %v8086, 4
    %v8088 = vadd.f32 %v8086, %v8087
    %v8089 = vrot.slane %v8088, 2
    %v8090 = vadd.f32 %v8088, %v8089
    %v8091 = vrot.slane %v8090, 1
    %v8092 = vadd.f32 %v8090, %v8091
    %v8093 = vmul.f32 %v8015, 0.00390625
    %v8094 = vmul.f32 %v8092, 0.00390625
    %8097 = vrot.lane.b32.xlu0 %v8093, 120
    %v8098 = vpop.permute.xlu0 %8097
    %8099 = vrot.lane.b32.xlu0 %v8094, 120
    %v8100 = vpop.permute.xlu0 %8099
    %8101 = vrot.lane.b32.xlu0 %v8093, 112
    %v8102 = vpop.permute.xlu0 %8101
    %8103 = vrot.lane.b32.xlu0 %v8094, 112
    %v8104 = vpop.permute.xlu0 %8103
    %v8105 = vrot.slane %v8094, 7
    %vm8106 = vcmask 1041409
    %v8107 = vsel %vm8106, %v8105, %v8093
    %v8108 = vrot.slane %v8100, 7
    %v8109 = vsel %vm8106, %v8108, %v8098
    %v8110 = vrot.slane %v8104, 7
    %v8111 = vsel %vm8106, %v8110, %v8102
    %v8114 = vcombine.low %v8107, %v8111
    %v8116 = vunpack.c.l.s4 1983009808
    %v8117 = vunpack.c.0.s8 %v8116
    %v8118 = vlaneseq
    %v8119 = vshrl.u32 %v8118, 7
    %v8120 = vsub.s32 %v8117, %v8119
    %v8121 = vrot.slane %v8114, %v8120
    %v8123 = vcombine.low %v8121, %v8109
    %v8125 = vunpack.c.l.s4 1934713408
    %v8126 = vunpack.c.0.s8 %v8125
    %v8127 = vlaneseq
    %v8128 = vshrl.u32 %v8127, 7
    %v8129 = vsub.s32 %v8126, %v8128
    %v8130 = vrot.slane %v8123, %v8129
    %v8131 = vcombine.high %v8130, 0.0
    %v8132 = vmul.f32 %v3765, %v712
    %v8133 = vmul.f32 %v3766, %v713
    %v8134 = vmul.f32 %v3767, %v714
    %v8135 = vmul.f32 %v3768, %v715
    %v8136 = vmul.f32 %v3769, %v716
    %v8137 = vmul.f32 %v3770, %v717
    %v8138 = vmul.f32 %v3771, %v718
    %v8139 = vmul.f32 %v3772, %v719
    %v8140 = vmul.f32 %v3773, %v720
    %v8141 = vmul.f32 %v3774, %v721
    %v8142 = vmul.f32 %v3775, %v722
    %v8143 = vmul.f32 %v3776, %v723
    %v8144 = vmul.f32 %v3777, %v724
    %v8145 = vmul.f32 %v3778, %v725
    %v8146 = vmul.f32 %v3779, %v726
    %v8147 = vmul.f32 %v3780, %v727
    %v8148 = vmul.f32 %v3781, %v728
    %v8149 = vmul.f32 %v3782, %v729
    %v8150 = vmul.f32 %v3783, %v730
    %v8151 = vmul.f32 %v3784, %v731
    %v8152 = vmul.f32 %v3785, %v732
    %v8153 = vmul.f32 %v3786, %v733
    %v8154 = vmul.f32 %v3787, %v734
    %v8155 = vmul.f32 %v3788, %v735
    %v8156 = vmul.f32 %v3789, %v736
    %v8157 = vmul.f32 %v3790, %v737
    %v8158 = vmul.f32 %v3791, %v738
    %v8159 = vmul.f32 %v3792, %v739
    %v8160 = vmul.f32 %v3793, %v740
    %v8161 = vmul.f32 %v3794, %v741
    %v8162 = vmul.f32 %v3795, %v742
    %v8163 = vmul.f32 %v3796, %v743
    %v8164 = vmul.f32 %v3797, %v744
    %v8165 = vmul.f32 %v3798, %v745
    %v8166 = vmul.f32 %v3799, %v746
    %v8167 = vmul.f32 %v3800, %v747
    %v8168 = vmul.f32 %v3801, %v712
    %v8169 = vmul.f32 %v3802, %v713
    %v8170 = vmul.f32 %v3803, %v714
    %v8171 = vmul.f32 %v3804, %v715
    %v8172 = vmul.f32 %v3805, %v716
    %v8173 = vmul.f32 %v3806, %v717
    %v8174 = vmul.f32 %v3807, %v718
    %v8175 = vmul.f32 %v3808, %v719
    %v8176 = vmul.f32 %v3809, %v720
    %v8177 = vmul.f32 %v3810, %v721
    %v8178 = vmul.f32 %v3811, %v722
    %v8179 = vmul.f32 %v3812, %v723
    %v8180 = vmul.f32 %v3813, %v724
    %v8181 = vmul.f32 %v3814, %v725
    %v8182 = vmul.f32 %v3815, %v726
    %v8183 = vmul.f32 %v3816, %v727
    %v8184 = vmul.f32 %v3817, %v728
    %v8185 = vmul.f32 %v3818, %v729
    %v8186 = vmul.f32 %v3819, %v730
    %v8187 = vmul.f32 %v3820, %v731
    %v8188 = vmul.f32 %v3821, %v732
    %v8189 = vmul.f32 %v3822, %v733
    %v8190 = vmul.f32 %v3823, %v734
    %v8191 = vmul.f32 %v3824, %v735
    %v8192 = vmul.f32 %v3825, %v736
    %v8193 = vmul.f32 %v3826, %v737
    %v8194 = vmul.f32 %v3827, %v738
    %v8195 = vmul.f32 %v3828, %v739
    %v8196 = vmul.f32 %v3829, %v740
    %v8197 = vmul.f32 %v3830, %v741
    %v8198 = vmul.f32 %v3831, %v742
    %v8199 = vmul.f32 %v3832, %v743
    %v8200 = vmul.f32 %v3833, %v744
    %v8201 = vmul.f32 %v3834, %v745
    %v8202 = vmul.f32 %v3835, %v746
    %v8203 = vmul.f32 %v3836, %v747
    %v8204 = vsel %vm895, %v8132, 0.0
    %v8205 = vsel %vm895, %v8133, 0.0
    %v8206 = vadd.f32 %v8204, %v8205
    %v8207 = vsel %vm895, %v8134, 0.0
    %v8208 = vadd.f32 %v8206, %v8207
    %v8209 = vsel %vm895, %v8135, 0.0
    %v8210 = vadd.f32 %v8208, %v8209
    %v8211 = vsel %vm895, %v8136, 0.0
    %v8212 = vadd.f32 %v8210, %v8211
    %v8213 = vsel %vm895, %v8137, 0.0
    %v8214 = vadd.f32 %v8212, %v8213
    %v8215 = vsel %vm895, %v8138, 0.0
    %v8216 = vadd.f32 %v8214, %v8215
    %v8217 = vsel %vm895, %v8139, 0.0
    %v8218 = vadd.f32 %v8216, %v8217
    %v8219 = vsel %vm895, %v8140, 0.0
    %v8220 = vadd.f32 %v8218, %v8219
    %v8221 = vsel %vm895, %v8141, 0.0
    %v8222 = vadd.f32 %v8220, %v8221
    %v8223 = vsel %vm895, %v8142, 0.0
    %v8224 = vadd.f32 %v8222, %v8223
    %v8225 = vsel %vm895, %v8143, 0.0
    %v8226 = vadd.f32 %v8224, %v8225
    %v8227 = vsel %vm895, %v8144, 0.0
    %v8228 = vadd.f32 %v8226, %v8227
    %v8229 = vsel %vm895, %v8145, 0.0
    %v8230 = vadd.f32 %v8228, %v8229
    %v8231 = vsel %vm895, %v8146, 0.0
    %v8232 = vadd.f32 %v8230, %v8231
    %v8233 = vsel %vm895, %v8147, 0.0
    %v8234 = vadd.f32 %v8232, %v8233
    %v8235 = vsel %vm895, %v8148, 0.0
    %v8236 = vadd.f32 %v8234, %v8235
    %v8237 = vsel %vm895, %v8149, 0.0
    %v8238 = vadd.f32 %v8236, %v8237
    %v8239 = vsel %vm895, %v8150, 0.0
    %v8240 = vadd.f32 %v8238, %v8239
    %v8241 = vsel %vm895, %v8151, 0.0
    %v8242 = vadd.f32 %v8240, %v8241
    %v8243 = vsel %vm895, %v8152, 0.0
    %v8244 = vadd.f32 %v8242, %v8243
    %v8245 = vsel %vm895, %v8153, 0.0
    %v8246 = vadd.f32 %v8244, %v8245
    %v8247 = vsel %vm895, %v8154, 0.0
    %v8248 = vadd.f32 %v8246, %v8247
    %v8249 = vsel %vm895, %v8155, 0.0
    %v8250 = vadd.f32 %v8248, %v8249
    %v8251 = vsel %vm895, %v8156, 0.0
    %v8252 = vadd.f32 %v8250, %v8251
    %v8253 = vsel %vm895, %v8157, 0.0
    %v8254 = vadd.f32 %v8252, %v8253
    %v8255 = vsel %vm895, %v8158, 0.0
    %v8256 = vadd.f32 %v8254, %v8255
    %v8257 = vsel %vm895, %v8159, 0.0
    %v8258 = vadd.f32 %v8256, %v8257
    %v8259 = vsel %vm895, %v8160, 0.0
    %v8260 = vadd.f32 %v8258, %v8259
    %v8261 = vsel %vm895, %v8161, 0.0
    %v8262 = vadd.f32 %v8260, %v8261
    %v8263 = vsel %vm895, %v8162, 0.0
    %v8264 = vadd.f32 %v8262, %v8263
    %v8265 = vsel %vm895, %v8163, 0.0
    %v8266 = vadd.f32 %v8264, %v8265
    %v8267 = vsel %vm895, %v8164, 0.0
    %v8268 = vadd.f32 %v8266, %v8267
    %v8269 = vsel %vm895, %v8165, 0.0
    %v8270 = vadd.f32 %v8268, %v8269
    %v8271 = vsel %vm895, %v8166, 0.0
    %v8272 = vadd.f32 %v8270, %v8271
    %v8273 = vsel %vm895, %v8167, 0.0
    %v8274 = vadd.f32 %v8272, %v8273
    %v8275 = vrot.slane %v8274, 4
    %v8276 = vadd.f32 %v8274, %v8275
    %v8277 = vrot.slane %v8276, 2
    %v8278 = vadd.f32 %v8276, %v8277
    %v8279 = vrot.slane %v8278, 1
    %v8280 = vadd.f32 %v8278, %v8279
    %v8281 = vsel %vm895, %v8168, 0.0
    %v8282 = vsel %vm895, %v8169, 0.0
    %v8283 = vadd.f32 %v8281, %v8282
    %v8284 = vsel %vm895, %v8170, 0.0
    %v8285 = vadd.f32 %v8283, %v8284
    %v8286 = vsel %vm895, %v8171, 0.0
    %v8287 = vadd.f32 %v8285, %v8286
    %v8288 = vsel %vm895, %v8172, 0.0
    %v8289 = vadd.f32 %v8287, %v8288
    %v8290 = vsel %vm895, %v8173, 0.0
    %v8291 = vadd.f32 %v8289, %v8290
    %v8292 = vsel %vm895, %v8174, 0.0
    %v8293 = vadd.f32 %v8291, %v8292
    %v8294 = vsel %vm895, %v8175, 0.0
    %v8295 = vadd.f32 %v8293, %v8294
    %v8296 = vsel %vm895, %v8176, 0.0
    %v8297 = vadd.f32 %v8295, %v8296
    %v8298 = vsel %vm895, %v8177, 0.0
    %v8299 = vadd.f32 %v8297, %v8298
    %v8300 = vsel %vm895, %v8178, 0.0
    %v8301 = vadd.f32 %v8299, %v8300
    %v8302 = vsel %vm895, %v8179, 0.0
    %v8303 = vadd.f32 %v8301, %v8302
    %v8304 = vsel %vm895, %v8180, 0.0
    %v8305 = vadd.f32 %v8303, %v8304
    %v8306 = vsel %vm895, %v8181, 0.0
    %v8307 = vadd.f32 %v8305, %v8306
    %v8308 = vsel %vm895, %v8182, 0.0
    %v8309 = vadd.f32 %v8307, %v8308
    %v8310 = vsel %vm895, %v8183, 0.0
    %v8311 = vadd.f32 %v8309, %v8310
    %v8312 = vsel %vm895, %v8184, 0.0
    %v8313 = vadd.f32 %v8311, %v8312
    %v8314 = vsel %vm895, %v8185, 0.0
    %v8315 = vadd.f32 %v8313, %v8314
    %v8316 = vsel %vm895, %v8186, 0.0
    %v8317 = vadd.f32 %v8315, %v8316
    %v8318 = vsel %vm895, %v8187, 0.0
    %v8319 = vadd.f32 %v8317, %v8318
    %v8320 = vsel %vm895, %v8188, 0.0
    %v8321 = vadd.f32 %v8319, %v8320
    %v8322 = vsel %vm895, %v8189, 0.0
    %v8323 = vadd.f32 %v8321, %v8322
    %v8324 = vsel %vm895, %v8190, 0.0
    %v8325 = vadd.f32 %v8323, %v8324
    %v8326 = vsel %vm895, %v8191, 0.0
    %v8327 = vadd.f32 %v8325, %v8326
    %v8328 = vsel %vm895, %v8192, 0.0
    %v8329 = vadd.f32 %v8327, %v8328
    %v8330 = vsel %vm895, %v8193, 0.0
    %v8331 = vadd.f32 %v8329, %v8330
    %v8332 = vsel %vm895, %v8194, 0.0
    %v8333 = vadd.f32 %v8331, %v8332
    %v8334 = vsel %vm895, %v8195, 0.0
    %v8335 = vadd.f32 %v8333, %v8334
    %v8336 = vsel %vm895, %v8196, 0.0
    %v8337 = vadd.f32 %v8335, %v8336
    %v8338 = vsel %vm895, %v8197, 0.0
    %v8339 = vadd.f32 %v8337, %v8338
    %v8340 = vsel %vm895, %v8198, 0.0
    %v8341 = vadd.f32 %v8339, %v8340
    %v8342 = vsel %vm895, %v8199, 0.0
    %v8343 = vadd.f32 %v8341, %v8342
    %v8344 = vsel %vm895, %v8200, 0.0
    %v8345 = vadd.f32 %v8343, %v8344
    %v8346 = vsel %vm895, %v8201, 0.0
    %v8347 = vadd.f32 %v8345, %v8346
    %v8348 = vsel %vm895, %v8202, 0.0
    %v8349 = vadd.f32 %v8347, %v8348
    %v8350 = vsel %vm895, %v8203, 0.0
    %v8351 = vadd.f32 %v8349, %v8350
    %v8352 = vrot.slane %v8351, 4
    %v8353 = vadd.f32 %v8351, %v8352
    %v8354 = vrot.slane %v8353, 2
    %v8355 = vadd.f32 %v8353, %v8354
    %v8356 = vrot.slane %v8355, 1
    %v8357 = vadd.f32 %v8355, %v8356
    %v8358 = vmul.f32 %v8280, 0.00390625
    %v8359 = vmul.f32 %v8357, 0.00390625
    %v8360 = vld [vmem:[%s3] sm:$0xf]
    %v8363 = vsel %vm8106, %v8359, %v8358
    %v8364 = vsel %vm895, %v8363, 0
    %v8367 = vsel %vm1112, %v8360, 0
    %8369 = vmatprep.subr.mxu0 0.0
    %8370 = vmatpush1.msra.mxu0 %v8367
    %8371 = vmatprep.subr.mxu0 0.0
    %8372 = vmatpush1.msra.mxu0 0.0
    %8373 = vmatprep.subr.mxu0 0.0
    %8374 = vmatpush1.msra.mxu0 0.0
    %8375 = vmatprep.subr.mxu0 0.0
    %8376 = vmatpush1.msra.mxu0 0.0
    %8377 = vmatprep.subr.mxu0 0.0
    %8378 = vmatpush1.msra.mxu0 0.0
    %8379 = vmatprep.subr.mxu0 0.0
    %8380 = vmatpush1.msra.mxu0 0.0
    %8381 = vmatprep.subr.mxu0 0.0
    %8382 = vmatpush1.msra.mxu0 0.0
    %8383 = vmatprep.subr.mxu0 0.0
    %8384 = vmatpush1.msra.mxu0 0.0
    %8385 = vmatprep.subr.mxu0 0.0
    %8386 = vmatpush1.msra.mxu0 0.0
    %8387 = vmatprep.subr.mxu0 0.0
    %8388 = vmatpush1.msra.mxu0 0.0
    %8389 = vmatprep.subr.mxu0 0.0
    %8390 = vmatpush1.msra.mxu0 0.0
    %8391 = vmatprep.subr.mxu0 0.0
    %8392 = vmatpush1.msra.mxu0 0.0
    %8393 = vmatprep.subr.mxu0 0.0
    %8394 = vmatpush1.msra.mxu0 0.0
    %8395 = vmatprep.subr.mxu0 0.0
    %8396 = vmatpush1.msra.mxu0 0.0
    %8397 = vmatprep.subr.mxu0 0.0
    %8398 = vmatpush1.msra.mxu0 0.0
    %8399 = vmatprep.subr.mxu0 0.0
    %8400 = vmatpush1.msra.mxu0 0.0
    %8401 = vmatprep.subr.mxu0 0.0
    %8402 = vmatpush1.msra.mxu0 0.0
    %8403 = vmatprep.subr.mxu0 0.0
    %8404 = vmatpush1.msra.mxu0 0.0
    %8405 = vmatprep.subr.mxu0 0.0
    %8406 = vmatpush1.msra.mxu0 0.0
    %8407 = vmatprep.subr.mxu0 0.0
    %8408 = vmatpush1.msra.mxu0 0.0
    %8409 = vmatprep.subr.mxu0 0.0
    %8410 = vmatpush1.msra.mxu0 0.0
    %8411 = vmatprep.subr.mxu0 0.0
    %8412 = vmatpush1.msra.mxu0 0.0
    %8413 = vmatprep.subr.mxu0 0.0
    %8414 = vmatpush1.msra.mxu0 0.0
    %8415 = vmatprep.subr.mxu0 0.0
    %8416 = vmatpush1.msra.mxu0 0.0
    %8417 = vmatprep.subr.mxu0 0.0
    %8418 = vmatpush1.msra.mxu0 0.0
    %8419 = vmatprep.subr.mxu0 0.0
    %8420 = vmatpush1.msra.mxu0 0.0
    %8421 = vmatprep.subr.mxu0 0.0
    %8422 = vmatpush1.msra.mxu0 0.0
    %8423 = vmatprep.subr.mxu0 0.0
    %8424 = vmatpush1.msra.mxu0 0.0
    %8425 = vmatprep.subr.mxu0 0.0
    %8426 = vmatpush1.msra.mxu0 0.0
    %8427 = vmatprep.subr.mxu0 0.0
    %8428 = vmatpush1.msra.mxu0 0.0
    %8429 = vmatprep.subr.mxu0 0.0
    %8430 = vmatpush1.msra.mxu0 0.0
    %8431 = vmatprep.subr.mxu0 0.0
    %8432 = vmatpush1.msra.mxu0 0.0
    %8433 = vmatprep.mubr.f32.mxu0 0.0
    %8434 = vmatmul.mubr.f32.gmra.mrb[0].mxu0 %v8364
    %v8435 = vpop.f32.mrb[0].mxu0
    %v8436 = vadd.f32 0.0, %v8435
    %v8437 = vpop.f32.mrb[0].mxu0
    %8438 = vdwg.mxu0
    %8440 = vrot.lane.b32.xlu0 %v8436, 125
    %v8441 = vpop.permute.xlu0 %8440
    %v8443 = vcombine.low %v8436, %v8441
    %v8445 = vunpack.c.l.s4 1934713408
    %v8446 = vunpack.c.0.s8 %v8445
    %v8447 = vlaneseq
    %v8448 = vshrl.u32 %v8447, 7
    %v8449 = vsub.s32 %v8446, %v8448
    %v8450 = vrot.slane %v8443, %v8449
    %v8451 = vcombine.high %v8450, 0.0
    %v8452 = vld [vmem:[%s4] sm:$0x3]
    %v8453 = vadd.f32 %v8450, %v8452
    %v8454 = vadd.f32 %v8451, %v8452
    %vm8455 = vcmask 17408
    %v8456 = vsel %vm8455, %v8453, -inf
    %8457 = vmax.xlane.f32.xlu0 %v8456
    %v8458 = vpop.xlane.xlu0 %8457
    %v8459 = vsel %vm8455, %v8454, -inf
    %8460 = vmax.xlane.f32.xlu0 %v8459
    %v8461 = vpop.xlane.xlu0 %8460
    %v8462 = vsub.f32 %v8453, %v8458
    %v8463 = vsub.f32 %v8454, %v8461
    %v8464 = vmul.f32 %v8462, 1.442695
    %v8465 = vpow.pop %v8464
    %v8466 = vmul.f32 %v8463, 1.442695
    %v8467 = vpow.pop %v8466
    %v8468 = vsel %vm8455, %v8465, 0.0
    %8469 = vadd.xlane.f32.xlu0 %v8468
    %v8470 = vpop.xlane.xlu0 %8469
    %v8471 = vsel %vm8455, %v8467, 0.0
    %8472 = vadd.xlane.f32.xlu0 %v8471
    %v8473 = vpop.xlane.xlu0 %8472
    %v8474 = vrcp.pop %v8470
    %v8475 = vmul.f32 %v8465, %v8474
    %v8476 = vrcp.pop %v8473
    %v8477 = vmul.f32 %v8467, %v8476
    %vm8478 = vcmask 23552
    %v8480 = vsel %vm8478, %v8475, 0
    %vm8482 = vcmask 1042432
    %v8484 = vsel %vm8482, %v8130, 0
    %8486 = vmatprep.subr.mxu0 0.0
    %8487 = vmatpush1.msra.mxu0 %v8484
    %8488 = vmatprep.subr.mxu0 0.0
    %8489 = vmatpush1.msra.mxu0 0.0
    %8490 = vmatprep.subr.mxu0 0.0
    %8491 = vmatpush1.msra.mxu0 0.0
    %8492 = vmatprep.subr.mxu0 0.0
    %8493 = vmatpush1.msra.mxu0 0.0
    %8494 = vmatprep.subr.mxu0 0.0
    %8495 = vmatpush1.msra.mxu0 0.0
    %8496 = vmatprep.subr.mxu0 0.0
    %8497 = vmatpush1.msra.mxu0 0.0
    %8498 = vmatprep.subr.mxu0 0.0
    %8499 = vmatpush1.msra.mxu0 0.0
    %8500 = vmatprep.subr.mxu0 0.0
    %8501 = vmatpush1.msra.mxu0 0.0
    %8502 = vmatprep.subr.mxu0 0.0
    %8503 = vmatpush1.msra.mxu0 0.0
    %8504 = vmatprep.subr.mxu0 0.0
    %8505 = vmatpush1.msra.mxu0 0.0
    %8506 = vmatprep.subr.mxu0 0.0
    %8507 = vmatpush1.msra.mxu0 0.0
    %8508 = vmatprep.subr.mxu0 0.0
    %8509 = vmatpush1.msra.mxu0 0.0
    %8510 = vmatprep.subr.mxu0 0.0
    %8511 = vmatpush1.msra.mxu0 0.0
    %8512 = vmatprep.subr.mxu0 0.0
    %8513 = vmatpush1.msra.mxu0 0.0
    %8514 = vmatprep.subr.mxu0 0.0
    %8515 = vmatpush1.msra.mxu0 0.0
    %8516 = vmatprep.subr.mxu0 0.0
    %8517 = vmatpush1.msra.mxu0 0.0
    %8518 = vmatprep.subr.mxu0 0.0
    %8519 = vmatpush1.msra.mxu0 0.0
    %8520 = vmatprep.subr.mxu0 0.0
    %8521 = vmatpush1.msra.mxu0 0.0
    %8522 = vmatprep.subr.mxu0 0.0
    %8523 = vmatpush1.msra.mxu0 0.0
    %8524 = vmatprep.subr.mxu0 0.0
    %8525 = vmatpush1.msra.mxu0 0.0
    %8526 = vmatprep.subr.mxu0 0.0
    %8527 = vmatpush1.msra.mxu0 0.0
    %8528 = vmatprep.subr.mxu0 0.0
    %8529 = vmatpush1.msra.mxu0 0.0
    %8530 = vmatprep.subr.mxu0 0.0
    %8531 = vmatpush1.msra.mxu0 0.0
    %8532 = vmatprep.subr.mxu0 0.0
    %8533 = vmatpush1.msra.mxu0 0.0
    %8534 = vmatprep.subr.mxu0 0.0
    %8535 = vmatpush1.msra.mxu0 0.0
    %8536 = vmatprep.subr.mxu0 0.0
    %8537 = vmatpush1.msra.mxu0 0.0
    %8538 = vmatprep.subr.mxu0 0.0
    %8539 = vmatpush1.msra.mxu0 0.0
    %8540 = vmatprep.subr.mxu0 0.0
    %8541 = vmatpush1.msra.mxu0 0.0
    %8542 = vmatprep.subr.mxu0 0.0
    %8543 = vmatpush1.msra.mxu0 0.0
    %8544 = vmatprep.subr.mxu0 0.0
    %8545 = vmatpush1.msra.mxu0 0.0
    %8546 = vmatprep.subr.mxu0 0.0
    %8547 = vmatpush1.msra.mxu0 0.0
    %8548 = vmatprep.subr.mxu0 0.0
    %8549 = vmatpush1.msra.mxu0 0.0
    %8550 = vmatprep.mubr.f32.mxu0 0.0
    %8551 = vmatmul.mubr.f32.gmra.mrb[0].mxu0 %v8480
    %v8552 = vpop.f32.mrb[0].mxu0
    %v8553 = vadd.f32 0.0, %v8552
    %v8554 = vpop.f32.mrb[0].mxu0
    %8555 = vdwg.mxu0
    %v8557 = vsel %vm8478, %v8477, 0
    %v8560 = vsel %vm8482, %v8131, 0
    %8562 = vmatprep.subr.mxu0 0.0
    %8563 = vmatpush1.msra.mxu0 %v8560
    %8564 = vmatprep.subr.mxu0 0.0
    %8565 = vmatpush1.msra.mxu0 0.0
    %8566 = vmatprep.subr.mxu0 0.0
    %8567 = vmatpush1.msra.mxu0 0.0
    %8568 = vmatprep.subr.mxu0 0.0
    %8569 = vmatpush1.msra.mxu0 0.0
    %8570 = vmatprep.subr.mxu0 0.0
    %8571 = vmatpush1.msra.mxu0 0.0
    %8572 = vmatprep.subr.mxu0 0.0
    %8573 = vmatpush1.msra.mxu0 0.0
    %8574 = vmatprep.subr.mxu0 0.0
    %8575 = vmatpush1.msra.mxu0 0.0
    %8576 = vmatprep.subr.mxu0 0.0
    %8577 = vmatpush1.msra.mxu0 0.0
    %8578 = vmatprep.subr.mxu0 0.0
    %8579 = vmatpush1.msra.mxu0 0.0
    %8580 = vmatprep.subr.mxu0 0.0
    %8581 = vmatpush1.msra.mxu0 0.0
    %8582 = vmatprep.subr.mxu0 0.0
    %8583 = vmatpush1.msra.mxu0 0.0
    %8584 = vmatprep.subr.mxu0 0.0
    %8585 = vmatpush1.msra.mxu0 0.0
    %8586 = vmatprep.subr.mxu0 0.0
    %8587 = vmatpush1.msra.mxu0 0.0
    %8588 = vmatprep.subr.mxu0 0.0
    %8589 = vmatpush1.msra.mxu0 0.0
    %8590 = vmatprep.subr.mxu0 0.0
    %8591 = vmatpush1.msra.mxu0 0.0
    %8592 = vmatprep.subr.mxu0 0.0
    %8593 = vmatpush1.msra.mxu0 0.0
    %8594 = vmatprep.subr.mxu0 0.0
    %8595 = vmatpush1.msra.mxu0 0.0
    %8596 = vmatprep.subr.mxu0 0.0
    %8597 = vmatpush1.msra.mxu0 0.0
    %8598 = vmatprep.subr.mxu0 0.0
    %8599 = vmatpush1.msra.mxu0 0.0
    %8600 = vmatprep.subr.mxu0 0.0
    %8601 = vmatpush1.msra.mxu0 0.0
    %8602 = vmatprep.subr.mxu0 0.0
    %8603 = vmatpush1.msra.mxu0 0.0
    %8604 = vmatprep.subr.mxu0 0.0
    %8605 = vmatpush1.msra.mxu0 0.0
    %8606 = vmatprep.subr.mxu0 0.0
    %8607 = vmatpush1.msra.mxu0 0.0
    %8608 = vmatprep.subr.mxu0 0.0
    %8609 = vmatpush1.msra.mxu0 0.0
    %8610 = vmatprep.subr.mxu0 0.0
    %8611 = vmatpush1.msra.mxu0 0.0
    %8612 = vmatprep.subr.mxu0 0.0
    %8613 = vmatpush1.msra.mxu0 0.0
    %8614 = vmatprep.subr.mxu0 0.0
    %8615 = vmatpush1.msra.mxu0 0.0
    %8616 = vmatprep.subr.mxu0 0.0
    %8617 = vmatpush1.msra.mxu0 0.0
    %8618 = vmatprep.subr.mxu0 0.0
    %8619 = vmatpush1.msra.mxu0 0.0
    %8620 = vmatprep.subr.mxu0 0.0
    %8621 = vmatpush1.msra.mxu0 0.0
    %8622 = vmatprep.subr.mxu0 0.0
    %8623 = vmatpush1.msra.mxu0 0.0
    %8624 = vmatprep.subr.mxu0 0.0
    %8625 = vmatpush1.msra.mxu0 0.0
    %8626 = vmatprep.mubr.f32.mxu0 0.0
    %8627 = vmatmul.mubr.f32.gmra.mrb[0].mxu0 %v8557
    %v8628 = vpop.f32.mrb[0].mxu0
    %v8629 = vadd.f32 0.0, %v8628
    %v8630 = vpop.f32.mrb[0].mxu0
    %8631 = vdwg.mxu0
    %v8632 = vld [vmem:[%s5] sm:$0xff]
    %v8633 = vld [vmem:[%s6] sm:$0x3]
    %v8634 = vlaneseq
    %v8635 = vshrl.u32 %v8634, 7
    %v8636 = vsub.s32 0, %v8635
    %v8637 = vrot.slane %v8633, %v8636
    %v8640 = vrot.slane %v8629, 7
    %v8641 = vsel %vm8106, %v8640, %v8553
    %vm8642 = vcmask 64512
    %v8643 = vsel %vm8642, %v8641, 0
    %8645 = vmatprep.subr.mxu0 0.0
    %8646 = vmatpush1.msra.mxu0 %v8632
    %8647 = vmatprep.subr.mxu0 0.0
    %8648 = vmatpush1.msra.mxu0 0.0
    %8649 = vmatprep.subr.mxu0 0.0
    %8650 = vmatpush1.msra.mxu0 0.0
    %8651 = vmatprep.subr.mxu0 0.0
    %8652 = vmatpush1.msra.mxu0 0.0
    %8653 = vmatprep.subr.mxu0 0.0
    %8654 = vmatpush1.msra.mxu0 0.0
    %8655 = vmatprep.subr.mxu0 0.0
    %8656 = vmatpush1.msra.mxu0 0.0
    %8657 = vmatprep.subr.mxu0 0.0
    %8658 = vmatpush1.msra.mxu0 0.0
    %8659 = vmatprep.subr.mxu0 0.0
    %8660 = vmatpush1.msra.mxu0 0.0
    %8661 = vmatprep.subr.mxu0 0.0
    %8662 = vmatpush1.msra.mxu0 0.0
    %8663 = vmatprep.subr.mxu0 0.0
    %8664 = vmatpush1.msra.mxu0 0.0
    %8665 = vmatprep.subr.mxu0 0.0
    %8666 = vmatpush1.msra.mxu0 0.0
    %8667 = vmatprep.subr.mxu0 0.0
    %8668 = vmatpush1.msra.mxu0 0.0
    %8669 = vmatprep.subr.mxu0 0.0
    %8670 = vmatpush1.msra.mxu0 0.0
    %8671 = vmatprep.subr.mxu0 0.0
    %8672 = vmatpush1.msra.mxu0 0.0
    %8673 = vmatprep.subr.mxu0 0.0
    %8674 = vmatpush1.msra.mxu0 0.0
    %8675 = vmatprep.subr.mxu0 0.0
    %8676 = vmatpush1.msra.mxu0 0.0
    %8677 = vmatprep.subr.mxu0 0.0
    %8678 = vmatpush1.msra.mxu0 0.0
    %8679 = vmatprep.subr.mxu0 0.0
    %8680 = vmatpush1.msra.mxu0 0.0
    %8681 = vmatprep.subr.mxu0 0.0
    %8682 = vmatpush1.msra.mxu0 0.0
    %8683 = vmatprep.subr.mxu0 0.0
    %8684 = vmatpush1.msra.mxu0 0.0
    %8685 = vmatprep.subr.mxu0 0.0
    %8686 = vmatpush1.msra.mxu0 0.0
    %8687 = vmatprep.subr.mxu0 0.0
    %8688 = vmatpush1.msra.mxu0 0.0
    %8689 = vmatprep.subr.mxu0 0.0
    %8690 = vmatpush1.msra.mxu0 0.0
    %8691 = vmatprep.subr.mxu0 0.0
    %8692 = vmatpush1.msra.mxu0 0.0
    %8693 = vmatprep.subr.mxu0 0.0
    %8694 = vmatpush1.msra.mxu0 0.0
    %8695 = vmatprep.subr.mxu0 0.0
    %8696 = vmatpush1.msra.mxu0 0.0
    %8697 = vmatprep.subr.mxu0 0.0
    %8698 = vmatpush1.msra.mxu0 0.0
    %8699 = vmatprep.subr.mxu0 0.0
    %8700 = vmatpush1.msra.mxu0 0.0
    %8701 = vmatprep.subr.mxu0 0.0
    %8702 = vmatpush1.msra.mxu0 0.0
    %8703 = vmatprep.subr.mxu0 0.0
    %8704 = vmatpush1.msra.mxu0 0.0
    %8705 = vmatprep.subr.mxu0 0.0
    %8706 = vmatpush1.msra.mxu0 0.0
    %8707 = vmatprep.subr.mxu0 0.0
    %8708 = vmatpush1.msra.mxu0 0.0
    %8709 = vmatprep.mubr.f32.mxu0 0.0
    %8710 = vmatmul.mubr.f32.gmra.mrb[0].mxu0 %v8643
    %v8711 = vpop.f32.mrb[0].mxu0
    %v8712 = vadd.f32 %v8637, %v8711
    %v8713 = vpop.f32.mrb[0].mxu0
    %8714 = vdwg.mxu0
    %v8717 = vunpack.c.l.s4 1966171168
    %v8718 = vunpack.c.0.s8 %v8717
    %v8719 = vlaneseq
    %v8720 = vshrl.u32 %v8719, 7
    %v8721 = vsub.s32 %v8718, %v8720
    %v8722 = vrot.slane %v8712, %v8721
    %v8723 = vcombine.high %v8722, %v8722
    %v8725 = vunpack.c.l.s4 1966171168
    %v8726 = vunpack.c.0.s8 %v8725
    %v8727 = vlaneseq
    %v8728 = vshrl.u32 %v8727, 7
    %v8729 = vsub.s32 %v8726, %v8728
    %v8730 = vrot.slane %v8722, %v8729
    %v8732 = vunpack.c.l.s4 1966171168
    %v8733 = vunpack.c.0.s8 %v8732
    %v8734 = vlaneseq
    %v8735 = vshrl.u32 %v8734, 7
    %v8736 = vsub.s32 %v8733, %v8735
    %v8737 = vrot.slane %v8723, %v8736
    %s8740 = scalar_lea.vmem %s5, 8
    %v8741 = vld [vmem:[%s8740] sm:$0xff]
    %v8742 = vlaneseq
    %v8743 = vshrl.u32 %v8742, 7
    %v8744 = vsub.s32 1, %v8743
    %v8745 = vrot.slane %v8633, %v8744
    %v8746 = vrot.slane %v8553, 1
    %v8747 = vsel %vm8106, %v8629, %v8746
    %v8748 = vsel %vm8642, %v8747, 0
    %8750 = vmatprep.subr.mxu0 0.0
    %8751 = vmatpush1.msra.mxu0 %v8741
    %8752 = vmatprep.subr.mxu0 0.0
    %8753 = vmatpush1.msra.mxu0 0.0
    %8754 = vmatprep.subr.mxu0 0.0
    %8755 = vmatpush1.msra.mxu0 0.0
    %8756 = vmatprep.subr.mxu0 0.0
    %8757 = vmatpush1.msra.mxu0 0.0
    %8758 = vmatprep.subr.mxu0 0.0
    %8759 = vmatpush1.msra.mxu0 0.0
    %8760 = vmatprep.subr.mxu0 0.0
    %8761 = vmatpush1.msra.mxu0 0.0
    %8762 = vmatprep.subr.mxu0 0.0
    %8763 = vmatpush1.msra.mxu0 0.0
    %8764 = vmatprep.subr.mxu0 0.0
    %8765 = vmatpush1.msra.mxu0 0.0
    %8766 = vmatprep.subr.mxu0 0.0
    %8767 = vmatpush1.msra.mxu0 0.0
    %8768 = vmatprep.subr.mxu0 0.0
    %8769 = vmatpush1.msra.mxu0 0.0
    %8770 = vmatprep.subr.mxu0 0.0
    %8771 = vmatpush1.msra.mxu0 0.0
    %8772 = vmatprep.subr.mxu0 0.0
    %8773 = vmatpush1.msra.mxu0 0.0
    %8774 = vmatprep.subr.mxu0 0.0
    %8775 = vmatpush1.msra.mxu0 0.0
    %8776 = vmatprep.subr.mxu0 0.0
    %8777 = vmatpush1.msra.mxu0 0.0
    %8778 = vmatprep.subr.mxu0 0.0
    %8779 = vmatpush1.msra.mxu0 0.0
    %8780 = vmatprep.subr.mxu0 0.0
    %8781 = vmatpush1.msra.mxu0 0.0
    %8782 = vmatprep.subr.mxu0 0.0
    %8783 = vmatpush1.msra.mxu0 0.0
    %8784 = vmatprep.subr.mxu0 0.0
    %8785 = vmatpush1.msra.mxu0 0.0
    %8786 = vmatprep.subr.mxu0 0.0
    %8787 = vmatpush1.msra.mxu0 0.0
    %8788 = vmatprep.subr.mxu0 0.0
    %8789 = vmatpush1.msra.mxu0 0.0
    %8790 = vmatprep.subr.mxu0 0.0
    %8791 = vmatpush1.msra.mxu0 0.0
    %8792 = vmatprep.subr.mxu0 0.0
    %8793 = vmatpush1.msra.mxu0 0.0
    %8794 = vmatprep.subr.mxu0 0.0
    %8795 = vmatpush1.msra.mxu0 0.0
    %8796 = vmatprep.subr.mxu0 0.0
    %8797 = vmatpush1.msra.mxu0 0.0
    %8798 = vmatprep.subr.mxu0 0.0
    %8799 = vmatpush1.msra.mxu0 0.0
    %8800 = vmatprep.subr.mxu0 0.0
    %8801 = vmatpush1.msra.mxu0 0.0
    %8802 = vmatprep.subr.mxu0 0.0
    %8803 = vmatpush1.msra.mxu0 0.0
    %8804 = vmatprep.subr.mxu0 0.0
    %8805 = vmatpush1.msra.mxu0 0.0
    %8806 = vmatprep.subr.mxu0 0.0
    %8807 = vmatpush1.msra.mxu0 0.0
    %8808 = vmatprep.subr.mxu0 0.0
    %8809 = vmatpush1.msra.mxu0 0.0
    %8810 = vmatprep.subr.mxu0 0.0
    %8811 = vmatpush1.msra.mxu0 0.0
    %8812 = vmatprep.subr.mxu0 0.0
    %8813 = vmatpush1.msra.mxu0 0.0
    %8814 = vmatprep.mubr.f32.mxu0 0.0
    %8815 = vmatmul.mubr.f32.gmra.mrb[0].mxu0 %v8748
    %v8816 = vpop.f32.mrb[0].mxu0
    %v8817 = vadd.f32 %v8745, %v8816
    %v8818 = vpop.f32.mrb[0].mxu0
    %8819 = vdwg.mxu0
    %v8822 = vunpack.c.l.s4 1966171168
    %v8823 = vunpack.c.0.s8 %v8822
    %v8824 = vlaneseq
    %v8825 = vshrl.u32 %v8824, 7
    %v8826 = vsub.s32 %v8823, %v8825
    %v8827 = vrot.slane %v8817, %v8826
    %v8828 = vcombine.high %v8827, %v8827
    %v8830 = vunpack.c.l.s4 1966171168
    %v8831 = vunpack.c.0.s8 %v8830
    %v8832 = vlaneseq
    %v8833 = vshrl.u32 %v8832, 7
    %v8834 = vsub.s32 %v8831, %v8833
    %v8835 = vrot.slane %v8827, %v8834
    %v8837 = vunpack.c.l.s4 1966171168
    %v8838 = vunpack.c.0.s8 %v8837
    %v8839 = vlaneseq
    %v8840 = vshrl.u32 %v8839, 7
    %v8841 = vsub.s32 %v8838, %v8840
    %v8842 = vrot.slane %v8828, %v8841
    %v8843 = vlaneseq
    %v8844 = vshrl.u32 %v8843, 7
    %v8845 = vsub.s32 0, %v8844
    %v8846 = vrot.slane %v8835, %v8845
    %v8847 = vlaneseq
    %v8848 = vshrl.u32 %v8847, 7
    %v8849 = vsub.s32 0, %v8848
    %v8850 = vrot.slane %v8842, %v8849
    %vm8853 = vcmask 1040384
    %v8854 = vsel %vm8853, %v8730, %v8846
    %v8855 = vsel %vm8853, %v8737, %v8850
    %8858 = vrot.lane.b32.xlu0 %v8854, 3
    %v8859 = vpop.permute.xlu0 %8858
    %8860 = vrot.lane.b32.xlu0 %v8855, 3
    %v8861 = vpop.permute.xlu0 %8860
    %v8864 = vsel %vm8478, %v8475, %v8859
    %v8865 = vsel %vm8478, %v8477, %v8861
    %vm8866 = vcmask 58368
    %8867 = vst.msk [vmem:[#allocation2] sm:$0x3] %vm8866, %v8864
    %8868 = vst.msk [vmem:[#allocation2 + $0x2] sm:$0x3] %vm8866, %v8865
    // Predicated region
    $region30: #{tpu_custom_call.1} parent=1 // pred_check
      _
    $region31: #{tpu_custom_call.1} parent=1 // pred_check_branch
      %8870 = sbr.rel (0) target = $region33
    $region32: #{tpu_custom_call.1} parent=1 // pred_region
      %s8872 = ssub.s32 64, 64
      %8873 = vsyncadd [#allocation3], %s8872
      %s8874 = sshll.u32 [#allocation2], 4
      %s8875 = int_to_ptr.vmem [resolvable:$true] %s8874
      %8880 = dma.vmem_to_hbm [thread:$0]  %s8875, 64, %s7, [#allocation3], 32, 32, 2
    $region33: #{tpu_custom_call.1} parent=1 // pred_fallthru
      _
    // Predicated region
    $region34: #{tpu_custom_call.1} parent=1 // pred_check
      _
    $region35: #{tpu_custom_call.1} parent=1 // pred_check_branch
      %8882 = sbr.rel (0) target = $region37
    $region36: #{tpu_custom_call.1} parent=1 // pred_region
      %8883 = dma.done [#allocation3], 64
    $region37: #{tpu_custom_call.1} parent=1 // pred_fallthru
      _
    %8884 = vsyncpa [#allocation3], 1

</llo_original>
